<compile_context>
chip_gen: v5e
topology: v5e:2x2
jax: 0.10.0
libtpu: 0.0.40
codegen_flags: <defaults>
</compile_context>

<pallas_src>
import functools

import jax
import jax.numpy as jnp
import numpy as np
from jax.experimental import pallas as pl
from jax.experimental.pallas import tpu as pltpu

EPS = 1e-5
ROW_TILE_MATMUL = 1024   # rows per matmul block (fits easily in VMEM even on v7x)
ROW_TILE_EW = 512        # rows per lane-dense elementwise block


def _round_up(x, m):
    return ((x + m - 1) // m) * m


def _pick_row_tile(rows, target):
    # tile must be a multiple of 8 (sublane); single tile if the array is small
    if rows <= target:
        return _round_up(rows, 8)
    return target


# ----------------------------- Pallas kernels ------------------------------

def _matmul_stats_kernel(x_ref, w_ref, b_ref, y_ref, sum_ref, sq_ref, *,
                         valid_rows, row_tile, need_mask):
    """y = x @ w + b, plus per-channel sum / sum-of-squares accumulated across
    the row axis (resident (1, C) outputs per parity, init at first row block)."""
    @pl.when(pl.program_id(1) == 0)
    def _():
        sum_ref[...] = jnp.zeros_like(sum_ref)
        sq_ref[...] = jnp.zeros_like(sq_ref)

    y = jnp.dot(x_ref[...], w_ref[...],
                preferred_element_type=jnp.float32) + b_ref[...]
    y_ref[...] = y

    if need_mask:   # only emitted when the row count was padded to the tile
        row0 = pl.program_id(1) * row_tile
        rows = row0 + jax.lax.broadcasted_iota(jnp.int32, (row_tile, 1), 0)
        yv = jnp.where(rows < valid_rows, y, 0.0)
    else:
        yv = y
    sum_ref[...] += jnp.sum(yv, axis=0, keepdims=True)
    sq_ref[...] += jnp.sum(yv * yv, axis=0, keepdims=True)


def matmul_bias_stats(patches, wmat, bias, *, row_tile_target=ROW_TILE_MATMUL):
    """patches: (P, M, K); wmat: (P, K, C); bias: (C,).
    Returns y: (P, M, C) and per-parity col_sum / col_sumsq: (P, 1, C)."""
    P, M, K = patches.shape
    C = wmat.shape[-1]
    tm = _pick_row_tile(M, row_tile_target)
    Mp = _round_up(M, tm)
    if Mp != M:
        patches = jnp.pad(patches, ((0, 0), (0, Mp - M), (0, 0)))
    kern = functools.partial(_matmul_stats_kernel, valid_rows=M,
                             row_tile=tm, need_mask=(Mp != M))
    y, s, sq = pl.pallas_call(
        kern,
        out_shape=(jax.ShapeDtypeStruct((P, Mp, C), jnp.float32),
                   jax.ShapeDtypeStruct((P, 1, C), jnp.float32),
                   jax.ShapeDtypeStruct((P, 1, C), jnp.float32)),
        grid_spec=pltpu.PrefetchScalarGridSpec(
            num_scalar_prefetch=0,
            grid=(P, Mp // tm),
            in_specs=[pl.BlockSpec((None, tm, K), lambda p, i: (p, i, 0)),
                      pl.BlockSpec((None, K, C), lambda p, i: (p, 0, 0)),
                      pl.BlockSpec((1, C), lambda p, i: (0, 0))],
            out_specs=(pl.BlockSpec((None, tm, C), lambda p, i: (p, i, 0)),
                       pl.BlockSpec((None, 1, C), lambda p, i: (p, 0, 0)),
                       pl.BlockSpec((None, 1, C), lambda p, i: (p, 0, 0))),
        ),
        # parity axis is independent (stats are per-parity) -> parallel;
        # the row axis carries the stats accumulator -> arbitrary.
        compiler_params=pltpu.CompilerParams(
            dimension_semantics=("parallel", "arbitrary")),
    )(patches, wmat, bias.reshape(1, C))
    return y[:, :M, :], s, sq


def _bnrelu_conv_stats_kernel(x_ref, sc_ref, sh_ref, oh_ref, ow_ref,
                              khm1_ref, kwm1_ref, w_ref, b_ref,
                              y_ref, sum_ref, sq_ref, *,
                              OH, OW, row_tile, valid_rows, need_mask):
    """Fused: a = relu(BN1(patches)) (per-channel affine commutes with im2col),
    halo taps re-zeroed, then y = a @ w + b with BN2-stats epilogue."""
    @pl.when(pl.program_id(0) == 0)
    def _():
        sum_ref[...] = jnp.zeros_like(sum_ref)
        sq_ref[...] = jnp.zeros_like(sq_ref)

    # which (row, tap) pairs fall inside the image (conv zero-padding halo
    # must contribute exactly 0 after BN+ReLU, not relu(shift)).
    ih = oh_ref[...] + khm1_ref[...]          # (tm,1) + (1,9C) -> (tm,9C)
    iw = ow_ref[...] + kwm1_ref[...]
    inside = (ih >= 0) & (ih < OH) & (iw >= 0) & (iw < OW)

    a = jnp.maximum(x_ref[...] * sc_ref[...] + sh_ref[...], 0.0)
    a = jnp.where(inside, a, 0.0)

    y = jnp.dot(a, w_ref[...], preferred_element_type=jnp.float32) + b_ref[...]
    y_ref[...] = y

    if need_mask:
        row0 = pl.program_id(0) * row_tile
        rows = row0 + jax.lax.broadcasted_iota(jnp.int32, (row_tile, 1), 0)
        yv = jnp.where(rows < valid_rows, y, 0.0)
    else:
        yv = y
    sum_ref[...] += jnp.sum(yv, axis=0, keepdims=True)
    sq_ref[...] += jnp.sum(yv * yv, axis=0, keepdims=True)


def conv3x3_bnrelu_stats(y1, scale1, shift1, w2, b2, *,
                         row_tile_target=ROW_TILE_MATMUL):
    """y1: (N, OH, OW, C) pre-BN conv1 output. Applies BN1+ReLU and the 3x3
    same-padding conv in one fused matmul. Returns y2 (M, Cout) and its
    per-channel sum / sum-of-squares for BN2."""
    N, OH, OW, C = y1.shape
    Cout = w2.shape[0]
    M = N * OH * OW
    KC = 9 * C

    # TODO(synk): replace the XLA im2col (9x blow-up of y1) with in-kernel tap
    # accumulation via manual halo DMA if this block is used at production sizes.
    patches = conv3x3_patches(y1)                       # (M, 9*C), zero halo
    wmat = conv_weight_to_mat(w2)                       # (9*C, Cout)

    sc9 = jnp.tile(scale1.reshape(1, C), (1, 9))        # per-lane BN scale
    sh9 = jnp.tile(shift1.reshape(1, C), (1, 9))        # per-lane BN shift

    # per-row output-pixel coordinates (rows are (n, oh, ow) row-major)
    pix = jnp.arange(OH * OW, dtype=jnp.int32)
    oh_all = jnp.tile(pix // OW, (N,)).reshape(M, 1)
    ow_all = jnp.tile(pix % OW, (N,)).reshape(M, 1)
    # per-lane tap offsets (kh-1, kw-1); lane l = tap*C + c, tap = 3*kh + kw
    taps = np.arange(KC) // C
    khm1 = jnp.asarray((taps // 3 - 1).reshape(1, KC), jnp.int32)
    kwm1 = jnp.asarray((taps % 3 - 1).reshape(1, KC), jnp.int32)

    tm = _pick_row_tile(M, row_tile_target)
    Mp = _round_up(M, tm)
    if Mp != M:
        pad = ((0, Mp - M), (0, 0))
        patches = jnp.pad(patches, pad)
        oh_all = jnp.pad(oh_all, pad)
        ow_all = jnp.pad(ow_all, pad)

    kern = functools.partial(_bnrelu_conv_stats_kernel, OH=OH, OW=OW,
                             row_tile=tm, valid_rows=M, need_mask=(Mp != M))
    y2, s, sq = pl.pallas_call(
        kern,
        out_shape=(jax.ShapeDtypeStruct((Mp, Cout), jnp.float32),
                   jax.ShapeDtypeStruct((1, Cout), jnp.float32),
                   jax.ShapeDtypeStruct((1, Cout), jnp.float32)),
        grid_spec=pltpu.PrefetchScalarGridSpec(
            num_scalar_prefetch=0,
            grid=(Mp // tm,),
            in_specs=[pl.BlockSpec((tm, KC), lambda i: (i, 0)),
                      pl.BlockSpec((1, KC), lambda i: (0, 0)),
                      pl.BlockSpec((1, KC), lambda i: (0, 0)),
                      pl.BlockSpec((tm, 1), lambda i: (i, 0)),
                      pl.BlockSpec((tm, 1), lambda i: (i, 0)),
                      pl.BlockSpec((1, KC), lambda i: (0, 0)),
                      pl.BlockSpec((1, KC), lambda i: (0, 0)),
                      pl.BlockSpec((KC, Cout), lambda i: (0, 0)),
                      pl.BlockSpec((1, Cout), lambda i: (0, 0))],
            out_specs=(pl.BlockSpec((tm, Cout), lambda i: (i, 0)),
                       pl.BlockSpec((1, Cout), lambda i: (0, 0)),
                       pl.BlockSpec((1, Cout), lambda i: (0, 0))),
        ),
        compiler_params=pltpu.CompilerParams(
            dimension_semantics=("arbitrary",)),
    )(patches, sc9, sh9, oh_all, ow_all, khm1, kwm1, wmat, b2.reshape(1, Cout))
    return y2[:M], s, sq


def _bn_add_relu_kernel(y_ref, r_ref, s2_ref, b2_ref, ss_ref, bs_ref, o_ref):
    o_ref[...] = jnp.maximum(
        y_ref[...] * s2_ref[...] + b2_ref[...] +
        r_ref[...] * ss_ref[...] + bs_ref[...], 0.0)


def _elementwise_call(kernel, mats, vecs, *, row_tile_target=ROW_TILE_EW):
    """Lane-dense per-channel elementwise op: (M, C) tensors are viewed as
    (M*C/128, 128) (channel = lane % C) with the per-channel vectors tiled to
    128 lanes so every store uses full vreg lanes."""
    M, C = mats[0].shape
    if 128 % C == 0 and (M * C) % 128 == 0:
        rep = 128 // C
        width = 128
        mats = [m.reshape((M * C) // 128, width) for m in mats]
        vecs = [jnp.tile(v.reshape(1, C), (1, rep)) for v in vecs]
    else:
        width = C
        vecs = [v.reshape(1, C) for v in vecs]
    R = mats[0].shape[0]
    tr = _pick_row_tile(R, row_tile_target)
    Rp = _round_up(R, tr)
    if Rp != R:
        mats = [jnp.pad(m, ((0, Rp - R), (0, 0))) for m in mats]
    out = pl.pallas_call(
        kernel,
        out_shape=jax.ShapeDtypeStruct((Rp, width), jnp.float32),
        grid_spec=pltpu.PrefetchScalarGridSpec(
            num_scalar_prefetch=0,
            grid=(Rp // tr,),
            in_specs=([pl.BlockSpec((tr, width), lambda i: (i, 0)) for _ in mats]
                      + [pl.BlockSpec((1, width), lambda i: (0, 0)) for _ in vecs]),
            out_specs=pl.BlockSpec((tr, width), lambda i: (i, 0)),
        ),
        compiler_params=pltpu.CompilerParams(
            dimension_semantics=("parallel",)),
    )(*mats, *vecs)
    return out[:R].reshape(M, C)


# --------------------------------- glue ------------------------------------
# Sub-pixel decomposition of ConvTranspose2d(k=4, stride=2, padding=1):
# output pixel (2q+ph, 2r+pw) only touches a 2x2 input window and a fixed
# 2x2 sub-kernel (oh = 2*ih - 1 + kh  =>  kh in {3,1} for ph=0, {2,0} for ph=1).
_KSEL = ((3, 1), (2, 0))   # kernel tap (kh/kw) per parity, by increasing input offset


def convT_subpixel_patches(x):
    """x: (N, H, W, Cin) -> patches (4, N*H*W, 4*Cin); parity p = 2*ph + pw."""
    N, H, W, Cin = x.shape
    per_parity = []
    for ph in range(2):
        for pw in range(2):
            xp = jnp.pad(x, ((0, 0), (1 - ph, ph), (1 - pw, pw), (0, 0)))
            wins = [xp[:, a:a + H, b:b + W, :] for a in range(2) for b in range(2)]
            pt = jnp.stack(wins, axis=3)                 # (N, H, W, 4, Cin)
            per_parity.append(pt.reshape(N * H * W, 4 * Cin))
    return jnp.stack(per_parity, axis=0)


def convT_subpixel_wmat(w):
    """PyTorch ConvTranspose2d weight (Cin, Cout, 4, 4) -> (4, 4*Cin, Cout)."""
    Cin, Cout = w.shape[0], w.shape[1]
    mats = []
    for ph in range(2):
        for pw in range(2):
            taps = [w[:, :, _KSEL[ph][a], _KSEL[pw][b]]
                    for a in range(2) for b in range(2)]   # each (Cin, Cout)
            mats.append(jnp.stack(taps, axis=0).reshape(4 * Cin, Cout))
    return jnp.stack(mats, axis=0)


def subpixel_to_nhwc(y, N, H, W):
    """y: (4, N*H*W, C) parity-major -> (N, 2H, 2W, C)."""
    C = y.shape[-1]
    y = y.reshape(2, 2, N, H, W, C)                      # (ph, pw, n, q, r, c)
    return y.transpose(2, 3, 0, 4, 1, 5).reshape(N, 2 * H, 2 * W, C)


def conv3x3_patches(a):
    """a: (N, H, W, C) -> (N*H*W, 9*C) im2col in (kh, kw, ci) order, padding=1."""
    N, H, W, C = a.shape
    ap = jnp.pad(a, ((0, 0), (1, 1), (1, 1), (0, 0)))
    wins = [ap[:, i:i + H, j:j + W, :] for i in range(3) for j in range(3)]
    return jnp.stack(wins, axis=3).reshape(N * H * W, 9 * C)


def conv_weight_to_mat(w):
    """PyTorch Conv2d weight (Cout, Cin, kh, kw) -> (kh*kw*Cin, Cout)."""
    return w.transpose(2, 3, 1, 0).reshape(-1, w.shape[0])


def bn_scale_shift(col_sum, col_sq, count, gamma, beta, eps=EPS):
    mean = col_sum / count
    var = jnp.maximum(col_sq / count - mean * mean, 0.0)
    scale = gamma.reshape(1, -1) / jnp.sqrt(var + eps)
    shift = beta.reshape(1, -1) - mean * scale
    return scale, shift


def residual_up_block(x_nchw, p):
    x = jnp.transpose(x_nchw, (0, 2, 3, 1)).astype(jnp.float32)     # NCHW -> NHWC
    N, H, W, Cin = x.shape
    Cout = p['b1'].shape[0]
    OH, OW = 2 * H, 2 * W
    M = N * OH * OW

    # -- launch 1: conv1 + skip transposed convs, fused into one matmul
    #    (sub-pixel 2x2 decomposition) with BN-stats epilogue ---------------
    patches = convT_subpixel_patches(x)                             # (4, M/4, 4*Cin)
    w_cat = jnp.concatenate([convT_subpixel_wmat(p['w1']),
                             convT_subpixel_wmat(p['ws'])], axis=2)  # (4, 4Cin, 2Cout)
    b_cat = jnp.concatenate([p['b1'], p['bs']])
    y_cat, s_par, sq_par = matmul_bias_stats(patches, w_cat, b_cat)
    s_cat = jnp.sum(s_par, axis=0)                                  # (1, 2Cout)
    sq_cat = jnp.sum(sq_par, axis=0)

    y_full = subpixel_to_nhwc(y_cat, N, H, W)                       # (N, OH, OW, 2Cout)
    y1 = y_full[..., :Cout]                                         # pre-BN main path
    ys = y_full[..., Cout:].reshape(M, Cout)                        # pre-BN skip path

    scale1, shift1 = bn_scale_shift(s_cat[:, :Cout], sq_cat[:, :Cout], M,
                                    p['g1'], p['be1'])
    scale_s, shift_s = bn_scale_shift(s_cat[:, Cout:], sq_cat[:, Cout:], M,
                                      p['gs'], p['bes'])

    # -- launch 2: BN1 + ReLU fused into the 3x3-conv matmul, with BN2-stats --
    y2, s2_sum, s2_sq = conv3x3_bnrelu_stats(y1, scale1, shift1, p['w2'], p['b2'])
    scale2, shift2 = bn_scale_shift(s2_sum, s2_sq, M, p['g2'], p['be2'])

    # -- launch 3: BN2 + BN_skip + residual add + ReLU (lane-dense, fused) --
    out = _elementwise_call(_bn_add_relu_kernel, [y2, ys],
                            [scale2, shift2, scale_s, shift_s])

    return out.reshape(N, OH, OW, Cout).transpose(0, 3, 1, 2)       # back to NCHW


# ----------------------- pure-JAX reference (for check) --------------------

def reference(x, p, eps=EPS):
    def bn(z, g, b):
        m = z.mean(axis=(0, 2, 3), keepdims=True)
        v = z.var(axis=(0, 2, 3), keepdims=True)
        return (z - m) / jnp.sqrt(v + eps) * g.reshape(1, -1, 1, 1) + b.reshape(1, -1, 1, 1)

    def convT(z, w, b):
        wk = jnp.flip(w, (2, 3)).transpose(1, 0, 2, 3)
        y = jax.lax.conv_general_dilated(
            z, wk, window_strides=(1, 1), padding=[(2, 2), (2, 2)],
            lhs_dilation=(2, 2), dimension_numbers=('NCHW', 'OIHW', 'NCHW'))
        return y + b.reshape(1, -1, 1, 1)

    def conv(z, w, b):
        y = jax.lax.conv_general_dilated(
            z, w, window_strides=(1, 1), padding=[(1, 1), (1, 1)],
            dimension_numbers=('NCHW', 'OIHW', 'NCHW'))
        return y + b.reshape(1, -1, 1, 1)

    residual = bn(convT(x, p['ws'], p['bs']), p['gs'], p['bes'])
    h = jnp.maximum(bn(convT(x, p['w1'], p['b1']), p['g1'], p['be1']), 0.0)
    h = bn(conv(h, p['w2'], p['b2']), p['g2'], p['be2'])
    return jnp.maximum(h + residual, 0.0)


# --------------------------------- main -------------------------------------

if __name__ == "__main__":
    key = jax.random.PRNGKey(0)
    N, Cin, H, W = 2, 4, 16, 16
    Cout = 8                     # input_dim != output_dim -> skip_layer present
    ks = jax.random.split(key, 8)

    x = jax.random.normal(ks[0], (N, Cin, H, W), jnp.float32)
    params = dict(
        w1=0.1 * jax.random.normal(ks[1], (Cin, Cout, 4, 4), jnp.float32),
        b1=0.1 * jax.random.normal(ks[2], (Cout,), jnp.float32),
        w2=0.1 * jax.random.normal(ks[3], (Cout, Cout, 3, 3), jnp.float32),
        b2=0.1 * jax.random.normal(ks[4], (Cout,), jnp.float32),
        ws=0.1 * jax.random.normal(ks[5], (Cin, Cout, 4, 4), jnp.float32),
        bs=0.1 * jax.random.normal(ks[6], (Cout,), jnp.float32),
        g1=jnp.ones((Cout,), jnp.float32), be1=jnp.zeros((Cout,), jnp.float32),
        g2=1.0 + 0.1 * jax.random.normal(ks[7], (Cout,), jnp.float32),
        be2=jnp.zeros((Cout,), jnp.float32),
        gs=jnp.ones((Cout,), jnp.float32), bes=jnp.zeros((Cout,), jnp.float32),
    )

    out = jax.block_until_ready(jax.jit(residual_up_block)(x, params))
    assert out.shape == (N, Cout, 2 * H, 2 * W)

    ref = reference(x, params)
    np.testing.assert_allclose(np.asarray(out), np.asarray(ref), atol=1e-4, rtol=1e-4)
    print("KERNEL_OK")
</pallas_src>

<mosaic_0001>
module attributes {stable_mosaic.version = 11 : i64} {
  func.func @_matmul_stats_kernel(%arg0: i32, %arg1: i32, %arg2: memref<1x512x16xf32, #tpu.memory_space<vmem>>, %arg3: memref<1x16x16xf32, #tpu.memory_space<vmem>>, %arg4: memref<1x16xf32, #tpu.memory_space<vmem>>, %arg5: memref<1x512x16xf32, #tpu.memory_space<vmem>>, %arg6: memref<1x1x16xf32, #tpu.memory_space<vmem>>, %arg7: memref<1x1x16xf32, #tpu.memory_space<vmem>>) attributes {dimension_semantics = [#tpu.dimension_semantics<parallel>, #tpu.dimension_semantics<arbitrary>], iteration_bounds = array<i64: 4, 1>, scalar_prefetch = 0 : i64, scratch_operands = 0 : i64, tpu.core_type = #tpu.core_type<tc>, window_params = [{transform_indices = @transform_0, window_bounds = array<i64: 1, 512, 16>}, {transform_indices = @transform_1, window_bounds = array<i64: 1, 16, 16>}, {pipeline_mode = #tpu.pipeline_mode<synchronous>, transform_indices = @transform_2, window_bounds = array<i64: 1, 16>}, {transform_indices = @transform_3, window_bounds = array<i64: 1, 512, 16>}, {transform_indices = @transform_4, window_bounds = array<i64: 1, 1, 16>}, {transform_indices = @transform_5, window_bounds = array<i64: 1, 1, 16>}]} {
    %c0_i32 = arith.constant 0 : i32
    %0 = arith.cmpi eq, %arg1, %c0_i32 : i32
    %1 = arith.extui %0 : i1 to i32
    %c0_i32_0 = arith.constant 0 : i32
    %2 = arith.cmpi ne, %1, %c0_i32_0 : i32
    scf.if %2 {
      %cst_25 = arith.constant 0.000000e+00 : f32
      %31 = vector.broadcast %cst_25 : f32 to vector<1x16xf32>
      %c0_26 = arith.constant 0 : index
      %c0_27 = arith.constant 0 : index
      %c0_28 = arith.constant 0 : index
      %32 = vector.load %arg6[%c0_26, %c0_27, %c0_28] : memref<1x1x16xf32, #tpu.memory_space<vmem>>, vector<1x1x16xf32>
      %33 = vector.shape_cast %32 : vector<1x1x16xf32> to vector<1x16xf32>
      %34 = vector.shape_cast %31 : vector<1x16xf32> to vector<1x1x16xf32>
      tpu.vector_store %arg6[%c0_26, %c0_27, %c0_28], %34 {strides = array<i32>} : memref<1x1x16xf32, #tpu.memory_space<vmem>>, vector<1x1x16xf32>,
      %cst_29 = arith.constant 0.000000e+00 : f32
      %35 = vector.broadcast %cst_29 : f32 to vector<1x16xf32>
      %c0_30 = arith.constant 0 : index
      %c0_31 = arith.constant 0 : index
      %c0_32 = arith.constant 0 : index
      %36 = vector.load %arg7[%c0_30, %c0_31, %c0_32] : memref<1x1x16xf32, #tpu.memory_space<vmem>>, vector<1x1x16xf32>
      %37 = vector.shape_cast %36 : vector<1x1x16xf32> to vector<1x16xf32>
      %38 = vector.shape_cast %35 : vector<1x16xf32> to vector<1x1x16xf32>
      tpu.vector_store %arg7[%c0_30, %c0_31, %c0_32], %38 {strides = array<i32>} : memref<1x1x16xf32, #tpu.memory_space<vmem>>, vector<1x1x16xf32>,
    } else {
    }
    %c0 = arith.constant 0 : index
    %c0_1 = arith.constant 0 : index
    %c0_2 = arith.constant 0 : index
    %3 = vector.load %arg2[%c0, %c0_1, %c0_2] : memref<1x512x16xf32, #tpu.memory_space<vmem>>, vector<1x512x16xf32>
    %4 = vector.shape_cast %3 : vector<1x512x16xf32> to vector<512x16xf32>
    %c0_3 = arith.constant 0 : index
    %c0_4 = arith.constant 0 : index
    %c0_5 = arith.constant 0 : index
    %5 = vector.load %arg3[%c0_3, %c0_4, %c0_5] : memref<1x16x16xf32, #tpu.memory_space<vmem>>, vector<1x16x16xf32>
    %6 = vector.shape_cast %5 : vector<1x16x16xf32> to vector<16x16xf32>
    %cst = arith.constant dense<0.000000e+00> : vector<512x16xf32>
    %7 = tpu.matmul %4, %6, %cst {dimension_numbers = #tpu.dot_dimension_numbers<[1], [0], [0], [1], [0, 0, 1, 1], [], []>} : vector<512x16xf32>, vector<16x16xf32>, vector<512x16xf32> -> vector<512x16xf32>
    %c0_6 = arith.constant 0 : index
    %c0_7 = arith.constant 0 : index
    %8 = vector.load %arg4[%c0_6, %c0_7] : memref<1x16xf32, #tpu.memory_space<vmem>>, vector<1x16xf32>
    %9 = vector.broadcast %8 : vector<1x16xf32> to vector<512x16xf32>
    %10 = arith.addf %7, %9 : vector<512x16xf32>
    %c0_8 = arith.constant 0 : index
    %c0_9 = arith.constant 0 : index
    %c0_10 = arith.constant 0 : index
    %11 = vector.load %arg5[%c0_8, %c0_9, %c0_10] : memref<1x512x16xf32, #tpu.memory_space<vmem>>, vector<1x512x16xf32>
    %12 = vector.shape_cast %11 : vector<1x512x16xf32> to vector<512x16xf32>
    %13 = vector.shape_cast %10 : vector<512x16xf32> to vector<1x512x16xf32>
    tpu.vector_store %arg5[%c0_8, %c0_9, %c0_10], %13 {strides = array<i32>} : memref<1x512x16xf32, #tpu.memory_space<vmem>>, vector<1x512x16xf32>,
    %c0_11 = arith.constant 0 : index
    %c0_12 = arith.constant 0 : index
    %c0_13 = arith.constant 0 : index
    %14 = vector.load %arg6[%c0_11, %c0_12, %c0_13] : memref<1x1x16xf32, #tpu.memory_space<vmem>>, vector<1x1x16xf32>
    %15 = vector.shape_cast %14 : vector<1x1x16xf32> to vector<1x16xf32>
    %cst_14 = arith.constant dense<0.000000e+00> : vector<16xf32>
    %16 = vector.multi_reduction <add>, %10, %cst_14 [0] : vector<512x16xf32> to vector<16xf32>
    %17 = vector.shape_cast %16 : vector<16xf32> to vector<1x16xf32>
    %18 = arith.addf %15, %17 : vector<1x16xf32>
    %c0_15 = arith.constant 0 : index
    %c0_16 = arith.constant 0 : index
    %c0_17 = arith.constant 0 : index
    %19 = vector.load %arg6[%c0_15, %c0_16, %c0_17] : memref<1x1x16xf32, #tpu.memory_space<vmem>>, vector<1x1x16xf32>
    %20 = vector.shape_cast %19 : vector<1x1x16xf32> to vector<1x16xf32>
    %21 = vector.shape_cast %18 : vector<1x16xf32> to vector<1x1x16xf32>
    tpu.vector_store %arg6[%c0_15, %c0_16, %c0_17], %21 {strides = array<i32>} : memref<1x1x16xf32, #tpu.memory_space<vmem>>, vector<1x1x16xf32>,
    %c0_18 = arith.constant 0 : index
    %c0_19 = arith.constant 0 : index
    %c0_20 = arith.constant 0 : index
    %22 = vector.load %arg7[%c0_18, %c0_19, %c0_20] : memref<1x1x16xf32, #tpu.memory_space<vmem>>, vector<1x1x16xf32>
    %23 = vector.shape_cast %22 : vector<1x1x16xf32> to vector<1x16xf32>
    %24 = arith.mulf %10, %10 : vector<512x16xf32>
    %cst_21 = arith.constant dense<0.000000e+00> : vector<16xf32>
    %25 = vector.multi_reduction <add>, %24, %cst_21 [0] : vector<512x16xf32> to vector<16xf32>
    %26 = vector.shape_cast %25 : vector<16xf32> to vector<1x16xf32>
    %27 = arith.addf %23, %26 : vector<1x16xf32>
    %c0_22 = arith.constant 0 : index
    %c0_23 = arith.constant 0 : index
    %c0_24 = arith.constant 0 : index
    %28 = vector.load %arg7[%c0_22, %c0_23, %c0_24] : memref<1x1x16xf32, #tpu.memory_space<vmem>>, vector<1x1x16xf32>
    %29 = vector.shape_cast %28 : vector<1x1x16xf32> to vector<1x16xf32>
    %30 = vector.shape_cast %27 : vector<1x16xf32> to vector<1x1x16xf32>
    tpu.vector_store %arg7[%c0_22, %c0_23, %c0_24], %30 {strides = array<i32>} : memref<1x1x16xf32, #tpu.memory_space<vmem>>, vector<1x1x16xf32>,
    return
  }
  func.func @transform_0(%arg0: i32, %arg1: i32) -> (i32, i32, i32) {
    %c0_i32 = arith.constant 0 : i32
    %c0_i32_0 = arith.constant 0 : i32
    return %arg0, %arg1, %c0_i32 : i32, i32, i32
  }
  func.func @transform_1(%arg0: i32, %arg1: i32) -> (i32, i32, i32) {
    %c0_i32 = arith.constant 0 : i32
    %c0_i32_0 = arith.constant 0 : i32
    %c0_i32_1 = arith.constant 0 : i32
    return %arg0, %c0_i32, %c0_i32_0 : i32, i32, i32
  }
  func.func @transform_2(%arg0: i32, %arg1: i32) -> (i32, i32) {
    %c0_i32 = arith.constant 0 : i32
    %c0_i32_0 = arith.constant 0 : i32
    %c0_i32_1 = arith.constant 0 : i32
    return %c0_i32, %c0_i32_0 : i32, i32
  }
  func.func @transform_3(%arg0: i32, %arg1: i32) -> (i32, i32, i32) {
    %c0_i32 = arith.constant 0 : i32
    %c0_i32_0 = arith.constant 0 : i32
    return %arg0, %arg1, %c0_i32 : i32, i32, i32
  }
  func.func @transform_4(%arg0: i32, %arg1: i32) -> (i32, i32, i32) {
    %c0_i32 = arith.constant 0 : i32
    %c0_i32_0 = arith.constant 0 : i32
    %c0_i32_1 = arith.constant 0 : i32
    return %arg0, %c0_i32, %c0_i32_0 : i32, i32, i32
  }
  func.func @transform_5(%arg0: i32, %arg1: i32) -> (i32, i32, i32) {
    %c0_i32 = arith.constant 0 : i32
    %c0_i32_0 = arith.constant 0 : i32
    %c0_i32_1 = arith.constant 0 : i32
    return %arg0, %c0_i32, %c0_i32_0 : i32, i32, i32
  }
}

module attributes {stable_mosaic.version = 11 : i64} {
  func.func @_bnrelu_conv_stats_kernel(%arg0: i32, %arg1: memref<1024x72xf32, #tpu.memory_space<vmem>>, %arg2: memref<1x72xf32, #tpu.memory_space<vmem>>, %arg3: memref<1x72xf32, #tpu.memory_space<vmem>>, %arg4: memref<1024x1xi32, #tpu.memory_space<vmem>>, %arg5: memref<1024x1xi32, #tpu.memory_space<vmem>>, %arg6: memref<1x72xi32, #tpu.memory_space<vmem>>, %arg7: memref<1x72xi32, #tpu.memory_space<vmem>>, %arg8: memref<72x8xf32, #tpu.memory_space<vmem>>, %arg9: memref<1x8xf32, #tpu.memory_space<vmem>>, %arg10: memref<1024x8xf32, #tpu.memory_space<vmem>>, %arg11: memref<1x8xf32, #tpu.memory_space<vmem>>, %arg12: memref<1x8xf32, #tpu.memory_space<vmem>>) attributes {dimension_semantics = [#tpu.dimension_semantics<arbitrary>], iteration_bounds = array<i64: 2>, scalar_prefetch = 0 : i64, scratch_operands = 0 : i64, tpu.core_type = #tpu.core_type<tc>, window_params = [{transform_indices = @transform_0, window_bounds = array<i64: 1024, 72>}, {pipeline_mode = #tpu.pipeline_mode<synchronous>, transform_indices = @transform_1, window_bounds = array<i64: 1, 72>}, {pipeline_mode = #tpu.pipeline_mode<synchronous>, transform_indices = @transform_2, window_bounds = array<i64: 1, 72>}, {transform_indices = @transform_3, window_bounds = array<i64: 1024, 1>}, {transform_indices = @transform_4, window_bounds = array<i64: 1024, 1>}, {pipeline_mode = #tpu.pipeline_mode<synchronous>, transform_indices = @transform_5, window_bounds = array<i64: 1, 72>}, {pipeline_mode = #tpu.pipeline_mode<synchronous>, transform_indices = @transform_6, window_bounds = array<i64: 1, 72>}, {pipeline_mode = #tpu.pipeline_mode<synchronous>, transform_indices = @transform_7, window_bounds = array<i64: 72, 8>}, {pipeline_mode = #tpu.pipeline_mode<synchronous>, transform_indices = @transform_8, window_bounds = array<i64: 1, 8>}, {transform_indices = @transform_9, window_bounds = array<i64: 1024, 8>}, {pipeline_mode = #tpu.pipeline_mode<synchronous>, transform_indices = @transform_10, window_bounds = array<i64: 1, 8>}, {pipeline_mode = #tpu.pipeline_mode<synchronous>, transform_indices = @transform_11, window_bounds = array<i64: 1, 8>}]} {
    %c0_i32 = arith.constant 0 : i32
    %0 = arith.cmpi eq, %arg0, %c0_i32 : i32
    %1 = arith.extui %0 : i1 to i32
    %c0_i32_0 = arith.constant 0 : i32
    %2 = arith.cmpi ne, %1, %c0_i32_0 : i32
    scf.if %2 {
      %cst_35 = arith.constant 0.000000e+00 : f32
      %52 = vector.broadcast %cst_35 : f32 to vector<1x8xf32>
      %c0_36 = arith.constant 0 : index
      %c0_37 = arith.constant 0 : index
      %53 = vector.load %arg11[%c0_36, %c0_37] : memref<1x8xf32, #tpu.memory_space<vmem>>, vector<1x8xf32>
      tpu.vector_store %arg11[%c0_36, %c0_37], %52 {strides = array<i32>} : memref<1x8xf32, #tpu.memory_space<vmem>>, vector<1x8xf32>,
      %cst_38 = arith.constant 0.000000e+00 : f32
      %54 = vector.broadcast %cst_38 : f32 to vector<1x8xf32>
      %c0_39 = arith.constant 0 : index
      %c0_40 = arith.constant 0 : index
      %55 = vector.load %arg12[%c0_39, %c0_40] : memref<1x8xf32, #tpu.memory_space<vmem>>, vector<1x8xf32>
      tpu.vector_store %arg12[%c0_39, %c0_40], %54 {strides = array<i32>} : memref<1x8xf32, #tpu.memory_space<vmem>>, vector<1x8xf32>,
    } else {
    }
    %c0 = arith.constant 0 : index
    %c0_1 = arith.constant 0 : index
    %3 = vector.load %arg4[%c0, %c0_1] : memref<1024x1xi32, #tpu.memory_space<vmem>>, vector<1024x1xi32>
    %c0_2 = arith.constant 0 : index
    %c0_3 = arith.constant 0 : index
    %4 = vector.load %arg6[%c0_2, %c0_3] : memref<1x72xi32, #tpu.memory_space<vmem>>, vector<1x72xi32>
    %5 = vector.broadcast %3 : vector<1024x1xi32> to vector<1024x72xi32>
    %6 = vector.broadcast %4 : vector<1x72xi32> to vector<1024x72xi32>
    %7 = arith.addi %5, %6 : vector<1024x72xi32>
    %c0_4 = arith.constant 0 : index
    %c0_5 = arith.constant 0 : index
    %8 = vector.load %arg5[%c0_4, %c0_5] : memref<1024x1xi32, #tpu.memory_space<vmem>>, vector<1024x1xi32>
    %c0_6 = arith.constant 0 : index
    %c0_7 = arith.constant 0 : index
    %9 = vector.load %arg7[%c0_6, %c0_7] : memref<1x72xi32, #tpu.memory_space<vmem>>, vector<1x72xi32>
    %10 = vector.broadcast %8 : vector<1024x1xi32> to vector<1024x72xi32>
    %11 = vector.broadcast %9 : vector<1x72xi32> to vector<1024x72xi32>
    %12 = arith.addi %10, %11 : vector<1024x72xi32>
    %c0_i32_8 = arith.constant 0 : i32
    %13 = vector.broadcast %c0_i32_8 : i32 to vector<1024x72xi32>
    %14 = arith.cmpi sge, %7, %13 : vector<1024x72xi32>
    %c32_i32 = arith.constant 32 : i32
    %15 = vector.broadcast %c32_i32 : i32 to vector<1024x72xi32>
    %16 = arith.cmpi slt, %7, %15 : vector<1024x72xi32>
    %17 = arith.andi %14, %16 : vector<1024x72xi1>
    %c0_i32_9 = arith.constant 0 : i32
    %18 = vector.broadcast %c0_i32_9 : i32 to vector<1024x72xi32>
    %19 = arith.cmpi sge, %12, %18 : vector<1024x72xi32>
    %20 = arith.andi %17, %19 : vector<1024x72xi1>
    %c32_i32_10 = arith.constant 32 : i32
    %21 = vector.broadcast %c32_i32_10 : i32 to vector<1024x72xi32>
    %22 = arith.cmpi slt, %12, %21 : vector<1024x72xi32>
    %23 = arith.andi %20, %22 : vector<1024x72xi1>
    %c0_11 = arith.constant 0 : index
    %c0_12 = arith.constant 0 : index
    %24 = vector.load %arg1[%c0_11, %c0_12] : memref<1024x72xf32, #tpu.memory_space<vmem>>, vector<1024x72xf32>
    %c0_13 = arith.constant 0 : index
    %c0_14 = arith.constant 0 : index
    %25 = vector.load %arg2[%c0_13, %c0_14] : memref<1x72xf32, #tpu.memory_space<vmem>>, vector<1x72xf32>
    %26 = vector.broadcast %25 : vector<1x72xf32> to vector<1024x72xf32>
    %27 = arith.mulf %24, %26 : vector<1024x72xf32>
    %c0_15 = arith.constant 0 : index
    %c0_16 = arith.constant 0 : index
    %28 = vector.load %arg3[%c0_15, %c0_16] : memref<1x72xf32, #tpu.memory_space<vmem>>, vector<1x72xf32>
    %29 = vector.broadcast %28 : vector<1x72xf32> to vector<1024x72xf32>
    %30 = arith.addf %27, %29 : vector<1024x72xf32>
    %cst = arith.constant 0.000000e+00 : f32
    %31 = vector.broadcast %cst : f32 to vector<1024x72xf32>
    %32 = arith.maximumf %30, %31 : vector<1024x72xf32>
    %cst_17 = arith.constant 0.000000e+00 : f32
    %33 = vector.broadcast %cst_17 : f32 to vector<1024x72xf32>
    %34 = arith.select %23, %32, %33 : vector<1024x72xi1>, vector<1024x72xf32>
    %c0_18 = arith.constant 0 : index
    %c0_19 = arith.constant 0 : index
    %35 = vector.load %arg8[%c0_18, %c0_19] : memref<72x8xf32, #tpu.memory_space<vmem>>, vector<72x8xf32>
    %cst_20 = arith.constant dense<0.000000e+00> : vector<1024x8xf32>
    %36 = tpu.matmul %34, %35, %cst_20 {dimension_numbers = #tpu.dot_dimension_numbers<[1], [0], [0], [1], [0, 0, 1, 1], [], []>} : vector<1024x72xf32>, vector<72x8xf32>, vector<1024x8xf32> -> vector<1024x8xf32>
    %c0_21 = arith.constant 0 : index
    %c0_22 = arith.constant 0 : index
    %37 = vector.load %arg9[%c0_21, %c0_22] : memref<1x8xf32, #tpu.memory_space<vmem>>, vector<1x8xf32>
    %38 = vector.broadcast %37 : vector<1x8xf32> to vector<1024x8xf32>
    %39 = arith.addf %36, %38 : vector<1024x8xf32>
    %c0_23 = arith.constant 0 : index
    %c0_24 = arith.constant 0 : index
    %40 = vector.load %arg10[%c0_23, %c0_24] : memref<1024x8xf32, #tpu.memory_space<vmem>>, vector<1024x8xf32>
    tpu.vector_store %arg10[%c0_23, %c0_24], %39 {strides = array<i32>} : memref<1024x8xf32, #tpu.memory_space<vmem>>, vector<1024x8xf32>,
    %c0_25 = arith.constant 0 : index
    %c0_26 = arith.constant 0 : index
    %41 = vector.load %arg11[%c0_25, %c0_26] : memref<1x8xf32, #tpu.memory_space<vmem>>, vector<1x8xf32>
    %cst_27 = arith.constant dense<0.000000e+00> : vector<8xf32>
    %42 = vector.multi_reduction <add>, %39, %cst_27 [0] : vector<1024x8xf32> to vector<8xf32>
    %43 = vector.shape_cast %42 : vector<8xf32> to vector<1x8xf32>
    %44 = arith.addf %41, %43 : vector<1x8xf32>
    %c0_28 = arith.constant 0 : index
    %c0_29 = arith.constant 0 : index
    %45 = vector.load %arg11[%c0_28, %c0_29] : memref<1x8xf32, #tpu.memory_space<vmem>>, vector<1x8xf32>
    tpu.vector_store %arg11[%c0_28, %c0_29], %44 {strides = array<i32>} : memref<1x8xf32, #tpu.memory_space<vmem>>, vector<1x8xf32>,
    %c0_30 = arith.constant 0 : index
    %c0_31 = arith.constant 0 : index
    %46 = vector.load %arg12[%c0_30, %c0_31] : memref<1x8xf32, #tpu.memory_space<vmem>>, vector<1x8xf32>
    %47 = arith.mulf %39, %39 : vector<1024x8xf32>
    %cst_32 = arith.constant dense<0.000000e+00> : vector<8xf32>
    %48 = vector.multi_reduction <add>, %47, %cst_32 [0] : vector<1024x8xf32> to vector<8xf32>
    %49 = vector.shape_cast %48 : vector<8xf32> to vector<1x8xf32>
    %50 = arith.addf %46, %49 : vector<1x8xf32>
    %c0_33 = arith.constant 0 : index
    %c0_34 = arith.constant 0 : index
    %51 = vector.load %arg12[%c0_33, %c0_34] : memref<1x8xf32, #tpu.memory_space<vmem>>, vector<1x8xf32>
    tpu.vector_store %arg12[%c0_33, %c0_34], %50 {strides = array<i32>} : memref<1x8xf32, #tpu.memory_space<vmem>>, vector<1x8xf32>,
    return
  }
  func.func @transform_0(%arg0: i32) -> (i32, i32) {
    %c0_i32 = arith.constant 0 : i32
    %c0_i32_0 = arith.constant 0 : i32
    return %arg0, %c0_i32 : i32, i32
  }
  func.func @transform_1(%arg0: i32) -> (i32, i32) {
    %c0_i32 = arith.constant 0 : i32
    %c0_i32_0 = arith.constant 0 : i32
    %c0_i32_1 = arith.constant 0 : i32
    return %c0_i32, %c0_i32_0 : i32, i32
  }
  func.func @transform_2(%arg0: i32) -> (i32, i32) {
    %c0_i32 = arith.constant 0 : i32
    %c0_i32_0 = arith.constant 0 : i32
    %c0_i32_1 = arith.constant 0 : i32
    return %c0_i32, %c0_i32_0 : i32, i32
  }
  func.func @transform_3(%arg0: i32) -> (i32, i32) {
    %c0_i32 = arith.constant 0 : i32
    %c0_i32_0 = arith.constant 0 : i32
    return %arg0, %c0_i32 : i32, i32
  }
  func.func @transform_4(%arg0: i32) -> (i32, i32) {
    %c0_i32 = arith.constant 0 : i32
    %c0_i32_0 = arith.constant 0 : i32
    return %arg0, %c0_i32 : i32, i32
  }
  func.func @transform_5(%arg0: i32) -> (i32, i32) {
    %c0_i32 = arith.constant 0 : i32
    %c0_i32_0 = arith.constant 0 : i32
    %c0_i32_1 = arith.constant 0 : i32
    return %c0_i32, %c0_i32_0 : i32, i32
  }
  func.func @transform_6(%arg0: i32) -> (i32, i32) {
    %c0_i32 = arith.constant 0 : i32
    %c0_i32_0 = arith.constant 0 : i32
    %c0_i32_1 = arith.constant 0 : i32
    return %c0_i32, %c0_i32_0 : i32, i32
  }
  func.func @transform_7(%arg0: i32) -> (i32, i32) {
    %c0_i32 = arith.constant 0 : i32
    %c0_i32_0 = arith.constant 0 : i32
    %c0_i32_1 = arith.constant 0 : i32
    return %c0_i32, %c0_i32_0 : i32, i32
  }
  func.func @transform_8(%arg0: i32) -> (i32, i32) {
    %c0_i32 = arith.constant 0 : i32
    %c0_i32_0 = arith.constant 0 : i32
    %c0_i32_1 = arith.constant 0 : i32
    return %c0_i32, %c0_i32_0 : i32, i32
  }
  func.func @transform_9(%arg0: i32) -> (i32, i32) {
    %c0_i32 = arith.constant 0 : i32
    %c0_i32_0 = arith.constant 0 : i32
    return %arg0, %c0_i32 : i32, i32
  }
  func.func @transform_10(%arg0: i32) -> (i32, i32) {
    %c0_i32 = arith.constant 0 : i32
    %c0_i32_0 = arith.constant 0 : i32
    %c0_i32_1 = arith.constant 0 : i32
    return %c0_i32, %c0_i32_0 : i32, i32
  }
  func.func @transform_11(%arg0: i32) -> (i32, i32) {
    %c0_i32 = arith.constant 0 : i32
    %c0_i32_0 = arith.constant 0 : i32
    %c0_i32_1 = arith.constant 0 : i32
    return %c0_i32, %c0_i32_0 : i32, i32
  }
}

module attributes {stable_mosaic.version = 11 : i64} {
  func.func @_bn_add_relu_kernel(%arg0: i32, %arg1: memref<128x128xf32, #tpu.memory_space<vmem>>, %arg2: memref<128x128xf32, #tpu.memory_space<vmem>>, %arg3: memref<1x128xf32, #tpu.memory_space<vmem>>, %arg4: memref<1x128xf32, #tpu.memory_space<vmem>>, %arg5: memref<1x128xf32, #tpu.memory_space<vmem>>, %arg6: memref<1x128xf32, #tpu.memory_space<vmem>>, %arg7: memref<128x128xf32, #tpu.memory_space<vmem>>) attributes {dimension_semantics = [#tpu.dimension_semantics<parallel>], iteration_bounds = array<i64: 1>, scalar_prefetch = 0 : i64, scratch_operands = 0 : i64, tpu.core_type = #tpu.core_type<tc>, window_params = [{transform_indices = @transform_0, window_bounds = array<i64: 128, 128>}, {transform_indices = @transform_1, window_bounds = array<i64: 128, 128>}, {pipeline_mode = #tpu.pipeline_mode<synchronous>, transform_indices = @transform_2, window_bounds = array<i64: 1, 128>}, {pipeline_mode = #tpu.pipeline_mode<synchronous>, transform_indices = @transform_3, window_bounds = array<i64: 1, 128>}, {pipeline_mode = #tpu.pipeline_mode<synchronous>, transform_indices = @transform_4, window_bounds = array<i64: 1, 128>}, {pipeline_mode = #tpu.pipeline_mode<synchronous>, transform_indices = @transform_5, window_bounds = array<i64: 1, 128>}, {transform_indices = @transform_6, window_bounds = array<i64: 128, 128>}]} {
    %c0 = arith.constant 0 : index
    %c0_0 = arith.constant 0 : index
    %0 = vector.load %arg1[%c0, %c0_0] : memref<128x128xf32, #tpu.memory_space<vmem>>, vector<128x128xf32>
    %c0_1 = arith.constant 0 : index
    %c0_2 = arith.constant 0 : index
    %1 = vector.load %arg3[%c0_1, %c0_2] : memref<1x128xf32, #tpu.memory_space<vmem>>, vector<1x128xf32>
    %2 = vector.broadcast %1 : vector<1x128xf32> to vector<128x128xf32>
    %3 = arith.mulf %0, %2 : vector<128x128xf32>
    %c0_3 = arith.constant 0 : index
    %c0_4 = arith.constant 0 : index
    %4 = vector.load %arg4[%c0_3, %c0_4] : memref<1x128xf32, #tpu.memory_space<vmem>>, vector<1x128xf32>
    %5 = vector.broadcast %4 : vector<1x128xf32> to vector<128x128xf32>
    %6 = arith.addf %3, %5 : vector<128x128xf32>
    %c0_5 = arith.constant 0 : index
    %c0_6 = arith.constant 0 : index
    %7 = vector.load %arg2[%c0_5, %c0_6] : memref<128x128xf32, #tpu.memory_space<vmem>>, vector<128x128xf32>
    %c0_7 = arith.constant 0 : index
    %c0_8 = arith.constant 0 : index
    %8 = vector.load %arg5[%c0_7, %c0_8] : memref<1x128xf32, #tpu.memory_space<vmem>>, vector<1x128xf32>
    %9 = vector.broadcast %8 : vector<1x128xf32> to vector<128x128xf32>
    %10 = arith.mulf %7, %9 : vector<128x128xf32>
    %11 = arith.addf %6, %10 : vector<128x128xf32>
    %c0_9 = arith.constant 0 : index
    %c0_10 = arith.constant 0 : index
    %12 = vector.load %arg6[%c0_9, %c0_10] : memref<1x128xf32, #tpu.memory_space<vmem>>, vector<1x128xf32>
    %13 = vector.broadcast %12 : vector<1x128xf32> to vector<128x128xf32>
    %14 = arith.addf %11, %13 : vector<128x128xf32>
    %cst = arith.constant 0.000000e+00 : f32
    %15 = vector.broadcast %cst : f32 to vector<128x128xf32>
    %16 = arith.maximumf %14, %15 : vector<128x128xf32>
    %c0_11 = arith.constant 0 : index
    %c0_12 = arith.constant 0 : index
    %17 = vector.load %arg7[%c0_11, %c0_12] : memref<128x128xf32, #tpu.memory_space<vmem>>, vector<128x128xf32>
    tpu.vector_store %arg7[%c0_11, %c0_12], %16 {strides = array<i32>} : memref<128x128xf32, #tpu.memory_space<vmem>>, vector<128x128xf32>,
    return
  }
  func.func @transform_0(%arg0: i32) -> (i32, i32) {
    %c0_i32 = arith.constant 0 : i32
    %c0_i32_0 = arith.constant 0 : i32
    return %arg0, %c0_i32 : i32, i32
  }
  func.func @transform_1(%arg0: i32) -> (i32, i32) {
    %c0_i32 = arith.constant 0 : i32
    %c0_i32_0 = arith.constant 0 : i32
    return %arg0, %c0_i32 : i32, i32
  }
  func.func @transform_2(%arg0: i32) -> (i32, i32) {
    %c0_i32 = arith.constant 0 : i32
    %c0_i32_0 = arith.constant 0 : i32
    %c0_i32_1 = arith.constant 0 : i32
    return %c0_i32, %c0_i32_0 : i32, i32
  }
  func.func @transform_3(%arg0: i32) -> (i32, i32) {
    %c0_i32 = arith.constant 0 : i32
    %c0_i32_0 = arith.constant 0 : i32
    %c0_i32_1 = arith.constant 0 : i32
    return %c0_i32, %c0_i32_0 : i32, i32
  }
  func.func @transform_4(%arg0: i32) -> (i32, i32) {
    %c0_i32 = arith.constant 0 : i32
    %c0_i32_0 = arith.constant 0 : i32
    %c0_i32_1 = arith.constant 0 : i32
    return %c0_i32, %c0_i32_0 : i32, i32
  }
  func.func @transform_5(%arg0: i32) -> (i32, i32) {
    %c0_i32 = arith.constant 0 : i32
    %c0_i32_0 = arith.constant 0 : i32
    %c0_i32_1 = arith.constant 0 : i32
    return %c0_i32, %c0_i32_0 : i32, i32
  }
  func.func @transform_6(%arg0: i32) -> (i32, i32) {
    %c0_i32 = arith.constant 0 : i32
    %c0_i32_0 = arith.constant 0 : i32
    return %arg0, %c0_i32 : i32, i32
  }
}

</mosaic_0001>

<llo_original>
// kernel: residual_up_block.3
$region0: #{residual_up_block.3}
  #allocation0 [shape = 'u32[]', space=smem, size = 0x4, offset = 0x4, fixed_abs, tag = 'smem constant byte address 0x4 - core index']
  #allocation1 [shape = 'u32[72,128]{1,0:T(1,128)}', space=vmem, size = 0x9000, scoped, tag = 'internal scratch']
  %s0 = inlined_call_operand.vmem [shape: f32[4,512,16], index: 0, kind: input, shape index: {}]
  %s1 = inlined_call_operand.vmem [shape: f32[4,16,16], index: 1, kind: input, shape index: {}]
  %s2 = inlined_call_operand.vmem [shape: f32[1,16], index: 2, kind: input, shape index: {}]
  %s3 = inlined_call_operand.vmem [shape: f32[4,512,16], index: 3, kind: output, shape index: {0}]
  %s4 = inlined_call_operand.vmem [shape: f32[4,1,16], index: 4, kind: output, shape index: {1}]
  %s5 = inlined_call_operand.vmem [shape: f32[4,1,16], index: 5, kind: output, shape index: {2}]
  %6 = xla_tuple %s3, %s4, %s5
  %s7 = sld [smem:[#allocation0]]
  $region65: #{residual_up_block.3} parent=0
    _
  %s9 = ssub.s32 1, %s7
  %s10 = scalar_select 0, %s9, %s7
  loop: start=0, step=1, limit=6
  $region2: #{residual_up_block.3} parent=0 // loop_pre_header
    _
  $region3: #{residual_up_block.3} parent=0 // loop_header
    %s12 = sphi 0, %s16
    %p13 = scmp.ge.s32.totalorder %s12, 6
    %s19 = sphi 0, %s31
    %s20 = sphi 0, %s27
    %s21 = sphi 0, %s19
    %s22 = sphi 0, %s20
    %s23 = sphi 0, %s21
    %s24 = sphi 0, %s22
    %s36 = sphi 0, %s38
    %s39 = sphi 0, %s36
    %s40 = sphi 0, %s39
    %s56 = sphi 0, %s40
    %s62 = sphi 0, %s64
    %s65 = sphi 0, %s62
    %s66 = sphi 0, %s65
    %s82 = sphi 0, %s66
    %s86 = sphi 0, %s86
    %s88 = sphi 0, %s86
    %s89 = sphi 0, %s88
    %s103 = sphi 0, %s89
    %s111 = sphi 0, %s113
    %s114 = sphi 0, %s111
    %s115 = sphi 0, %s114
    %s131 = sphi 0, %s115
    %s137 = sphi 0, %s139
    %s140 = sphi 0, %s137
    %s141 = sphi 0, %s140
    %s157 = sphi 0, %s141
    %s163 = sphi 0, %s165
    %s166 = sphi 0, %s163
    %s167 = sphi 0, %s166
    %s183 = sphi 0, %s167
  $region4: #{residual_up_block.3} parent=0 // loop_header_branch
    %15 = sbr.rel (%p13) target = $region8
  $region5: #{residual_up_block.3} parent=0 // loop_body
    %s17 = ssub.s32 %s12, 1
    %s18 = ssub.s32 %s12, 2
    %s25 = sadd.s32 1, %s20
    %p26 = scmp.ge.s32.totalorder %s25, 1
    %s27 = scalar_select %p26, 0, %s25
    %s28 = sadd.s32 1, %s19
    %s29 = scalar_select %p26, %s28, %s19
    %p30 = scmp.ge.s32.totalorder %s29, 4
    %s31 = scalar_select %p30, 0, %s29
    %s32 = ssub.s32 %s19, %s31
    %s33 = ssub.s32 %s20, %s27
    %s34 = sor.u32 %s32, %s33
    %p35 = scmp.eq.s32.totalorder %s34, 0
    %s37 = sadd.s32 %s36, 1
    %s38 = scalar_select %p35, %s36, %s37
    %p41 = pneg %p35
    %p42 = scmp.eq.s32.totalorder %s12, 3
    %p43 = por %p41, %p42
    %p44 = scmp.ne.s32.totalorder %s36, %s39
    %p45 = scmp.eq.s32.totalorder %s12, 0
    %p46 = por %p44, %p45
    %p47 = scmp.ne.s32.totalorder %s36, %s39
    %p48 = scmp.eq.s32.totalorder %s17, 3
    %p49 = por %p47, %p48
    %p50 = scmp.ne.s32.totalorder %s39, %s40
    %p51 = scmp.eq.s32.totalorder %s17, 0
    %p52 = por %p50, %p51
    %p53 = scmp.ne.s32.totalorder %s39, %s40
    %p54 = scmp.eq.s32.totalorder %s18, 3
    %p55 = por %p53, %p54
    %p57 = scmp.ne.s32.totalorder %s40, %s56
    %p58 = scmp.eq.s32.totalorder %s18, 0
    %p59 = por %p57, %p58
    %s60 = ssub.s32 %s19, %s31
    %p61 = scmp.eq.s32.totalorder %s60, 0
    %s63 = sadd.s32 %s62, 1
    %s64 = scalar_select %p61, %s62, %s63
    %p67 = pneg %p61
    %p68 = scmp.eq.s32.totalorder %s12, 3
    %p69 = por %p67, %p68
    %p70 = scmp.ne.s32.totalorder %s62, %s65
    %p71 = scmp.eq.s32.totalorder %s12, 0
    %p72 = por %p70, %p71
    %p73 = scmp.ne.s32.totalorder %s62, %s65
    %p74 = scmp.eq.s32.totalorder %s17, 3
    %p75 = por %p73, %p74
    %p76 = scmp.ne.s32.totalorder %s65, %s66
    %p77 = scmp.eq.s32.totalorder %s17, 0
    %p78 = por %p76, %p77
    %p79 = scmp.ne.s32.totalorder %s65, %s66
    %p80 = scmp.eq.s32.totalorder %s18, 3
    %p81 = por %p79, %p80
    %p83 = scmp.ne.s32.totalorder %s66, %s82
    %p84 = scmp.eq.s32.totalorder %s18, 0
    %p85 = por %p83, %p84
    %s87 = sadd.s32 %s86, 1
    %p90 = scmp.eq.s32.totalorder %s12, 3
    %p91 = scmp.ne.s32.totalorder %s86, %s88
    %p92 = scmp.eq.s32.totalorder %s12, 0
    %p93 = por %p91, %p92
    %p94 = scmp.ne.s32.totalorder %s86, %s88
    %p95 = scmp.eq.s32.totalorder %s17, 3
    %p96 = por %p94, %p95
    %p97 = scmp.ne.s32.totalorder %s88, %s89
    %p98 = scmp.eq.s32.totalorder %s17, 0
    %p99 = por %p97, %p98
    %p100 = scmp.ne.s32.totalorder %s88, %s89
    %p101 = scmp.eq.s32.totalorder %s18, 3
    %p102 = por %p100, %p101
    %p104 = scmp.ne.s32.totalorder %s89, %s103
    %p105 = scmp.eq.s32.totalorder %s18, 0
    %p106 = por %p104, %p105
    %s107 = ssub.s32 %s19, %s31
    %s108 = ssub.s32 %s20, %s27
    %s109 = sor.u32 %s107, %s108
    %p110 = scmp.eq.s32.totalorder %s109, 0
    %s112 = sadd.s32 %s111, 1
    %s113 = scalar_select %p110, %s111, %s112
    %p116 = pneg %p110
    %p117 = scmp.eq.s32.totalorder %s12, 3
    %p118 = por %p116, %p117
    %p119 = scmp.ne.s32.totalorder %s111, %s114
    %p120 = scmp.eq.s32.totalorder %s12, 0
    %p121 = por %p119, %p120
    %p122 = scmp.ne.s32.totalorder %s111, %s114
    %p123 = scmp.eq.s32.totalorder %s17, 3
    %p124 = por %p122, %p123
    %p125 = scmp.ne.s32.totalorder %s114, %s115
    %p126 = scmp.eq.s32.totalorder %s17, 0
    %p127 = por %p125, %p126
    %p128 = scmp.ne.s32.totalorder %s114, %s115
    %p129 = scmp.eq.s32.totalorder %s18, 3
    %p130 = por %p128, %p129
    %p132 = scmp.ne.s32.totalorder %s115, %s131
    %p133 = scmp.eq.s32.totalorder %s18, 0
    %p134 = por %p132, %p133
    %s135 = ssub.s32 %s19, %s31
    %p136 = scmp.eq.s32.totalorder %s135, 0
    %s138 = sadd.s32 %s137, 1
    %s139 = scalar_select %p136, %s137, %s138
    %p142 = pneg %p136
    %p143 = scmp.eq.s32.totalorder %s12, 3
    %p144 = por %p142, %p143
    %p145 = scmp.ne.s32.totalorder %s137, %s140
    %p146 = scmp.eq.s32.totalorder %s12, 0
    %p147 = por %p145, %p146
    %p148 = scmp.ne.s32.totalorder %s137, %s140
    %p149 = scmp.eq.s32.totalorder %s17, 3
    %p150 = por %p148, %p149
    %p151 = scmp.ne.s32.totalorder %s140, %s141
    %p152 = scmp.eq.s32.totalorder %s17, 0
    %p153 = por %p151, %p152
    %p154 = scmp.ne.s32.totalorder %s140, %s141
    %p155 = scmp.eq.s32.totalorder %s18, 3
    %p156 = por %p154, %p155
    %p158 = scmp.ne.s32.totalorder %s141, %s157
    %p159 = scmp.eq.s32.totalorder %s18, 0
    %p160 = por %p158, %p159
    %s161 = ssub.s32 %s19, %s31
    %p162 = scmp.eq.s32.totalorder %s161, 0
    %s164 = sadd.s32 %s163, 1
    %s165 = scalar_select %p162, %s163, %s164
    %p168 = pneg %p162
    %p169 = scmp.eq.s32.totalorder %s12, 3
    %p170 = por %p168, %p169
    %p171 = scmp.ne.s32.totalorder %s163, %s166
    %p172 = scmp.eq.s32.totalorder %s12, 0
    %p173 = por %p171, %p172
    %p174 = scmp.ne.s32.totalorder %s163, %s166
    %p175 = scmp.eq.s32.totalorder %s17, 3
    %p176 = por %p174, %p175
    %p177 = scmp.ne.s32.totalorder %s166, %s167
    %p178 = scmp.eq.s32.totalorder %s17, 0
    %p179 = por %p177, %p178
    %p180 = scmp.ne.s32.totalorder %s166, %s167
    %p181 = scmp.eq.s32.totalorder %s18, 3
    %p182 = por %p180, %p181
    %p184 = scmp.ne.s32.totalorder %s167, %s183
    %p185 = scmp.eq.s32.totalorder %s18, 0
    %p186 = por %p184, %p185
    %p187 = scmp.le.s32.totalorder 1, %s12
    %p188 = scmp.lt.s32.totalorder %s12, 5
    %p189 = pnand %p187, %p188
    %p190 = pneg %p189
    // Predicated region
    $region9: #{residual_up_block.3} parent=5 // pred_check
      _
    $region10: #{residual_up_block.3} parent=5 // pred_check_branch
      %192 = sbr.rel (%p189) target = $region12
    $region11: #{residual_up_block.3} parent=5 // pred_region
      %s193 = ssub.s32 %s12, 1
      // Predicated region
      $region13: #{residual_up_block.3} parent=11 // pred_check
        %p194 = pneg %p99
      $region14: #{residual_up_block.3} parent=11 // pred_check_branch
        %196 = sbr.rel (%p194) target = $region16
      $region15: #{residual_up_block.3} parent=11 // pred_region
        _
      $region16: #{residual_up_block.3} parent=11 // pred_fallthru
        _
    $region12: #{residual_up_block.3} parent=5 // pred_fallthru
      _
    %p197 = scmp.lt.s32.totalorder %s12, 4
    // Predicated region
    $region17: #{residual_up_block.3} parent=5 // pred_check
      %p198 = pneg %p197
    $region18: #{residual_up_block.3} parent=5 // pred_check_branch
      %200 = sbr.rel (%p198) target = $region20
    $region19: #{residual_up_block.3} parent=5 // pred_region
      // Predicated region
      $region21: #{residual_up_block.3} parent=19 // pred_check
        %p201 = pneg %p46
      $region22: #{residual_up_block.3} parent=19 // pred_check_branch
        %203 = sbr.rel (%p201) target = $region24
      $region23: #{residual_up_block.3} parent=19 // pred_region
        %s204 = smul.u32 64, %s20
        %p205 = scmp.lt.s32.totalorder %s19, 3
        %s206 = scalar_select %p205, %s19, 3
        %p207 = scmp.lt.s32.totalorder %s204, 63
        %s208 = scalar_select %p207, %s204, 63
        %s209 = smul.addr %s206, 64
        %s210 = sadd.s32 %s208, %s209
        %s211 = smul.addr %s210, 8
        %s212 = scalar_lea.vmem %s0, %s211
        %s213 = smul.u32 64, %s20
      $region24: #{residual_up_block.3} parent=19 // pred_fallthru
        _
      // Predicated region
      $region25: #{residual_up_block.3} parent=19 // pred_check
        %p214 = pneg %p72
      $region26: #{residual_up_block.3} parent=19 // pred_check_branch
        %216 = sbr.rel (%p214) target = $region28
      $region27: #{residual_up_block.3} parent=19 // pred_region
        %p217 = scmp.lt.s32.totalorder %s19, 3
        %s218 = scalar_select %p217, %s19, 3
        %s219 = smul.addr %s218, 2
        %s220 = smul.addr %s219, 8
        %s221 = scalar_lea.vmem %s1, %s220
      $region28: #{residual_up_block.3} parent=19 // pred_fallthru
        _
    $region20: #{residual_up_block.3} parent=5 // pred_fallthru
      _
    %p222 = scmp.le.s32.totalorder 1, %s12
    %p223 = scmp.lt.s32.totalorder %s12, 5
    %p224 = pnand %p222, %p223
    %p225 = pneg %p224
    // Predicated region
    $region29: #{residual_up_block.3} parent=5 // pred_check
      _
    $region30: #{residual_up_block.3} parent=5 // pred_check_branch
      %227 = sbr.rel (%p224) target = $region32
    $region31: #{residual_up_block.3} parent=5 // pred_region
      %s228 = ssub.s32 %s12, 1
      %s229 = smul.u32 64, %s22
      %p230 = scmp.lt.s32.totalorder %s21, 3
      %s231 = scalar_select %p230, %s21, 3
      %p232 = scmp.lt.s32.totalorder %s229, 63
      %s233 = scalar_select %p232, %s229, 63
      %s234 = smul.addr %s231, 64
      %s235 = sadd.s32 %s233, %s234
      %s236 = smul.addr %s235, 8
      %s237 = scalar_lea.vmem %s0, %s236
      %p238 = pneg %p52
      %p239 = pneg %p49
      %p240 = scmp.lt.s32.totalorder %s21, 3
      %s241 = scalar_select %p240, %s21, 3
      %s242 = smul.addr %s241, 2
      %s243 = smul.addr %s242, 8
      %s244 = scalar_lea.vmem %s1, %s243
      %p245 = pneg %p78
      %p246 = pneg %p75
      %p247 = pneg %p99
      %p248 = pneg %p96
      %p249 = pneg %p127
      %p250 = pneg %p124
      %s251 = smul.u32 64, %s22
      %p252 = scmp.lt.s32.totalorder %s21, 3
      %s253 = scalar_select %p252, %s21, 3
      %p254 = scmp.lt.s32.totalorder %s251, 63
      %s255 = scalar_select %p254, %s251, 63
      %s256 = smul.addr %s253, 64
      %s257 = sadd.s32 %s255, %s256
      %s258 = smul.addr %s257, 8
      %s259 = scalar_lea.vmem %s3, %s258
      %p260 = pneg %p153
      %p261 = pneg %p150
      %p262 = scmp.lt.s32.totalorder %s21, 3
      %s263 = scalar_select %p262, %s21, 3
      %s264 = scalar_lea.vmem %s4, %s263
      %p265 = pneg %p179
      %p266 = pneg %p176
      %p267 = scmp.lt.s32.totalorder %s21, 3
      %s268 = scalar_select %p267, %s21, 3
      %s269 = scalar_lea.vmem %s5, %s268
      %s270 = smul.u32 64, %s22
      %p271 = scmp.lt.s32.totalorder %s21, 3
      %s272 = scalar_select %p271, %s21, 3
      %p273 = scmp.lt.s32.totalorder %s270, 63
      %s274 = scalar_select %p273, %s270, 63
      %s275 = smul.addr %s272, 64
      %s276 = sadd.s32 %s274, %s275
      %s277 = smul.addr %s276, 8
      %s278 = scalar_lea.vmem %s0, %s277
      %s279 = smul.u32 64, %s22
      %p280 = scmp.lt.s32.totalorder %s21, 3
      %s281 = scalar_select %p280, %s21, 3
      %s282 = smul.addr %s281, 2
      %s283 = smul.addr %s282, 8
      %s284 = scalar_lea.vmem %s1, %s283
      %s285 = smul.u32 64, %s22
      %p286 = scmp.lt.s32.totalorder %s21, 3
      %s287 = scalar_select %p286, %s21, 3
      %p288 = scmp.lt.s32.totalorder %s285, 63
      %s289 = scalar_select %p288, %s285, 63
      %s290 = smul.addr %s287, 64
      %s291 = sadd.s32 %s289, %s290
      %s292 = smul.addr %s291, 8
      %s293 = scalar_lea.vmem %s3, %s292
      %s294 = smul.u32 64, %s22
      %p295 = scmp.lt.s32.totalorder %s21, 3
      %s296 = scalar_select %p295, %s21, 3
      %s297 = scalar_lea.vmem %s4, %s296
      %p298 = scmp.lt.s32.totalorder %s21, 3
      %s299 = scalar_select %p298, %s21, 3
      %s300 = scalar_lea.vmem %s5, %s299
      %p301 = scmp.eq.s32.totalorder %s22, 0
      // Predicated region
      $region33: #{residual_up_block.3} parent=31 // pred_check
        %p302 = pneg %p301
      $region34: #{residual_up_block.3} parent=31 // pred_check_branch
        %304 = sbr.rel (%p302) target = $region36
      $region35: #{residual_up_block.3} parent=31 // pred_region
        %vm305 = vcmask 122880
        %306 = vst.msk [vmem:[%s297] sm:$0x1] %vm305, 0.0
        %307 = vst.msk [vmem:[%s300] sm:$0x1] %vm305, 0.0
      $region36: #{residual_up_block.3} parent=31 // pred_fallthru
        _
      %v308 = vld [vmem:[%s278] sm:$0xff]
      %v309 = vld [vmem:[%s278 + $0x8] sm:$0xff]
      %v310 = vld [vmem:[%s278 + $0x10] sm:$0xff]
      %v311 = vld [vmem:[%s278 + $0x18] sm:$0xff]
      %v312 = vld [vmem:[%s278 + $0x20] sm:$0xff]
      %v313 = vld [vmem:[%s278 + $0x28] sm:$0xff]
      %v314 = vld [vmem:[%s278 + $0x30] sm:$0xff]
      %v315 = vld [vmem:[%s278 + $0x38] sm:$0xff]
      %v316 = vld [vmem:[%s278 + $0x40] sm:$0xff]
      %v317 = vld [vmem:[%s278 + $0x48] sm:$0xff]
      %v318 = vld [vmem:[%s278 + $0x50] sm:$0xff]
      %v319 = vld [vmem:[%s278 + $0x58] sm:$0xff]
      %v320 = vld [vmem:[%s278 + $0x60] sm:$0xff]
      %v321 = vld [vmem:[%s278 + $0x68] sm:$0xff]
      %v322 = vld [vmem:[%s278 + $0x70] sm:$0xff]
      %v323 = vld [vmem:[%s278 + $0x78] sm:$0xff]
      %v324 = vld [vmem:[%s278 + $0x80] sm:$0xff]
      %v325 = vld [vmem:[%s278 + $0x88] sm:$0xff]
      %v326 = vld [vmem:[%s278 + $0x90] sm:$0xff]
      %v327 = vld [vmem:[%s278 + $0x98] sm:$0xff]
      %v328 = vld [vmem:[%s278 + $0xa0] sm:$0xff]
      %v329 = vld [vmem:[%s278 + $0xa8] sm:$0xff]
      %v330 = vld [vmem:[%s278 + $0xb0] sm:$0xff]
      %v331 = vld [vmem:[%s278 + $0xb8] sm:$0xff]
      %v332 = vld [vmem:[%s278 + $0xc0] sm:$0xff]
      %v333 = vld [vmem:[%s278 + $0xc8] sm:$0xff]
      %v334 = vld [vmem:[%s278 + $0xd0] sm:$0xff]
      %v335 = vld [vmem:[%s278 + $0xd8] sm:$0xff]
      %v336 = vld [vmem:[%s278 + $0xe0] sm:$0xff]
      %v337 = vld [vmem:[%s278 + $0xe8] sm:$0xff]
      %v338 = vld [vmem:[%s278 + $0xf0] sm:$0xff]
      %v339 = vld [vmem:[%s278 + $0xf8] sm:$0xff]
      %v340 = vld [vmem:[%s278 + $0x100] sm:$0xff]
      %v341 = vld [vmem:[%s278 + $0x108] sm:$0xff]
      %v342 = vld [vmem:[%s278 + $0x110] sm:$0xff]
      %v343 = vld [vmem:[%s278 + $0x118] sm:$0xff]
      %v344 = vld [vmem:[%s278 + $0x120] sm:$0xff]
      %v345 = vld [vmem:[%s278 + $0x128] sm:$0xff]
      %v346 = vld [vmem:[%s278 + $0x130] sm:$0xff]
      %v347 = vld [vmem:[%s278 + $0x138] sm:$0xff]
      %v348 = vld [vmem:[%s278 + $0x140] sm:$0xff]
      %v349 = vld [vmem:[%s278 + $0x148] sm:$0xff]
      %v350 = vld [vmem:[%s278 + $0x150] sm:$0xff]
      %v351 = vld [vmem:[%s278 + $0x158] sm:$0xff]
      %v352 = vld [vmem:[%s278 + $0x160] sm:$0xff]
      %v353 = vld [vmem:[%s278 + $0x168] sm:$0xff]
      %v354 = vld [vmem:[%s278 + $0x170] sm:$0xff]
      %v355 = vld [vmem:[%s278 + $0x178] sm:$0xff]
      %v356 = vld [vmem:[%s278 + $0x180] sm:$0xff]
      %v357 = vld [vmem:[%s278 + $0x188] sm:$0xff]
      %v358 = vld [vmem:[%s278 + $0x190] sm:$0xff]
      %v359 = vld [vmem:[%s278 + $0x198] sm:$0xff]
      %v360 = vld [vmem:[%s278 + $0x1a0] sm:$0xff]
      %v361 = vld [vmem:[%s278 + $0x1a8] sm:$0xff]
      %v362 = vld [vmem:[%s278 + $0x1b0] sm:$0xff]
      %v363 = vld [vmem:[%s278 + $0x1b8] sm:$0xff]
      %v364 = vld [vmem:[%s278 + $0x1c0] sm:$0xff]
      %v365 = vld [vmem:[%s278 + $0x1c8] sm:$0xff]
      %v366 = vld [vmem:[%s278 + $0x1d0] sm:$0xff]
      %v367 = vld [vmem:[%s278 + $0x1d8] sm:$0xff]
      %v368 = vld [vmem:[%s278 + $0x1e0] sm:$0xff]
      %v369 = vld [vmem:[%s278 + $0x1e8] sm:$0xff]
      %v370 = vld [vmem:[%s278 + $0x1f0] sm:$0xff]
      %v371 = vld [vmem:[%s278 + $0x1f8] sm:$0xff]
      %v372 = vld [vmem:[%s284] sm:$0xff]
      %v373 = vld [vmem:[%s284 + $0x8] sm:$0xff]
      %v374 = vld [vmem:[%s2] sm:$0x1]
      %v376 = vperm.slane %v374, 0
      %vm378 = vcmask 130048
      %v380 = vsel %vm378, %v308, 0
      %v383 = vsel %vm378, %v309, 0
      %v386 = vsel %vm378, %v310, 0
      %v389 = vsel %vm378, %v311, 0
      %v392 = vsel %vm378, %v312, 0
      %v395 = vsel %vm378, %v313, 0
      %v398 = vsel %vm378, %v314, 0
      %v401 = vsel %vm378, %v315, 0
      %v404 = vsel %vm378, %v316, 0
      %v407 = vsel %vm378, %v317, 0
      %v410 = vsel %vm378, %v318, 0
      %v413 = vsel %vm378, %v319, 0
      %v416 = vsel %vm378, %v320, 0
      %v419 = vsel %vm378, %v321, 0
      %v422 = vsel %vm378, %v322, 0
      %v425 = vsel %vm378, %v323, 0
      %v428 = vsel %vm378, %v324, 0
      %v431 = vsel %vm378, %v325, 0
      %v434 = vsel %vm378, %v326, 0
      %v437 = vsel %vm378, %v327, 0
      %v440 = vsel %vm378, %v328, 0
      %v443 = vsel %vm378, %v329, 0
      %v446 = vsel %vm378, %v330, 0
      %v449 = vsel %vm378, %v331, 0
      %v452 = vsel %vm378, %v332, 0
      %v455 = vsel %vm378, %v333, 0
      %v458 = vsel %vm378, %v334, 0
      %v461 = vsel %vm378, %v335, 0
      %v464 = vsel %vm378, %v336, 0
      %v467 = vsel %vm378, %v337, 0
      %v470 = vsel %vm378, %v338, 0
      %v473 = vsel %vm378, %v339, 0
      %v476 = vsel %vm378, %v340, 0
      %v479 = vsel %vm378, %v341, 0
      %v482 = vsel %vm378, %v342, 0
      %v485 = vsel %vm378, %v343, 0
      %v488 = vsel %vm378, %v344, 0
      %v491 = vsel %vm378, %v345, 0
      %v494 = vsel %vm378, %v346, 0
      %v497 = vsel %vm378, %v347, 0
      %v500 = vsel %vm378, %v348, 0
      %v503 = vsel %vm378, %v349, 0
      %v506 = vsel %vm378, %v350, 0
      %v509 = vsel %vm378, %v351, 0
      %v512 = vsel %vm378, %v352, 0
      %v515 = vsel %vm378, %v353, 0
      %v518 = vsel %vm378, %v354, 0
      %v521 = vsel %vm378, %v355, 0
      %v524 = vsel %vm378, %v356, 0
      %v527 = vsel %vm378, %v357, 0
      %v530 = vsel %vm378, %v358, 0
      %v533 = vsel %vm378, %v359, 0
      %v536 = vsel %vm378, %v360, 0
      %v539 = vsel %vm378, %v361, 0
      %v542 = vsel %vm378, %v362, 0
      %v545 = vsel %vm378, %v363, 0
      %v548 = vsel %vm378, %v364, 0
      %v551 = vsel %vm378, %v365, 0
      %v554 = vsel %vm378, %v366, 0
      %v557 = vsel %vm378, %v367, 0
      %v560 = vsel %vm378, %v368, 0
      %v563 = vsel %vm378, %v369, 0
      %v566 = vsel %vm378, %v370, 0
      %v569 = vsel %vm378, %v371, 0
      %571 = vmatpush.msra.mxu0 0.0
      %572 = vmatpush.msra.mxu0 0.0
      %573 = vmatpush.msra.mxu0 0.0
      %574 = vmatpush.msra.mxu0 0.0
      %575 = vmatpush.msra.mxu0 0.0
      %576 = vmatpush.msra.mxu0 0.0
      %577 = vmatpush.msra.mxu0 0.0
      %578 = vmatpush.msra.mxu0 0.0
      %579 = vmatpush.msra.mxu0 0.0
      %580 = vmatpush.msra.mxu0 0.0
      %581 = vmatpush.msra.mxu0 0.0
      %582 = vmatpush.msra.mxu0 0.0
      %583 = vmatpush.msra.mxu0 0.0
      %584 = vmatpush.msra.mxu0 0.0
      %585 = vmatpush.msra.mxu0 %v373
      %586 = vmatpush.msra.mxu0 %v372
      %587 = vmatmul.f32.gmra.mxu0 %v380
      %v588 = vpop.f32.mrf.mxu0
      %v589 = vadd.f32 %v376, %v588
      %590 = vmatmul.f32.gmra.mxu0 %v383
      %v591 = vpop.f32.mrf.mxu0
      %v592 = vadd.f32 %v376, %v591
      %593 = vmatmul.f32.gmra.mxu0 %v386
      %v594 = vpop.f32.mrf.mxu0
      %v595 = vadd.f32 %v376, %v594
      %596 = vmatmul.f32.gmra.mxu0 %v389
      %v597 = vpop.f32.mrf.mxu0
      %v598 = vadd.f32 %v376, %v597
      %599 = vmatmul.f32.gmra.mxu0 %v392
      %v600 = vpop.f32.mrf.mxu0
      %v601 = vadd.f32 %v376, %v600
      %602 = vmatmul.f32.gmra.mxu0 %v395
      %v603 = vpop.f32.mrf.mxu0
      %v604 = vadd.f32 %v376, %v603
      %605 = vmatmul.f32.gmra.mxu0 %v398
      %v606 = vpop.f32.mrf.mxu0
      %v607 = vadd.f32 %v376, %v606
      %608 = vmatmul.f32.gmra.mxu0 %v401
      %v609 = vpop.f32.mrf.mxu0
      %v610 = vadd.f32 %v376, %v609
      %611 = vmatmul.f32.gmra.mxu0 %v404
      %v612 = vpop.f32.mrf.mxu0
      %v613 = vadd.f32 %v376, %v612
      %614 = vmatmul.f32.gmra.mxu0 %v407
      %v615 = vpop.f32.mrf.mxu0
      %v616 = vadd.f32 %v376, %v615
      %617 = vmatmul.f32.gmra.mxu0 %v410
      %v618 = vpop.f32.mrf.mxu0
      %v619 = vadd.f32 %v376, %v618
      %620 = vmatmul.f32.gmra.mxu0 %v413
      %v621 = vpop.f32.mrf.mxu0
      %v622 = vadd.f32 %v376, %v621
      %623 = vmatmul.f32.gmra.mxu0 %v416
      %v624 = vpop.f32.mrf.mxu0
      %v625 = vadd.f32 %v376, %v624
      %626 = vmatmul.f32.gmra.mxu0 %v419
      %v627 = vpop.f32.mrf.mxu0
      %v628 = vadd.f32 %v376, %v627
      %629 = vmatmul.f32.gmra.mxu0 %v422
      %v630 = vpop.f32.mrf.mxu0
      %v631 = vadd.f32 %v376, %v630
      %632 = vmatmul.f32.gmra.mxu0 %v425
      %v633 = vpop.f32.mrf.mxu0
      %v634 = vadd.f32 %v376, %v633
      %635 = vmatmul.f32.gmra.mxu0 %v428
      %v636 = vpop.f32.mrf.mxu0
      %v637 = vadd.f32 %v376, %v636
      %638 = vmatmul.f32.gmra.mxu0 %v431
      %v639 = vpop.f32.mrf.mxu0
      %v640 = vadd.f32 %v376, %v639
      %641 = vmatmul.f32.gmra.mxu0 %v434
      %v642 = vpop.f32.mrf.mxu0
      %v643 = vadd.f32 %v376, %v642
      %644 = vmatmul.f32.gmra.mxu0 %v437
      %v645 = vpop.f32.mrf.mxu0
      %v646 = vadd.f32 %v376, %v645
      %647 = vmatmul.f32.gmra.mxu0 %v440
      %v648 = vpop.f32.mrf.mxu0
      %v649 = vadd.f32 %v376, %v648
      %650 = vmatmul.f32.gmra.mxu0 %v443
      %v651 = vpop.f32.mrf.mxu0
      %v652 = vadd.f32 %v376, %v651
      %653 = vmatmul.f32.gmra.mxu0 %v446
      %v654 = vpop.f32.mrf.mxu0
      %v655 = vadd.f32 %v376, %v654
      %656 = vmatmul.f32.gmra.mxu0 %v449
      %v657 = vpop.f32.mrf.mxu0
      %v658 = vadd.f32 %v376, %v657
      %659 = vmatmul.f32.gmra.mxu0 %v452
      %v660 = vpop.f32.mrf.mxu0
      %v661 = vadd.f32 %v376, %v660
      %662 = vmatmul.f32.gmra.mxu0 %v455
      %v663 = vpop.f32.mrf.mxu0
      %v664 = vadd.f32 %v376, %v663
      %665 = vmatmul.f32.gmra.mxu0 %v458
      %v666 = vpop.f32.mrf.mxu0
      %v667 = vadd.f32 %v376, %v666
      %668 = vmatmul.f32.gmra.mxu0 %v461
      %v669 = vpop.f32.mrf.mxu0
      %v670 = vadd.f32 %v376, %v669
      %671 = vmatmul.f32.gmra.mxu0 %v464
      %v672 = vpop.f32.mrf.mxu0
      %v673 = vadd.f32 %v376, %v672
      %674 = vmatmul.f32.gmra.mxu0 %v467
      %v675 = vpop.f32.mrf.mxu0
      %v676 = vadd.f32 %v376, %v675
      %677 = vmatmul.f32.gmra.mxu0 %v470
      %v678 = vpop.f32.mrf.mxu0
      %v679 = vadd.f32 %v376, %v678
      %680 = vmatmul.f32.gmra.mxu0 %v473
      %v681 = vpop.f32.mrf.mxu0
      %v682 = vadd.f32 %v376, %v681
      %683 = vmatmul.f32.gmra.mxu0 %v476
      %v684 = vpop.f32.mrf.mxu0
      %v685 = vadd.f32 %v376, %v684
      %686 = vmatmul.f32.gmra.mxu0 %v479
      %v687 = vpop.f32.mrf.mxu0
      %v688 = vadd.f32 %v376, %v687
      %689 = vmatmul.f32.gmra.mxu0 %v482
      %v690 = vpop.f32.mrf.mxu0
      %v691 = vadd.f32 %v376, %v690
      %692 = vmatmul.f32.gmra.mxu0 %v485
      %v693 = vpop.f32.mrf.mxu0
      %v694 = vadd.f32 %v376, %v693
      %695 = vmatmul.f32.gmra.mxu0 %v488
      %v696 = vpop.f32.mrf.mxu0
      %v697 = vadd.f32 %v376, %v696
      %698 = vmatmul.f32.gmra.mxu0 %v491
      %v699 = vpop.f32.mrf.mxu0
      %v700 = vadd.f32 %v376, %v699
      %701 = vmatmul.f32.gmra.mxu0 %v494
      %v702 = vpop.f32.mrf.mxu0
      %v703 = vadd.f32 %v376, %v702
      %704 = vmatmul.f32.gmra.mxu0 %v497
      %v705 = vpop.f32.mrf.mxu0
      %v706 = vadd.f32 %v376, %v705
      %707 = vmatmul.f32.gmra.mxu0 %v500
      %v708 = vpop.f32.mrf.mxu0
      %v709 = vadd.f32 %v376, %v708
      %710 = vmatmul.f32.gmra.mxu0 %v503
      %v711 = vpop.f32.mrf.mxu0
      %v712 = vadd.f32 %v376, %v711
      %713 = vmatmul.f32.gmra.mxu0 %v506
      %v714 = vpop.f32.mrf.mxu0
      %v715 = vadd.f32 %v376, %v714
      %716 = vmatmul.f32.gmra.mxu0 %v509
      %v717 = vpop.f32.mrf.mxu0
      %v718 = vadd.f32 %v376, %v717
      %719 = vmatmul.f32.gmra.mxu0 %v512
      %v720 = vpop.f32.mrf.mxu0
      %v721 = vadd.f32 %v376, %v720
      %722 = vmatmul.f32.gmra.mxu0 %v515
      %v723 = vpop.f32.mrf.mxu0
      %v724 = vadd.f32 %v376, %v723
      %725 = vmatmul.f32.gmra.mxu0 %v518
      %v726 = vpop.f32.mrf.mxu0
      %v727 = vadd.f32 %v376, %v726
      %728 = vmatmul.f32.gmra.mxu0 %v521
      %v729 = vpop.f32.mrf.mxu0
      %v730 = vadd.f32 %v376, %v729
      %731 = vmatmul.f32.gmra.mxu0 %v524
      %v732 = vpop.f32.mrf.mxu0
      %v733 = vadd.f32 %v376, %v732
      %734 = vmatmul.f32.gmra.mxu0 %v527
      %v735 = vpop.f32.mrf.mxu0
      %v736 = vadd.f32 %v376, %v735
      %737 = vmatmul.f32.gmra.mxu0 %v530
      %v738 = vpop.f32.mrf.mxu0
      %v739 = vadd.f32 %v376, %v738
      %740 = vmatmul.f32.gmra.mxu0 %v533
      %v741 = vpop.f32.mrf.mxu0
      %v742 = vadd.f32 %v376, %v741
      %743 = vmatmul.f32.gmra.mxu0 %v536
      %v744 = vpop.f32.mrf.mxu0
      %v745 = vadd.f32 %v376, %v744
      %746 = vmatmul.f32.gmra.mxu0 %v539
      %v747 = vpop.f32.mrf.mxu0
      %v748 = vadd.f32 %v376, %v747
      %749 = vmatmul.f32.gmra.mxu0 %v542
      %v750 = vpop.f32.mrf.mxu0
      %v751 = vadd.f32 %v376, %v750
      %752 = vmatmul.f32.gmra.mxu0 %v545
      %v753 = vpop.f32.mrf.mxu0
      %v754 = vadd.f32 %v376, %v753
      %755 = vmatmul.f32.gmra.mxu0 %v548
      %v756 = vpop.f32.mrf.mxu0
      %v757 = vadd.f32 %v376, %v756
      %758 = vmatmul.f32.gmra.mxu0 %v551
      %v759 = vpop.f32.mrf.mxu0
      %v760 = vadd.f32 %v376, %v759
      %761 = vmatmul.f32.gmra.mxu0 %v554
      %v762 = vpop.f32.mrf.mxu0
      %v763 = vadd.f32 %v376, %v762
      %764 = vmatmul.f32.gmra.mxu0 %v557
      %v765 = vpop.f32.mrf.mxu0
      %v766 = vadd.f32 %v376, %v765
      %767 = vmatmul.f32.gmra.mxu0 %v560
      %v768 = vpop.f32.mrf.mxu0
      %v769 = vadd.f32 %v376, %v768
      %770 = vmatmul.f32.gmra.mxu0 %v563
      %v771 = vpop.f32.mrf.mxu0
      %v772 = vadd.f32 %v376, %v771
      %773 = vmatmul.f32.gmra.mxu0 %v566
      %v774 = vpop.f32.mrf.mxu0
      %v775 = vadd.f32 %v376, %v774
      %776 = vmatmul.f32.gmra.mxu0 %v569
      %v777 = vpop.f32.mrf.mxu0
      %v778 = vadd.f32 %v376, %v777
      %779 = vdwg.mxu0
      %780 = vst.msk [vmem:[%s293] sm:$0xff] %vm378, %v589
      %781 = vst.msk [vmem:[%s293 + $0x8] sm:$0xff] %vm378, %v592
      %782 = vst.msk [vmem:[%s293 + $0x10] sm:$0xff] %vm378, %v595
      %783 = vst.msk [vmem:[%s293 + $0x18] sm:$0xff] %vm378, %v598
      %784 = vst.msk [vmem:[%s293 + $0x20] sm:$0xff] %vm378, %v601
      %785 = vst.msk [vmem:[%s293 + $0x28] sm:$0xff] %vm378, %v604
      %786 = vst.msk [vmem:[%s293 + $0x30] sm:$0xff] %vm378, %v607
      %787 = vst.msk [vmem:[%s293 + $0x38] sm:$0xff] %vm378, %v610
      %788 = vst.msk [vmem:[%s293 + $0x40] sm:$0xff] %vm378, %v613
      %789 = vst.msk [vmem:[%s293 + $0x48] sm:$0xff] %vm378, %v616
      %790 = vst.msk [vmem:[%s293 + $0x50] sm:$0xff] %vm378, %v619
      %791 = vst.msk [vmem:[%s293 + $0x58] sm:$0xff] %vm378, %v622
      %792 = vst.msk [vmem:[%s293 + $0x60] sm:$0xff] %vm378, %v625
      %793 = vst.msk [vmem:[%s293 + $0x68] sm:$0xff] %vm378, %v628
      %794 = vst.msk [vmem:[%s293 + $0x70] sm:$0xff] %vm378, %v631
      %795 = vst.msk [vmem:[%s293 + $0x78] sm:$0xff] %vm378, %v634
      %796 = vst.msk [vmem:[%s293 + $0x80] sm:$0xff] %vm378, %v637
      %797 = vst.msk [vmem:[%s293 + $0x88] sm:$0xff] %vm378, %v640
      %798 = vst.msk [vmem:[%s293 + $0x90] sm:$0xff] %vm378, %v643
      %799 = vst.msk [vmem:[%s293 + $0x98] sm:$0xff] %vm378, %v646
      %800 = vst.msk [vmem:[%s293 + $0xa0] sm:$0xff] %vm378, %v649
      %801 = vst.msk [vmem:[%s293 + $0xa8] sm:$0xff] %vm378, %v652
      %802 = vst.msk [vmem:[%s293 + $0xb0] sm:$0xff] %vm378, %v655
      %803 = vst.msk [vmem:[%s293 + $0xb8] sm:$0xff] %vm378, %v658
      %804 = vst.msk [vmem:[%s293 + $0xc0] sm:$0xff] %vm378, %v661
      %805 = vst.msk [vmem:[%s293 + $0xc8] sm:$0xff] %vm378, %v664
      %806 = vst.msk [vmem:[%s293 + $0xd0] sm:$0xff] %vm378, %v667
      %807 = vst.msk [vmem:[%s293 + $0xd8] sm:$0xff] %vm378, %v670
      %808 = vst.msk [vmem:[%s293 + $0xe0] sm:$0xff] %vm378, %v673
      %809 = vst.msk [vmem:[%s293 + $0xe8] sm:$0xff] %vm378, %v676
      %810 = vst.msk [vmem:[%s293 + $0xf0] sm:$0xff] %vm378, %v679
      %811 = vst.msk [vmem:[%s293 + $0xf8] sm:$0xff] %vm378, %v682
      %812 = vst.msk [vmem:[%s293 + $0x100] sm:$0xff] %vm378, %v685
      %813 = vst.msk [vmem:[%s293 + $0x108] sm:$0xff] %vm378, %v688
      %814 = vst.msk [vmem:[%s293 + $0x110] sm:$0xff] %vm378, %v691
      %815 = vst.msk [vmem:[%s293 + $0x118] sm:$0xff] %vm378, %v694
      %816 = vst.msk [vmem:[%s293 + $0x120] sm:$0xff] %vm378, %v697
      %817 = vst.msk [vmem:[%s293 + $0x128] sm:$0xff] %vm378, %v700
      %818 = vst.msk [vmem:[%s293 + $0x130] sm:$0xff] %vm378, %v703
      %819 = vst.msk [vmem:[%s293 + $0x138] sm:$0xff] %vm378, %v706
      %820 = vst.msk [vmem:[%s293 + $0x140] sm:$0xff] %vm378, %v709
      %821 = vst.msk [vmem:[%s293 + $0x148] sm:$0xff] %vm378, %v712
      %822 = vst.msk [vmem:[%s293 + $0x150] sm:$0xff] %vm378, %v715
      %823 = vst.msk [vmem:[%s293 + $0x158] sm:$0xff] %vm378, %v718
      %824 = vst.msk [vmem:[%s293 + $0x160] sm:$0xff] %vm378, %v721
      %825 = vst.msk [vmem:[%s293 + $0x168] sm:$0xff] %vm378, %v724
      %826 = vst.msk [vmem:[%s293 + $0x170] sm:$0xff] %vm378, %v727
      %827 = vst.msk [vmem:[%s293 + $0x178] sm:$0xff] %vm378, %v730
      %828 = vst.msk [vmem:[%s293 + $0x180] sm:$0xff] %vm378, %v733
      %829 = vst.msk [vmem:[%s293 + $0x188] sm:$0xff] %vm378, %v736
      %830 = vst.msk [vmem:[%s293 + $0x190] sm:$0xff] %vm378, %v739
      %831 = vst.msk [vmem:[%s293 + $0x198] sm:$0xff] %vm378, %v742
      %832 = vst.msk [vmem:[%s293 + $0x1a0] sm:$0xff] %vm378, %v745
      %833 = vst.msk [vmem:[%s293 + $0x1a8] sm:$0xff] %vm378, %v748
      %834 = vst.msk [vmem:[%s293 + $0x1b0] sm:$0xff] %vm378, %v751
      %835 = vst.msk [vmem:[%s293 + $0x1b8] sm:$0xff] %vm378, %v754
      %836 = vst.msk [vmem:[%s293 + $0x1c0] sm:$0xff] %vm378, %v757
      %837 = vst.msk [vmem:[%s293 + $0x1c8] sm:$0xff] %vm378, %v760
      %838 = vst.msk [vmem:[%s293 + $0x1d0] sm:$0xff] %vm378, %v763
      %839 = vst.msk [vmem:[%s293 + $0x1d8] sm:$0xff] %vm378, %v766
      %840 = vst.msk [vmem:[%s293 + $0x1e0] sm:$0xff] %vm378, %v769
      %841 = vst.msk [vmem:[%s293 + $0x1e8] sm:$0xff] %vm378, %v772
      %842 = vst.msk [vmem:[%s293 + $0x1f0] sm:$0xff] %vm378, %v775
      %843 = vst.msk [vmem:[%s293 + $0x1f8] sm:$0xff] %vm378, %v778
      %v844 = vld [vmem:[%s297] sm:$0x1]
      %v845 = vsel %vm378, %v589, 0.0
      %v846 = vsel %vm378, %v592, 0.0
      %v847 = vadd.f32 %v845, %v846
      %v848 = vsel %vm378, %v595, 0.0
      %v849 = vadd.f32 %v847, %v848
      %v850 = vsel %vm378, %v598, 0.0
      %v851 = vadd.f32 %v849, %v850
      %v852 = vsel %vm378, %v601, 0.0
      %v853 = vadd.f32 %v851, %v852
      %v854 = vsel %vm378, %v604, 0.0
      %v855 = vadd.f32 %v853, %v854
      %v856 = vsel %vm378, %v607, 0.0
      %v857 = vadd.f32 %v855, %v856
      %v858 = vsel %vm378, %v610, 0.0
      %v859 = vadd.f32 %v857, %v858
      %v860 = vsel %vm378, %v613, 0.0
      %v861 = vadd.f32 %v859, %v860
      %v862 = vsel %vm378, %v616, 0.0
      %v863 = vadd.f32 %v861, %v862
      %v864 = vsel %vm378, %v619, 0.0
      %v865 = vadd.f32 %v863, %v864
      %v866 = vsel %vm378, %v622, 0.0
      %v867 = vadd.f32 %v865, %v866
      %v868 = vsel %vm378, %v625, 0.0
      %v869 = vadd.f32 %v867, %v868
      %v870 = vsel %vm378, %v628, 0.0
      %v871 = vadd.f32 %v869, %v870
      %v872 = vsel %vm378, %v631, 0.0
      %v873 = vadd.f32 %v871, %v872
      %v874 = vsel %vm378, %v634, 0.0
      %v875 = vadd.f32 %v873, %v874
      %v876 = vsel %vm378, %v637, 0.0
      %v877 = vadd.f32 %v875, %v876
      %v878 = vsel %vm378, %v640, 0.0
      %v879 = vadd.f32 %v877, %v878
      %v880 = vsel %vm378, %v643, 0.0
      %v881 = vadd.f32 %v879, %v880
      %v882 = vsel %vm378, %v646, 0.0
      %v883 = vadd.f32 %v881, %v882
      %v884 = vsel %vm378, %v649, 0.0
      %v885 = vadd.f32 %v883, %v884
      %v886 = vsel %vm378, %v652, 0.0
      %v887 = vadd.f32 %v885, %v886
      %v888 = vsel %vm378, %v655, 0.0
      %v889 = vadd.f32 %v887, %v888
      %v890 = vsel %vm378, %v658, 0.0
      %v891 = vadd.f32 %v889, %v890
      %v892 = vsel %vm378, %v661, 0.0
      %v893 = vadd.f32 %v891, %v892
      %v894 = vsel %vm378, %v664, 0.0
      %v895 = vadd.f32 %v893, %v894
      %v896 = vsel %vm378, %v667, 0.0
      %v897 = vadd.f32 %v895, %v896
      %v898 = vsel %vm378, %v670, 0.0
      %v899 = vadd.f32 %v897, %v898
      %v900 = vsel %vm378, %v673, 0.0
      %v901 = vadd.f32 %v899, %v900
      %v902 = vsel %vm378, %v676, 0.0
      %v903 = vadd.f32 %v901, %v902
      %v904 = vsel %vm378, %v679, 0.0
      %v905 = vadd.f32 %v903, %v904
      %v906 = vsel %vm378, %v682, 0.0
      %v907 = vadd.f32 %v905, %v906
      %v908 = vsel %vm378, %v685, 0.0
      %v909 = vadd.f32 %v907, %v908
      %v910 = vsel %vm378, %v688, 0.0
      %v911 = vadd.f32 %v909, %v910
      %v912 = vsel %vm378, %v691, 0.0
      %v913 = vadd.f32 %v911, %v912
      %v914 = vsel %vm378, %v694, 0.0
      %v915 = vadd.f32 %v913, %v914
      %v916 = vsel %vm378, %v697, 0.0
      %v917 = vadd.f32 %v915, %v916
      %v918 = vsel %vm378, %v700, 0.0
      %v919 = vadd.f32 %v917, %v918
      %v920 = vsel %vm378, %v703, 0.0
      %v921 = vadd.f32 %v919, %v920
      %v922 = vsel %vm378, %v706, 0.0
      %v923 = vadd.f32 %v921, %v922
      %v924 = vsel %vm378, %v709, 0.0
      %v925 = vadd.f32 %v923, %v924
      %v926 = vsel %vm378, %v712, 0.0
      %v927 = vadd.f32 %v925, %v926
      %v928 = vsel %vm378, %v715, 0.0
      %v929 = vadd.f32 %v927, %v928
      %v930 = vsel %vm378, %v718, 0.0
      %v931 = vadd.f32 %v929, %v930
      %v932 = vsel %vm378, %v721, 0.0
      %v933 = vadd.f32 %v931, %v932
      %v934 = vsel %vm378, %v724, 0.0
      %v935 = vadd.f32 %v933, %v934
      %v936 = vsel %vm378, %v727, 0.0
      %v937 = vadd.f32 %v935, %v936
      %v938 = vsel %vm378, %v730, 0.0
      %v939 = vadd.f32 %v937, %v938
      %v940 = vsel %vm378, %v733, 0.0
      %v941 = vadd.f32 %v939, %v940
      %v942 = vsel %vm378, %v736, 0.0
      %v943 = vadd.f32 %v941, %v942
      %v944 = vsel %vm378, %v739, 0.0
      %v945 = vadd.f32 %v943, %v944
      %v946 = vsel %vm378, %v742, 0.0
      %v947 = vadd.f32 %v945, %v946
      %v948 = vsel %vm378, %v745, 0.0
      %v949 = vadd.f32 %v947, %v948
      %v950 = vsel %vm378, %v748, 0.0
      %v951 = vadd.f32 %v949, %v950
      %v952 = vsel %vm378, %v751, 0.0
      %v953 = vadd.f32 %v951, %v952
      %v954 = vsel %vm378, %v754, 0.0
      %v955 = vadd.f32 %v953, %v954
      %v956 = vsel %vm378, %v757, 0.0
      %v957 = vadd.f32 %v955, %v956
      %v958 = vsel %vm378, %v760, 0.0
      %v959 = vadd.f32 %v957, %v958
      %v960 = vsel %vm378, %v763, 0.0
      %v961 = vadd.f32 %v959, %v960
      %v962 = vsel %vm378, %v766, 0.0
      %v963 = vadd.f32 %v961, %v962
      %v964 = vsel %vm378, %v769, 0.0
      %v965 = vadd.f32 %v963, %v964
      %v966 = vsel %vm378, %v772, 0.0
      %v967 = vadd.f32 %v965, %v966
      %v968 = vsel %vm378, %v775, 0.0
      %v969 = vadd.f32 %v967, %v968
      %v970 = vsel %vm378, %v778, 0.0
      %v971 = vadd.f32 %v969, %v970
      %v972 = vrot.slane %v971, 4
      %v973 = vadd.f32 %v971, %v972
      %v974 = vrot.slane %v973, 2
      %v975 = vadd.f32 %v973, %v974
      %v976 = vrot.slane %v975, 1
      %v977 = vadd.f32 %v975, %v976
      %v978 = vadd.f32 %v844, %v977
      %vm979 = vcmask 122880
      %980 = vst.msk [vmem:[%s297] sm:$0x1] %vm979, %v978
      %v981 = vld [vmem:[%s300] sm:$0x1]
      %v982 = vmul.f32 %v589, %v589
      %v983 = vmul.f32 %v592, %v592
      %v984 = vmul.f32 %v595, %v595
      %v985 = vmul.f32 %v598, %v598
      %v986 = vmul.f32 %v601, %v601
      %v987 = vmul.f32 %v604, %v604
      %v988 = vmul.f32 %v607, %v607
      %v989 = vmul.f32 %v610, %v610
      %v990 = vmul.f32 %v613, %v613
      %v991 = vmul.f32 %v616, %v616
      %v992 = vmul.f32 %v619, %v619
      %v993 = vmul.f32 %v622, %v622
      %v994 = vmul.f32 %v625, %v625
      %v995 = vmul.f32 %v628, %v628
      %v996 = vmul.f32 %v631, %v631
      %v997 = vmul.f32 %v634, %v634
      %v998 = vmul.f32 %v637, %v637
      %v999 = vmul.f32 %v640, %v640
      %v1000 = vmul.f32 %v643, %v643
      %v1001 = vmul.f32 %v646, %v646
      %v1002 = vmul.f32 %v649, %v649
      %v1003 = vmul.f32 %v652, %v652
      %v1004 = vmul.f32 %v655, %v655
      %v1005 = vmul.f32 %v658, %v658
      %v1006 = vmul.f32 %v661, %v661
      %v1007 = vmul.f32 %v664, %v664
      %v1008 = vmul.f32 %v667, %v667
      %v1009 = vmul.f32 %v670, %v670
      %v1010 = vmul.f32 %v673, %v673
      %v1011 = vmul.f32 %v676, %v676
      %v1012 = vmul.f32 %v679, %v679
      %v1013 = vmul.f32 %v682, %v682
      %v1014 = vmul.f32 %v685, %v685
      %v1015 = vmul.f32 %v688, %v688
      %v1016 = vmul.f32 %v691, %v691
      %v1017 = vmul.f32 %v694, %v694
      %v1018 = vmul.f32 %v697, %v697
      %v1019 = vmul.f32 %v700, %v700
      %v1020 = vmul.f32 %v703, %v703
      %v1021 = vmul.f32 %v706, %v706
      %v1022 = vmul.f32 %v709, %v709
      %v1023 = vmul.f32 %v712, %v712
      %v1024 = vmul.f32 %v715, %v715
      %v1025 = vmul.f32 %v718, %v718
      %v1026 = vmul.f32 %v721, %v721
      %v1027 = vmul.f32 %v724, %v724
      %v1028 = vmul.f32 %v727, %v727
      %v1029 = vmul.f32 %v730, %v730
      %v1030 = vmul.f32 %v733, %v733
      %v1031 = vmul.f32 %v736, %v736
      %v1032 = vmul.f32 %v739, %v739
      %v1033 = vmul.f32 %v742, %v742
      %v1034 = vmul.f32 %v745, %v745
      %v1035 = vmul.f32 %v748, %v748
      %v1036 = vmul.f32 %v751, %v751
      %v1037 = vmul.f32 %v754, %v754
      %v1038 = vmul.f32 %v757, %v757
      %v1039 = vmul.f32 %v760, %v760
      %v1040 = vmul.f32 %v763, %v763
      %v1041 = vmul.f32 %v766, %v766
      %v1042 = vmul.f32 %v769, %v769
      %v1043 = vmul.f32 %v772, %v772
      %v1044 = vmul.f32 %v775, %v775
      %v1045 = vmul.f32 %v778, %v778
      %v1046 = vsel %vm378, %v982, 0.0
      %v1047 = vsel %vm378, %v983, 0.0
      %v1048 = vadd.f32 %v1046, %v1047
      %v1049 = vsel %vm378, %v984, 0.0
      %v1050 = vadd.f32 %v1048, %v1049
      %v1051 = vsel %vm378, %v985, 0.0
      %v1052 = vadd.f32 %v1050, %v1051
      %v1053 = vsel %vm378, %v986, 0.0
      %v1054 = vadd.f32 %v1052, %v1053
      %v1055 = vsel %vm378, %v987, 0.0
      %v1056 = vadd.f32 %v1054, %v1055
      %v1057 = vsel %vm378, %v988, 0.0
      %v1058 = vadd.f32 %v1056, %v1057
      %v1059 = vsel %vm378, %v989, 0.0
      %v1060 = vadd.f32 %v1058, %v1059
      %v1061 = vsel %vm378, %v990, 0.0
      %v1062 = vadd.f32 %v1060, %v1061
      %v1063 = vsel %vm378, %v991, 0.0
      %v1064 = vadd.f32 %v1062, %v1063
      %v1065 = vsel %vm378, %v992, 0.0
      %v1066 = vadd.f32 %v1064, %v1065
      %v1067 = vsel %vm378, %v993, 0.0
      %v1068 = vadd.f32 %v1066, %v1067
      %v1069 = vsel %vm378, %v994, 0.0
      %v1070 = vadd.f32 %v1068, %v1069
      %v1071 = vsel %vm378, %v995, 0.0
      %v1072 = vadd.f32 %v1070, %v1071
      %v1073 = vsel %vm378, %v996, 0.0
      %v1074 = vadd.f32 %v1072, %v1073
      %v1075 = vsel %vm378, %v997, 0.0
      %v1076 = vadd.f32 %v1074, %v1075
      %v1077 = vsel %vm378, %v998, 0.0
      %v1078 = vadd.f32 %v1076, %v1077
      %v1079 = vsel %vm378, %v999, 0.0
      %v1080 = vadd.f32 %v1078, %v1079
      %v1081 = vsel %vm378, %v1000, 0.0
      %v1082 = vadd.f32 %v1080, %v1081
      %v1083 = vsel %vm378, %v1001, 0.0
      %v1084 = vadd.f32 %v1082, %v1083
      %v1085 = vsel %vm378, %v1002, 0.0
      %v1086 = vadd.f32 %v1084, %v1085
      %v1087 = vsel %vm378, %v1003, 0.0
      %v1088 = vadd.f32 %v1086, %v1087
      %v1089 = vsel %vm378, %v1004, 0.0
      %v1090 = vadd.f32 %v1088, %v1089
      %v1091 = vsel %vm378, %v1005, 0.0
      %v1092 = vadd.f32 %v1090, %v1091
      %v1093 = vsel %vm378, %v1006, 0.0
      %v1094 = vadd.f32 %v1092, %v1093
      %v1095 = vsel %vm378, %v1007, 0.0
      %v1096 = vadd.f32 %v1094, %v1095
      %v1097 = vsel %vm378, %v1008, 0.0
      %v1098 = vadd.f32 %v1096, %v1097
      %v1099 = vsel %vm378, %v1009, 0.0
      %v1100 = vadd.f32 %v1098, %v1099
      %v1101 = vsel %vm378, %v1010, 0.0
      %v1102 = vadd.f32 %v1100, %v1101
      %v1103 = vsel %vm378, %v1011, 0.0
      %v1104 = vadd.f32 %v1102, %v1103
      %v1105 = vsel %vm378, %v1012, 0.0
      %v1106 = vadd.f32 %v1104, %v1105
      %v1107 = vsel %vm378, %v1013, 0.0
      %v1108 = vadd.f32 %v1106, %v1107
      %v1109 = vsel %vm378, %v1014, 0.0
      %v1110 = vadd.f32 %v1108, %v1109
      %v1111 = vsel %vm378, %v1015, 0.0
      %v1112 = vadd.f32 %v1110, %v1111
      %v1113 = vsel %vm378, %v1016, 0.0
      %v1114 = vadd.f32 %v1112, %v1113
      %v1115 = vsel %vm378, %v1017, 0.0
      %v1116 = vadd.f32 %v1114, %v1115
      %v1117 = vsel %vm378, %v1018, 0.0
      %v1118 = vadd.f32 %v1116, %v1117
      %v1119 = vsel %vm378, %v1019, 0.0
      %v1120 = vadd.f32 %v1118, %v1119
      %v1121 = vsel %vm378, %v1020, 0.0
      %v1122 = vadd.f32 %v1120, %v1121
      %v1123 = vsel %vm378, %v1021, 0.0
      %v1124 = vadd.f32 %v1122, %v1123
      %v1125 = vsel %vm378, %v1022, 0.0
      %v1126 = vadd.f32 %v1124, %v1125
      %v1127 = vsel %vm378, %v1023, 0.0
      %v1128 = vadd.f32 %v1126, %v1127
      %v1129 = vsel %vm378, %v1024, 0.0
      %v1130 = vadd.f32 %v1128, %v1129
      %v1131 = vsel %vm378, %v1025, 0.0
      %v1132 = vadd.f32 %v1130, %v1131
      %v1133 = vsel %vm378, %v1026, 0.0
      %v1134 = vadd.f32 %v1132, %v1133
      %v1135 = vsel %vm378, %v1027, 0.0
      %v1136 = vadd.f32 %v1134, %v1135
      %v1137 = vsel %vm378, %v1028, 0.0
      %v1138 = vadd.f32 %v1136, %v1137
      %v1139 = vsel %vm378, %v1029, 0.0
      %v1140 = vadd.f32 %v1138, %v1139
      %v1141 = vsel %vm378, %v1030, 0.0
      %v1142 = vadd.f32 %v1140, %v1141
      %v1143 = vsel %vm378, %v1031, 0.0
      %v1144 = vadd.f32 %v1142, %v1143
      %v1145 = vsel %vm378, %v1032, 0.0
      %v1146 = vadd.f32 %v1144, %v1145
      %v1147 = vsel %vm378, %v1033, 0.0
      %v1148 = vadd.f32 %v1146, %v1147
      %v1149 = vsel %vm378, %v1034, 0.0
      %v1150 = vadd.f32 %v1148, %v1149
      %v1151 = vsel %vm378, %v1035, 0.0
      %v1152 = vadd.f32 %v1150, %v1151
      %v1153 = vsel %vm378, %v1036, 0.0
      %v1154 = vadd.f32 %v1152, %v1153
      %v1155 = vsel %vm378, %v1037, 0.0
      %v1156 = vadd.f32 %v1154, %v1155
      %v1157 = vsel %vm378, %v1038, 0.0
      %v1158 = vadd.f32 %v1156, %v1157
      %v1159 = vsel %vm378, %v1039, 0.0
      %v1160 = vadd.f32 %v1158, %v1159
      %v1161 = vsel %vm378, %v1040, 0.0
      %v1162 = vadd.f32 %v1160, %v1161
      %v1163 = vsel %vm378, %v1041, 0.0
      %v1164 = vadd.f32 %v1162, %v1163
      %v1165 = vsel %vm378, %v1042, 0.0
      %v1166 = vadd.f32 %v1164, %v1165
      %v1167 = vsel %vm378, %v1043, 0.0
      %v1168 = vadd.f32 %v1166, %v1167
      %v1169 = vsel %vm378, %v1044, 0.0
      %v1170 = vadd.f32 %v1168, %v1169
      %v1171 = vsel %vm378, %v1045, 0.0
      %v1172 = vadd.f32 %v1170, %v1171
      %v1173 = vrot.slane %v1172, 4
      %v1174 = vadd.f32 %v1172, %v1173
      %v1175 = vrot.slane %v1174, 2
      %v1176 = vadd.f32 %v1174, %v1175
      %v1177 = vrot.slane %v1176, 1
      %v1178 = vadd.f32 %v1176, %v1177
      %v1179 = vadd.f32 %v981, %v1178
      %1180 = vst.msk [vmem:[%s300] sm:$0x1] %vm979, %v1179
      %s1181 = smul.u32 64, %s22
      %p1182 = scmp.lt.s32.totalorder %s21, 3
      %s1183 = scalar_select %p1182, %s21, 3
      %p1184 = scmp.lt.s32.totalorder %s1181, 63
      %s1185 = scalar_select %p1184, %s1181, 63
      %s1186 = smul.addr %s1183, 64
      %s1187 = sadd.s32 %s1185, %s1186
      %s1188 = smul.addr %s1187, 8
      %s1189 = scalar_lea.vmem %s3, %s1188
      %p1190 = scmp.lt.s32.totalorder %s21, 3
      %s1191 = scalar_select %p1190, %s21, 3
      %s1192 = scalar_lea.vmem %s4, %s1191
      %p1193 = scmp.lt.s32.totalorder %s21, 3
      %s1194 = scalar_select %p1193, %s21, 3
      %s1195 = scalar_lea.vmem %s5, %s1194
      // Predicated region
      $region37: #{residual_up_block.3} parent=31 // pred_check
        %p1196 = pneg %p124
      $region38: #{residual_up_block.3} parent=31 // pred_check_branch
        %1198 = sbr.rel (%p1196) target = $region40
      $region39: #{residual_up_block.3} parent=31 // pred_region
        %s1199 = smul.u32 64, %s22
      $region40: #{residual_up_block.3} parent=31 // pred_fallthru
        _
      // Predicated region
      $region41: #{residual_up_block.3} parent=31 // pred_check
        %p1200 = pneg %p150
      $region42: #{residual_up_block.3} parent=31 // pred_check_branch
        %1202 = sbr.rel (%p1200) target = $region44
      $region43: #{residual_up_block.3} parent=31 // pred_region
        _
      $region44: #{residual_up_block.3} parent=31 // pred_fallthru
        _
      // Predicated region
      $region45: #{residual_up_block.3} parent=31 // pred_check
        %p1203 = pneg %p176
      $region46: #{residual_up_block.3} parent=31 // pred_check_branch
        %1205 = sbr.rel (%p1203) target = $region48
      $region47: #{residual_up_block.3} parent=31 // pred_region
        _
      $region48: #{residual_up_block.3} parent=31 // pred_fallthru
        _
    $region32: #{residual_up_block.3} parent=5 // pred_fallthru
      _
    %p1206 = scmp.le.s32.totalorder 2, %s12
    // Predicated region
    $region49: #{residual_up_block.3} parent=5 // pred_check
      %p1207 = pneg %p1206
    $region50: #{residual_up_block.3} parent=5 // pred_check_branch
      %1209 = sbr.rel (%p1207) target = $region52
    $region51: #{residual_up_block.3} parent=5 // pred_region
      %s1210 = ssub.s32 %s12, 2
      // Predicated region
      $region53: #{residual_up_block.3} parent=51 // pred_check
        %p1211 = pneg %p130
      $region54: #{residual_up_block.3} parent=51 // pred_check_branch
        %1213 = sbr.rel (%p1211) target = $region56
      $region55: #{residual_up_block.3} parent=51 // pred_region
        %s1214 = smul.u32 64, %s24
        %p1215 = scmp.lt.s32.totalorder %s23, 3
        %s1216 = scalar_select %p1215, %s23, 3
        %p1217 = scmp.lt.s32.totalorder %s1214, 63
        %s1218 = scalar_select %p1217, %s1214, 63
        %s1219 = smul.addr %s1216, 64
        %s1220 = sadd.s32 %s1218, %s1219
        %s1221 = smul.addr %s1220, 8
        %s1222 = scalar_lea.vmem %s3, %s1221
      $region56: #{residual_up_block.3} parent=51 // pred_fallthru
        _
      // Predicated region
      $region57: #{residual_up_block.3} parent=51 // pred_check
        %p1223 = pneg %p156
      $region58: #{residual_up_block.3} parent=51 // pred_check_branch
        %1225 = sbr.rel (%p1223) target = $region60
      $region59: #{residual_up_block.3} parent=51 // pred_region
        %p1226 = scmp.lt.s32.totalorder %s23, 3
        %s1227 = scalar_select %p1226, %s23, 3
        %s1228 = scalar_lea.vmem %s4, %s1227
      $region60: #{residual_up_block.3} parent=51 // pred_fallthru
        _
      // Predicated region
      $region61: #{residual_up_block.3} parent=51 // pred_check
        %p1229 = pneg %p182
      $region62: #{residual_up_block.3} parent=51 // pred_check_branch
        %1231 = sbr.rel (%p1229) target = $region64
      $region63: #{residual_up_block.3} parent=51 // pred_region
        %p1232 = scmp.lt.s32.totalorder %s23, 3
        %s1233 = scalar_select %p1232, %s23, 3
        %s1234 = scalar_lea.vmem %s5, %s1233
      $region64: #{residual_up_block.3} parent=51 // pred_fallthru
        _
    $region52: #{residual_up_block.3} parent=5 // pred_fallthru
      _
  $region6: #{residual_up_block.3} parent=0 // loop_footer
    %s16 = sadd.s32 1, %s12
  $region7: #{residual_up_block.3} parent=0 // loop_footer_branch
    %11 = sbr.rel target = $region3
  $region8: #{residual_up_block.3} parent=0 // loop_exit
    _

// kernel: residual_up_block.4
$region0: #{residual_up_block.4}
  #allocation0 [shape = 'u32[]', space=smem, size = 0x4, offset = 0x4, fixed_abs, tag = 'smem constant byte address 0x4 - core index']
  #allocation1 [shape = 'u32[72,128]{1,0:T(1,128)}', space=vmem, size = 0x9000, scoped, tag = 'internal scratch']
  %s0 = inlined_call_operand.vmem [shape: f32[2048,72], index: 0, kind: input, shape index: {}]
  %s1 = inlined_call_operand.vmem [shape: f32[1,72], index: 1, kind: input, shape index: {}]
  %s2 = inlined_call_operand.vmem [shape: f32[1,72], index: 2, kind: input, shape index: {}]
  %s3 = inlined_call_operand.vmem [shape: s32[2048,1], index: 3, kind: input, shape index: {}]
  %s4 = inlined_call_operand.vmem [shape: s32[2048,1], index: 4, kind: input, shape index: {}]
  %s5 = inlined_call_operand.vmem [shape: s32[1,72], index: 5, kind: input, shape index: {}]
  %s6 = inlined_call_operand.vmem [shape: s32[1,72], index: 6, kind: input, shape index: {}]
  %s7 = inlined_call_operand.vmem [shape: f32[72,8], index: 7, kind: input, shape index: {}]
  %s8 = inlined_call_operand.vmem [shape: f32[1,8], index: 8, kind: input, shape index: {}]
  %s9 = inlined_call_operand.vmem [shape: f32[2048,8], index: 9, kind: output, shape index: {0}]
  %s10 = inlined_call_operand.vmem [shape: f32[1,8], index: 10, kind: output, shape index: {1}]
  %s11 = inlined_call_operand.vmem [shape: f32[1,8], index: 11, kind: output, shape index: {2}]
  %12 = xla_tuple %s9, %s10, %s11
  %s13 = sld [smem:[#allocation0]]
  $region89: #{residual_up_block.4} parent=0
    _
  %s15 = ssub.s32 1, %s13
  %s16 = scalar_select 0, %s15, %s13
  loop: start=0, step=1, limit=4
  $region2: #{residual_up_block.4} parent=0 // loop_pre_header
    _
  $region3: #{residual_up_block.4} parent=0 // loop_header
    %s18 = sphi 0, %s22
    %p19 = scmp.ge.s32.totalorder %s18, 4
    %s28 = sphi 0, %s30
    %s31 = sphi 0, %s28
    %s32 = sphi 0, %s31
    %s48 = sphi 0, %s32
    %s52 = sphi 0, %s52
    %s54 = sphi 0, %s52
    %s55 = sphi 0, %s54
    %s69 = sphi 0, %s55
    %s73 = sphi 0, %s73
    %s75 = sphi 0, %s73
    %s76 = sphi 0, %s75
    %s90 = sphi 0, %s76
    %s96 = sphi 0, %s98
    %s99 = sphi 0, %s96
    %s100 = sphi 0, %s99
    %s116 = sphi 0, %s100
    %s122 = sphi 0, %s124
    %s125 = sphi 0, %s122
    %s126 = sphi 0, %s125
    %s142 = sphi 0, %s126
    %s146 = sphi 0, %s146
    %s148 = sphi 0, %s146
    %s149 = sphi 0, %s148
    %s163 = sphi 0, %s149
    %s167 = sphi 0, %s167
    %s169 = sphi 0, %s167
    %s170 = sphi 0, %s169
    %s184 = sphi 0, %s170
    %s188 = sphi 0, %s188
    %s190 = sphi 0, %s188
    %s191 = sphi 0, %s190
    %s205 = sphi 0, %s191
    %s209 = sphi 0, %s209
    %s211 = sphi 0, %s209
    %s212 = sphi 0, %s211
    %s226 = sphi 0, %s212
    %s232 = sphi 0, %s234
    %s235 = sphi 0, %s232
    %s236 = sphi 0, %s235
    %s252 = sphi 0, %s236
    %s256 = sphi 0, %s256
    %s258 = sphi 0, %s256
    %s259 = sphi 0, %s258
    %s273 = sphi 0, %s259
    %s277 = sphi 0, %s277
    %s279 = sphi 0, %s277
    %s280 = sphi 0, %s279
    %s294 = sphi 0, %s280
  $region4: #{residual_up_block.4} parent=0 // loop_header_branch
    %21 = sbr.rel (%p19) target = $region8
  $region5: #{residual_up_block.4} parent=0 // loop_body
    %s23 = ssub.s32 %s18, 1
    %s24 = ssub.s32 %s18, 2
    %s25 = sadd.s32 %s18, 1
    %s26 = ssub.s32 %s18, %s25
    %p27 = scmp.eq.s32.totalorder %s26, 0
    %s29 = sadd.s32 %s28, 1
    %s30 = scalar_select %p27, %s28, %s29
    %p33 = pneg %p27
    %p34 = scmp.eq.s32.totalorder %s18, 1
    %p35 = por %p33, %p34
    %p36 = scmp.ne.s32.totalorder %s28, %s31
    %p37 = scmp.eq.s32.totalorder %s18, 0
    %p38 = por %p36, %p37
    %p39 = scmp.ne.s32.totalorder %s28, %s31
    %p40 = scmp.eq.s32.totalorder %s23, 1
    %p41 = por %p39, %p40
    %p42 = scmp.ne.s32.totalorder %s31, %s32
    %p43 = scmp.eq.s32.totalorder %s23, 0
    %p44 = por %p42, %p43
    %p45 = scmp.ne.s32.totalorder %s31, %s32
    %p46 = scmp.eq.s32.totalorder %s24, 1
    %p47 = por %p45, %p46
    %p49 = scmp.ne.s32.totalorder %s32, %s48
    %p50 = scmp.eq.s32.totalorder %s24, 0
    %p51 = por %p49, %p50
    %s53 = sadd.s32 %s52, 1
    %p56 = scmp.eq.s32.totalorder %s18, 1
    %p57 = scmp.ne.s32.totalorder %s52, %s54
    %p58 = scmp.eq.s32.totalorder %s18, 0
    %p59 = por %p57, %p58
    %p60 = scmp.ne.s32.totalorder %s52, %s54
    %p61 = scmp.eq.s32.totalorder %s23, 1
    %p62 = por %p60, %p61
    %p63 = scmp.ne.s32.totalorder %s54, %s55
    %p64 = scmp.eq.s32.totalorder %s23, 0
    %p65 = por %p63, %p64
    %p66 = scmp.ne.s32.totalorder %s54, %s55
    %p67 = scmp.eq.s32.totalorder %s24, 1
    %p68 = por %p66, %p67
    %p70 = scmp.ne.s32.totalorder %s55, %s69
    %p71 = scmp.eq.s32.totalorder %s24, 0
    %p72 = por %p70, %p71
    %s74 = sadd.s32 %s73, 1
    %p77 = scmp.eq.s32.totalorder %s18, 1
    %p78 = scmp.ne.s32.totalorder %s73, %s75
    %p79 = scmp.eq.s32.totalorder %s18, 0
    %p80 = por %p78, %p79
    %p81 = scmp.ne.s32.totalorder %s73, %s75
    %p82 = scmp.eq.s32.totalorder %s23, 1
    %p83 = por %p81, %p82
    %p84 = scmp.ne.s32.totalorder %s75, %s76
    %p85 = scmp.eq.s32.totalorder %s23, 0
    %p86 = por %p84, %p85
    %p87 = scmp.ne.s32.totalorder %s75, %s76
    %p88 = scmp.eq.s32.totalorder %s24, 1
    %p89 = por %p87, %p88
    %p91 = scmp.ne.s32.totalorder %s76, %s90
    %p92 = scmp.eq.s32.totalorder %s24, 0
    %p93 = por %p91, %p92
    %s94 = ssub.s32 %s18, %s25
    %p95 = scmp.eq.s32.totalorder %s94, 0
    %s97 = sadd.s32 %s96, 1
    %s98 = scalar_select %p95, %s96, %s97
    %p101 = pneg %p95
    %p102 = scmp.eq.s32.totalorder %s18, 1
    %p103 = por %p101, %p102
    %p104 = scmp.ne.s32.totalorder %s96, %s99
    %p105 = scmp.eq.s32.totalorder %s18, 0
    %p106 = por %p104, %p105
    %p107 = scmp.ne.s32.totalorder %s96, %s99
    %p108 = scmp.eq.s32.totalorder %s23, 1
    %p109 = por %p107, %p108
    %p110 = scmp.ne.s32.totalorder %s99, %s100
    %p111 = scmp.eq.s32.totalorder %s23, 0
    %p112 = por %p110, %p111
    %p113 = scmp.ne.s32.totalorder %s99, %s100
    %p114 = scmp.eq.s32.totalorder %s24, 1
    %p115 = por %p113, %p114
    %p117 = scmp.ne.s32.totalorder %s100, %s116
    %p118 = scmp.eq.s32.totalorder %s24, 0
    %p119 = por %p117, %p118
    %s120 = ssub.s32 %s18, %s25
    %p121 = scmp.eq.s32.totalorder %s120, 0
    %s123 = sadd.s32 %s122, 1
    %s124 = scalar_select %p121, %s122, %s123
    %p127 = pneg %p121
    %p128 = scmp.eq.s32.totalorder %s18, 1
    %p129 = por %p127, %p128
    %p130 = scmp.ne.s32.totalorder %s122, %s125
    %p131 = scmp.eq.s32.totalorder %s18, 0
    %p132 = por %p130, %p131
    %p133 = scmp.ne.s32.totalorder %s122, %s125
    %p134 = scmp.eq.s32.totalorder %s23, 1
    %p135 = por %p133, %p134
    %p136 = scmp.ne.s32.totalorder %s125, %s126
    %p137 = scmp.eq.s32.totalorder %s23, 0
    %p138 = por %p136, %p137
    %p139 = scmp.ne.s32.totalorder %s125, %s126
    %p140 = scmp.eq.s32.totalorder %s24, 1
    %p141 = por %p139, %p140
    %p143 = scmp.ne.s32.totalorder %s126, %s142
    %p144 = scmp.eq.s32.totalorder %s24, 0
    %p145 = por %p143, %p144
    %s147 = sadd.s32 %s146, 1
    %p150 = scmp.eq.s32.totalorder %s18, 1
    %p151 = scmp.ne.s32.totalorder %s146, %s148
    %p152 = scmp.eq.s32.totalorder %s18, 0
    %p153 = por %p151, %p152
    %p154 = scmp.ne.s32.totalorder %s146, %s148
    %p155 = scmp.eq.s32.totalorder %s23, 1
    %p156 = por %p154, %p155
    %p157 = scmp.ne.s32.totalorder %s148, %s149
    %p158 = scmp.eq.s32.totalorder %s23, 0
    %p159 = por %p157, %p158
    %p160 = scmp.ne.s32.totalorder %s148, %s149
    %p161 = scmp.eq.s32.totalorder %s24, 1
    %p162 = por %p160, %p161
    %p164 = scmp.ne.s32.totalorder %s149, %s163
    %p165 = scmp.eq.s32.totalorder %s24, 0
    %p166 = por %p164, %p165
    %s168 = sadd.s32 %s167, 1
    %p171 = scmp.eq.s32.totalorder %s18, 1
    %p172 = scmp.ne.s32.totalorder %s167, %s169
    %p173 = scmp.eq.s32.totalorder %s18, 0
    %p174 = por %p172, %p173
    %p175 = scmp.ne.s32.totalorder %s167, %s169
    %p176 = scmp.eq.s32.totalorder %s23, 1
    %p177 = por %p175, %p176
    %p178 = scmp.ne.s32.totalorder %s169, %s170
    %p179 = scmp.eq.s32.totalorder %s23, 0
    %p180 = por %p178, %p179
    %p181 = scmp.ne.s32.totalorder %s169, %s170
    %p182 = scmp.eq.s32.totalorder %s24, 1
    %p183 = por %p181, %p182
    %p185 = scmp.ne.s32.totalorder %s170, %s184
    %p186 = scmp.eq.s32.totalorder %s24, 0
    %p187 = por %p185, %p186
    %s189 = sadd.s32 %s188, 1
    %p192 = scmp.eq.s32.totalorder %s18, 1
    %p193 = scmp.ne.s32.totalorder %s188, %s190
    %p194 = scmp.eq.s32.totalorder %s18, 0
    %p195 = por %p193, %p194
    %p196 = scmp.ne.s32.totalorder %s188, %s190
    %p197 = scmp.eq.s32.totalorder %s23, 1
    %p198 = por %p196, %p197
    %p199 = scmp.ne.s32.totalorder %s190, %s191
    %p200 = scmp.eq.s32.totalorder %s23, 0
    %p201 = por %p199, %p200
    %p202 = scmp.ne.s32.totalorder %s190, %s191
    %p203 = scmp.eq.s32.totalorder %s24, 1
    %p204 = por %p202, %p203
    %p206 = scmp.ne.s32.totalorder %s191, %s205
    %p207 = scmp.eq.s32.totalorder %s24, 0
    %p208 = por %p206, %p207
    %s210 = sadd.s32 %s209, 1
    %p213 = scmp.eq.s32.totalorder %s18, 1
    %p214 = scmp.ne.s32.totalorder %s209, %s211
    %p215 = scmp.eq.s32.totalorder %s18, 0
    %p216 = por %p214, %p215
    %p217 = scmp.ne.s32.totalorder %s209, %s211
    %p218 = scmp.eq.s32.totalorder %s23, 1
    %p219 = por %p217, %p218
    %p220 = scmp.ne.s32.totalorder %s211, %s212
    %p221 = scmp.eq.s32.totalorder %s23, 0
    %p222 = por %p220, %p221
    %p223 = scmp.ne.s32.totalorder %s211, %s212
    %p224 = scmp.eq.s32.totalorder %s24, 1
    %p225 = por %p223, %p224
    %p227 = scmp.ne.s32.totalorder %s212, %s226
    %p228 = scmp.eq.s32.totalorder %s24, 0
    %p229 = por %p227, %p228
    %s230 = ssub.s32 %s18, %s25
    %p231 = scmp.eq.s32.totalorder %s230, 0
    %s233 = sadd.s32 %s232, 1
    %s234 = scalar_select %p231, %s232, %s233
    %p237 = pneg %p231
    %p238 = scmp.eq.s32.totalorder %s18, 1
    %p239 = por %p237, %p238
    %p240 = scmp.ne.s32.totalorder %s232, %s235
    %p241 = scmp.eq.s32.totalorder %s18, 0
    %p242 = por %p240, %p241
    %p243 = scmp.ne.s32.totalorder %s232, %s235
    %p244 = scmp.eq.s32.totalorder %s23, 1
    %p245 = por %p243, %p244
    %p246 = scmp.ne.s32.totalorder %s235, %s236
    %p247 = scmp.eq.s32.totalorder %s23, 0
    %p248 = por %p246, %p247
    %p249 = scmp.ne.s32.totalorder %s235, %s236
    %p250 = scmp.eq.s32.totalorder %s24, 1
    %p251 = por %p249, %p250
    %p253 = scmp.ne.s32.totalorder %s236, %s252
    %p254 = scmp.eq.s32.totalorder %s24, 0
    %p255 = por %p253, %p254
    %s257 = sadd.s32 %s256, 1
    %p260 = scmp.eq.s32.totalorder %s18, 1
    %p261 = scmp.ne.s32.totalorder %s256, %s258
    %p262 = scmp.eq.s32.totalorder %s18, 0
    %p263 = por %p261, %p262
    %p264 = scmp.ne.s32.totalorder %s256, %s258
    %p265 = scmp.eq.s32.totalorder %s23, 1
    %p266 = por %p264, %p265
    %p267 = scmp.ne.s32.totalorder %s258, %s259
    %p268 = scmp.eq.s32.totalorder %s23, 0
    %p269 = por %p267, %p268
    %p270 = scmp.ne.s32.totalorder %s258, %s259
    %p271 = scmp.eq.s32.totalorder %s24, 1
    %p272 = por %p270, %p271
    %p274 = scmp.ne.s32.totalorder %s259, %s273
    %p275 = scmp.eq.s32.totalorder %s24, 0
    %p276 = por %p274, %p275
    %s278 = sadd.s32 %s277, 1
    %p281 = scmp.eq.s32.totalorder %s18, 1
    %p282 = scmp.ne.s32.totalorder %s277, %s279
    %p283 = scmp.eq.s32.totalorder %s18, 0
    %p284 = por %p282, %p283
    %p285 = scmp.ne.s32.totalorder %s277, %s279
    %p286 = scmp.eq.s32.totalorder %s23, 1
    %p287 = por %p285, %p286
    %p288 = scmp.ne.s32.totalorder %s279, %s280
    %p289 = scmp.eq.s32.totalorder %s23, 0
    %p290 = por %p288, %p289
    %p291 = scmp.ne.s32.totalorder %s279, %s280
    %p292 = scmp.eq.s32.totalorder %s24, 1
    %p293 = por %p291, %p292
    %p295 = scmp.ne.s32.totalorder %s280, %s294
    %p296 = scmp.eq.s32.totalorder %s24, 0
    %p297 = por %p295, %p296
    %p298 = scmp.le.s32.totalorder 1, %s18
    %p299 = scmp.lt.s32.totalorder %s18, 3
    %p300 = pnand %p298, %p299
    %p301 = pneg %p300
    // Predicated region
    $region9: #{residual_up_block.4} parent=5 // pred_check
      _
    $region10: #{residual_up_block.4} parent=5 // pred_check_branch
      %303 = sbr.rel (%p300) target = $region12
    $region11: #{residual_up_block.4} parent=5 // pred_region
      %s304 = ssub.s32 %s18, 1
      // Predicated region
      $region13: #{residual_up_block.4} parent=11 // pred_check
        %p305 = pneg %p65
      $region14: #{residual_up_block.4} parent=11 // pred_check_branch
        %307 = sbr.rel (%p305) target = $region16
      $region15: #{residual_up_block.4} parent=11 // pred_region
        _
      $region16: #{residual_up_block.4} parent=11 // pred_fallthru
        _
      // Predicated region
      $region17: #{residual_up_block.4} parent=11 // pred_check
        %p308 = pneg %p86
      $region18: #{residual_up_block.4} parent=11 // pred_check_branch
        %310 = sbr.rel (%p308) target = $region20
      $region19: #{residual_up_block.4} parent=11 // pred_region
        _
      $region20: #{residual_up_block.4} parent=11 // pred_fallthru
        _
      // Predicated region
      $region21: #{residual_up_block.4} parent=11 // pred_check
        %p311 = pneg %p159
      $region22: #{residual_up_block.4} parent=11 // pred_check_branch
        %313 = sbr.rel (%p311) target = $region24
      $region23: #{residual_up_block.4} parent=11 // pred_region
        _
      $region24: #{residual_up_block.4} parent=11 // pred_fallthru
        _
      // Predicated region
      $region25: #{residual_up_block.4} parent=11 // pred_check
        %p314 = pneg %p180
      $region26: #{residual_up_block.4} parent=11 // pred_check_branch
        %316 = sbr.rel (%p314) target = $region28
      $region27: #{residual_up_block.4} parent=11 // pred_region
        _
      $region28: #{residual_up_block.4} parent=11 // pred_fallthru
        _
      // Predicated region
      $region29: #{residual_up_block.4} parent=11 // pred_check
        %p317 = pneg %p201
      $region30: #{residual_up_block.4} parent=11 // pred_check_branch
        %319 = sbr.rel (%p317) target = $region32
      $region31: #{residual_up_block.4} parent=11 // pred_region
        _
      $region32: #{residual_up_block.4} parent=11 // pred_fallthru
        _
      // Predicated region
      $region33: #{residual_up_block.4} parent=11 // pred_check
        %p320 = pneg %p222
      $region34: #{residual_up_block.4} parent=11 // pred_check_branch
        %322 = sbr.rel (%p320) target = $region36
      $region35: #{residual_up_block.4} parent=11 // pred_region
        _
      $region36: #{residual_up_block.4} parent=11 // pred_fallthru
        _
    $region12: #{residual_up_block.4} parent=5 // pred_fallthru
      _
    %p323 = scmp.lt.s32.totalorder %s18, 2
    // Predicated region
    $region37: #{residual_up_block.4} parent=5 // pred_check
      %p324 = pneg %p323
    $region38: #{residual_up_block.4} parent=5 // pred_check_branch
      %326 = sbr.rel (%p324) target = $region40
    $region39: #{residual_up_block.4} parent=5 // pred_region
      // Predicated region
      $region41: #{residual_up_block.4} parent=39 // pred_check
        %p327 = pneg %p38
      $region42: #{residual_up_block.4} parent=39 // pred_check_branch
        %329 = sbr.rel (%p327) target = $region44
      $region43: #{residual_up_block.4} parent=39 // pred_region
        %s330 = smul.u32 128, %s18
        %p331 = scmp.lt.s32.totalorder %s330, 255
        %s332 = scalar_select %p331, %s330, 255
        %s333 = smul.addr %s332, 8
        %s334 = scalar_lea.vmem %s0, %s333
        %s335 = smul.u32 128, %s18
      $region44: #{residual_up_block.4} parent=39 // pred_fallthru
        _
      // Predicated region
      $region45: #{residual_up_block.4} parent=39 // pred_check
        %p336 = pneg %p106
      $region46: #{residual_up_block.4} parent=39 // pred_check_branch
        %338 = sbr.rel (%p336) target = $region48
      $region47: #{residual_up_block.4} parent=39 // pred_region
        %s339 = smul.u32 128, %s18
        %p340 = scmp.lt.s32.totalorder %s339, 255
        %s341 = scalar_select %p340, %s339, 255
        %s342 = smul.addr %s341, 8
        %s343 = scalar_lea.vmem %s3, %s342
        %s344 = smul.u32 128, %s18
      $region48: #{residual_up_block.4} parent=39 // pred_fallthru
        _
      // Predicated region
      $region49: #{residual_up_block.4} parent=39 // pred_check
        %p345 = pneg %p132
      $region50: #{residual_up_block.4} parent=39 // pred_check_branch
        %347 = sbr.rel (%p345) target = $region52
      $region51: #{residual_up_block.4} parent=39 // pred_region
        %s348 = smul.u32 128, %s18
        %p349 = scmp.lt.s32.totalorder %s348, 255
        %s350 = scalar_select %p349, %s348, 255
        %s351 = smul.addr %s350, 8
        %s352 = scalar_lea.vmem %s4, %s351
        %s353 = smul.u32 128, %s18
      $region52: #{residual_up_block.4} parent=39 // pred_fallthru
        _
    $region40: #{residual_up_block.4} parent=5 // pred_fallthru
      _
    %p354 = scmp.le.s32.totalorder 1, %s18
    %p355 = scmp.lt.s32.totalorder %s18, 3
    %p356 = pnand %p354, %p355
    %p357 = pneg %p356
    // Predicated region
    $region53: #{residual_up_block.4} parent=5 // pred_check
      _
    $region54: #{residual_up_block.4} parent=5 // pred_check_branch
      %359 = sbr.rel (%p356) target = $region56
    $region55: #{residual_up_block.4} parent=5 // pred_region
      %s360 = ssub.s32 %s18, 1
      %s361 = smul.u32 128, %s23
      %p362 = scmp.lt.s32.totalorder %s361, 255
      %s363 = scalar_select %p362, %s361, 255
      %s364 = smul.addr %s363, 8
      %s365 = scalar_lea.vmem %s0, %s364
      %p366 = pneg %p44
      %p367 = pneg %p41
      %p368 = pneg %p65
      %p369 = pneg %p62
      %p370 = pneg %p86
      %p371 = pneg %p83
      %s372 = smul.u32 128, %s23
      %p373 = scmp.lt.s32.totalorder %s372, 255
      %s374 = scalar_select %p373, %s372, 255
      %s375 = smul.addr %s374, 8
      %s376 = scalar_lea.vmem %s3, %s375
      %p377 = pneg %p112
      %p378 = pneg %p109
      %s379 = smul.u32 128, %s23
      %p380 = scmp.lt.s32.totalorder %s379, 255
      %s381 = scalar_select %p380, %s379, 255
      %s382 = smul.addr %s381, 8
      %s383 = scalar_lea.vmem %s4, %s382
      %p384 = pneg %p138
      %p385 = pneg %p135
      %p386 = pneg %p159
      %p387 = pneg %p156
      %p388 = pneg %p180
      %p389 = pneg %p177
      %p390 = pneg %p201
      %p391 = pneg %p198
      %p392 = pneg %p222
      %p393 = pneg %p219
      %p394 = pneg %p248
      %p395 = pneg %p245
      %s396 = smul.u32 128, %s23
      %p397 = scmp.lt.s32.totalorder %s396, 255
      %s398 = scalar_select %p397, %s396, 255
      %s399 = smul.addr %s398, 8
      %s400 = scalar_lea.vmem %s9, %s399
      %p401 = pneg %p269
      %p402 = pneg %p266
      %p403 = pneg %p290
      %p404 = pneg %p287
      %s405 = smul.u32 128, %s23
      %p406 = scmp.lt.s32.totalorder %s405, 255
      %s407 = scalar_select %p406, %s405, 255
      %s408 = smul.addr %s407, 8
      %s409 = scalar_lea.vmem %s0, %s408
      %s410 = smul.u32 128, %s23
      %s411 = smul.u32 128, %s23
      %p412 = scmp.lt.s32.totalorder %s411, 255
      %s413 = scalar_select %p412, %s411, 255
      %s414 = smul.addr %s413, 8
      %s415 = scalar_lea.vmem %s3, %s414
      %s416 = smul.u32 128, %s23
      %s417 = smul.u32 128, %s23
      %p418 = scmp.lt.s32.totalorder %s417, 255
      %s419 = scalar_select %p418, %s417, 255
      %s420 = smul.addr %s419, 8
      %s421 = scalar_lea.vmem %s4, %s420
      %s422 = smul.u32 128, %s23
      %s423 = smul.u32 128, %s23
      %p424 = scmp.lt.s32.totalorder %s423, 255
      %s425 = scalar_select %p424, %s423, 255
      %s426 = smul.addr %s425, 8
      %s427 = scalar_lea.vmem %s9, %s426
      %s428 = smul.u32 128, %s23
      %p429 = scmp.eq.s32.totalorder %s23, 0
      // Predicated region
      $region57: #{residual_up_block.4} parent=55 // pred_check
        %p430 = pneg %p429
      $region58: #{residual_up_block.4} parent=55 // pred_check_branch
        %432 = sbr.rel (%p430) target = $region60
      $region59: #{residual_up_block.4} parent=55 // pred_region
        %vm433 = vcmask 57344
        %434 = vst.msk [vmem:[%s10] sm:$0x1] %vm433, 0.0
        %435 = vst.msk [vmem:[%s11] sm:$0x1] %vm433, 0.0
      $region60: #{residual_up_block.4} parent=55 // pred_fallthru
        _
      %v436 = vld [vmem:[%s415] sm:$0xff]
      %v437 = vld [vmem:[%s415 + $0x8] sm:$0xff]
      %v438 = vld [vmem:[%s415 + $0x10] sm:$0xff]
      %v439 = vld [vmem:[%s415 + $0x18] sm:$0xff]
      %v440 = vld [vmem:[%s415 + $0x20] sm:$0xff]
      %v441 = vld [vmem:[%s415 + $0x28] sm:$0xff]
      %v442 = vld [vmem:[%s415 + $0x30] sm:$0xff]
      %v443 = vld [vmem:[%s415 + $0x38] sm:$0xff]
      %v444 = vld [vmem:[%s415 + $0x40] sm:$0xff]
      %v445 = vld [vmem:[%s415 + $0x48] sm:$0xff]
      %v446 = vld [vmem:[%s415 + $0x50] sm:$0xff]
      %v447 = vld [vmem:[%s415 + $0x58] sm:$0xff]
      %v448 = vld [vmem:[%s415 + $0x60] sm:$0xff]
      %v449 = vld [vmem:[%s415 + $0x68] sm:$0xff]
      %v450 = vld [vmem:[%s415 + $0x70] sm:$0xff]
      %v451 = vld [vmem:[%s415 + $0x78] sm:$0xff]
      %v452 = vld [vmem:[%s415 + $0x80] sm:$0xff]
      %v453 = vld [vmem:[%s415 + $0x88] sm:$0xff]
      %v454 = vld [vmem:[%s415 + $0x90] sm:$0xff]
      %v455 = vld [vmem:[%s415 + $0x98] sm:$0xff]
      %v456 = vld [vmem:[%s415 + $0xa0] sm:$0xff]
      %v457 = vld [vmem:[%s415 + $0xa8] sm:$0xff]
      %v458 = vld [vmem:[%s415 + $0xb0] sm:$0xff]
      %v459 = vld [vmem:[%s415 + $0xb8] sm:$0xff]
      %v460 = vld [vmem:[%s415 + $0xc0] sm:$0xff]
      %v461 = vld [vmem:[%s415 + $0xc8] sm:$0xff]
      %v462 = vld [vmem:[%s415 + $0xd0] sm:$0xff]
      %v463 = vld [vmem:[%s415 + $0xd8] sm:$0xff]
      %v464 = vld [vmem:[%s415 + $0xe0] sm:$0xff]
      %v465 = vld [vmem:[%s415 + $0xe8] sm:$0xff]
      %v466 = vld [vmem:[%s415 + $0xf0] sm:$0xff]
      %v467 = vld [vmem:[%s415 + $0xf8] sm:$0xff]
      %v468 = vld [vmem:[%s415 + $0x100] sm:$0xff]
      %v469 = vld [vmem:[%s415 + $0x108] sm:$0xff]
      %v470 = vld [vmem:[%s415 + $0x110] sm:$0xff]
      %v471 = vld [vmem:[%s415 + $0x118] sm:$0xff]
      %v472 = vld [vmem:[%s415 + $0x120] sm:$0xff]
      %v473 = vld [vmem:[%s415 + $0x128] sm:$0xff]
      %v474 = vld [vmem:[%s415 + $0x130] sm:$0xff]
      %v475 = vld [vmem:[%s415 + $0x138] sm:$0xff]
      %v476 = vld [vmem:[%s415 + $0x140] sm:$0xff]
      %v477 = vld [vmem:[%s415 + $0x148] sm:$0xff]
      %v478 = vld [vmem:[%s415 + $0x150] sm:$0xff]
      %v479 = vld [vmem:[%s415 + $0x158] sm:$0xff]
      %v480 = vld [vmem:[%s415 + $0x160] sm:$0xff]
      %v481 = vld [vmem:[%s415 + $0x168] sm:$0xff]
      %v482 = vld [vmem:[%s415 + $0x170] sm:$0xff]
      %v483 = vld [vmem:[%s415 + $0x178] sm:$0xff]
      %v484 = vld [vmem:[%s415 + $0x180] sm:$0xff]
      %v485 = vld [vmem:[%s415 + $0x188] sm:$0xff]
      %v486 = vld [vmem:[%s415 + $0x190] sm:$0xff]
      %v487 = vld [vmem:[%s415 + $0x198] sm:$0xff]
      %v488 = vld [vmem:[%s415 + $0x1a0] sm:$0xff]
      %v489 = vld [vmem:[%s415 + $0x1a8] sm:$0xff]
      %v490 = vld [vmem:[%s415 + $0x1b0] sm:$0xff]
      %v491 = vld [vmem:[%s415 + $0x1b8] sm:$0xff]
      %v492 = vld [vmem:[%s415 + $0x1c0] sm:$0xff]
      %v493 = vld [vmem:[%s415 + $0x1c8] sm:$0xff]
      %v494 = vld [vmem:[%s415 + $0x1d0] sm:$0xff]
      %v495 = vld [vmem:[%s415 + $0x1d8] sm:$0xff]
      %v496 = vld [vmem:[%s415 + $0x1e0] sm:$0xff]
      %v497 = vld [vmem:[%s415 + $0x1e8] sm:$0xff]
      %v498 = vld [vmem:[%s415 + $0x1f0] sm:$0xff]
      %v499 = vld [vmem:[%s415 + $0x1f8] sm:$0xff]
      %v500 = vld [vmem:[%s415 + $0x200] sm:$0xff]
      %v501 = vld [vmem:[%s415 + $0x208] sm:$0xff]
      %v502 = vld [vmem:[%s415 + $0x210] sm:$0xff]
      %v503 = vld [vmem:[%s415 + $0x218] sm:$0xff]
      %v504 = vld [vmem:[%s415 + $0x220] sm:$0xff]
      %v505 = vld [vmem:[%s415 + $0x228] sm:$0xff]
      %v506 = vld [vmem:[%s415 + $0x230] sm:$0xff]
      %v507 = vld [vmem:[%s415 + $0x238] sm:$0xff]
      %v508 = vld [vmem:[%s415 + $0x240] sm:$0xff]
      %v509 = vld [vmem:[%s415 + $0x248] sm:$0xff]
      %v510 = vld [vmem:[%s415 + $0x250] sm:$0xff]
      %v511 = vld [vmem:[%s415 + $0x258] sm:$0xff]
      %v512 = vld [vmem:[%s415 + $0x260] sm:$0xff]
      %v513 = vld [vmem:[%s415 + $0x268] sm:$0xff]
      %v514 = vld [vmem:[%s415 + $0x270] sm:$0xff]
      %v515 = vld [vmem:[%s415 + $0x278] sm:$0xff]
      %v516 = vld [vmem:[%s415 + $0x280] sm:$0xff]
      %v517 = vld [vmem:[%s415 + $0x288] sm:$0xff]
      %v518 = vld [vmem:[%s415 + $0x290] sm:$0xff]
      %v519 = vld [vmem:[%s415 + $0x298] sm:$0xff]
      %v520 = vld [vmem:[%s415 + $0x2a0] sm:$0xff]
      %v521 = vld [vmem:[%s415 + $0x2a8] sm:$0xff]
      %v522 = vld [vmem:[%s415 + $0x2b0] sm:$0xff]
      %v523 = vld [vmem:[%s415 + $0x2b8] sm:$0xff]
      %v524 = vld [vmem:[%s415 + $0x2c0] sm:$0xff]
      %v525 = vld [vmem:[%s415 + $0x2c8] sm:$0xff]
      %v526 = vld [vmem:[%s415 + $0x2d0] sm:$0xff]
      %v527 = vld [vmem:[%s415 + $0x2d8] sm:$0xff]
      %v528 = vld [vmem:[%s415 + $0x2e0] sm:$0xff]
      %v529 = vld [vmem:[%s415 + $0x2e8] sm:$0xff]
      %v530 = vld [vmem:[%s415 + $0x2f0] sm:$0xff]
      %v531 = vld [vmem:[%s415 + $0x2f8] sm:$0xff]
      %v532 = vld [vmem:[%s415 + $0x300] sm:$0xff]
      %v533 = vld [vmem:[%s415 + $0x308] sm:$0xff]
      %v534 = vld [vmem:[%s415 + $0x310] sm:$0xff]
      %v535 = vld [vmem:[%s415 + $0x318] sm:$0xff]
      %v536 = vld [vmem:[%s415 + $0x320] sm:$0xff]
      %v537 = vld [vmem:[%s415 + $0x328] sm:$0xff]
      %v538 = vld [vmem:[%s415 + $0x330] sm:$0xff]
      %v539 = vld [vmem:[%s415 + $0x338] sm:$0xff]
      %v540 = vld [vmem:[%s415 + $0x340] sm:$0xff]
      %v541 = vld [vmem:[%s415 + $0x348] sm:$0xff]
      %v542 = vld [vmem:[%s415 + $0x350] sm:$0xff]
      %v543 = vld [vmem:[%s415 + $0x358] sm:$0xff]
      %v544 = vld [vmem:[%s415 + $0x360] sm:$0xff]
      %v545 = vld [vmem:[%s415 + $0x368] sm:$0xff]
      %v546 = vld [vmem:[%s415 + $0x370] sm:$0xff]
      %v547 = vld [vmem:[%s415 + $0x378] sm:$0xff]
      %v548 = vld [vmem:[%s415 + $0x380] sm:$0xff]
      %v549 = vld [vmem:[%s415 + $0x388] sm:$0xff]
      %v550 = vld [vmem:[%s415 + $0x390] sm:$0xff]
      %v551 = vld [vmem:[%s415 + $0x398] sm:$0xff]
      %v552 = vld [vmem:[%s415 + $0x3a0] sm:$0xff]
      %v553 = vld [vmem:[%s415 + $0x3a8] sm:$0xff]
      %v554 = vld [vmem:[%s415 + $0x3b0] sm:$0xff]
      %v555 = vld [vmem:[%s415 + $0x3b8] sm:$0xff]
      %v556 = vld [vmem:[%s415 + $0x3c0] sm:$0xff]
      %v557 = vld [vmem:[%s415 + $0x3c8] sm:$0xff]
      %v558 = vld [vmem:[%s415 + $0x3d0] sm:$0xff]
      %v559 = vld [vmem:[%s415 + $0x3d8] sm:$0xff]
      %v560 = vld [vmem:[%s415 + $0x3e0] sm:$0xff]
      %v561 = vld [vmem:[%s415 + $0x3e8] sm:$0xff]
      %v562 = vld [vmem:[%s415 + $0x3f0] sm:$0xff]
      %v563 = vld [vmem:[%s415 + $0x3f8] sm:$0xff]
      %v564 = vld [vmem:[%s5] sm:$0x1]
      %565 = vset.pattern.permute.xlu0 0
      %566 = vperm.xlu0 %565, %v436
      %v567 = vpop.permute.xlu0 %566
      %568 = vset.pattern.permute.xlu0 0
      %569 = vperm.xlu0 %568, %v437
      %v570 = vpop.permute.xlu0 %569
      %571 = vset.pattern.permute.xlu0 0
      %572 = vperm.xlu0 %571, %v438
      %v573 = vpop.permute.xlu0 %572
      %574 = vset.pattern.permute.xlu0 0
      %575 = vperm.xlu0 %574, %v439
      %v576 = vpop.permute.xlu0 %575
      %577 = vset.pattern.permute.xlu0 0
      %578 = vperm.xlu0 %577, %v440
      %v579 = vpop.permute.xlu0 %578
      %580 = vset.pattern.permute.xlu0 0
      %581 = vperm.xlu0 %580, %v441
      %v582 = vpop.permute.xlu0 %581
      %583 = vset.pattern.permute.xlu0 0
      %584 = vperm.xlu0 %583, %v442
      %v585 = vpop.permute.xlu0 %584
      %586 = vset.pattern.permute.xlu0 0
      %587 = vperm.xlu0 %586, %v443
      %v588 = vpop.permute.xlu0 %587
      %589 = vset.pattern.permute.xlu0 0
      %590 = vperm.xlu0 %589, %v444
      %v591 = vpop.permute.xlu0 %590
      %592 = vset.pattern.permute.xlu0 0
      %593 = vperm.xlu0 %592, %v445
      %v594 = vpop.permute.xlu0 %593
      %595 = vset.pattern.permute.xlu0 0
      %596 = vperm.xlu0 %595, %v446
      %v597 = vpop.permute.xlu0 %596
      %598 = vset.pattern.permute.xlu0 0
      %599 = vperm.xlu0 %598, %v447
      %v600 = vpop.permute.xlu0 %599
      %601 = vset.pattern.permute.xlu0 0
      %602 = vperm.xlu0 %601, %v448
      %v603 = vpop.permute.xlu0 %602
      %604 = vset.pattern.permute.xlu0 0
      %605 = vperm.xlu0 %604, %v449
      %v606 = vpop.permute.xlu0 %605
      %607 = vset.pattern.permute.xlu0 0
      %608 = vperm.xlu0 %607, %v450
      %v609 = vpop.permute.xlu0 %608
      %610 = vset.pattern.permute.xlu0 0
      %611 = vperm.xlu0 %610, %v451
      %v612 = vpop.permute.xlu0 %611
      %613 = vset.pattern.permute.xlu0 0
      %614 = vperm.xlu0 %613, %v452
      %v615 = vpop.permute.xlu0 %614
      %616 = vset.pattern.permute.xlu0 0
      %617 = vperm.xlu0 %616, %v453
      %v618 = vpop.permute.xlu0 %617
      %619 = vset.pattern.permute.xlu0 0
      %620 = vperm.xlu0 %619, %v454
      %v621 = vpop.permute.xlu0 %620
      %622 = vset.pattern.permute.xlu0 0
      %623 = vperm.xlu0 %622, %v455
      %v624 = vpop.permute.xlu0 %623
      %625 = vset.pattern.permute.xlu0 0
      %626 = vperm.xlu0 %625, %v456
      %v627 = vpop.permute.xlu0 %626
      %628 = vset.pattern.permute.xlu0 0
      %629 = vperm.xlu0 %628, %v457
      %v630 = vpop.permute.xlu0 %629
      %631 = vset.pattern.permute.xlu0 0
      %632 = vperm.xlu0 %631, %v458
      %v633 = vpop.permute.xlu0 %632
      %634 = vset.pattern.permute.xlu0 0
      %635 = vperm.xlu0 %634, %v459
      %v636 = vpop.permute.xlu0 %635
      %637 = vset.pattern.permute.xlu0 0
      %638 = vperm.xlu0 %637, %v460
      %v639 = vpop.permute.xlu0 %638
      %640 = vset.pattern.permute.xlu0 0
      %641 = vperm.xlu0 %640, %v461
      %v642 = vpop.permute.xlu0 %641
      %643 = vset.pattern.permute.xlu0 0
      %644 = vperm.xlu0 %643, %v462
      %v645 = vpop.permute.xlu0 %644
      %646 = vset.pattern.permute.xlu0 0
      %647 = vperm.xlu0 %646, %v463
      %v648 = vpop.permute.xlu0 %647
      %649 = vset.pattern.permute.xlu0 0
      %650 = vperm.xlu0 %649, %v464
      %v651 = vpop.permute.xlu0 %650
      %652 = vset.pattern.permute.xlu0 0
      %653 = vperm.xlu0 %652, %v465
      %v654 = vpop.permute.xlu0 %653
      %655 = vset.pattern.permute.xlu0 0
      %656 = vperm.xlu0 %655, %v466
      %v657 = vpop.permute.xlu0 %656
      %658 = vset.pattern.permute.xlu0 0
      %659 = vperm.xlu0 %658, %v467
      %v660 = vpop.permute.xlu0 %659
      %661 = vset.pattern.permute.xlu0 0
      %662 = vperm.xlu0 %661, %v468
      %v663 = vpop.permute.xlu0 %662
      %664 = vset.pattern.permute.xlu0 0
      %665 = vperm.xlu0 %664, %v469
      %v666 = vpop.permute.xlu0 %665
      %667 = vset.pattern.permute.xlu0 0
      %668 = vperm.xlu0 %667, %v470
      %v669 = vpop.permute.xlu0 %668
      %670 = vset.pattern.permute.xlu0 0
      %671 = vperm.xlu0 %670, %v471
      %v672 = vpop.permute.xlu0 %671
      %673 = vset.pattern.permute.xlu0 0
      %674 = vperm.xlu0 %673, %v472
      %v675 = vpop.permute.xlu0 %674
      %676 = vset.pattern.permute.xlu0 0
      %677 = vperm.xlu0 %676, %v473
      %v678 = vpop.permute.xlu0 %677
      %679 = vset.pattern.permute.xlu0 0
      %680 = vperm.xlu0 %679, %v474
      %v681 = vpop.permute.xlu0 %680
      %682 = vset.pattern.permute.xlu0 0
      %683 = vperm.xlu0 %682, %v475
      %v684 = vpop.permute.xlu0 %683
      %685 = vset.pattern.permute.xlu0 0
      %686 = vperm.xlu0 %685, %v476
      %v687 = vpop.permute.xlu0 %686
      %688 = vset.pattern.permute.xlu0 0
      %689 = vperm.xlu0 %688, %v477
      %v690 = vpop.permute.xlu0 %689
      %691 = vset.pattern.permute.xlu0 0
      %692 = vperm.xlu0 %691, %v478
      %v693 = vpop.permute.xlu0 %692
      %694 = vset.pattern.permute.xlu0 0
      %695 = vperm.xlu0 %694, %v479
      %v696 = vpop.permute.xlu0 %695
      %697 = vset.pattern.permute.xlu0 0
      %698 = vperm.xlu0 %697, %v480
      %v699 = vpop.permute.xlu0 %698
      %700 = vset.pattern.permute.xlu0 0
      %701 = vperm.xlu0 %700, %v481
      %v702 = vpop.permute.xlu0 %701
      %703 = vset.pattern.permute.xlu0 0
      %704 = vperm.xlu0 %703, %v482
      %v705 = vpop.permute.xlu0 %704
      %706 = vset.pattern.permute.xlu0 0
      %707 = vperm.xlu0 %706, %v483
      %v708 = vpop.permute.xlu0 %707
      %709 = vset.pattern.permute.xlu0 0
      %710 = vperm.xlu0 %709, %v484
      %v711 = vpop.permute.xlu0 %710
      %712 = vset.pattern.permute.xlu0 0
      %713 = vperm.xlu0 %712, %v485
      %v714 = vpop.permute.xlu0 %713
      %715 = vset.pattern.permute.xlu0 0
      %716 = vperm.xlu0 %715, %v486
      %v717 = vpop.permute.xlu0 %716
      %718 = vset.pattern.permute.xlu0 0
      %719 = vperm.xlu0 %718, %v487
      %v720 = vpop.permute.xlu0 %719
      %721 = vset.pattern.permute.xlu0 0
      %722 = vperm.xlu0 %721, %v488
      %v723 = vpop.permute.xlu0 %722
      %724 = vset.pattern.permute.xlu0 0
      %725 = vperm.xlu0 %724, %v489
      %v726 = vpop.permute.xlu0 %725
      %727 = vset.pattern.permute.xlu0 0
      %728 = vperm.xlu0 %727, %v490
      %v729 = vpop.permute.xlu0 %728
      %730 = vset.pattern.permute.xlu0 0
      %731 = vperm.xlu0 %730, %v491
      %v732 = vpop.permute.xlu0 %731
      %733 = vset.pattern.permute.xlu0 0
      %734 = vperm.xlu0 %733, %v492
      %v735 = vpop.permute.xlu0 %734
      %736 = vset.pattern.permute.xlu0 0
      %737 = vperm.xlu0 %736, %v493
      %v738 = vpop.permute.xlu0 %737
      %739 = vset.pattern.permute.xlu0 0
      %740 = vperm.xlu0 %739, %v494
      %v741 = vpop.permute.xlu0 %740
      %742 = vset.pattern.permute.xlu0 0
      %743 = vperm.xlu0 %742, %v495
      %v744 = vpop.permute.xlu0 %743
      %745 = vset.pattern.permute.xlu0 0
      %746 = vperm.xlu0 %745, %v496
      %v747 = vpop.permute.xlu0 %746
      %748 = vset.pattern.permute.xlu0 0
      %749 = vperm.xlu0 %748, %v497
      %v750 = vpop.permute.xlu0 %749
      %751 = vset.pattern.permute.xlu0 0
      %752 = vperm.xlu0 %751, %v498
      %v753 = vpop.permute.xlu0 %752
      %754 = vset.pattern.permute.xlu0 0
      %755 = vperm.xlu0 %754, %v499
      %v756 = vpop.permute.xlu0 %755
      %757 = vset.pattern.permute.xlu0 0
      %758 = vperm.xlu0 %757, %v500
      %v759 = vpop.permute.xlu0 %758
      %760 = vset.pattern.permute.xlu0 0
      %761 = vperm.xlu0 %760, %v501
      %v762 = vpop.permute.xlu0 %761
      %763 = vset.pattern.permute.xlu0 0
      %764 = vperm.xlu0 %763, %v502
      %v765 = vpop.permute.xlu0 %764
      %766 = vset.pattern.permute.xlu0 0
      %767 = vperm.xlu0 %766, %v503
      %v768 = vpop.permute.xlu0 %767
      %769 = vset.pattern.permute.xlu0 0
      %770 = vperm.xlu0 %769, %v504
      %v771 = vpop.permute.xlu0 %770
      %772 = vset.pattern.permute.xlu0 0
      %773 = vperm.xlu0 %772, %v505
      %v774 = vpop.permute.xlu0 %773
      %775 = vset.pattern.permute.xlu0 0
      %776 = vperm.xlu0 %775, %v506
      %v777 = vpop.permute.xlu0 %776
      %778 = vset.pattern.permute.xlu0 0
      %779 = vperm.xlu0 %778, %v507
      %v780 = vpop.permute.xlu0 %779
      %781 = vset.pattern.permute.xlu0 0
      %782 = vperm.xlu0 %781, %v508
      %v783 = vpop.permute.xlu0 %782
      %784 = vset.pattern.permute.xlu0 0
      %785 = vperm.xlu0 %784, %v509
      %v786 = vpop.permute.xlu0 %785
      %787 = vset.pattern.permute.xlu0 0
      %788 = vperm.xlu0 %787, %v510
      %v789 = vpop.permute.xlu0 %788
      %790 = vset.pattern.permute.xlu0 0
      %791 = vperm.xlu0 %790, %v511
      %v792 = vpop.permute.xlu0 %791
      %793 = vset.pattern.permute.xlu0 0
      %794 = vperm.xlu0 %793, %v512
      %v795 = vpop.permute.xlu0 %794
      %796 = vset.pattern.permute.xlu0 0
      %797 = vperm.xlu0 %796, %v513
      %v798 = vpop.permute.xlu0 %797
      %799 = vset.pattern.permute.xlu0 0
      %800 = vperm.xlu0 %799, %v514
      %v801 = vpop.permute.xlu0 %800
      %802 = vset.pattern.permute.xlu0 0
      %803 = vperm.xlu0 %802, %v515
      %v804 = vpop.permute.xlu0 %803
      %805 = vset.pattern.permute.xlu0 0
      %806 = vperm.xlu0 %805, %v516
      %v807 = vpop.permute.xlu0 %806
      %808 = vset.pattern.permute.xlu0 0
      %809 = vperm.xlu0 %808, %v517
      %v810 = vpop.permute.xlu0 %809
      %811 = vset.pattern.permute.xlu0 0
      %812 = vperm.xlu0 %811, %v518
      %v813 = vpop.permute.xlu0 %812
      %814 = vset.pattern.permute.xlu0 0
      %815 = vperm.xlu0 %814, %v519
      %v816 = vpop.permute.xlu0 %815
      %817 = vset.pattern.permute.xlu0 0
      %818 = vperm.xlu0 %817, %v520
      %v819 = vpop.permute.xlu0 %818
      %820 = vset.pattern.permute.xlu0 0
      %821 = vperm.xlu0 %820, %v521
      %v822 = vpop.permute.xlu0 %821
      %823 = vset.pattern.permute.xlu0 0
      %824 = vperm.xlu0 %823, %v522
      %v825 = vpop.permute.xlu0 %824
      %826 = vset.pattern.permute.xlu0 0
      %827 = vperm.xlu0 %826, %v523
      %v828 = vpop.permute.xlu0 %827
      %829 = vset.pattern.permute.xlu0 0
      %830 = vperm.xlu0 %829, %v524
      %v831 = vpop.permute.xlu0 %830
      %832 = vset.pattern.permute.xlu0 0
      %833 = vperm.xlu0 %832, %v525
      %v834 = vpop.permute.xlu0 %833
      %835 = vset.pattern.permute.xlu0 0
      %836 = vperm.xlu0 %835, %v526
      %v837 = vpop.permute.xlu0 %836
      %838 = vset.pattern.permute.xlu0 0
      %839 = vperm.xlu0 %838, %v527
      %v840 = vpop.permute.xlu0 %839
      %841 = vset.pattern.permute.xlu0 0
      %842 = vperm.xlu0 %841, %v528
      %v843 = vpop.permute.xlu0 %842
      %844 = vset.pattern.permute.xlu0 0
      %845 = vperm.xlu0 %844, %v529
      %v846 = vpop.permute.xlu0 %845
      %847 = vset.pattern.permute.xlu0 0
      %848 = vperm.xlu0 %847, %v530
      %v849 = vpop.permute.xlu0 %848
      %850 = vset.pattern.permute.xlu0 0
      %851 = vperm.xlu0 %850, %v531
      %v852 = vpop.permute.xlu0 %851
      %853 = vset.pattern.permute.xlu0 0
      %854 = vperm.xlu0 %853, %v532
      %v855 = vpop.permute.xlu0 %854
      %856 = vset.pattern.permute.xlu0 0
      %857 = vperm.xlu0 %856, %v533
      %v858 = vpop.permute.xlu0 %857
      %859 = vset.pattern.permute.xlu0 0
      %860 = vperm.xlu0 %859, %v534
      %v861 = vpop.permute.xlu0 %860
      %862 = vset.pattern.permute.xlu0 0
      %863 = vperm.xlu0 %862, %v535
      %v864 = vpop.permute.xlu0 %863
      %865 = vset.pattern.permute.xlu0 0
      %866 = vperm.xlu0 %865, %v536
      %v867 = vpop.permute.xlu0 %866
      %868 = vset.pattern.permute.xlu0 0
      %869 = vperm.xlu0 %868, %v537
      %v870 = vpop.permute.xlu0 %869
      %871 = vset.pattern.permute.xlu0 0
      %872 = vperm.xlu0 %871, %v538
      %v873 = vpop.permute.xlu0 %872
      %874 = vset.pattern.permute.xlu0 0
      %875 = vperm.xlu0 %874, %v539
      %v876 = vpop.permute.xlu0 %875
      %877 = vset.pattern.permute.xlu0 0
      %878 = vperm.xlu0 %877, %v540
      %v879 = vpop.permute.xlu0 %878
      %880 = vset.pattern.permute.xlu0 0
      %881 = vperm.xlu0 %880, %v541
      %v882 = vpop.permute.xlu0 %881
      %883 = vset.pattern.permute.xlu0 0
      %884 = vperm.xlu0 %883, %v542
      %v885 = vpop.permute.xlu0 %884
      %886 = vset.pattern.permute.xlu0 0
      %887 = vperm.xlu0 %886, %v543
      %v888 = vpop.permute.xlu0 %887
      %889 = vset.pattern.permute.xlu0 0
      %890 = vperm.xlu0 %889, %v544
      %v891 = vpop.permute.xlu0 %890
      %892 = vset.pattern.permute.xlu0 0
      %893 = vperm.xlu0 %892, %v545
      %v894 = vpop.permute.xlu0 %893
      %895 = vset.pattern.permute.xlu0 0
      %896 = vperm.xlu0 %895, %v546
      %v897 = vpop.permute.xlu0 %896
      %898 = vset.pattern.permute.xlu0 0
      %899 = vperm.xlu0 %898, %v547
      %v900 = vpop.permute.xlu0 %899
      %901 = vset.pattern.permute.xlu0 0
      %902 = vperm.xlu0 %901, %v548
      %v903 = vpop.permute.xlu0 %902
      %904 = vset.pattern.permute.xlu0 0
      %905 = vperm.xlu0 %904, %v549
      %v906 = vpop.permute.xlu0 %905
      %907 = vset.pattern.permute.xlu0 0
      %908 = vperm.xlu0 %907, %v550
      %v909 = vpop.permute.xlu0 %908
      %910 = vset.pattern.permute.xlu0 0
      %911 = vperm.xlu0 %910, %v551
      %v912 = vpop.permute.xlu0 %911
      %913 = vset.pattern.permute.xlu0 0
      %914 = vperm.xlu0 %913, %v552
      %v915 = vpop.permute.xlu0 %914
      %916 = vset.pattern.permute.xlu0 0
      %917 = vperm.xlu0 %916, %v553
      %v918 = vpop.permute.xlu0 %917
      %919 = vset.pattern.permute.xlu0 0
      %920 = vperm.xlu0 %919, %v554
      %v921 = vpop.permute.xlu0 %920
      %922 = vset.pattern.permute.xlu0 0
      %923 = vperm.xlu0 %922, %v555
      %v924 = vpop.permute.xlu0 %923
      %925 = vset.pattern.permute.xlu0 0
      %926 = vperm.xlu0 %925, %v556
      %v927 = vpop.permute.xlu0 %926
      %928 = vset.pattern.permute.xlu0 0
      %929 = vperm.xlu0 %928, %v557
      %v930 = vpop.permute.xlu0 %929
      %931 = vset.pattern.permute.xlu0 0
      %932 = vperm.xlu0 %931, %v558
      %v933 = vpop.permute.xlu0 %932
      %934 = vset.pattern.permute.xlu0 0
      %935 = vperm.xlu0 %934, %v559
      %v936 = vpop.permute.xlu0 %935
      %937 = vset.pattern.permute.xlu0 0
      %938 = vperm.xlu0 %937, %v560
      %v939 = vpop.permute.xlu0 %938
      %940 = vset.pattern.permute.xlu0 0
      %941 = vperm.xlu0 %940, %v561
      %v942 = vpop.permute.xlu0 %941
      %943 = vset.pattern.permute.xlu0 0
      %944 = vperm.xlu0 %943, %v562
      %v945 = vpop.permute.xlu0 %944
      %946 = vset.pattern.permute.xlu0 0
      %947 = vperm.xlu0 %946, %v563
      %v948 = vpop.permute.xlu0 %947
      %v949 = vperm.slane %v564, 0
      %v950 = vadd.s32 %v567, %v949
      %v951 = vadd.s32 %v570, %v949
      %v952 = vadd.s32 %v573, %v949
      %v953 = vadd.s32 %v576, %v949
      %v954 = vadd.s32 %v579, %v949
      %v955 = vadd.s32 %v582, %v949
      %v956 = vadd.s32 %v585, %v949
      %v957 = vadd.s32 %v588, %v949
      %v958 = vadd.s32 %v591, %v949
      %v959 = vadd.s32 %v594, %v949
      %v960 = vadd.s32 %v597, %v949
      %v961 = vadd.s32 %v600, %v949
      %v962 = vadd.s32 %v603, %v949
      %v963 = vadd.s32 %v606, %v949
      %v964 = vadd.s32 %v609, %v949
      %v965 = vadd.s32 %v612, %v949
      %v966 = vadd.s32 %v615, %v949
      %v967 = vadd.s32 %v618, %v949
      %v968 = vadd.s32 %v621, %v949
      %v969 = vadd.s32 %v624, %v949
      %v970 = vadd.s32 %v627, %v949
      %v971 = vadd.s32 %v630, %v949
      %v972 = vadd.s32 %v633, %v949
      %v973 = vadd.s32 %v636, %v949
      %v974 = vadd.s32 %v639, %v949
      %v975 = vadd.s32 %v642, %v949
      %v976 = vadd.s32 %v645, %v949
      %v977 = vadd.s32 %v648, %v949
      %v978 = vadd.s32 %v651, %v949
      %v979 = vadd.s32 %v654, %v949
      %v980 = vadd.s32 %v657, %v949
      %v981 = vadd.s32 %v660, %v949
      %v982 = vadd.s32 %v663, %v949
      %v983 = vadd.s32 %v666, %v949
      %v984 = vadd.s32 %v669, %v949
      %v985 = vadd.s32 %v672, %v949
      %v986 = vadd.s32 %v675, %v949
      %v987 = vadd.s32 %v678, %v949
      %v988 = vadd.s32 %v681, %v949
      %v989 = vadd.s32 %v684, %v949
      %v990 = vadd.s32 %v687, %v949
      %v991 = vadd.s32 %v690, %v949
      %v992 = vadd.s32 %v693, %v949
      %v993 = vadd.s32 %v696, %v949
      %v994 = vadd.s32 %v699, %v949
      %v995 = vadd.s32 %v702, %v949
      %v996 = vadd.s32 %v705, %v949
      %v997 = vadd.s32 %v708, %v949
      %v998 = vadd.s32 %v711, %v949
      %v999 = vadd.s32 %v714, %v949
      %v1000 = vadd.s32 %v717, %v949
      %v1001 = vadd.s32 %v720, %v949
      %v1002 = vadd.s32 %v723, %v949
      %v1003 = vadd.s32 %v726, %v949
      %v1004 = vadd.s32 %v729, %v949
      %v1005 = vadd.s32 %v732, %v949
      %v1006 = vadd.s32 %v735, %v949
      %v1007 = vadd.s32 %v738, %v949
      %v1008 = vadd.s32 %v741, %v949
      %v1009 = vadd.s32 %v744, %v949
      %v1010 = vadd.s32 %v747, %v949
      %v1011 = vadd.s32 %v750, %v949
      %v1012 = vadd.s32 %v753, %v949
      %v1013 = vadd.s32 %v756, %v949
      %v1014 = vadd.s32 %v759, %v949
      %v1015 = vadd.s32 %v762, %v949
      %v1016 = vadd.s32 %v765, %v949
      %v1017 = vadd.s32 %v768, %v949
      %v1018 = vadd.s32 %v771, %v949
      %v1019 = vadd.s32 %v774, %v949
      %v1020 = vadd.s32 %v777, %v949
      %v1021 = vadd.s32 %v780, %v949
      %v1022 = vadd.s32 %v783, %v949
      %v1023 = vadd.s32 %v786, %v949
      %v1024 = vadd.s32 %v789, %v949
      %v1025 = vadd.s32 %v792, %v949
      %v1026 = vadd.s32 %v795, %v949
      %v1027 = vadd.s32 %v798, %v949
      %v1028 = vadd.s32 %v801, %v949
      %v1029 = vadd.s32 %v804, %v949
      %v1030 = vadd.s32 %v807, %v949
      %v1031 = vadd.s32 %v810, %v949
      %v1032 = vadd.s32 %v813, %v949
      %v1033 = vadd.s32 %v816, %v949
      %v1034 = vadd.s32 %v819, %v949
      %v1035 = vadd.s32 %v822, %v949
      %v1036 = vadd.s32 %v825, %v949
      %v1037 = vadd.s32 %v828, %v949
      %v1038 = vadd.s32 %v831, %v949
      %v1039 = vadd.s32 %v834, %v949
      %v1040 = vadd.s32 %v837, %v949
      %v1041 = vadd.s32 %v840, %v949
      %v1042 = vadd.s32 %v843, %v949
      %v1043 = vadd.s32 %v846, %v949
      %v1044 = vadd.s32 %v849, %v949
      %v1045 = vadd.s32 %v852, %v949
      %v1046 = vadd.s32 %v855, %v949
      %v1047 = vadd.s32 %v858, %v949
      %v1048 = vadd.s32 %v861, %v949
      %v1049 = vadd.s32 %v864, %v949
      %v1050 = vadd.s32 %v867, %v949
      %v1051 = vadd.s32 %v870, %v949
      %v1052 = vadd.s32 %v873, %v949
      %v1053 = vadd.s32 %v876, %v949
      %v1054 = vadd.s32 %v879, %v949
      %v1055 = vadd.s32 %v882, %v949
      %v1056 = vadd.s32 %v885, %v949
      %v1057 = vadd.s32 %v888, %v949
      %v1058 = vadd.s32 %v891, %v949
      %v1059 = vadd.s32 %v894, %v949
      %v1060 = vadd.s32 %v897, %v949
      %v1061 = vadd.s32 %v900, %v949
      %v1062 = vadd.s32 %v903, %v949
      %v1063 = vadd.s32 %v906, %v949
      %v1064 = vadd.s32 %v909, %v949
      %v1065 = vadd.s32 %v912, %v949
      %v1066 = vadd.s32 %v915, %v949
      %v1067 = vadd.s32 %v918, %v949
      %v1068 = vadd.s32 %v921, %v949
      %v1069 = vadd.s32 %v924, %v949
      %v1070 = vadd.s32 %v927, %v949
      %v1071 = vadd.s32 %v930, %v949
      %v1072 = vadd.s32 %v933, %v949
      %v1073 = vadd.s32 %v936, %v949
      %v1074 = vadd.s32 %v939, %v949
      %v1075 = vadd.s32 %v942, %v949
      %v1076 = vadd.s32 %v945, %v949
      %v1077 = vadd.s32 %v948, %v949
      %v1078 = vld [vmem:[%s421] sm:$0xff]
      %v1079 = vld [vmem:[%s421 + $0x8] sm:$0xff]
      %v1080 = vld [vmem:[%s421 + $0x10] sm:$0xff]
      %v1081 = vld [vmem:[%s421 + $0x18] sm:$0xff]
      %v1082 = vld [vmem:[%s421 + $0x20] sm:$0xff]
      %v1083 = vld [vmem:[%s421 + $0x28] sm:$0xff]
      %v1084 = vld [vmem:[%s421 + $0x30] sm:$0xff]
      %v1085 = vld [vmem:[%s421 + $0x38] sm:$0xff]
      %v1086 = vld [vmem:[%s421 + $0x40] sm:$0xff]
      %v1087 = vld [vmem:[%s421 + $0x48] sm:$0xff]
      %v1088 = vld [vmem:[%s421 + $0x50] sm:$0xff]
      %v1089 = vld [vmem:[%s421 + $0x58] sm:$0xff]
      %v1090 = vld [vmem:[%s421 + $0x60] sm:$0xff]
      %v1091 = vld [vmem:[%s421 + $0x68] sm:$0xff]
      %v1092 = vld [vmem:[%s421 + $0x70] sm:$0xff]
      %v1093 = vld [vmem:[%s421 + $0x78] sm:$0xff]
      %v1094 = vld [vmem:[%s421 + $0x80] sm:$0xff]
      %v1095 = vld [vmem:[%s421 + $0x88] sm:$0xff]
      %v1096 = vld [vmem:[%s421 + $0x90] sm:$0xff]
      %v1097 = vld [vmem:[%s421 + $0x98] sm:$0xff]
      %v1098 = vld [vmem:[%s421 + $0xa0] sm:$0xff]
      %v1099 = vld [vmem:[%s421 + $0xa8] sm:$0xff]
      %v1100 = vld [vmem:[%s421 + $0xb0] sm:$0xff]
      %v1101 = vld [vmem:[%s421 + $0xb8] sm:$0xff]
      %v1102 = vld [vmem:[%s421 + $0xc0] sm:$0xff]
      %v1103 = vld [vmem:[%s421 + $0xc8] sm:$0xff]
      %v1104 = vld [vmem:[%s421 + $0xd0] sm:$0xff]
      %v1105 = vld [vmem:[%s421 + $0xd8] sm:$0xff]
      %v1106 = vld [vmem:[%s421 + $0xe0] sm:$0xff]
      %v1107 = vld [vmem:[%s421 + $0xe8] sm:$0xff]
      %v1108 = vld [vmem:[%s421 + $0xf0] sm:$0xff]
      %v1109 = vld [vmem:[%s421 + $0xf8] sm:$0xff]
      %v1110 = vld [vmem:[%s421 + $0x100] sm:$0xff]
      %v1111 = vld [vmem:[%s421 + $0x108] sm:$0xff]
      %v1112 = vld [vmem:[%s421 + $0x110] sm:$0xff]
      %v1113 = vld [vmem:[%s421 + $0x118] sm:$0xff]
      %v1114 = vld [vmem:[%s421 + $0x120] sm:$0xff]
      %v1115 = vld [vmem:[%s421 + $0x128] sm:$0xff]
      %v1116 = vld [vmem:[%s421 + $0x130] sm:$0xff]
      %v1117 = vld [vmem:[%s421 + $0x138] sm:$0xff]
      %v1118 = vld [vmem:[%s421 + $0x140] sm:$0xff]
      %v1119 = vld [vmem:[%s421 + $0x148] sm:$0xff]
      %v1120 = vld [vmem:[%s421 + $0x150] sm:$0xff]
      %v1121 = vld [vmem:[%s421 + $0x158] sm:$0xff]
      %v1122 = vld [vmem:[%s421 + $0x160] sm:$0xff]
      %v1123 = vld [vmem:[%s421 + $0x168] sm:$0xff]
      %v1124 = vld [vmem:[%s421 + $0x170] sm:$0xff]
      %v1125 = vld [vmem:[%s421 + $0x178] sm:$0xff]
      %v1126 = vld [vmem:[%s421 + $0x180] sm:$0xff]
      %v1127 = vld [vmem:[%s421 + $0x188] sm:$0xff]
      %v1128 = vld [vmem:[%s421 + $0x190] sm:$0xff]
      %v1129 = vld [vmem:[%s421 + $0x198] sm:$0xff]
      %v1130 = vld [vmem:[%s421 + $0x1a0] sm:$0xff]
      %v1131 = vld [vmem:[%s421 + $0x1a8] sm:$0xff]
      %v1132 = vld [vmem:[%s421 + $0x1b0] sm:$0xff]
      %v1133 = vld [vmem:[%s421 + $0x1b8] sm:$0xff]
      %v1134 = vld [vmem:[%s421 + $0x1c0] sm:$0xff]
      %v1135 = vld [vmem:[%s421 + $0x1c8] sm:$0xff]
      %v1136 = vld [vmem:[%s421 + $0x1d0] sm:$0xff]
      %v1137 = vld [vmem:[%s421 + $0x1d8] sm:$0xff]
      %v1138 = vld [vmem:[%s421 + $0x1e0] sm:$0xff]
      %v1139 = vld [vmem:[%s421 + $0x1e8] sm:$0xff]
      %v1140 = vld [vmem:[%s421 + $0x1f0] sm:$0xff]
      %v1141 = vld [vmem:[%s421 + $0x1f8] sm:$0xff]
      %v1142 = vld [vmem:[%s421 + $0x200] sm:$0xff]
      %v1143 = vld [vmem:[%s421 + $0x208] sm:$0xff]
      %v1144 = vld [vmem:[%s421 + $0x210] sm:$0xff]
      %v1145 = vld [vmem:[%s421 + $0x218] sm:$0xff]
      %v1146 = vld [vmem:[%s421 + $0x220] sm:$0xff]
      %v1147 = vld [vmem:[%s421 + $0x228] sm:$0xff]
      %v1148 = vld [vmem:[%s421 + $0x230] sm:$0xff]
      %v1149 = vld [vmem:[%s421 + $0x238] sm:$0xff]
      %v1150 = vld [vmem:[%s421 + $0x240] sm:$0xff]
      %v1151 = vld [vmem:[%s421 + $0x248] sm:$0xff]
      %v1152 = vld [vmem:[%s421 + $0x250] sm:$0xff]
      %v1153 = vld [vmem:[%s421 + $0x258] sm:$0xff]
      %v1154 = vld [vmem:[%s421 + $0x260] sm:$0xff]
      %v1155 = vld [vmem:[%s421 + $0x268] sm:$0xff]
      %v1156 = vld [vmem:[%s421 + $0x270] sm:$0xff]
      %v1157 = vld [vmem:[%s421 + $0x278] sm:$0xff]
      %v1158 = vld [vmem:[%s421 + $0x280] sm:$0xff]
      %v1159 = vld [vmem:[%s421 + $0x288] sm:$0xff]
      %v1160 = vld [vmem:[%s421 + $0x290] sm:$0xff]
      %v1161 = vld [vmem:[%s421 + $0x298] sm:$0xff]
      %v1162 = vld [vmem:[%s421 + $0x2a0] sm:$0xff]
      %v1163 = vld [vmem:[%s421 + $0x2a8] sm:$0xff]
      %v1164 = vld [vmem:[%s421 + $0x2b0] sm:$0xff]
      %v1165 = vld [vmem:[%s421 + $0x2b8] sm:$0xff]
      %v1166 = vld [vmem:[%s421 + $0x2c0] sm:$0xff]
      %v1167 = vld [vmem:[%s421 + $0x2c8] sm:$0xff]
      %v1168 = vld [vmem:[%s421 + $0x2d0] sm:$0xff]
      %v1169 = vld [vmem:[%s421 + $0x2d8] sm:$0xff]
      %v1170 = vld [vmem:[%s421 + $0x2e0] sm:$0xff]
      %v1171 = vld [vmem:[%s421 + $0x2e8] sm:$0xff]
      %v1172 = vld [vmem:[%s421 + $0x2f0] sm:$0xff]
      %v1173 = vld [vmem:[%s421 + $0x2f8] sm:$0xff]
      %v1174 = vld [vmem:[%s421 + $0x300] sm:$0xff]
      %v1175 = vld [vmem:[%s421 + $0x308] sm:$0xff]
      %v1176 = vld [vmem:[%s421 + $0x310] sm:$0xff]
      %v1177 = vld [vmem:[%s421 + $0x318] sm:$0xff]
      %v1178 = vld [vmem:[%s421 + $0x320] sm:$0xff]
      %v1179 = vld [vmem:[%s421 + $0x328] sm:$0xff]
      %v1180 = vld [vmem:[%s421 + $0x330] sm:$0xff]
      %v1181 = vld [vmem:[%s421 + $0x338] sm:$0xff]
      %v1182 = vld [vmem:[%s421 + $0x340] sm:$0xff]
      %v1183 = vld [vmem:[%s421 + $0x348] sm:$0xff]
      %v1184 = vld [vmem:[%s421 + $0x350] sm:$0xff]
      %v1185 = vld [vmem:[%s421 + $0x358] sm:$0xff]
      %v1186 = vld [vmem:[%s421 + $0x360] sm:$0xff]
      %v1187 = vld [vmem:[%s421 + $0x368] sm:$0xff]
      %v1188 = vld [vmem:[%s421 + $0x370] sm:$0xff]
      %v1189 = vld [vmem:[%s421 + $0x378] sm:$0xff]
      %v1190 = vld [vmem:[%s421 + $0x380] sm:$0xff]
      %v1191 = vld [vmem:[%s421 + $0x388] sm:$0xff]
      %v1192 = vld [vmem:[%s421 + $0x390] sm:$0xff]
      %v1193 = vld [vmem:[%s421 + $0x398] sm:$0xff]
      %v1194 = vld [vmem:[%s421 + $0x3a0] sm:$0xff]
      %v1195 = vld [vmem:[%s421 + $0x3a8] sm:$0xff]
      %v1196 = vld [vmem:[%s421 + $0x3b0] sm:$0xff]
      %v1197 = vld [vmem:[%s421 + $0x3b8] sm:$0xff]
      %v1198 = vld [vmem:[%s421 + $0x3c0] sm:$0xff]
      %v1199 = vld [vmem:[%s421 + $0x3c8] sm:$0xff]
      %v1200 = vld [vmem:[%s421 + $0x3d0] sm:$0xff]
      %v1201 = vld [vmem:[%s421 + $0x3d8] sm:$0xff]
      %v1202 = vld [vmem:[%s421 + $0x3e0] sm:$0xff]
      %v1203 = vld [vmem:[%s421 + $0x3e8] sm:$0xff]
      %v1204 = vld [vmem:[%s421 + $0x3f0] sm:$0xff]
      %v1205 = vld [vmem:[%s421 + $0x3f8] sm:$0xff]
      %v1206 = vld [vmem:[%s6] sm:$0x1]
      %1207 = vset.pattern.permute.xlu0 0
      %1208 = vperm.xlu0 %1207, %v1078
      %v1209 = vpop.permute.xlu0 %1208
      %1210 = vset.pattern.permute.xlu0 0
      %1211 = vperm.xlu0 %1210, %v1079
      %v1212 = vpop.permute.xlu0 %1211
      %1213 = vset.pattern.permute.xlu0 0
      %1214 = vperm.xlu0 %1213, %v1080
      %v1215 = vpop.permute.xlu0 %1214
      %1216 = vset.pattern.permute.xlu0 0
      %1217 = vperm.xlu0 %1216, %v1081
      %v1218 = vpop.permute.xlu0 %1217
      %1219 = vset.pattern.permute.xlu0 0
      %1220 = vperm.xlu0 %1219, %v1082
      %v1221 = vpop.permute.xlu0 %1220
      %1222 = vset.pattern.permute.xlu0 0
      %1223 = vperm.xlu0 %1222, %v1083
      %v1224 = vpop.permute.xlu0 %1223
      %1225 = vset.pattern.permute.xlu0 0
      %1226 = vperm.xlu0 %1225, %v1084
      %v1227 = vpop.permute.xlu0 %1226
      %1228 = vset.pattern.permute.xlu0 0
      %1229 = vperm.xlu0 %1228, %v1085
      %v1230 = vpop.permute.xlu0 %1229
      %1231 = vset.pattern.permute.xlu0 0
      %1232 = vperm.xlu0 %1231, %v1086
      %v1233 = vpop.permute.xlu0 %1232
      %1234 = vset.pattern.permute.xlu0 0
      %1235 = vperm.xlu0 %1234, %v1087
      %v1236 = vpop.permute.xlu0 %1235
      %1237 = vset.pattern.permute.xlu0 0
      %1238 = vperm.xlu0 %1237, %v1088
      %v1239 = vpop.permute.xlu0 %1238
      %1240 = vset.pattern.permute.xlu0 0
      %1241 = vperm.xlu0 %1240, %v1089
      %v1242 = vpop.permute.xlu0 %1241
      %1243 = vset.pattern.permute.xlu0 0
      %1244 = vperm.xlu0 %1243, %v1090
      %v1245 = vpop.permute.xlu0 %1244
      %1246 = vset.pattern.permute.xlu0 0
      %1247 = vperm.xlu0 %1246, %v1091
      %v1248 = vpop.permute.xlu0 %1247
      %1249 = vset.pattern.permute.xlu0 0
      %1250 = vperm.xlu0 %1249, %v1092
      %v1251 = vpop.permute.xlu0 %1250
      %1252 = vset.pattern.permute.xlu0 0
      %1253 = vperm.xlu0 %1252, %v1093
      %v1254 = vpop.permute.xlu0 %1253
      %1255 = vset.pattern.permute.xlu0 0
      %1256 = vperm.xlu0 %1255, %v1094
      %v1257 = vpop.permute.xlu0 %1256
      %1258 = vset.pattern.permute.xlu0 0
      %1259 = vperm.xlu0 %1258, %v1095
      %v1260 = vpop.permute.xlu0 %1259
      %1261 = vset.pattern.permute.xlu0 0
      %1262 = vperm.xlu0 %1261, %v1096
      %v1263 = vpop.permute.xlu0 %1262
      %1264 = vset.pattern.permute.xlu0 0
      %1265 = vperm.xlu0 %1264, %v1097
      %v1266 = vpop.permute.xlu0 %1265
      %1267 = vset.pattern.permute.xlu0 0
      %1268 = vperm.xlu0 %1267, %v1098
      %v1269 = vpop.permute.xlu0 %1268
      %1270 = vset.pattern.permute.xlu0 0
      %1271 = vperm.xlu0 %1270, %v1099
      %v1272 = vpop.permute.xlu0 %1271
      %1273 = vset.pattern.permute.xlu0 0
      %1274 = vperm.xlu0 %1273, %v1100
      %v1275 = vpop.permute.xlu0 %1274
      %1276 = vset.pattern.permute.xlu0 0
      %1277 = vperm.xlu0 %1276, %v1101
      %v1278 = vpop.permute.xlu0 %1277
      %1279 = vset.pattern.permute.xlu0 0
      %1280 = vperm.xlu0 %1279, %v1102
      %v1281 = vpop.permute.xlu0 %1280
      %1282 = vset.pattern.permute.xlu0 0
      %1283 = vperm.xlu0 %1282, %v1103
      %v1284 = vpop.permute.xlu0 %1283
      %1285 = vset.pattern.permute.xlu0 0
      %1286 = vperm.xlu0 %1285, %v1104
      %v1287 = vpop.permute.xlu0 %1286
      %1288 = vset.pattern.permute.xlu0 0
      %1289 = vperm.xlu0 %1288, %v1105
      %v1290 = vpop.permute.xlu0 %1289
      %1291 = vset.pattern.permute.xlu0 0
      %1292 = vperm.xlu0 %1291, %v1106
      %v1293 = vpop.permute.xlu0 %1292
      %1294 = vset.pattern.permute.xlu0 0
      %1295 = vperm.xlu0 %1294, %v1107
      %v1296 = vpop.permute.xlu0 %1295
      %1297 = vset.pattern.permute.xlu0 0
      %1298 = vperm.xlu0 %1297, %v1108
      %v1299 = vpop.permute.xlu0 %1298
      %1300 = vset.pattern.permute.xlu0 0
      %1301 = vperm.xlu0 %1300, %v1109
      %v1302 = vpop.permute.xlu0 %1301
      %1303 = vset.pattern.permute.xlu0 0
      %1304 = vperm.xlu0 %1303, %v1110
      %v1305 = vpop.permute.xlu0 %1304
      %1306 = vset.pattern.permute.xlu0 0
      %1307 = vperm.xlu0 %1306, %v1111
      %v1308 = vpop.permute.xlu0 %1307
      %1309 = vset.pattern.permute.xlu0 0
      %1310 = vperm.xlu0 %1309, %v1112
      %v1311 = vpop.permute.xlu0 %1310
      %1312 = vset.pattern.permute.xlu0 0
      %1313 = vperm.xlu0 %1312, %v1113
      %v1314 = vpop.permute.xlu0 %1313
      %1315 = vset.pattern.permute.xlu0 0
      %1316 = vperm.xlu0 %1315, %v1114
      %v1317 = vpop.permute.xlu0 %1316
      %1318 = vset.pattern.permute.xlu0 0
      %1319 = vperm.xlu0 %1318, %v1115
      %v1320 = vpop.permute.xlu0 %1319
      %1321 = vset.pattern.permute.xlu0 0
      %1322 = vperm.xlu0 %1321, %v1116
      %v1323 = vpop.permute.xlu0 %1322
      %1324 = vset.pattern.permute.xlu0 0
      %1325 = vperm.xlu0 %1324, %v1117
      %v1326 = vpop.permute.xlu0 %1325
      %1327 = vset.pattern.permute.xlu0 0
      %1328 = vperm.xlu0 %1327, %v1118
      %v1329 = vpop.permute.xlu0 %1328
      %1330 = vset.pattern.permute.xlu0 0
      %1331 = vperm.xlu0 %1330, %v1119
      %v1332 = vpop.permute.xlu0 %1331
      %1333 = vset.pattern.permute.xlu0 0
      %1334 = vperm.xlu0 %1333, %v1120
      %v1335 = vpop.permute.xlu0 %1334
      %1336 = vset.pattern.permute.xlu0 0
      %1337 = vperm.xlu0 %1336, %v1121
      %v1338 = vpop.permute.xlu0 %1337
      %1339 = vset.pattern.permute.xlu0 0
      %1340 = vperm.xlu0 %1339, %v1122
      %v1341 = vpop.permute.xlu0 %1340
      %1342 = vset.pattern.permute.xlu0 0
      %1343 = vperm.xlu0 %1342, %v1123
      %v1344 = vpop.permute.xlu0 %1343
      %1345 = vset.pattern.permute.xlu0 0
      %1346 = vperm.xlu0 %1345, %v1124
      %v1347 = vpop.permute.xlu0 %1346
      %1348 = vset.pattern.permute.xlu0 0
      %1349 = vperm.xlu0 %1348, %v1125
      %v1350 = vpop.permute.xlu0 %1349
      %1351 = vset.pattern.permute.xlu0 0
      %1352 = vperm.xlu0 %1351, %v1126
      %v1353 = vpop.permute.xlu0 %1352
      %1354 = vset.pattern.permute.xlu0 0
      %1355 = vperm.xlu0 %1354, %v1127
      %v1356 = vpop.permute.xlu0 %1355
      %1357 = vset.pattern.permute.xlu0 0
      %1358 = vperm.xlu0 %1357, %v1128
      %v1359 = vpop.permute.xlu0 %1358
      %1360 = vset.pattern.permute.xlu0 0
      %1361 = vperm.xlu0 %1360, %v1129
      %v1362 = vpop.permute.xlu0 %1361
      %1363 = vset.pattern.permute.xlu0 0
      %1364 = vperm.xlu0 %1363, %v1130
      %v1365 = vpop.permute.xlu0 %1364
      %1366 = vset.pattern.permute.xlu0 0
      %1367 = vperm.xlu0 %1366, %v1131
      %v1368 = vpop.permute.xlu0 %1367
      %1369 = vset.pattern.permute.xlu0 0
      %1370 = vperm.xlu0 %1369, %v1132
      %v1371 = vpop.permute.xlu0 %1370
      %1372 = vset.pattern.permute.xlu0 0
      %1373 = vperm.xlu0 %1372, %v1133
      %v1374 = vpop.permute.xlu0 %1373
      %1375 = vset.pattern.permute.xlu0 0
      %1376 = vperm.xlu0 %1375, %v1134
      %v1377 = vpop.permute.xlu0 %1376
      %1378 = vset.pattern.permute.xlu0 0
      %1379 = vperm.xlu0 %1378, %v1135
      %v1380 = vpop.permute.xlu0 %1379
      %1381 = vset.pattern.permute.xlu0 0
      %1382 = vperm.xlu0 %1381, %v1136
      %v1383 = vpop.permute.xlu0 %1382
      %1384 = vset.pattern.permute.xlu0 0
      %1385 = vperm.xlu0 %1384, %v1137
      %v1386 = vpop.permute.xlu0 %1385
      %1387 = vset.pattern.permute.xlu0 0
      %1388 = vperm.xlu0 %1387, %v1138
      %v1389 = vpop.permute.xlu0 %1388
      %1390 = vset.pattern.permute.xlu0 0
      %1391 = vperm.xlu0 %1390, %v1139
      %v1392 = vpop.permute.xlu0 %1391
      %1393 = vset.pattern.permute.xlu0 0
      %1394 = vperm.xlu0 %1393, %v1140
      %v1395 = vpop.permute.xlu0 %1394
      %1396 = vset.pattern.permute.xlu0 0
      %1397 = vperm.xlu0 %1396, %v1141
      %v1398 = vpop.permute.xlu0 %1397
      %1399 = vset.pattern.permute.xlu0 0
      %1400 = vperm.xlu0 %1399, %v1142
      %v1401 = vpop.permute.xlu0 %1400
      %1402 = vset.pattern.permute.xlu0 0
      %1403 = vperm.xlu0 %1402, %v1143
      %v1404 = vpop.permute.xlu0 %1403
      %1405 = vset.pattern.permute.xlu0 0
      %1406 = vperm.xlu0 %1405, %v1144
      %v1407 = vpop.permute.xlu0 %1406
      %1408 = vset.pattern.permute.xlu0 0
      %1409 = vperm.xlu0 %1408, %v1145
      %v1410 = vpop.permute.xlu0 %1409
      %1411 = vset.pattern.permute.xlu0 0
      %1412 = vperm.xlu0 %1411, %v1146
      %v1413 = vpop.permute.xlu0 %1412
      %1414 = vset.pattern.permute.xlu0 0
      %1415 = vperm.xlu0 %1414, %v1147
      %v1416 = vpop.permute.xlu0 %1415
      %1417 = vset.pattern.permute.xlu0 0
      %1418 = vperm.xlu0 %1417, %v1148
      %v1419 = vpop.permute.xlu0 %1418
      %1420 = vset.pattern.permute.xlu0 0
      %1421 = vperm.xlu0 %1420, %v1149
      %v1422 = vpop.permute.xlu0 %1421
      %1423 = vset.pattern.permute.xlu0 0
      %1424 = vperm.xlu0 %1423, %v1150
      %v1425 = vpop.permute.xlu0 %1424
      %1426 = vset.pattern.permute.xlu0 0
      %1427 = vperm.xlu0 %1426, %v1151
      %v1428 = vpop.permute.xlu0 %1427
      %1429 = vset.pattern.permute.xlu0 0
      %1430 = vperm.xlu0 %1429, %v1152
      %v1431 = vpop.permute.xlu0 %1430
      %1432 = vset.pattern.permute.xlu0 0
      %1433 = vperm.xlu0 %1432, %v1153
      %v1434 = vpop.permute.xlu0 %1433
      %1435 = vset.pattern.permute.xlu0 0
      %1436 = vperm.xlu0 %1435, %v1154
      %v1437 = vpop.permute.xlu0 %1436
      %1438 = vset.pattern.permute.xlu0 0
      %1439 = vperm.xlu0 %1438, %v1155
      %v1440 = vpop.permute.xlu0 %1439
      %1441 = vset.pattern.permute.xlu0 0
      %1442 = vperm.xlu0 %1441, %v1156
      %v1443 = vpop.permute.xlu0 %1442
      %1444 = vset.pattern.permute.xlu0 0
      %1445 = vperm.xlu0 %1444, %v1157
      %v1446 = vpop.permute.xlu0 %1445
      %1447 = vset.pattern.permute.xlu0 0
      %1448 = vperm.xlu0 %1447, %v1158
      %v1449 = vpop.permute.xlu0 %1448
      %1450 = vset.pattern.permute.xlu0 0
      %1451 = vperm.xlu0 %1450, %v1159
      %v1452 = vpop.permute.xlu0 %1451
      %1453 = vset.pattern.permute.xlu0 0
      %1454 = vperm.xlu0 %1453, %v1160
      %v1455 = vpop.permute.xlu0 %1454
      %1456 = vset.pattern.permute.xlu0 0
      %1457 = vperm.xlu0 %1456, %v1161
      %v1458 = vpop.permute.xlu0 %1457
      %1459 = vset.pattern.permute.xlu0 0
      %1460 = vperm.xlu0 %1459, %v1162
      %v1461 = vpop.permute.xlu0 %1460
      %1462 = vset.pattern.permute.xlu0 0
      %1463 = vperm.xlu0 %1462, %v1163
      %v1464 = vpop.permute.xlu0 %1463
      %1465 = vset.pattern.permute.xlu0 0
      %1466 = vperm.xlu0 %1465, %v1164
      %v1467 = vpop.permute.xlu0 %1466
      %1468 = vset.pattern.permute.xlu0 0
      %1469 = vperm.xlu0 %1468, %v1165
      %v1470 = vpop.permute.xlu0 %1469
      %1471 = vset.pattern.permute.xlu0 0
      %1472 = vperm.xlu0 %1471, %v1166
      %v1473 = vpop.permute.xlu0 %1472
      %1474 = vset.pattern.permute.xlu0 0
      %1475 = vperm.xlu0 %1474, %v1167
      %v1476 = vpop.permute.xlu0 %1475
      %1477 = vset.pattern.permute.xlu0 0
      %1478 = vperm.xlu0 %1477, %v1168
      %v1479 = vpop.permute.xlu0 %1478
      %1480 = vset.pattern.permute.xlu0 0
      %1481 = vperm.xlu0 %1480, %v1169
      %v1482 = vpop.permute.xlu0 %1481
      %1483 = vset.pattern.permute.xlu0 0
      %1484 = vperm.xlu0 %1483, %v1170
      %v1485 = vpop.permute.xlu0 %1484
      %1486 = vset.pattern.permute.xlu0 0
      %1487 = vperm.xlu0 %1486, %v1171
      %v1488 = vpop.permute.xlu0 %1487
      %1489 = vset.pattern.permute.xlu0 0
      %1490 = vperm.xlu0 %1489, %v1172
      %v1491 = vpop.permute.xlu0 %1490
      %1492 = vset.pattern.permute.xlu0 0
      %1493 = vperm.xlu0 %1492, %v1173
      %v1494 = vpop.permute.xlu0 %1493
      %1495 = vset.pattern.permute.xlu0 0
      %1496 = vperm.xlu0 %1495, %v1174
      %v1497 = vpop.permute.xlu0 %1496
      %1498 = vset.pattern.permute.xlu0 0
      %1499 = vperm.xlu0 %1498, %v1175
      %v1500 = vpop.permute.xlu0 %1499
      %1501 = vset.pattern.permute.xlu0 0
      %1502 = vperm.xlu0 %1501, %v1176
      %v1503 = vpop.permute.xlu0 %1502
      %1504 = vset.pattern.permute.xlu0 0
      %1505 = vperm.xlu0 %1504, %v1177
      %v1506 = vpop.permute.xlu0 %1505
      %1507 = vset.pattern.permute.xlu0 0
      %1508 = vperm.xlu0 %1507, %v1178
      %v1509 = vpop.permute.xlu0 %1508
      %1510 = vset.pattern.permute.xlu0 0
      %1511 = vperm.xlu0 %1510, %v1179
      %v1512 = vpop.permute.xlu0 %1511
      %1513 = vset.pattern.permute.xlu0 0
      %1514 = vperm.xlu0 %1513, %v1180
      %v1515 = vpop.permute.xlu0 %1514
      %1516 = vset.pattern.permute.xlu0 0
      %1517 = vperm.xlu0 %1516, %v1181
      %v1518 = vpop.permute.xlu0 %1517
      %1519 = vset.pattern.permute.xlu0 0
      %1520 = vperm.xlu0 %1519, %v1182
      %v1521 = vpop.permute.xlu0 %1520
      %1522 = vset.pattern.permute.xlu0 0
      %1523 = vperm.xlu0 %1522, %v1183
      %v1524 = vpop.permute.xlu0 %1523
      %1525 = vset.pattern.permute.xlu0 0
      %1526 = vperm.xlu0 %1525, %v1184
      %v1527 = vpop.permute.xlu0 %1526
      %1528 = vset.pattern.permute.xlu0 0
      %1529 = vperm.xlu0 %1528, %v1185
      %v1530 = vpop.permute.xlu0 %1529
      %1531 = vset.pattern.permute.xlu0 0
      %1532 = vperm.xlu0 %1531, %v1186
      %v1533 = vpop.permute.xlu0 %1532
      %1534 = vset.pattern.permute.xlu0 0
      %1535 = vperm.xlu0 %1534, %v1187
      %v1536 = vpop.permute.xlu0 %1535
      %1537 = vset.pattern.permute.xlu0 0
      %1538 = vperm.xlu0 %1537, %v1188
      %v1539 = vpop.permute.xlu0 %1538
      %1540 = vset.pattern.permute.xlu0 0
      %1541 = vperm.xlu0 %1540, %v1189
      %v1542 = vpop.permute.xlu0 %1541
      %1543 = vset.pattern.permute.xlu0 0
      %1544 = vperm.xlu0 %1543, %v1190
      %v1545 = vpop.permute.xlu0 %1544
      %1546 = vset.pattern.permute.xlu0 0
      %1547 = vperm.xlu0 %1546, %v1191
      %v1548 = vpop.permute.xlu0 %1547
      %1549 = vset.pattern.permute.xlu0 0
      %1550 = vperm.xlu0 %1549, %v1192
      %v1551 = vpop.permute.xlu0 %1550
      %1552 = vset.pattern.permute.xlu0 0
      %1553 = vperm.xlu0 %1552, %v1193
      %v1554 = vpop.permute.xlu0 %1553
      %1555 = vset.pattern.permute.xlu0 0
      %1556 = vperm.xlu0 %1555, %v1194
      %v1557 = vpop.permute.xlu0 %1556
      %1558 = vset.pattern.permute.xlu0 0
      %1559 = vperm.xlu0 %1558, %v1195
      %v1560 = vpop.permute.xlu0 %1559
      %1561 = vset.pattern.permute.xlu0 0
      %1562 = vperm.xlu0 %1561, %v1196
      %v1563 = vpop.permute.xlu0 %1562
      %1564 = vset.pattern.permute.xlu0 0
      %1565 = vperm.xlu0 %1564, %v1197
      %v1566 = vpop.permute.xlu0 %1565
      %1567 = vset.pattern.permute.xlu0 0
      %1568 = vperm.xlu0 %1567, %v1198
      %v1569 = vpop.permute.xlu0 %1568
      %1570 = vset.pattern.permute.xlu0 0
      %1571 = vperm.xlu0 %1570, %v1199
      %v1572 = vpop.permute.xlu0 %1571
      %1573 = vset.pattern.permute.xlu0 0
      %1574 = vperm.xlu0 %1573, %v1200
      %v1575 = vpop.permute.xlu0 %1574
      %1576 = vset.pattern.permute.xlu0 0
      %1577 = vperm.xlu0 %1576, %v1201
      %v1578 = vpop.permute.xlu0 %1577
      %1579 = vset.pattern.permute.xlu0 0
      %1580 = vperm.xlu0 %1579, %v1202
      %v1581 = vpop.permute.xlu0 %1580
      %1582 = vset.pattern.permute.xlu0 0
      %1583 = vperm.xlu0 %1582, %v1203
      %v1584 = vpop.permute.xlu0 %1583
      %1585 = vset.pattern.permute.xlu0 0
      %1586 = vperm.xlu0 %1585, %v1204
      %v1587 = vpop.permute.xlu0 %1586
      %1588 = vset.pattern.permute.xlu0 0
      %1589 = vperm.xlu0 %1588, %v1205
      %v1590 = vpop.permute.xlu0 %1589
      %v1591 = vperm.slane %v1206, 0
      %v1592 = vadd.s32 %v1209, %v1591
      %v1593 = vadd.s32 %v1212, %v1591
      %v1594 = vadd.s32 %v1215, %v1591
      %v1595 = vadd.s32 %v1218, %v1591
      %v1596 = vadd.s32 %v1221, %v1591
      %v1597 = vadd.s32 %v1224, %v1591
      %v1598 = vadd.s32 %v1227, %v1591
      %v1599 = vadd.s32 %v1230, %v1591
      %v1600 = vadd.s32 %v1233, %v1591
      %v1601 = vadd.s32 %v1236, %v1591
      %v1602 = vadd.s32 %v1239, %v1591
      %v1603 = vadd.s32 %v1242, %v1591
      %v1604 = vadd.s32 %v1245, %v1591
      %v1605 = vadd.s32 %v1248, %v1591
      %v1606 = vadd.s32 %v1251, %v1591
      %v1607 = vadd.s32 %v1254, %v1591
      %v1608 = vadd.s32 %v1257, %v1591
      %v1609 = vadd.s32 %v1260, %v1591
      %v1610 = vadd.s32 %v1263, %v1591
      %v1611 = vadd.s32 %v1266, %v1591
      %v1612 = vadd.s32 %v1269, %v1591
      %v1613 = vadd.s32 %v1272, %v1591
      %v1614 = vadd.s32 %v1275, %v1591
      %v1615 = vadd.s32 %v1278, %v1591
      %v1616 = vadd.s32 %v1281, %v1591
      %v1617 = vadd.s32 %v1284, %v1591
      %v1618 = vadd.s32 %v1287, %v1591
      %v1619 = vadd.s32 %v1290, %v1591
      %v1620 = vadd.s32 %v1293, %v1591
      %v1621 = vadd.s32 %v1296, %v1591
      %v1622 = vadd.s32 %v1299, %v1591
      %v1623 = vadd.s32 %v1302, %v1591
      %v1624 = vadd.s32 %v1305, %v1591
      %v1625 = vadd.s32 %v1308, %v1591
      %v1626 = vadd.s32 %v1311, %v1591
      %v1627 = vadd.s32 %v1314, %v1591
      %v1628 = vadd.s32 %v1317, %v1591
      %v1629 = vadd.s32 %v1320, %v1591
      %v1630 = vadd.s32 %v1323, %v1591
      %v1631 = vadd.s32 %v1326, %v1591
      %v1632 = vadd.s32 %v1329, %v1591
      %v1633 = vadd.s32 %v1332, %v1591
      %v1634 = vadd.s32 %v1335, %v1591
      %v1635 = vadd.s32 %v1338, %v1591
      %v1636 = vadd.s32 %v1341, %v1591
      %v1637 = vadd.s32 %v1344, %v1591
      %v1638 = vadd.s32 %v1347, %v1591
      %v1639 = vadd.s32 %v1350, %v1591
      %v1640 = vadd.s32 %v1353, %v1591
      %v1641 = vadd.s32 %v1356, %v1591
      %v1642 = vadd.s32 %v1359, %v1591
      %v1643 = vadd.s32 %v1362, %v1591
      %v1644 = vadd.s32 %v1365, %v1591
      %v1645 = vadd.s32 %v1368, %v1591
      %v1646 = vadd.s32 %v1371, %v1591
      %v1647 = vadd.s32 %v1374, %v1591
      %v1648 = vadd.s32 %v1377, %v1591
      %v1649 = vadd.s32 %v1380, %v1591
      %v1650 = vadd.s32 %v1383, %v1591
      %v1651 = vadd.s32 %v1386, %v1591
      %v1652 = vadd.s32 %v1389, %v1591
      %v1653 = vadd.s32 %v1392, %v1591
      %v1654 = vadd.s32 %v1395, %v1591
      %v1655 = vadd.s32 %v1398, %v1591
      %v1656 = vadd.s32 %v1401, %v1591
      %v1657 = vadd.s32 %v1404, %v1591
      %v1658 = vadd.s32 %v1407, %v1591
      %v1659 = vadd.s32 %v1410, %v1591
      %v1660 = vadd.s32 %v1413, %v1591
      %v1661 = vadd.s32 %v1416, %v1591
      %v1662 = vadd.s32 %v1419, %v1591
      %v1663 = vadd.s32 %v1422, %v1591
      %v1664 = vadd.s32 %v1425, %v1591
      %v1665 = vadd.s32 %v1428, %v1591
      %v1666 = vadd.s32 %v1431, %v1591
      %v1667 = vadd.s32 %v1434, %v1591
      %v1668 = vadd.s32 %v1437, %v1591
      %v1669 = vadd.s32 %v1440, %v1591
      %v1670 = vadd.s32 %v1443, %v1591
      %v1671 = vadd.s32 %v1446, %v1591
      %v1672 = vadd.s32 %v1449, %v1591
      %v1673 = vadd.s32 %v1452, %v1591
      %v1674 = vadd.s32 %v1455, %v1591
      %v1675 = vadd.s32 %v1458, %v1591
      %v1676 = vadd.s32 %v1461, %v1591
      %v1677 = vadd.s32 %v1464, %v1591
      %v1678 = vadd.s32 %v1467, %v1591
      %v1679 = vadd.s32 %v1470, %v1591
      %v1680 = vadd.s32 %v1473, %v1591
      %v1681 = vadd.s32 %v1476, %v1591
      %v1682 = vadd.s32 %v1479, %v1591
      %v1683 = vadd.s32 %v1482, %v1591
      %v1684 = vadd.s32 %v1485, %v1591
      %v1685 = vadd.s32 %v1488, %v1591
      %v1686 = vadd.s32 %v1491, %v1591
      %v1687 = vadd.s32 %v1494, %v1591
      %v1688 = vadd.s32 %v1497, %v1591
      %v1689 = vadd.s32 %v1500, %v1591
      %v1690 = vadd.s32 %v1503, %v1591
      %v1691 = vadd.s32 %v1506, %v1591
      %v1692 = vadd.s32 %v1509, %v1591
      %v1693 = vadd.s32 %v1512, %v1591
      %v1694 = vadd.s32 %v1515, %v1591
      %v1695 = vadd.s32 %v1518, %v1591
      %v1696 = vadd.s32 %v1521, %v1591
      %v1697 = vadd.s32 %v1524, %v1591
      %v1698 = vadd.s32 %v1527, %v1591
      %v1699 = vadd.s32 %v1530, %v1591
      %v1700 = vadd.s32 %v1533, %v1591
      %v1701 = vadd.s32 %v1536, %v1591
      %v1702 = vadd.s32 %v1539, %v1591
      %v1703 = vadd.s32 %v1542, %v1591
      %v1704 = vadd.s32 %v1545, %v1591
      %v1705 = vadd.s32 %v1548, %v1591
      %v1706 = vadd.s32 %v1551, %v1591
      %v1707 = vadd.s32 %v1554, %v1591
      %v1708 = vadd.s32 %v1557, %v1591
      %v1709 = vadd.s32 %v1560, %v1591
      %v1710 = vadd.s32 %v1563, %v1591
      %v1711 = vadd.s32 %v1566, %v1591
      %v1712 = vadd.s32 %v1569, %v1591
      %v1713 = vadd.s32 %v1572, %v1591
      %v1714 = vadd.s32 %v1575, %v1591
      %v1715 = vadd.s32 %v1578, %v1591
      %v1716 = vadd.s32 %v1581, %v1591
      %v1717 = vadd.s32 %v1584, %v1591
      %v1718 = vadd.s32 %v1587, %v1591
      %v1719 = vadd.s32 %v1590, %v1591
      %vm1720 = vcmp.ge.s32.totalorder %v950, 0
      %vm1721 = vcmp.ge.s32.totalorder %v951, 0
      %vm1722 = vcmp.ge.s32.totalorder %v952, 0
      %vm1723 = vcmp.ge.s32.totalorder %v953, 0
      %vm1724 = vcmp.ge.s32.totalorder %v954, 0
      %vm1725 = vcmp.ge.s32.totalorder %v955, 0
      %vm1726 = vcmp.ge.s32.totalorder %v956, 0
      %vm1727 = vcmp.ge.s32.totalorder %v957, 0
      %vm1728 = vcmp.ge.s32.totalorder %v958, 0
      %vm1729 = vcmp.ge.s32.totalorder %v959, 0
      %vm1730 = vcmp.ge.s32.totalorder %v960, 0
      %vm1731 = vcmp.ge.s32.totalorder %v961, 0
      %vm1732 = vcmp.ge.s32.totalorder %v962, 0
      %vm1733 = vcmp.ge.s32.totalorder %v963, 0
      %vm1734 = vcmp.ge.s32.totalorder %v964, 0
      %vm1735 = vcmp.ge.s32.totalorder %v965, 0
      %vm1736 = vcmp.ge.s32.totalorder %v966, 0
      %vm1737 = vcmp.ge.s32.totalorder %v967, 0
      %vm1738 = vcmp.ge.s32.totalorder %v968, 0
      %vm1739 = vcmp.ge.s32.totalorder %v969, 0
      %vm1740 = vcmp.ge.s32.totalorder %v970, 0
      %vm1741 = vcmp.ge.s32.totalorder %v971, 0
      %vm1742 = vcmp.ge.s32.totalorder %v972, 0
      %vm1743 = vcmp.ge.s32.totalorder %v973, 0
      %vm1744 = vcmp.ge.s32.totalorder %v974, 0
      %vm1745 = vcmp.ge.s32.totalorder %v975, 0
      %vm1746 = vcmp.ge.s32.totalorder %v976, 0
      %vm1747 = vcmp.ge.s32.totalorder %v977, 0
      %vm1748 = vcmp.ge.s32.totalorder %v978, 0
      %vm1749 = vcmp.ge.s32.totalorder %v979, 0
      %vm1750 = vcmp.ge.s32.totalorder %v980, 0
      %vm1751 = vcmp.ge.s32.totalorder %v981, 0
      %vm1752 = vcmp.ge.s32.totalorder %v982, 0
      %vm1753 = vcmp.ge.s32.totalorder %v983, 0
      %vm1754 = vcmp.ge.s32.totalorder %v984, 0
      %vm1755 = vcmp.ge.s32.totalorder %v985, 0
      %vm1756 = vcmp.ge.s32.totalorder %v986, 0
      %vm1757 = vcmp.ge.s32.totalorder %v987, 0
      %vm1758 = vcmp.ge.s32.totalorder %v988, 0
      %vm1759 = vcmp.ge.s32.totalorder %v989, 0
      %vm1760 = vcmp.ge.s32.totalorder %v990, 0
      %vm1761 = vcmp.ge.s32.totalorder %v991, 0
      %vm1762 = vcmp.ge.s32.totalorder %v992, 0
      %vm1763 = vcmp.ge.s32.totalorder %v993, 0
      %vm1764 = vcmp.ge.s32.totalorder %v994, 0
      %vm1765 = vcmp.ge.s32.totalorder %v995, 0
      %vm1766 = vcmp.ge.s32.totalorder %v996, 0
      %vm1767 = vcmp.ge.s32.totalorder %v997, 0
      %vm1768 = vcmp.ge.s32.totalorder %v998, 0
      %vm1769 = vcmp.ge.s32.totalorder %v999, 0
      %vm1770 = vcmp.ge.s32.totalorder %v1000, 0
      %vm1771 = vcmp.ge.s32.totalorder %v1001, 0
      %vm1772 = vcmp.ge.s32.totalorder %v1002, 0
      %vm1773 = vcmp.ge.s32.totalorder %v1003, 0
      %vm1774 = vcmp.ge.s32.totalorder %v1004, 0
      %vm1775 = vcmp.ge.s32.totalorder %v1005, 0
      %vm1776 = vcmp.ge.s32.totalorder %v1006, 0
      %vm1777 = vcmp.ge.s32.totalorder %v1007, 0
      %vm1778 = vcmp.ge.s32.totalorder %v1008, 0
      %vm1779 = vcmp.ge.s32.totalorder %v1009, 0
      %vm1780 = vcmp.ge.s32.totalorder %v1010, 0
      %vm1781 = vcmp.ge.s32.totalorder %v1011, 0
      %vm1782 = vcmp.ge.s32.totalorder %v1012, 0
      %vm1783 = vcmp.ge.s32.totalorder %v1013, 0
      %vm1784 = vcmp.ge.s32.totalorder %v1014, 0
      %vm1785 = vcmp.ge.s32.totalorder %v1015, 0
      %vm1786 = vcmp.ge.s32.totalorder %v1016, 0
      %vm1787 = vcmp.ge.s32.totalorder %v1017, 0
      %vm1788 = vcmp.ge.s32.totalorder %v1018, 0
      %vm1789 = vcmp.ge.s32.totalorder %v1019, 0
      %vm1790 = vcmp.ge.s32.totalorder %v1020, 0
      %vm1791 = vcmp.ge.s32.totalorder %v1021, 0
      %vm1792 = vcmp.ge.s32.totalorder %v1022, 0
      %vm1793 = vcmp.ge.s32.totalorder %v1023, 0
      %vm1794 = vcmp.ge.s32.totalorder %v1024, 0
      %vm1795 = vcmp.ge.s32.totalorder %v1025, 0
      %vm1796 = vcmp.ge.s32.totalorder %v1026, 0
      %vm1797 = vcmp.ge.s32.totalorder %v1027, 0
      %vm1798 = vcmp.ge.s32.totalorder %v1028, 0
      %vm1799 = vcmp.ge.s32.totalorder %v1029, 0
      %vm1800 = vcmp.ge.s32.totalorder %v1030, 0
      %vm1801 = vcmp.ge.s32.totalorder %v1031, 0
      %vm1802 = vcmp.ge.s32.totalorder %v1032, 0
      %vm1803 = vcmp.ge.s32.totalorder %v1033, 0
      %vm1804 = vcmp.ge.s32.totalorder %v1034, 0
      %vm1805 = vcmp.ge.s32.totalorder %v1035, 0
      %vm1806 = vcmp.ge.s32.totalorder %v1036, 0
      %vm1807 = vcmp.ge.s32.totalorder %v1037, 0
      %vm1808 = vcmp.ge.s32.totalorder %v1038, 0
      %vm1809 = vcmp.ge.s32.totalorder %v1039, 0
      %vm1810 = vcmp.ge.s32.totalorder %v1040, 0
      %vm1811 = vcmp.ge.s32.totalorder %v1041, 0
      %vm1812 = vcmp.ge.s32.totalorder %v1042, 0
      %vm1813 = vcmp.ge.s32.totalorder %v1043, 0
      %vm1814 = vcmp.ge.s32.totalorder %v1044, 0
      %vm1815 = vcmp.ge.s32.totalorder %v1045, 0
      %vm1816 = vcmp.ge.s32.totalorder %v1046, 0
      %vm1817 = vcmp.ge.s32.totalorder %v1047, 0
      %vm1818 = vcmp.ge.s32.totalorder %v1048, 0
      %vm1819 = vcmp.ge.s32.totalorder %v1049, 0
      %vm1820 = vcmp.ge.s32.totalorder %v1050, 0
      %vm1821 = vcmp.ge.s32.totalorder %v1051, 0
      %vm1822 = vcmp.ge.s32.totalorder %v1052, 0
      %vm1823 = vcmp.ge.s32.totalorder %v1053, 0
      %vm1824 = vcmp.ge.s32.totalorder %v1054, 0
      %vm1825 = vcmp.ge.s32.totalorder %v1055, 0
      %vm1826 = vcmp.ge.s32.totalorder %v1056, 0
      %vm1827 = vcmp.ge.s32.totalorder %v1057, 0
      %vm1828 = vcmp.ge.s32.totalorder %v1058, 0
      %vm1829 = vcmp.ge.s32.totalorder %v1059, 0
      %vm1830 = vcmp.ge.s32.totalorder %v1060, 0
      %vm1831 = vcmp.ge.s32.totalorder %v1061, 0
      %vm1832 = vcmp.ge.s32.totalorder %v1062, 0
      %vm1833 = vcmp.ge.s32.totalorder %v1063, 0
      %vm1834 = vcmp.ge.s32.totalorder %v1064, 0
      %vm1835 = vcmp.ge.s32.totalorder %v1065, 0
      %vm1836 = vcmp.ge.s32.totalorder %v1066, 0
      %vm1837 = vcmp.ge.s32.totalorder %v1067, 0
      %vm1838 = vcmp.ge.s32.totalorder %v1068, 0
      %vm1839 = vcmp.ge.s32.totalorder %v1069, 0
      %vm1840 = vcmp.ge.s32.totalorder %v1070, 0
      %vm1841 = vcmp.ge.s32.totalorder %v1071, 0
      %vm1842 = vcmp.ge.s32.totalorder %v1072, 0
      %vm1843 = vcmp.ge.s32.totalorder %v1073, 0
      %vm1844 = vcmp.ge.s32.totalorder %v1074, 0
      %vm1845 = vcmp.ge.s32.totalorder %v1075, 0
      %vm1846 = vcmp.ge.s32.totalorder %v1076, 0
      %vm1847 = vcmp.ge.s32.totalorder %v1077, 0
      %vm1848 = vcmp.lt.s32.totalorder %v950, 32
      %vm1849 = vcmp.lt.s32.totalorder %v951, 32
      %vm1850 = vcmp.lt.s32.totalorder %v952, 32
      %vm1851 = vcmp.lt.s32.totalorder %v953, 32
      %vm1852 = vcmp.lt.s32.totalorder %v954, 32
      %vm1853 = vcmp.lt.s32.totalorder %v955, 32
      %vm1854 = vcmp.lt.s32.totalorder %v956, 32
      %vm1855 = vcmp.lt.s32.totalorder %v957, 32
      %vm1856 = vcmp.lt.s32.totalorder %v958, 32
      %vm1857 = vcmp.lt.s32.totalorder %v959, 32
      %vm1858 = vcmp.lt.s32.totalorder %v960, 32
      %vm1859 = vcmp.lt.s32.totalorder %v961, 32
      %vm1860 = vcmp.lt.s32.totalorder %v962, 32
      %vm1861 = vcmp.lt.s32.totalorder %v963, 32
      %vm1862 = vcmp.lt.s32.totalorder %v964, 32
      %vm1863 = vcmp.lt.s32.totalorder %v965, 32
      %vm1864 = vcmp.lt.s32.totalorder %v966, 32
      %vm1865 = vcmp.lt.s32.totalorder %v967, 32
      %vm1866 = vcmp.lt.s32.totalorder %v968, 32
      %vm1867 = vcmp.lt.s32.totalorder %v969, 32
      %vm1868 = vcmp.lt.s32.totalorder %v970, 32
      %vm1869 = vcmp.lt.s32.totalorder %v971, 32
      %vm1870 = vcmp.lt.s32.totalorder %v972, 32
      %vm1871 = vcmp.lt.s32.totalorder %v973, 32
      %vm1872 = vcmp.lt.s32.totalorder %v974, 32
      %vm1873 = vcmp.lt.s32.totalorder %v975, 32
      %vm1874 = vcmp.lt.s32.totalorder %v976, 32
      %vm1875 = vcmp.lt.s32.totalorder %v977, 32
      %vm1876 = vcmp.lt.s32.totalorder %v978, 32
      %vm1877 = vcmp.lt.s32.totalorder %v979, 32
      %vm1878 = vcmp.lt.s32.totalorder %v980, 32
      %vm1879 = vcmp.lt.s32.totalorder %v981, 32
      %vm1880 = vcmp.lt.s32.totalorder %v982, 32
      %vm1881 = vcmp.lt.s32.totalorder %v983, 32
      %vm1882 = vcmp.lt.s32.totalorder %v984, 32
      %vm1883 = vcmp.lt.s32.totalorder %v985, 32
      %vm1884 = vcmp.lt.s32.totalorder %v986, 32
      %vm1885 = vcmp.lt.s32.totalorder %v987, 32
      %vm1886 = vcmp.lt.s32.totalorder %v988, 32
      %vm1887 = vcmp.lt.s32.totalorder %v989, 32
      %vm1888 = vcmp.lt.s32.totalorder %v990, 32
      %vm1889 = vcmp.lt.s32.totalorder %v991, 32
      %vm1890 = vcmp.lt.s32.totalorder %v992, 32
      %vm1891 = vcmp.lt.s32.totalorder %v993, 32
      %vm1892 = vcmp.lt.s32.totalorder %v994, 32
      %vm1893 = vcmp.lt.s32.totalorder %v995, 32
      %vm1894 = vcmp.lt.s32.totalorder %v996, 32
      %vm1895 = vcmp.lt.s32.totalorder %v997, 32
      %vm1896 = vcmp.lt.s32.totalorder %v998, 32
      %vm1897 = vcmp.lt.s32.totalorder %v999, 32
      %vm1898 = vcmp.lt.s32.totalorder %v1000, 32
      %vm1899 = vcmp.lt.s32.totalorder %v1001, 32
      %vm1900 = vcmp.lt.s32.totalorder %v1002, 32
      %vm1901 = vcmp.lt.s32.totalorder %v1003, 32
      %vm1902 = vcmp.lt.s32.totalorder %v1004, 32
      %vm1903 = vcmp.lt.s32.totalorder %v1005, 32
      %vm1904 = vcmp.lt.s32.totalorder %v1006, 32
      %vm1905 = vcmp.lt.s32.totalorder %v1007, 32
      %vm1906 = vcmp.lt.s32.totalorder %v1008, 32
      %vm1907 = vcmp.lt.s32.totalorder %v1009, 32
      %vm1908 = vcmp.lt.s32.totalorder %v1010, 32
      %vm1909 = vcmp.lt.s32.totalorder %v1011, 32
      %vm1910 = vcmp.lt.s32.totalorder %v1012, 32
      %vm1911 = vcmp.lt.s32.totalorder %v1013, 32
      %vm1912 = vcmp.lt.s32.totalorder %v1014, 32
      %vm1913 = vcmp.lt.s32.totalorder %v1015, 32
      %vm1914 = vcmp.lt.s32.totalorder %v1016, 32
      %vm1915 = vcmp.lt.s32.totalorder %v1017, 32
      %vm1916 = vcmp.lt.s32.totalorder %v1018, 32
      %vm1917 = vcmp.lt.s32.totalorder %v1019, 32
      %vm1918 = vcmp.lt.s32.totalorder %v1020, 32
      %vm1919 = vcmp.lt.s32.totalorder %v1021, 32
      %vm1920 = vcmp.lt.s32.totalorder %v1022, 32
      %vm1921 = vcmp.lt.s32.totalorder %v1023, 32
      %vm1922 = vcmp.lt.s32.totalorder %v1024, 32
      %vm1923 = vcmp.lt.s32.totalorder %v1025, 32
      %vm1924 = vcmp.lt.s32.totalorder %v1026, 32
      %vm1925 = vcmp.lt.s32.totalorder %v1027, 32
      %vm1926 = vcmp.lt.s32.totalorder %v1028, 32
      %vm1927 = vcmp.lt.s32.totalorder %v1029, 32
      %vm1928 = vcmp.lt.s32.totalorder %v1030, 32
      %vm1929 = vcmp.lt.s32.totalorder %v1031, 32
      %vm1930 = vcmp.lt.s32.totalorder %v1032, 32
      %vm1931 = vcmp.lt.s32.totalorder %v1033, 32
      %vm1932 = vcmp.lt.s32.totalorder %v1034, 32
      %vm1933 = vcmp.lt.s32.totalorder %v1035, 32
      %vm1934 = vcmp.lt.s32.totalorder %v1036, 32
      %vm1935 = vcmp.lt.s32.totalorder %v1037, 32
      %vm1936 = vcmp.lt.s32.totalorder %v1038, 32
      %vm1937 = vcmp.lt.s32.totalorder %v1039, 32
      %vm1938 = vcmp.lt.s32.totalorder %v1040, 32
      %vm1939 = vcmp.lt.s32.totalorder %v1041, 32
      %vm1940 = vcmp.lt.s32.totalorder %v1042, 32
      %vm1941 = vcmp.lt.s32.totalorder %v1043, 32
      %vm1942 = vcmp.lt.s32.totalorder %v1044, 32
      %vm1943 = vcmp.lt.s32.totalorder %v1045, 32
      %vm1944 = vcmp.lt.s32.totalorder %v1046, 32
      %vm1945 = vcmp.lt.s32.totalorder %v1047, 32
      %vm1946 = vcmp.lt.s32.totalorder %v1048, 32
      %vm1947 = vcmp.lt.s32.totalorder %v1049, 32
      %vm1948 = vcmp.lt.s32.totalorder %v1050, 32
      %vm1949 = vcmp.lt.s32.totalorder %v1051, 32
      %vm1950 = vcmp.lt.s32.totalorder %v1052, 32
      %vm1951 = vcmp.lt.s32.totalorder %v1053, 32
      %vm1952 = vcmp.lt.s32.totalorder %v1054, 32
      %vm1953 = vcmp.lt.s32.totalorder %v1055, 32
      %vm1954 = vcmp.lt.s32.totalorder %v1056, 32
      %vm1955 = vcmp.lt.s32.totalorder %v1057, 32
      %vm1956 = vcmp.lt.s32.totalorder %v1058, 32
      %vm1957 = vcmp.lt.s32.totalorder %v1059, 32
      %vm1958 = vcmp.lt.s32.totalorder %v1060, 32
      %vm1959 = vcmp.lt.s32.totalorder %v1061, 32
      %vm1960 = vcmp.lt.s32.totalorder %v1062, 32
      %vm1961 = vcmp.lt.s32.totalorder %v1063, 32
      %vm1962 = vcmp.lt.s32.totalorder %v1064, 32
      %vm1963 = vcmp.lt.s32.totalorder %v1065, 32
      %vm1964 = vcmp.lt.s32.totalorder %v1066, 32
      %vm1965 = vcmp.lt.s32.totalorder %v1067, 32
      %vm1966 = vcmp.lt.s32.totalorder %v1068, 32
      %vm1967 = vcmp.lt.s32.totalorder %v1069, 32
      %vm1968 = vcmp.lt.s32.totalorder %v1070, 32
      %vm1969 = vcmp.lt.s32.totalorder %v1071, 32
      %vm1970 = vcmp.lt.s32.totalorder %v1072, 32
      %vm1971 = vcmp.lt.s32.totalorder %v1073, 32
      %vm1972 = vcmp.lt.s32.totalorder %v1074, 32
      %vm1973 = vcmp.lt.s32.totalorder %v1075, 32
      %vm1974 = vcmp.lt.s32.totalorder %v1076, 32
      %vm1975 = vcmp.lt.s32.totalorder %v1077, 32
      %vm1976 = vmand %vm1720, %vm1848
      %vm1977 = vmand %vm1721, %vm1849
      %vm1978 = vmand %vm1722, %vm1850
      %vm1979 = vmand %vm1723, %vm1851
      %vm1980 = vmand %vm1724, %vm1852
      %vm1981 = vmand %vm1725, %vm1853
      %vm1982 = vmand %vm1726, %vm1854
      %vm1983 = vmand %vm1727, %vm1855
      %vm1984 = vmand %vm1728, %vm1856
      %vm1985 = vmand %vm1729, %vm1857
      %vm1986 = vmand %vm1730, %vm1858
      %vm1987 = vmand %vm1731, %vm1859
      %vm1988 = vmand %vm1732, %vm1860
      %vm1989 = vmand %vm1733, %vm1861
      %vm1990 = vmand %vm1734, %vm1862
      %vm1991 = vmand %vm1735, %vm1863
      %vm1992 = vmand %vm1736, %vm1864
      %vm1993 = vmand %vm1737, %vm1865
      %vm1994 = vmand %vm1738, %vm1866
      %vm1995 = vmand %vm1739, %vm1867
      %vm1996 = vmand %vm1740, %vm1868
      %vm1997 = vmand %vm1741, %vm1869
      %vm1998 = vmand %vm1742, %vm1870
      %vm1999 = vmand %vm1743, %vm1871
      %vm2000 = vmand %vm1744, %vm1872
      %vm2001 = vmand %vm1745, %vm1873
      %vm2002 = vmand %vm1746, %vm1874
      %vm2003 = vmand %vm1747, %vm1875
      %vm2004 = vmand %vm1748, %vm1876
      %vm2005 = vmand %vm1749, %vm1877
      %vm2006 = vmand %vm1750, %vm1878
      %vm2007 = vmand %vm1751, %vm1879
      %vm2008 = vmand %vm1752, %vm1880
      %vm2009 = vmand %vm1753, %vm1881
      %vm2010 = vmand %vm1754, %vm1882
      %vm2011 = vmand %vm1755, %vm1883
      %vm2012 = vmand %vm1756, %vm1884
      %vm2013 = vmand %vm1757, %vm1885
      %vm2014 = vmand %vm1758, %vm1886
      %vm2015 = vmand %vm1759, %vm1887
      %vm2016 = vmand %vm1760, %vm1888
      %vm2017 = vmand %vm1761, %vm1889
      %vm2018 = vmand %vm1762, %vm1890
      %vm2019 = vmand %vm1763, %vm1891
      %vm2020 = vmand %vm1764, %vm1892
      %vm2021 = vmand %vm1765, %vm1893
      %vm2022 = vmand %vm1766, %vm1894
      %vm2023 = vmand %vm1767, %vm1895
      %vm2024 = vmand %vm1768, %vm1896
      %vm2025 = vmand %vm1769, %vm1897
      %vm2026 = vmand %vm1770, %vm1898
      %vm2027 = vmand %vm1771, %vm1899
      %vm2028 = vmand %vm1772, %vm1900
      %vm2029 = vmand %vm1773, %vm1901
      %vm2030 = vmand %vm1774, %vm1902
      %vm2031 = vmand %vm1775, %vm1903
      %vm2032 = vmand %vm1776, %vm1904
      %vm2033 = vmand %vm1777, %vm1905
      %vm2034 = vmand %vm1778, %vm1906
      %vm2035 = vmand %vm1779, %vm1907
      %vm2036 = vmand %vm1780, %vm1908
      %vm2037 = vmand %vm1781, %vm1909
      %vm2038 = vmand %vm1782, %vm1910
      %vm2039 = vmand %vm1783, %vm1911
      %vm2040 = vmand %vm1784, %vm1912
      %vm2041 = vmand %vm1785, %vm1913
      %vm2042 = vmand %vm1786, %vm1914
      %vm2043 = vmand %vm1787, %vm1915
      %vm2044 = vmand %vm1788, %vm1916
      %vm2045 = vmand %vm1789, %vm1917
      %vm2046 = vmand %vm1790, %vm1918
      %vm2047 = vmand %vm1791, %vm1919
      %vm2048 = vmand %vm1792, %vm1920
      %vm2049 = vmand %vm1793, %vm1921
      %vm2050 = vmand %vm1794, %vm1922
      %vm2051 = vmand %vm1795, %vm1923
      %vm2052 = vmand %vm1796, %vm1924
      %vm2053 = vmand %vm1797, %vm1925
      %vm2054 = vmand %vm1798, %vm1926
      %vm2055 = vmand %vm1799, %vm1927
      %vm2056 = vmand %vm1800, %vm1928
      %vm2057 = vmand %vm1801, %vm1929
      %vm2058 = vmand %vm1802, %vm1930
      %vm2059 = vmand %vm1803, %vm1931
      %vm2060 = vmand %vm1804, %vm1932
      %vm2061 = vmand %vm1805, %vm1933
      %vm2062 = vmand %vm1806, %vm1934
      %vm2063 = vmand %vm1807, %vm1935
      %vm2064 = vmand %vm1808, %vm1936
      %vm2065 = vmand %vm1809, %vm1937
      %vm2066 = vmand %vm1810, %vm1938
      %vm2067 = vmand %vm1811, %vm1939
      %vm2068 = vmand %vm1812, %vm1940
      %vm2069 = vmand %vm1813, %vm1941
      %vm2070 = vmand %vm1814, %vm1942
      %vm2071 = vmand %vm1815, %vm1943
      %vm2072 = vmand %vm1816, %vm1944
      %vm2073 = vmand %vm1817, %vm1945
      %vm2074 = vmand %vm1818, %vm1946
      %vm2075 = vmand %vm1819, %vm1947
      %vm2076 = vmand %vm1820, %vm1948
      %vm2077 = vmand %vm1821, %vm1949
      %vm2078 = vmand %vm1822, %vm1950
      %vm2079 = vmand %vm1823, %vm1951
      %vm2080 = vmand %vm1824, %vm1952
      %vm2081 = vmand %vm1825, %vm1953
      %vm2082 = vmand %vm1826, %vm1954
      %vm2083 = vmand %vm1827, %vm1955
      %vm2084 = vmand %vm1828, %vm1956
      %vm2085 = vmand %vm1829, %vm1957
      %vm2086 = vmand %vm1830, %vm1958
      %vm2087 = vmand %vm1831, %vm1959
      %vm2088 = vmand %vm1832, %vm1960
      %vm2089 = vmand %vm1833, %vm1961
      %vm2090 = vmand %vm1834, %vm1962
      %vm2091 = vmand %vm1835, %vm1963
      %vm2092 = vmand %vm1836, %vm1964
      %vm2093 = vmand %vm1837, %vm1965
      %vm2094 = vmand %vm1838, %vm1966
      %vm2095 = vmand %vm1839, %vm1967
      %vm2096 = vmand %vm1840, %vm1968
      %vm2097 = vmand %vm1841, %vm1969
      %vm2098 = vmand %vm1842, %vm1970
      %vm2099 = vmand %vm1843, %vm1971
      %vm2100 = vmand %vm1844, %vm1972
      %vm2101 = vmand %vm1845, %vm1973
      %vm2102 = vmand %vm1846, %vm1974
      %vm2103 = vmand %vm1847, %vm1975
      %vm2104 = vcmp.ge.s32.totalorder %v1592, 0
      %vm2105 = vcmp.ge.s32.totalorder %v1593, 0
      %vm2106 = vcmp.ge.s32.totalorder %v1594, 0
      %vm2107 = vcmp.ge.s32.totalorder %v1595, 0
      %vm2108 = vcmp.ge.s32.totalorder %v1596, 0
      %vm2109 = vcmp.ge.s32.totalorder %v1597, 0
      %vm2110 = vcmp.ge.s32.totalorder %v1598, 0
      %vm2111 = vcmp.ge.s32.totalorder %v1599, 0
      %vm2112 = vcmp.ge.s32.totalorder %v1600, 0
      %vm2113 = vcmp.ge.s32.totalorder %v1601, 0
      %vm2114 = vcmp.ge.s32.totalorder %v1602, 0
      %vm2115 = vcmp.ge.s32.totalorder %v1603, 0
      %vm2116 = vcmp.ge.s32.totalorder %v1604, 0
      %vm2117 = vcmp.ge.s32.totalorder %v1605, 0
      %vm2118 = vcmp.ge.s32.totalorder %v1606, 0
      %vm2119 = vcmp.ge.s32.totalorder %v1607, 0
      %vm2120 = vcmp.ge.s32.totalorder %v1608, 0
      %vm2121 = vcmp.ge.s32.totalorder %v1609, 0
      %vm2122 = vcmp.ge.s32.totalorder %v1610, 0
      %vm2123 = vcmp.ge.s32.totalorder %v1611, 0
      %vm2124 = vcmp.ge.s32.totalorder %v1612, 0
      %vm2125 = vcmp.ge.s32.totalorder %v1613, 0
      %vm2126 = vcmp.ge.s32.totalorder %v1614, 0
      %vm2127 = vcmp.ge.s32.totalorder %v1615, 0
      %vm2128 = vcmp.ge.s32.totalorder %v1616, 0
      %vm2129 = vcmp.ge.s32.totalorder %v1617, 0
      %vm2130 = vcmp.ge.s32.totalorder %v1618, 0
      %vm2131 = vcmp.ge.s32.totalorder %v1619, 0
      %vm2132 = vcmp.ge.s32.totalorder %v1620, 0
      %vm2133 = vcmp.ge.s32.totalorder %v1621, 0
      %vm2134 = vcmp.ge.s32.totalorder %v1622, 0
      %vm2135 = vcmp.ge.s32.totalorder %v1623, 0
      %vm2136 = vcmp.ge.s32.totalorder %v1624, 0
      %vm2137 = vcmp.ge.s32.totalorder %v1625, 0
      %vm2138 = vcmp.ge.s32.totalorder %v1626, 0
      %vm2139 = vcmp.ge.s32.totalorder %v1627, 0
      %vm2140 = vcmp.ge.s32.totalorder %v1628, 0
      %vm2141 = vcmp.ge.s32.totalorder %v1629, 0
      %vm2142 = vcmp.ge.s32.totalorder %v1630, 0
      %vm2143 = vcmp.ge.s32.totalorder %v1631, 0
      %vm2144 = vcmp.ge.s32.totalorder %v1632, 0
      %vm2145 = vcmp.ge.s32.totalorder %v1633, 0
      %vm2146 = vcmp.ge.s32.totalorder %v1634, 0
      %vm2147 = vcmp.ge.s32.totalorder %v1635, 0
      %vm2148 = vcmp.ge.s32.totalorder %v1636, 0
      %vm2149 = vcmp.ge.s32.totalorder %v1637, 0
      %vm2150 = vcmp.ge.s32.totalorder %v1638, 0
      %vm2151 = vcmp.ge.s32.totalorder %v1639, 0
      %vm2152 = vcmp.ge.s32.totalorder %v1640, 0
      %vm2153 = vcmp.ge.s32.totalorder %v1641, 0
      %vm2154 = vcmp.ge.s32.totalorder %v1642, 0
      %vm2155 = vcmp.ge.s32.totalorder %v1643, 0
      %vm2156 = vcmp.ge.s32.totalorder %v1644, 0
      %vm2157 = vcmp.ge.s32.totalorder %v1645, 0
      %vm2158 = vcmp.ge.s32.totalorder %v1646, 0
      %vm2159 = vcmp.ge.s32.totalorder %v1647, 0
      %vm2160 = vcmp.ge.s32.totalorder %v1648, 0
      %vm2161 = vcmp.ge.s32.totalorder %v1649, 0
      %vm2162 = vcmp.ge.s32.totalorder %v1650, 0
      %vm2163 = vcmp.ge.s32.totalorder %v1651, 0
      %vm2164 = vcmp.ge.s32.totalorder %v1652, 0
      %vm2165 = vcmp.ge.s32.totalorder %v1653, 0
      %vm2166 = vcmp.ge.s32.totalorder %v1654, 0
      %vm2167 = vcmp.ge.s32.totalorder %v1655, 0
      %vm2168 = vcmp.ge.s32.totalorder %v1656, 0
      %vm2169 = vcmp.ge.s32.totalorder %v1657, 0
      %vm2170 = vcmp.ge.s32.totalorder %v1658, 0
      %vm2171 = vcmp.ge.s32.totalorder %v1659, 0
      %vm2172 = vcmp.ge.s32.totalorder %v1660, 0
      %vm2173 = vcmp.ge.s32.totalorder %v1661, 0
      %vm2174 = vcmp.ge.s32.totalorder %v1662, 0
      %vm2175 = vcmp.ge.s32.totalorder %v1663, 0
      %vm2176 = vcmp.ge.s32.totalorder %v1664, 0
      %vm2177 = vcmp.ge.s32.totalorder %v1665, 0
      %vm2178 = vcmp.ge.s32.totalorder %v1666, 0
      %vm2179 = vcmp.ge.s32.totalorder %v1667, 0
      %vm2180 = vcmp.ge.s32.totalorder %v1668, 0
      %vm2181 = vcmp.ge.s32.totalorder %v1669, 0
      %vm2182 = vcmp.ge.s32.totalorder %v1670, 0
      %vm2183 = vcmp.ge.s32.totalorder %v1671, 0
      %vm2184 = vcmp.ge.s32.totalorder %v1672, 0
      %vm2185 = vcmp.ge.s32.totalorder %v1673, 0
      %vm2186 = vcmp.ge.s32.totalorder %v1674, 0
      %vm2187 = vcmp.ge.s32.totalorder %v1675, 0
      %vm2188 = vcmp.ge.s32.totalorder %v1676, 0
      %vm2189 = vcmp.ge.s32.totalorder %v1677, 0
      %vm2190 = vcmp.ge.s32.totalorder %v1678, 0
      %vm2191 = vcmp.ge.s32.totalorder %v1679, 0
      %vm2192 = vcmp.ge.s32.totalorder %v1680, 0
      %vm2193 = vcmp.ge.s32.totalorder %v1681, 0
      %vm2194 = vcmp.ge.s32.totalorder %v1682, 0
      %vm2195 = vcmp.ge.s32.totalorder %v1683, 0
      %vm2196 = vcmp.ge.s32.totalorder %v1684, 0
      %vm2197 = vcmp.ge.s32.totalorder %v1685, 0
      %vm2198 = vcmp.ge.s32.totalorder %v1686, 0
      %vm2199 = vcmp.ge.s32.totalorder %v1687, 0
      %vm2200 = vcmp.ge.s32.totalorder %v1688, 0
      %vm2201 = vcmp.ge.s32.totalorder %v1689, 0
      %vm2202 = vcmp.ge.s32.totalorder %v1690, 0
      %vm2203 = vcmp.ge.s32.totalorder %v1691, 0
      %vm2204 = vcmp.ge.s32.totalorder %v1692, 0
      %vm2205 = vcmp.ge.s32.totalorder %v1693, 0
      %vm2206 = vcmp.ge.s32.totalorder %v1694, 0
      %vm2207 = vcmp.ge.s32.totalorder %v1695, 0
      %vm2208 = vcmp.ge.s32.totalorder %v1696, 0
      %vm2209 = vcmp.ge.s32.totalorder %v1697, 0
      %vm2210 = vcmp.ge.s32.totalorder %v1698, 0
      %vm2211 = vcmp.ge.s32.totalorder %v1699, 0
      %vm2212 = vcmp.ge.s32.totalorder %v1700, 0
      %vm2213 = vcmp.ge.s32.totalorder %v1701, 0
      %vm2214 = vcmp.ge.s32.totalorder %v1702, 0
      %vm2215 = vcmp.ge.s32.totalorder %v1703, 0
      %vm2216 = vcmp.ge.s32.totalorder %v1704, 0
      %vm2217 = vcmp.ge.s32.totalorder %v1705, 0
      %vm2218 = vcmp.ge.s32.totalorder %v1706, 0
      %vm2219 = vcmp.ge.s32.totalorder %v1707, 0
      %vm2220 = vcmp.ge.s32.totalorder %v1708, 0
      %vm2221 = vcmp.ge.s32.totalorder %v1709, 0
      %vm2222 = vcmp.ge.s32.totalorder %v1710, 0
      %vm2223 = vcmp.ge.s32.totalorder %v1711, 0
      %vm2224 = vcmp.ge.s32.totalorder %v1712, 0
      %vm2225 = vcmp.ge.s32.totalorder %v1713, 0
      %vm2226 = vcmp.ge.s32.totalorder %v1714, 0
      %vm2227 = vcmp.ge.s32.totalorder %v1715, 0
      %vm2228 = vcmp.ge.s32.totalorder %v1716, 0
      %vm2229 = vcmp.ge.s32.totalorder %v1717, 0
      %vm2230 = vcmp.ge.s32.totalorder %v1718, 0
      %vm2231 = vcmp.ge.s32.totalorder %v1719, 0
      %vm2232 = vmand %vm1976, %vm2104
      %vm2233 = vmand %vm1977, %vm2105
      %vm2234 = vmand %vm1978, %vm2106
      %vm2235 = vmand %vm1979, %vm2107
      %vm2236 = vmand %vm1980, %vm2108
      %vm2237 = vmand %vm1981, %vm2109
      %vm2238 = vmand %vm1982, %vm2110
      %vm2239 = vmand %vm1983, %vm2111
      %vm2240 = vmand %vm1984, %vm2112
      %vm2241 = vmand %vm1985, %vm2113
      %vm2242 = vmand %vm1986, %vm2114
      %vm2243 = vmand %vm1987, %vm2115
      %vm2244 = vmand %vm1988, %vm2116
      %vm2245 = vmand %vm1989, %vm2117
      %vm2246 = vmand %vm1990, %vm2118
      %vm2247 = vmand %vm1991, %vm2119
      %vm2248 = vmand %vm1992, %vm2120
      %vm2249 = vmand %vm1993, %vm2121
      %vm2250 = vmand %vm1994, %vm2122
      %vm2251 = vmand %vm1995, %vm2123
      %vm2252 = vmand %vm1996, %vm2124
      %vm2253 = vmand %vm1997, %vm2125
      %vm2254 = vmand %vm1998, %vm2126
      %vm2255 = vmand %vm1999, %vm2127
      %vm2256 = vmand %vm2000, %vm2128
      %vm2257 = vmand %vm2001, %vm2129
      %vm2258 = vmand %vm2002, %vm2130
      %vm2259 = vmand %vm2003, %vm2131
      %vm2260 = vmand %vm2004, %vm2132
      %vm2261 = vmand %vm2005, %vm2133
      %vm2262 = vmand %vm2006, %vm2134
      %vm2263 = vmand %vm2007, %vm2135
      %vm2264 = vmand %vm2008, %vm2136
      %vm2265 = vmand %vm2009, %vm2137
      %vm2266 = vmand %vm2010, %vm2138
      %vm2267 = vmand %vm2011, %vm2139
      %vm2268 = vmand %vm2012, %vm2140
      %vm2269 = vmand %vm2013, %vm2141
      %vm2270 = vmand %vm2014, %vm2142
      %vm2271 = vmand %vm2015, %vm2143
      %vm2272 = vmand %vm2016, %vm2144
      %vm2273 = vmand %vm2017, %vm2145
      %vm2274 = vmand %vm2018, %vm2146
      %vm2275 = vmand %vm2019, %vm2147
      %vm2276 = vmand %vm2020, %vm2148
      %vm2277 = vmand %vm2021, %vm2149
      %vm2278 = vmand %vm2022, %vm2150
      %vm2279 = vmand %vm2023, %vm2151
      %vm2280 = vmand %vm2024, %vm2152
      %vm2281 = vmand %vm2025, %vm2153
      %vm2282 = vmand %vm2026, %vm2154
      %vm2283 = vmand %vm2027, %vm2155
      %vm2284 = vmand %vm2028, %vm2156
      %vm2285 = vmand %vm2029, %vm2157
      %vm2286 = vmand %vm2030, %vm2158
      %vm2287 = vmand %vm2031, %vm2159
      %vm2288 = vmand %vm2032, %vm2160
      %vm2289 = vmand %vm2033, %vm2161
      %vm2290 = vmand %vm2034, %vm2162
      %vm2291 = vmand %vm2035, %vm2163
      %vm2292 = vmand %vm2036, %vm2164
      %vm2293 = vmand %vm2037, %vm2165
      %vm2294 = vmand %vm2038, %vm2166
      %vm2295 = vmand %vm2039, %vm2167
      %vm2296 = vmand %vm2040, %vm2168
      %vm2297 = vmand %vm2041, %vm2169
      %vm2298 = vmand %vm2042, %vm2170
      %vm2299 = vmand %vm2043, %vm2171
      %vm2300 = vmand %vm2044, %vm2172
      %vm2301 = vmand %vm2045, %vm2173
      %vm2302 = vmand %vm2046, %vm2174
      %vm2303 = vmand %vm2047, %vm2175
      %vm2304 = vmand %vm2048, %vm2176
      %vm2305 = vmand %vm2049, %vm2177
      %vm2306 = vmand %vm2050, %vm2178
      %vm2307 = vmand %vm2051, %vm2179
      %vm2308 = vmand %vm2052, %vm2180
      %vm2309 = vmand %vm2053, %vm2181
      %vm2310 = vmand %vm2054, %vm2182
      %vm2311 = vmand %vm2055, %vm2183
      %vm2312 = vmand %vm2056, %vm2184
      %vm2313 = vmand %vm2057, %vm2185
      %vm2314 = vmand %vm2058, %vm2186
      %vm2315 = vmand %vm2059, %vm2187
      %vm2316 = vmand %vm2060, %vm2188
      %vm2317 = vmand %vm2061, %vm2189
      %vm2318 = vmand %vm2062, %vm2190
      %vm2319 = vmand %vm2063, %vm2191
      %vm2320 = vmand %vm2064, %vm2192
      %vm2321 = vmand %vm2065, %vm2193
      %vm2322 = vmand %vm2066, %vm2194
      %vm2323 = vmand %vm2067, %vm2195
      %vm2324 = vmand %vm2068, %vm2196
      %vm2325 = vmand %vm2069, %vm2197
      %vm2326 = vmand %vm2070, %vm2198
      %vm2327 = vmand %vm2071, %vm2199
      %vm2328 = vmand %vm2072, %vm2200
      %vm2329 = vmand %vm2073, %vm2201
      %vm2330 = vmand %vm2074, %vm2202
      %vm2331 = vmand %vm2075, %vm2203
      %vm2332 = vmand %vm2076, %vm2204
      %vm2333 = vmand %vm2077, %vm2205
      %vm2334 = vmand %vm2078, %vm2206
      %vm2335 = vmand %vm2079, %vm2207
      %vm2336 = vmand %vm2080, %vm2208
      %vm2337 = vmand %vm2081, %vm2209
      %vm2338 = vmand %vm2082, %vm2210
      %vm2339 = vmand %vm2083, %vm2211
      %vm2340 = vmand %vm2084, %vm2212
      %vm2341 = vmand %vm2085, %vm2213
      %vm2342 = vmand %vm2086, %vm2214
      %vm2343 = vmand %vm2087, %vm2215
      %vm2344 = vmand %vm2088, %vm2216
      %vm2345 = vmand %vm2089, %vm2217
      %vm2346 = vmand %vm2090, %vm2218
      %vm2347 = vmand %vm2091, %vm2219
      %vm2348 = vmand %vm2092, %vm2220
      %vm2349 = vmand %vm2093, %vm2221
      %vm2350 = vmand %vm2094, %vm2222
      %vm2351 = vmand %vm2095, %vm2223
      %vm2352 = vmand %vm2096, %vm2224
      %vm2353 = vmand %vm2097, %vm2225
      %vm2354 = vmand %vm2098, %vm2226
      %vm2355 = vmand %vm2099, %vm2227
      %vm2356 = vmand %vm2100, %vm2228
      %vm2357 = vmand %vm2101, %vm2229
      %vm2358 = vmand %vm2102, %vm2230
      %vm2359 = vmand %vm2103, %vm2231
      %vm2360 = vcmp.lt.s32.totalorder %v1592, 32
      %vm2361 = vcmp.lt.s32.totalorder %v1593, 32
      %vm2362 = vcmp.lt.s32.totalorder %v1594, 32
      %vm2363 = vcmp.lt.s32.totalorder %v1595, 32
      %vm2364 = vcmp.lt.s32.totalorder %v1596, 32
      %vm2365 = vcmp.lt.s32.totalorder %v1597, 32
      %vm2366 = vcmp.lt.s32.totalorder %v1598, 32
      %vm2367 = vcmp.lt.s32.totalorder %v1599, 32
      %vm2368 = vcmp.lt.s32.totalorder %v1600, 32
      %vm2369 = vcmp.lt.s32.totalorder %v1601, 32
      %vm2370 = vcmp.lt.s32.totalorder %v1602, 32
      %vm2371 = vcmp.lt.s32.totalorder %v1603, 32
      %vm2372 = vcmp.lt.s32.totalorder %v1604, 32
      %vm2373 = vcmp.lt.s32.totalorder %v1605, 32
      %vm2374 = vcmp.lt.s32.totalorder %v1606, 32
      %vm2375 = vcmp.lt.s32.totalorder %v1607, 32
      %vm2376 = vcmp.lt.s32.totalorder %v1608, 32
      %vm2377 = vcmp.lt.s32.totalorder %v1609, 32
      %vm2378 = vcmp.lt.s32.totalorder %v1610, 32
      %vm2379 = vcmp.lt.s32.totalorder %v1611, 32
      %vm2380 = vcmp.lt.s32.totalorder %v1612, 32
      %vm2381 = vcmp.lt.s32.totalorder %v1613, 32
      %vm2382 = vcmp.lt.s32.totalorder %v1614, 32
      %vm2383 = vcmp.lt.s32.totalorder %v1615, 32
      %vm2384 = vcmp.lt.s32.totalorder %v1616, 32
      %vm2385 = vcmp.lt.s32.totalorder %v1617, 32
      %vm2386 = vcmp.lt.s32.totalorder %v1618, 32
      %vm2387 = vcmp.lt.s32.totalorder %v1619, 32
      %vm2388 = vcmp.lt.s32.totalorder %v1620, 32
      %vm2389 = vcmp.lt.s32.totalorder %v1621, 32
      %vm2390 = vcmp.lt.s32.totalorder %v1622, 32
      %vm2391 = vcmp.lt.s32.totalorder %v1623, 32
      %vm2392 = vcmp.lt.s32.totalorder %v1624, 32
      %vm2393 = vcmp.lt.s32.totalorder %v1625, 32
      %vm2394 = vcmp.lt.s32.totalorder %v1626, 32
      %vm2395 = vcmp.lt.s32.totalorder %v1627, 32
      %vm2396 = vcmp.lt.s32.totalorder %v1628, 32
      %vm2397 = vcmp.lt.s32.totalorder %v1629, 32
      %vm2398 = vcmp.lt.s32.totalorder %v1630, 32
      %vm2399 = vcmp.lt.s32.totalorder %v1631, 32
      %vm2400 = vcmp.lt.s32.totalorder %v1632, 32
      %vm2401 = vcmp.lt.s32.totalorder %v1633, 32
      %vm2402 = vcmp.lt.s32.totalorder %v1634, 32
      %vm2403 = vcmp.lt.s32.totalorder %v1635, 32
      %vm2404 = vcmp.lt.s32.totalorder %v1636, 32
      %vm2405 = vcmp.lt.s32.totalorder %v1637, 32
      %vm2406 = vcmp.lt.s32.totalorder %v1638, 32
      %vm2407 = vcmp.lt.s32.totalorder %v1639, 32
      %vm2408 = vcmp.lt.s32.totalorder %v1640, 32
      %vm2409 = vcmp.lt.s32.totalorder %v1641, 32
      %vm2410 = vcmp.lt.s32.totalorder %v1642, 32
      %vm2411 = vcmp.lt.s32.totalorder %v1643, 32
      %vm2412 = vcmp.lt.s32.totalorder %v1644, 32
      %vm2413 = vcmp.lt.s32.totalorder %v1645, 32
      %vm2414 = vcmp.lt.s32.totalorder %v1646, 32
      %vm2415 = vcmp.lt.s32.totalorder %v1647, 32
      %vm2416 = vcmp.lt.s32.totalorder %v1648, 32
      %vm2417 = vcmp.lt.s32.totalorder %v1649, 32
      %vm2418 = vcmp.lt.s32.totalorder %v1650, 32
      %vm2419 = vcmp.lt.s32.totalorder %v1651, 32
      %vm2420 = vcmp.lt.s32.totalorder %v1652, 32
      %vm2421 = vcmp.lt.s32.totalorder %v1653, 32
      %vm2422 = vcmp.lt.s32.totalorder %v1654, 32
      %vm2423 = vcmp.lt.s32.totalorder %v1655, 32
      %vm2424 = vcmp.lt.s32.totalorder %v1656, 32
      %vm2425 = vcmp.lt.s32.totalorder %v1657, 32
      %vm2426 = vcmp.lt.s32.totalorder %v1658, 32
      %vm2427 = vcmp.lt.s32.totalorder %v1659, 32
      %vm2428 = vcmp.lt.s32.totalorder %v1660, 32
      %vm2429 = vcmp.lt.s32.totalorder %v1661, 32
      %vm2430 = vcmp.lt.s32.totalorder %v1662, 32
      %vm2431 = vcmp.lt.s32.totalorder %v1663, 32
      %vm2432 = vcmp.lt.s32.totalorder %v1664, 32
      %vm2433 = vcmp.lt.s32.totalorder %v1665, 32
      %vm2434 = vcmp.lt.s32.totalorder %v1666, 32
      %vm2435 = vcmp.lt.s32.totalorder %v1667, 32
      %vm2436 = vcmp.lt.s32.totalorder %v1668, 32
      %vm2437 = vcmp.lt.s32.totalorder %v1669, 32
      %vm2438 = vcmp.lt.s32.totalorder %v1670, 32
      %vm2439 = vcmp.lt.s32.totalorder %v1671, 32
      %vm2440 = vcmp.lt.s32.totalorder %v1672, 32
      %vm2441 = vcmp.lt.s32.totalorder %v1673, 32
      %vm2442 = vcmp.lt.s32.totalorder %v1674, 32
      %vm2443 = vcmp.lt.s32.totalorder %v1675, 32
      %vm2444 = vcmp.lt.s32.totalorder %v1676, 32
      %vm2445 = vcmp.lt.s32.totalorder %v1677, 32
      %vm2446 = vcmp.lt.s32.totalorder %v1678, 32
      %vm2447 = vcmp.lt.s32.totalorder %v1679, 32
      %vm2448 = vcmp.lt.s32.totalorder %v1680, 32
      %vm2449 = vcmp.lt.s32.totalorder %v1681, 32
      %vm2450 = vcmp.lt.s32.totalorder %v1682, 32
      %vm2451 = vcmp.lt.s32.totalorder %v1683, 32
      %vm2452 = vcmp.lt.s32.totalorder %v1684, 32
      %vm2453 = vcmp.lt.s32.totalorder %v1685, 32
      %vm2454 = vcmp.lt.s32.totalorder %v1686, 32
      %vm2455 = vcmp.lt.s32.totalorder %v1687, 32
      %vm2456 = vcmp.lt.s32.totalorder %v1688, 32
      %vm2457 = vcmp.lt.s32.totalorder %v1689, 32
      %vm2458 = vcmp.lt.s32.totalorder %v1690, 32
      %vm2459 = vcmp.lt.s32.totalorder %v1691, 32
      %vm2460 = vcmp.lt.s32.totalorder %v1692, 32
      %vm2461 = vcmp.lt.s32.totalorder %v1693, 32
      %vm2462 = vcmp.lt.s32.totalorder %v1694, 32
      %vm2463 = vcmp.lt.s32.totalorder %v1695, 32
      %vm2464 = vcmp.lt.s32.totalorder %v1696, 32
      %vm2465 = vcmp.lt.s32.totalorder %v1697, 32
      %vm2466 = vcmp.lt.s32.totalorder %v1698, 32
      %vm2467 = vcmp.lt.s32.totalorder %v1699, 32
      %vm2468 = vcmp.lt.s32.totalorder %v1700, 32
      %vm2469 = vcmp.lt.s32.totalorder %v1701, 32
      %vm2470 = vcmp.lt.s32.totalorder %v1702, 32
      %vm2471 = vcmp.lt.s32.totalorder %v1703, 32
      %vm2472 = vcmp.lt.s32.totalorder %v1704, 32
      %vm2473 = vcmp.lt.s32.totalorder %v1705, 32
      %vm2474 = vcmp.lt.s32.totalorder %v1706, 32
      %vm2475 = vcmp.lt.s32.totalorder %v1707, 32
      %vm2476 = vcmp.lt.s32.totalorder %v1708, 32
      %vm2477 = vcmp.lt.s32.totalorder %v1709, 32
      %vm2478 = vcmp.lt.s32.totalorder %v1710, 32
      %vm2479 = vcmp.lt.s32.totalorder %v1711, 32
      %vm2480 = vcmp.lt.s32.totalorder %v1712, 32
      %vm2481 = vcmp.lt.s32.totalorder %v1713, 32
      %vm2482 = vcmp.lt.s32.totalorder %v1714, 32
      %vm2483 = vcmp.lt.s32.totalorder %v1715, 32
      %vm2484 = vcmp.lt.s32.totalorder %v1716, 32
      %vm2485 = vcmp.lt.s32.totalorder %v1717, 32
      %vm2486 = vcmp.lt.s32.totalorder %v1718, 32
      %vm2487 = vcmp.lt.s32.totalorder %v1719, 32
      %vm2488 = vmand %vm2232, %vm2360
      %vm2489 = vmand %vm2233, %vm2361
      %vm2490 = vmand %vm2234, %vm2362
      %vm2491 = vmand %vm2235, %vm2363
      %vm2492 = vmand %vm2236, %vm2364
      %vm2493 = vmand %vm2237, %vm2365
      %vm2494 = vmand %vm2238, %vm2366
      %vm2495 = vmand %vm2239, %vm2367
      %vm2496 = vmand %vm2240, %vm2368
      %vm2497 = vmand %vm2241, %vm2369
      %vm2498 = vmand %vm2242, %vm2370
      %vm2499 = vmand %vm2243, %vm2371
      %vm2500 = vmand %vm2244, %vm2372
      %vm2501 = vmand %vm2245, %vm2373
      %vm2502 = vmand %vm2246, %vm2374
      %vm2503 = vmand %vm2247, %vm2375
      %vm2504 = vmand %vm2248, %vm2376
      %vm2505 = vmand %vm2249, %vm2377
      %vm2506 = vmand %vm2250, %vm2378
      %vm2507 = vmand %vm2251, %vm2379
      %vm2508 = vmand %vm2252, %vm2380
      %vm2509 = vmand %vm2253, %vm2381
      %vm2510 = vmand %vm2254, %vm2382
      %vm2511 = vmand %vm2255, %vm2383
      %vm2512 = vmand %vm2256, %vm2384
      %vm2513 = vmand %vm2257, %vm2385
      %vm2514 = vmand %vm2258, %vm2386
      %vm2515 = vmand %vm2259, %vm2387
      %vm2516 = vmand %vm2260, %vm2388
      %vm2517 = vmand %vm2261, %vm2389
      %vm2518 = vmand %vm2262, %vm2390
      %vm2519 = vmand %vm2263, %vm2391
      %vm2520 = vmand %vm2264, %vm2392
      %vm2521 = vmand %vm2265, %vm2393
      %vm2522 = vmand %vm2266, %vm2394
      %vm2523 = vmand %vm2267, %vm2395
      %vm2524 = vmand %vm2268, %vm2396
      %vm2525 = vmand %vm2269, %vm2397
      %vm2526 = vmand %vm2270, %vm2398
      %vm2527 = vmand %vm2271, %vm2399
      %vm2528 = vmand %vm2272, %vm2400
      %vm2529 = vmand %vm2273, %vm2401
      %vm2530 = vmand %vm2274, %vm2402
      %vm2531 = vmand %vm2275, %vm2403
      %vm2532 = vmand %vm2276, %vm2404
      %vm2533 = vmand %vm2277, %vm2405
      %vm2534 = vmand %vm2278, %vm2406
      %vm2535 = vmand %vm2279, %vm2407
      %vm2536 = vmand %vm2280, %vm2408
      %vm2537 = vmand %vm2281, %vm2409
      %vm2538 = vmand %vm2282, %vm2410
      %vm2539 = vmand %vm2283, %vm2411
      %vm2540 = vmand %vm2284, %vm2412
      %vm2541 = vmand %vm2285, %vm2413
      %vm2542 = vmand %vm2286, %vm2414
      %vm2543 = vmand %vm2287, %vm2415
      %vm2544 = vmand %vm2288, %vm2416
      %vm2545 = vmand %vm2289, %vm2417
      %vm2546 = vmand %vm2290, %vm2418
      %vm2547 = vmand %vm2291, %vm2419
      %vm2548 = vmand %vm2292, %vm2420
      %vm2549 = vmand %vm2293, %vm2421
      %vm2550 = vmand %vm2294, %vm2422
      %vm2551 = vmand %vm2295, %vm2423
      %vm2552 = vmand %vm2296, %vm2424
      %vm2553 = vmand %vm2297, %vm2425
      %vm2554 = vmand %vm2298, %vm2426
      %vm2555 = vmand %vm2299, %vm2427
      %vm2556 = vmand %vm2300, %vm2428
      %vm2557 = vmand %vm2301, %vm2429
      %vm2558 = vmand %vm2302, %vm2430
      %vm2559 = vmand %vm2303, %vm2431
      %vm2560 = vmand %vm2304, %vm2432
      %vm2561 = vmand %vm2305, %vm2433
      %vm2562 = vmand %vm2306, %vm2434
      %vm2563 = vmand %vm2307, %vm2435
      %vm2564 = vmand %vm2308, %vm2436
      %vm2565 = vmand %vm2309, %vm2437
      %vm2566 = vmand %vm2310, %vm2438
      %vm2567 = vmand %vm2311, %vm2439
      %vm2568 = vmand %vm2312, %vm2440
      %vm2569 = vmand %vm2313, %vm2441
      %vm2570 = vmand %vm2314, %vm2442
      %vm2571 = vmand %vm2315, %vm2443
      %vm2572 = vmand %vm2316, %vm2444
      %vm2573 = vmand %vm2317, %vm2445
      %vm2574 = vmand %vm2318, %vm2446
      %vm2575 = vmand %vm2319, %vm2447
      %vm2576 = vmand %vm2320, %vm2448
      %vm2577 = vmand %vm2321, %vm2449
      %vm2578 = vmand %vm2322, %vm2450
      %vm2579 = vmand %vm2323, %vm2451
      %vm2580 = vmand %vm2324, %vm2452
      %vm2581 = vmand %vm2325, %vm2453
      %vm2582 = vmand %vm2326, %vm2454
      %vm2583 = vmand %vm2327, %vm2455
      %vm2584 = vmand %vm2328, %vm2456
      %vm2585 = vmand %vm2329, %vm2457
      %vm2586 = vmand %vm2330, %vm2458
      %vm2587 = vmand %vm2331, %vm2459
      %vm2588 = vmand %vm2332, %vm2460
      %vm2589 = vmand %vm2333, %vm2461
      %vm2590 = vmand %vm2334, %vm2462
      %vm2591 = vmand %vm2335, %vm2463
      %vm2592 = vmand %vm2336, %vm2464
      %vm2593 = vmand %vm2337, %vm2465
      %vm2594 = vmand %vm2338, %vm2466
      %vm2595 = vmand %vm2339, %vm2467
      %vm2596 = vmand %vm2340, %vm2468
      %vm2597 = vmand %vm2341, %vm2469
      %vm2598 = vmand %vm2342, %vm2470
      %vm2599 = vmand %vm2343, %vm2471
      %vm2600 = vmand %vm2344, %vm2472
      %vm2601 = vmand %vm2345, %vm2473
      %vm2602 = vmand %vm2346, %vm2474
      %vm2603 = vmand %vm2347, %vm2475
      %vm2604 = vmand %vm2348, %vm2476
      %vm2605 = vmand %vm2349, %vm2477
      %vm2606 = vmand %vm2350, %vm2478
      %vm2607 = vmand %vm2351, %vm2479
      %vm2608 = vmand %vm2352, %vm2480
      %vm2609 = vmand %vm2353, %vm2481
      %vm2610 = vmand %vm2354, %vm2482
      %vm2611 = vmand %vm2355, %vm2483
      %vm2612 = vmand %vm2356, %vm2484
      %vm2613 = vmand %vm2357, %vm2485
      %vm2614 = vmand %vm2358, %vm2486
      %vm2615 = vmand %vm2359, %vm2487
      %v2616 = vld [vmem:[%s409] sm:$0xff]
      %v2617 = vld [vmem:[%s409 + $0x8] sm:$0xff]
      %v2618 = vld [vmem:[%s409 + $0x10] sm:$0xff]
      %v2619 = vld [vmem:[%s409 + $0x18] sm:$0xff]
      %v2620 = vld [vmem:[%s409 + $0x20] sm:$0xff]
      %v2621 = vld [vmem:[%s409 + $0x28] sm:$0xff]
      %v2622 = vld [vmem:[%s409 + $0x30] sm:$0xff]
      %v2623 = vld [vmem:[%s409 + $0x38] sm:$0xff]
      %v2624 = vld [vmem:[%s409 + $0x40] sm:$0xff]
      %v2625 = vld [vmem:[%s409 + $0x48] sm:$0xff]
      %v2626 = vld [vmem:[%s409 + $0x50] sm:$0xff]
      %v2627 = vld [vmem:[%s409 + $0x58] sm:$0xff]
      %v2628 = vld [vmem:[%s409 + $0x60] sm:$0xff]
      %v2629 = vld [vmem:[%s409 + $0x68] sm:$0xff]
      %v2630 = vld [vmem:[%s409 + $0x70] sm:$0xff]
      %v2631 = vld [vmem:[%s409 + $0x78] sm:$0xff]
      %v2632 = vld [vmem:[%s409 + $0x80] sm:$0xff]
      %v2633 = vld [vmem:[%s409 + $0x88] sm:$0xff]
      %v2634 = vld [vmem:[%s409 + $0x90] sm:$0xff]
      %v2635 = vld [vmem:[%s409 + $0x98] sm:$0xff]
      %v2636 = vld [vmem:[%s409 + $0xa0] sm:$0xff]
      %v2637 = vld [vmem:[%s409 + $0xa8] sm:$0xff]
      %v2638 = vld [vmem:[%s409 + $0xb0] sm:$0xff]
      %v2639 = vld [vmem:[%s409 + $0xb8] sm:$0xff]
      %v2640 = vld [vmem:[%s409 + $0xc0] sm:$0xff]
      %v2641 = vld [vmem:[%s409 + $0xc8] sm:$0xff]
      %v2642 = vld [vmem:[%s409 + $0xd0] sm:$0xff]
      %v2643 = vld [vmem:[%s409 + $0xd8] sm:$0xff]
      %v2644 = vld [vmem:[%s409 + $0xe0] sm:$0xff]
      %v2645 = vld [vmem:[%s409 + $0xe8] sm:$0xff]
      %v2646 = vld [vmem:[%s409 + $0xf0] sm:$0xff]
      %v2647 = vld [vmem:[%s409 + $0xf8] sm:$0xff]
      %v2648 = vld [vmem:[%s409 + $0x100] sm:$0xff]
      %v2649 = vld [vmem:[%s409 + $0x108] sm:$0xff]
      %v2650 = vld [vmem:[%s409 + $0x110] sm:$0xff]
      %v2651 = vld [vmem:[%s409 + $0x118] sm:$0xff]
      %v2652 = vld [vmem:[%s409 + $0x120] sm:$0xff]
      %v2653 = vld [vmem:[%s409 + $0x128] sm:$0xff]
      %v2654 = vld [vmem:[%s409 + $0x130] sm:$0xff]
      %v2655 = vld [vmem:[%s409 + $0x138] sm:$0xff]
      %v2656 = vld [vmem:[%s409 + $0x140] sm:$0xff]
      %v2657 = vld [vmem:[%s409 + $0x148] sm:$0xff]
      %v2658 = vld [vmem:[%s409 + $0x150] sm:$0xff]
      %v2659 = vld [vmem:[%s409 + $0x158] sm:$0xff]
      %v2660 = vld [vmem:[%s409 + $0x160] sm:$0xff]
      %v2661 = vld [vmem:[%s409 + $0x168] sm:$0xff]
      %v2662 = vld [vmem:[%s409 + $0x170] sm:$0xff]
      %v2663 = vld [vmem:[%s409 + $0x178] sm:$0xff]
      %v2664 = vld [vmem:[%s409 + $0x180] sm:$0xff]
      %v2665 = vld [vmem:[%s409 + $0x188] sm:$0xff]
      %v2666 = vld [vmem:[%s409 + $0x190] sm:$0xff]
      %v2667 = vld [vmem:[%s409 + $0x198] sm:$0xff]
      %v2668 = vld [vmem:[%s409 + $0x1a0] sm:$0xff]
      %v2669 = vld [vmem:[%s409 + $0x1a8] sm:$0xff]
      %v2670 = vld [vmem:[%s409 + $0x1b0] sm:$0xff]
      %v2671 = vld [vmem:[%s409 + $0x1b8] sm:$0xff]
      %v2672 = vld [vmem:[%s409 + $0x1c0] sm:$0xff]
      %v2673 = vld [vmem:[%s409 + $0x1c8] sm:$0xff]
      %v2674 = vld [vmem:[%s409 + $0x1d0] sm:$0xff]
      %v2675 = vld [vmem:[%s409 + $0x1d8] sm:$0xff]
      %v2676 = vld [vmem:[%s409 + $0x1e0] sm:$0xff]
      %v2677 = vld [vmem:[%s409 + $0x1e8] sm:$0xff]
      %v2678 = vld [vmem:[%s409 + $0x1f0] sm:$0xff]
      %v2679 = vld [vmem:[%s409 + $0x1f8] sm:$0xff]
      %v2680 = vld [vmem:[%s409 + $0x200] sm:$0xff]
      %v2681 = vld [vmem:[%s409 + $0x208] sm:$0xff]
      %v2682 = vld [vmem:[%s409 + $0x210] sm:$0xff]
      %v2683 = vld [vmem:[%s409 + $0x218] sm:$0xff]
      %v2684 = vld [vmem:[%s409 + $0x220] sm:$0xff]
      %v2685 = vld [vmem:[%s409 + $0x228] sm:$0xff]
      %v2686 = vld [vmem:[%s409 + $0x230] sm:$0xff]
      %v2687 = vld [vmem:[%s409 + $0x238] sm:$0xff]
      %v2688 = vld [vmem:[%s409 + $0x240] sm:$0xff]
      %v2689 = vld [vmem:[%s409 + $0x248] sm:$0xff]
      %v2690 = vld [vmem:[%s409 + $0x250] sm:$0xff]
      %v2691 = vld [vmem:[%s409 + $0x258] sm:$0xff]
      %v2692 = vld [vmem:[%s409 + $0x260] sm:$0xff]
      %v2693 = vld [vmem:[%s409 + $0x268] sm:$0xff]
      %v2694 = vld [vmem:[%s409 + $0x270] sm:$0xff]
      %v2695 = vld [vmem:[%s409 + $0x278] sm:$0xff]
      %v2696 = vld [vmem:[%s409 + $0x280] sm:$0xff]
      %v2697 = vld [vmem:[%s409 + $0x288] sm:$0xff]
      %v2698 = vld [vmem:[%s409 + $0x290] sm:$0xff]
      %v2699 = vld [vmem:[%s409 + $0x298] sm:$0xff]
      %v2700 = vld [vmem:[%s409 + $0x2a0] sm:$0xff]
      %v2701 = vld [vmem:[%s409 + $0x2a8] sm:$0xff]
      %v2702 = vld [vmem:[%s409 + $0x2b0] sm:$0xff]
      %v2703 = vld [vmem:[%s409 + $0x2b8] sm:$0xff]
      %v2704 = vld [vmem:[%s409 + $0x2c0] sm:$0xff]
      %v2705 = vld [vmem:[%s409 + $0x2c8] sm:$0xff]
      %v2706 = vld [vmem:[%s409 + $0x2d0] sm:$0xff]
      %v2707 = vld [vmem:[%s409 + $0x2d8] sm:$0xff]
      %v2708 = vld [vmem:[%s409 + $0x2e0] sm:$0xff]
      %v2709 = vld [vmem:[%s409 + $0x2e8] sm:$0xff]
      %v2710 = vld [vmem:[%s409 + $0x2f0] sm:$0xff]
      %v2711 = vld [vmem:[%s409 + $0x2f8] sm:$0xff]
      %v2712 = vld [vmem:[%s409 + $0x300] sm:$0xff]
      %v2713 = vld [vmem:[%s409 + $0x308] sm:$0xff]
      %v2714 = vld [vmem:[%s409 + $0x310] sm:$0xff]
      %v2715 = vld [vmem:[%s409 + $0x318] sm:$0xff]
      %v2716 = vld [vmem:[%s409 + $0x320] sm:$0xff]
      %v2717 = vld [vmem:[%s409 + $0x328] sm:$0xff]
      %v2718 = vld [vmem:[%s409 + $0x330] sm:$0xff]
      %v2719 = vld [vmem:[%s409 + $0x338] sm:$0xff]
      %v2720 = vld [vmem:[%s409 + $0x340] sm:$0xff]
      %v2721 = vld [vmem:[%s409 + $0x348] sm:$0xff]
      %v2722 = vld [vmem:[%s409 + $0x350] sm:$0xff]
      %v2723 = vld [vmem:[%s409 + $0x358] sm:$0xff]
      %v2724 = vld [vmem:[%s409 + $0x360] sm:$0xff]
      %v2725 = vld [vmem:[%s409 + $0x368] sm:$0xff]
      %v2726 = vld [vmem:[%s409 + $0x370] sm:$0xff]
      %v2727 = vld [vmem:[%s409 + $0x378] sm:$0xff]
      %v2728 = vld [vmem:[%s409 + $0x380] sm:$0xff]
      %v2729 = vld [vmem:[%s409 + $0x388] sm:$0xff]
      %v2730 = vld [vmem:[%s409 + $0x390] sm:$0xff]
      %v2731 = vld [vmem:[%s409 + $0x398] sm:$0xff]
      %v2732 = vld [vmem:[%s409 + $0x3a0] sm:$0xff]
      %v2733 = vld [vmem:[%s409 + $0x3a8] sm:$0xff]
      %v2734 = vld [vmem:[%s409 + $0x3b0] sm:$0xff]
      %v2735 = vld [vmem:[%s409 + $0x3b8] sm:$0xff]
      %v2736 = vld [vmem:[%s409 + $0x3c0] sm:$0xff]
      %v2737 = vld [vmem:[%s409 + $0x3c8] sm:$0xff]
      %v2738 = vld [vmem:[%s409 + $0x3d0] sm:$0xff]
      %v2739 = vld [vmem:[%s409 + $0x3d8] sm:$0xff]
      %v2740 = vld [vmem:[%s409 + $0x3e0] sm:$0xff]
      %v2741 = vld [vmem:[%s409 + $0x3e8] sm:$0xff]
      %v2742 = vld [vmem:[%s409 + $0x3f0] sm:$0xff]
      %v2743 = vld [vmem:[%s409 + $0x3f8] sm:$0xff]
      %v2744 = vld [vmem:[%s1] sm:$0x1]
      %v2746 = vperm.slane %v2744, 0
      %v2748 = vmul.f32 %v2616, %v2746
      %v2749 = vmul.f32 %v2617, %v2746
      %v2750 = vmul.f32 %v2618, %v2746
      %v2751 = vmul.f32 %v2619, %v2746
      %v2752 = vmul.f32 %v2620, %v2746
      %v2753 = vmul.f32 %v2621, %v2746
      %v2754 = vmul.f32 %v2622, %v2746
      %v2755 = vmul.f32 %v2623, %v2746
      %v2756 = vmul.f32 %v2624, %v2746
      %v2757 = vmul.f32 %v2625, %v2746
      %v2758 = vmul.f32 %v2626, %v2746
      %v2759 = vmul.f32 %v2627, %v2746
      %v2760 = vmul.f32 %v2628, %v2746
      %v2761 = vmul.f32 %v2629, %v2746
      %v2762 = vmul.f32 %v2630, %v2746
      %v2763 = vmul.f32 %v2631, %v2746
      %v2764 = vmul.f32 %v2632, %v2746
      %v2765 = vmul.f32 %v2633, %v2746
      %v2766 = vmul.f32 %v2634, %v2746
      %v2767 = vmul.f32 %v2635, %v2746
      %v2768 = vmul.f32 %v2636, %v2746
      %v2769 = vmul.f32 %v2637, %v2746
      %v2770 = vmul.f32 %v2638, %v2746
      %v2771 = vmul.f32 %v2639, %v2746
      %v2772 = vmul.f32 %v2640, %v2746
      %v2773 = vmul.f32 %v2641, %v2746
      %v2774 = vmul.f32 %v2642, %v2746
      %v2775 = vmul.f32 %v2643, %v2746
      %v2776 = vmul.f32 %v2644, %v2746
      %v2777 = vmul.f32 %v2645, %v2746
      %v2778 = vmul.f32 %v2646, %v2746
      %v2779 = vmul.f32 %v2647, %v2746
      %v2780 = vmul.f32 %v2648, %v2746
      %v2781 = vmul.f32 %v2649, %v2746
      %v2782 = vmul.f32 %v2650, %v2746
      %v2783 = vmul.f32 %v2651, %v2746
      %v2784 = vmul.f32 %v2652, %v2746
      %v2785 = vmul.f32 %v2653, %v2746
      %v2786 = vmul.f32 %v2654, %v2746
      %v2787 = vmul.f32 %v2655, %v2746
      %v2788 = vmul.f32 %v2656, %v2746
      %v2789 = vmul.f32 %v2657, %v2746
      %v2790 = vmul.f32 %v2658, %v2746
      %v2791 = vmul.f32 %v2659, %v2746
      %v2792 = vmul.f32 %v2660, %v2746
      %v2793 = vmul.f32 %v2661, %v2746
      %v2794 = vmul.f32 %v2662, %v2746
      %v2795 = vmul.f32 %v2663, %v2746
      %v2796 = vmul.f32 %v2664, %v2746
      %v2797 = vmul.f32 %v2665, %v2746
      %v2798 = vmul.f32 %v2666, %v2746
      %v2799 = vmul.f32 %v2667, %v2746
      %v2800 = vmul.f32 %v2668, %v2746
      %v2801 = vmul.f32 %v2669, %v2746
      %v2802 = vmul.f32 %v2670, %v2746
      %v2803 = vmul.f32 %v2671, %v2746
      %v2804 = vmul.f32 %v2672, %v2746
      %v2805 = vmul.f32 %v2673, %v2746
      %v2806 = vmul.f32 %v2674, %v2746
      %v2807 = vmul.f32 %v2675, %v2746
      %v2808 = vmul.f32 %v2676, %v2746
      %v2809 = vmul.f32 %v2677, %v2746
      %v2810 = vmul.f32 %v2678, %v2746
      %v2811 = vmul.f32 %v2679, %v2746
      %v2812 = vmul.f32 %v2680, %v2746
      %v2813 = vmul.f32 %v2681, %v2746
      %v2814 = vmul.f32 %v2682, %v2746
      %v2815 = vmul.f32 %v2683, %v2746
      %v2816 = vmul.f32 %v2684, %v2746
      %v2817 = vmul.f32 %v2685, %v2746
      %v2818 = vmul.f32 %v2686, %v2746
      %v2819 = vmul.f32 %v2687, %v2746
      %v2820 = vmul.f32 %v2688, %v2746
      %v2821 = vmul.f32 %v2689, %v2746
      %v2822 = vmul.f32 %v2690, %v2746
      %v2823 = vmul.f32 %v2691, %v2746
      %v2824 = vmul.f32 %v2692, %v2746
      %v2825 = vmul.f32 %v2693, %v2746
      %v2826 = vmul.f32 %v2694, %v2746
      %v2827 = vmul.f32 %v2695, %v2746
      %v2828 = vmul.f32 %v2696, %v2746
      %v2829 = vmul.f32 %v2697, %v2746
      %v2830 = vmul.f32 %v2698, %v2746
      %v2831 = vmul.f32 %v2699, %v2746
      %v2832 = vmul.f32 %v2700, %v2746
      %v2833 = vmul.f32 %v2701, %v2746
      %v2834 = vmul.f32 %v2702, %v2746
      %v2835 = vmul.f32 %v2703, %v2746
      %v2836 = vmul.f32 %v2704, %v2746
      %v2837 = vmul.f32 %v2705, %v2746
      %v2838 = vmul.f32 %v2706, %v2746
      %v2839 = vmul.f32 %v2707, %v2746
      %v2840 = vmul.f32 %v2708, %v2746
      %v2841 = vmul.f32 %v2709, %v2746
      %v2842 = vmul.f32 %v2710, %v2746
      %v2843 = vmul.f32 %v2711, %v2746
      %v2844 = vmul.f32 %v2712, %v2746
      %v2845 = vmul.f32 %v2713, %v2746
      %v2846 = vmul.f32 %v2714, %v2746
      %v2847 = vmul.f32 %v2715, %v2746
      %v2848 = vmul.f32 %v2716, %v2746
      %v2849 = vmul.f32 %v2717, %v2746
      %v2850 = vmul.f32 %v2718, %v2746
      %v2851 = vmul.f32 %v2719, %v2746
      %v2852 = vmul.f32 %v2720, %v2746
      %v2853 = vmul.f32 %v2721, %v2746
      %v2854 = vmul.f32 %v2722, %v2746
      %v2855 = vmul.f32 %v2723, %v2746
      %v2856 = vmul.f32 %v2724, %v2746
      %v2857 = vmul.f32 %v2725, %v2746
      %v2858 = vmul.f32 %v2726, %v2746
      %v2859 = vmul.f32 %v2727, %v2746
      %v2860 = vmul.f32 %v2728, %v2746
      %v2861 = vmul.f32 %v2729, %v2746
      %v2862 = vmul.f32 %v2730, %v2746
      %v2863 = vmul.f32 %v2731, %v2746
      %v2864 = vmul.f32 %v2732, %v2746
      %v2865 = vmul.f32 %v2733, %v2746
      %v2866 = vmul.f32 %v2734, %v2746
      %v2867 = vmul.f32 %v2735, %v2746
      %v2868 = vmul.f32 %v2736, %v2746
      %v2869 = vmul.f32 %v2737, %v2746
      %v2870 = vmul.f32 %v2738, %v2746
      %v2871 = vmul.f32 %v2739, %v2746
      %v2872 = vmul.f32 %v2740, %v2746
      %v2873 = vmul.f32 %v2741, %v2746
      %v2874 = vmul.f32 %v2742, %v2746
      %v2875 = vmul.f32 %v2743, %v2746
      %v2876 = vld [vmem:[%s2] sm:$0x1]
      %v2878 = vperm.slane %v2876, 0
      %v2880 = vadd.f32 %v2748, %v2878
      %v2881 = vadd.f32 %v2749, %v2878
      %v2882 = vadd.f32 %v2750, %v2878
      %v2883 = vadd.f32 %v2751, %v2878
      %v2884 = vadd.f32 %v2752, %v2878
      %v2885 = vadd.f32 %v2753, %v2878
      %v2886 = vadd.f32 %v2754, %v2878
      %v2887 = vadd.f32 %v2755, %v2878
      %v2888 = vadd.f32 %v2756, %v2878
      %v2889 = vadd.f32 %v2757, %v2878
      %v2890 = vadd.f32 %v2758, %v2878
      %v2891 = vadd.f32 %v2759, %v2878
      %v2892 = vadd.f32 %v2760, %v2878
      %v2893 = vadd.f32 %v2761, %v2878
      %v2894 = vadd.f32 %v2762, %v2878
      %v2895 = vadd.f32 %v2763, %v2878
      %v2896 = vadd.f32 %v2764, %v2878
      %v2897 = vadd.f32 %v2765, %v2878
      %v2898 = vadd.f32 %v2766, %v2878
      %v2899 = vadd.f32 %v2767, %v2878
      %v2900 = vadd.f32 %v2768, %v2878
      %v2901 = vadd.f32 %v2769, %v2878
      %v2902 = vadd.f32 %v2770, %v2878
      %v2903 = vadd.f32 %v2771, %v2878
      %v2904 = vadd.f32 %v2772, %v2878
      %v2905 = vadd.f32 %v2773, %v2878
      %v2906 = vadd.f32 %v2774, %v2878
      %v2907 = vadd.f32 %v2775, %v2878
      %v2908 = vadd.f32 %v2776, %v2878
      %v2909 = vadd.f32 %v2777, %v2878
      %v2910 = vadd.f32 %v2778, %v2878
      %v2911 = vadd.f32 %v2779, %v2878
      %v2912 = vadd.f32 %v2780, %v2878
      %v2913 = vadd.f32 %v2781, %v2878
      %v2914 = vadd.f32 %v2782, %v2878
      %v2915 = vadd.f32 %v2783, %v2878
      %v2916 = vadd.f32 %v2784, %v2878
      %v2917 = vadd.f32 %v2785, %v2878
      %v2918 = vadd.f32 %v2786, %v2878
      %v2919 = vadd.f32 %v2787, %v2878
      %v2920 = vadd.f32 %v2788, %v2878
      %v2921 = vadd.f32 %v2789, %v2878
      %v2922 = vadd.f32 %v2790, %v2878
      %v2923 = vadd.f32 %v2791, %v2878
      %v2924 = vadd.f32 %v2792, %v2878
      %v2925 = vadd.f32 %v2793, %v2878
      %v2926 = vadd.f32 %v2794, %v2878
      %v2927 = vadd.f32 %v2795, %v2878
      %v2928 = vadd.f32 %v2796, %v2878
      %v2929 = vadd.f32 %v2797, %v2878
      %v2930 = vadd.f32 %v2798, %v2878
      %v2931 = vadd.f32 %v2799, %v2878
      %v2932 = vadd.f32 %v2800, %v2878
      %v2933 = vadd.f32 %v2801, %v2878
      %v2934 = vadd.f32 %v2802, %v2878
      %v2935 = vadd.f32 %v2803, %v2878
      %v2936 = vadd.f32 %v2804, %v2878
      %v2937 = vadd.f32 %v2805, %v2878
      %v2938 = vadd.f32 %v2806, %v2878
      %v2939 = vadd.f32 %v2807, %v2878
      %v2940 = vadd.f32 %v2808, %v2878
      %v2941 = vadd.f32 %v2809, %v2878
      %v2942 = vadd.f32 %v2810, %v2878
      %v2943 = vadd.f32 %v2811, %v2878
      %v2944 = vadd.f32 %v2812, %v2878
      %v2945 = vadd.f32 %v2813, %v2878
      %v2946 = vadd.f32 %v2814, %v2878
      %v2947 = vadd.f32 %v2815, %v2878
      %v2948 = vadd.f32 %v2816, %v2878
      %v2949 = vadd.f32 %v2817, %v2878
      %v2950 = vadd.f32 %v2818, %v2878
      %v2951 = vadd.f32 %v2819, %v2878
      %v2952 = vadd.f32 %v2820, %v2878
      %v2953 = vadd.f32 %v2821, %v2878
      %v2954 = vadd.f32 %v2822, %v2878
      %v2955 = vadd.f32 %v2823, %v2878
      %v2956 = vadd.f32 %v2824, %v2878
      %v2957 = vadd.f32 %v2825, %v2878
      %v2958 = vadd.f32 %v2826, %v2878
      %v2959 = vadd.f32 %v2827, %v2878
      %v2960 = vadd.f32 %v2828, %v2878
      %v2961 = vadd.f32 %v2829, %v2878
      %v2962 = vadd.f32 %v2830, %v2878
      %v2963 = vadd.f32 %v2831, %v2878
      %v2964 = vadd.f32 %v2832, %v2878
      %v2965 = vadd.f32 %v2833, %v2878
      %v2966 = vadd.f32 %v2834, %v2878
      %v2967 = vadd.f32 %v2835, %v2878
      %v2968 = vadd.f32 %v2836, %v2878
      %v2969 = vadd.f32 %v2837, %v2878
      %v2970 = vadd.f32 %v2838, %v2878
      %v2971 = vadd.f32 %v2839, %v2878
      %v2972 = vadd.f32 %v2840, %v2878
      %v2973 = vadd.f32 %v2841, %v2878
      %v2974 = vadd.f32 %v2842, %v2878
      %v2975 = vadd.f32 %v2843, %v2878
      %v2976 = vadd.f32 %v2844, %v2878
      %v2977 = vadd.f32 %v2845, %v2878
      %v2978 = vadd.f32 %v2846, %v2878
      %v2979 = vadd.f32 %v2847, %v2878
      %v2980 = vadd.f32 %v2848, %v2878
      %v2981 = vadd.f32 %v2849, %v2878
      %v2982 = vadd.f32 %v2850, %v2878
      %v2983 = vadd.f32 %v2851, %v2878
      %v2984 = vadd.f32 %v2852, %v2878
      %v2985 = vadd.f32 %v2853, %v2878
      %v2986 = vadd.f32 %v2854, %v2878
      %v2987 = vadd.f32 %v2855, %v2878
      %v2988 = vadd.f32 %v2856, %v2878
      %v2989 = vadd.f32 %v2857, %v2878
      %v2990 = vadd.f32 %v2858, %v2878
      %v2991 = vadd.f32 %v2859, %v2878
      %v2992 = vadd.f32 %v2860, %v2878
      %v2993 = vadd.f32 %v2861, %v2878
      %v2994 = vadd.f32 %v2862, %v2878
      %v2995 = vadd.f32 %v2863, %v2878
      %v2996 = vadd.f32 %v2864, %v2878
      %v2997 = vadd.f32 %v2865, %v2878
      %v2998 = vadd.f32 %v2866, %v2878
      %v2999 = vadd.f32 %v2867, %v2878
      %v3000 = vadd.f32 %v2868, %v2878
      %v3001 = vadd.f32 %v2869, %v2878
      %v3002 = vadd.f32 %v2870, %v2878
      %v3003 = vadd.f32 %v2871, %v2878
      %v3004 = vadd.f32 %v2872, %v2878
      %v3005 = vadd.f32 %v2873, %v2878
      %v3006 = vadd.f32 %v2874, %v2878
      %v3007 = vadd.f32 %v2875, %v2878
      %v3008 = vmax.f32 %v2880, 0.0
      %v3009 = vmax.f32 %v2881, 0.0
      %v3010 = vmax.f32 %v2882, 0.0
      %v3011 = vmax.f32 %v2883, 0.0
      %v3012 = vmax.f32 %v2884, 0.0
      %v3013 = vmax.f32 %v2885, 0.0
      %v3014 = vmax.f32 %v2886, 0.0
      %v3015 = vmax.f32 %v2887, 0.0
      %v3016 = vmax.f32 %v2888, 0.0
      %v3017 = vmax.f32 %v2889, 0.0
      %v3018 = vmax.f32 %v2890, 0.0
      %v3019 = vmax.f32 %v2891, 0.0
      %v3020 = vmax.f32 %v2892, 0.0
      %v3021 = vmax.f32 %v2893, 0.0
      %v3022 = vmax.f32 %v2894, 0.0
      %v3023 = vmax.f32 %v2895, 0.0
      %v3024 = vmax.f32 %v2896, 0.0
      %v3025 = vmax.f32 %v2897, 0.0
      %v3026 = vmax.f32 %v2898, 0.0
      %v3027 = vmax.f32 %v2899, 0.0
      %v3028 = vmax.f32 %v2900, 0.0
      %v3029 = vmax.f32 %v2901, 0.0
      %v3030 = vmax.f32 %v2902, 0.0
      %v3031 = vmax.f32 %v2903, 0.0
      %v3032 = vmax.f32 %v2904, 0.0
      %v3033 = vmax.f32 %v2905, 0.0
      %v3034 = vmax.f32 %v2906, 0.0
      %v3035 = vmax.f32 %v2907, 0.0
      %v3036 = vmax.f32 %v2908, 0.0
      %v3037 = vmax.f32 %v2909, 0.0
      %v3038 = vmax.f32 %v2910, 0.0
      %v3039 = vmax.f32 %v2911, 0.0
      %v3040 = vmax.f32 %v2912, 0.0
      %v3041 = vmax.f32 %v2913, 0.0
      %v3042 = vmax.f32 %v2914, 0.0
      %v3043 = vmax.f32 %v2915, 0.0
      %v3044 = vmax.f32 %v2916, 0.0
      %v3045 = vmax.f32 %v2917, 0.0
      %v3046 = vmax.f32 %v2918, 0.0
      %v3047 = vmax.f32 %v2919, 0.0
      %v3048 = vmax.f32 %v2920, 0.0
      %v3049 = vmax.f32 %v2921, 0.0
      %v3050 = vmax.f32 %v2922, 0.0
      %v3051 = vmax.f32 %v2923, 0.0
      %v3052 = vmax.f32 %v2924, 0.0
      %v3053 = vmax.f32 %v2925, 0.0
      %v3054 = vmax.f32 %v2926, 0.0
      %v3055 = vmax.f32 %v2927, 0.0
      %v3056 = vmax.f32 %v2928, 0.0
      %v3057 = vmax.f32 %v2929, 0.0
      %v3058 = vmax.f32 %v2930, 0.0
      %v3059 = vmax.f32 %v2931, 0.0
      %v3060 = vmax.f32 %v2932, 0.0
      %v3061 = vmax.f32 %v2933, 0.0
      %v3062 = vmax.f32 %v2934, 0.0
      %v3063 = vmax.f32 %v2935, 0.0
      %v3064 = vmax.f32 %v2936, 0.0
      %v3065 = vmax.f32 %v2937, 0.0
      %v3066 = vmax.f32 %v2938, 0.0
      %v3067 = vmax.f32 %v2939, 0.0
      %v3068 = vmax.f32 %v2940, 0.0
      %v3069 = vmax.f32 %v2941, 0.0
      %v3070 = vmax.f32 %v2942, 0.0
      %v3071 = vmax.f32 %v2943, 0.0
      %v3072 = vmax.f32 %v2944, 0.0
      %v3073 = vmax.f32 %v2945, 0.0
      %v3074 = vmax.f32 %v2946, 0.0
      %v3075 = vmax.f32 %v2947, 0.0
      %v3076 = vmax.f32 %v2948, 0.0
      %v3077 = vmax.f32 %v2949, 0.0
      %v3078 = vmax.f32 %v2950, 0.0
      %v3079 = vmax.f32 %v2951, 0.0
      %v3080 = vmax.f32 %v2952, 0.0
      %v3081 = vmax.f32 %v2953, 0.0
      %v3082 = vmax.f32 %v2954, 0.0
      %v3083 = vmax.f32 %v2955, 0.0
      %v3084 = vmax.f32 %v2956, 0.0
      %v3085 = vmax.f32 %v2957, 0.0
      %v3086 = vmax.f32 %v2958, 0.0
      %v3087 = vmax.f32 %v2959, 0.0
      %v3088 = vmax.f32 %v2960, 0.0
      %v3089 = vmax.f32 %v2961, 0.0
      %v3090 = vmax.f32 %v2962, 0.0
      %v3091 = vmax.f32 %v2963, 0.0
      %v3092 = vmax.f32 %v2964, 0.0
      %v3093 = vmax.f32 %v2965, 0.0
      %v3094 = vmax.f32 %v2966, 0.0
      %v3095 = vmax.f32 %v2967, 0.0
      %v3096 = vmax.f32 %v2968, 0.0
      %v3097 = vmax.f32 %v2969, 0.0
      %v3098 = vmax.f32 %v2970, 0.0
      %v3099 = vmax.f32 %v2971, 0.0
      %v3100 = vmax.f32 %v2972, 0.0
      %v3101 = vmax.f32 %v2973, 0.0
      %v3102 = vmax.f32 %v2974, 0.0
      %v3103 = vmax.f32 %v2975, 0.0
      %v3104 = vmax.f32 %v2976, 0.0
      %v3105 = vmax.f32 %v2977, 0.0
      %v3106 = vmax.f32 %v2978, 0.0
      %v3107 = vmax.f32 %v2979, 0.0
      %v3108 = vmax.f32 %v2980, 0.0
      %v3109 = vmax.f32 %v2981, 0.0
      %v3110 = vmax.f32 %v2982, 0.0
      %v3111 = vmax.f32 %v2983, 0.0
      %v3112 = vmax.f32 %v2984, 0.0
      %v3113 = vmax.f32 %v2985, 0.0
      %v3114 = vmax.f32 %v2986, 0.0
      %v3115 = vmax.f32 %v2987, 0.0
      %v3116 = vmax.f32 %v2988, 0.0
      %v3117 = vmax.f32 %v2989, 0.0
      %v3118 = vmax.f32 %v2990, 0.0
      %v3119 = vmax.f32 %v2991, 0.0
      %v3120 = vmax.f32 %v2992, 0.0
      %v3121 = vmax.f32 %v2993, 0.0
      %v3122 = vmax.f32 %v2994, 0.0
      %v3123 = vmax.f32 %v2995, 0.0
      %v3124 = vmax.f32 %v2996, 0.0
      %v3125 = vmax.f32 %v2997, 0.0
      %v3126 = vmax.f32 %v2998, 0.0
      %v3127 = vmax.f32 %v2999, 0.0
      %v3128 = vmax.f32 %v3000, 0.0
      %v3129 = vmax.f32 %v3001, 0.0
      %v3130 = vmax.f32 %v3002, 0.0
      %v3131 = vmax.f32 %v3003, 0.0
      %v3132 = vmax.f32 %v3004, 0.0
      %v3133 = vmax.f32 %v3005, 0.0
      %v3134 = vmax.f32 %v3006, 0.0
      %v3135 = vmax.f32 %v3007, 0.0
      %v3136 = vsel %vm2488, %v3008, 0.0
      %v3137 = vsel %vm2489, %v3009, 0.0
      %v3138 = vsel %vm2490, %v3010, 0.0
      %v3139 = vsel %vm2491, %v3011, 0.0
      %v3140 = vsel %vm2492, %v3012, 0.0
      %v3141 = vsel %vm2493, %v3013, 0.0
      %v3142 = vsel %vm2494, %v3014, 0.0
      %v3143 = vsel %vm2495, %v3015, 0.0
      %v3144 = vsel %vm2496, %v3016, 0.0
      %v3145 = vsel %vm2497, %v3017, 0.0
      %v3146 = vsel %vm2498, %v3018, 0.0
      %v3147 = vsel %vm2499, %v3019, 0.0
      %v3148 = vsel %vm2500, %v3020, 0.0
      %v3149 = vsel %vm2501, %v3021, 0.0
      %v3150 = vsel %vm2502, %v3022, 0.0
      %v3151 = vsel %vm2503, %v3023, 0.0
      %v3152 = vsel %vm2504, %v3024, 0.0
      %v3153 = vsel %vm2505, %v3025, 0.0
      %v3154 = vsel %vm2506, %v3026, 0.0
      %v3155 = vsel %vm2507, %v3027, 0.0
      %v3156 = vsel %vm2508, %v3028, 0.0
      %v3157 = vsel %vm2509, %v3029, 0.0
      %v3158 = vsel %vm2510, %v3030, 0.0
      %v3159 = vsel %vm2511, %v3031, 0.0
      %v3160 = vsel %vm2512, %v3032, 0.0
      %v3161 = vsel %vm2513, %v3033, 0.0
      %v3162 = vsel %vm2514, %v3034, 0.0
      %v3163 = vsel %vm2515, %v3035, 0.0
      %v3164 = vsel %vm2516, %v3036, 0.0
      %v3165 = vsel %vm2517, %v3037, 0.0
      %v3166 = vsel %vm2518, %v3038, 0.0
      %v3167 = vsel %vm2519, %v3039, 0.0
      %v3168 = vsel %vm2520, %v3040, 0.0
      %v3169 = vsel %vm2521, %v3041, 0.0
      %v3170 = vsel %vm2522, %v3042, 0.0
      %v3171 = vsel %vm2523, %v3043, 0.0
      %v3172 = vsel %vm2524, %v3044, 0.0
      %v3173 = vsel %vm2525, %v3045, 0.0
      %v3174 = vsel %vm2526, %v3046, 0.0
      %v3175 = vsel %vm2527, %v3047, 0.0
      %v3176 = vsel %vm2528, %v3048, 0.0
      %v3177 = vsel %vm2529, %v3049, 0.0
      %v3178 = vsel %vm2530, %v3050, 0.0
      %v3179 = vsel %vm2531, %v3051, 0.0
      %v3180 = vsel %vm2532, %v3052, 0.0
      %v3181 = vsel %vm2533, %v3053, 0.0
      %v3182 = vsel %vm2534, %v3054, 0.0
      %v3183 = vsel %vm2535, %v3055, 0.0
      %v3184 = vsel %vm2536, %v3056, 0.0
      %v3185 = vsel %vm2537, %v3057, 0.0
      %v3186 = vsel %vm2538, %v3058, 0.0
      %v3187 = vsel %vm2539, %v3059, 0.0
      %v3188 = vsel %vm2540, %v3060, 0.0
      %v3189 = vsel %vm2541, %v3061, 0.0
      %v3190 = vsel %vm2542, %v3062, 0.0
      %v3191 = vsel %vm2543, %v3063, 0.0
      %v3192 = vsel %vm2544, %v3064, 0.0
      %v3193 = vsel %vm2545, %v3065, 0.0
      %v3194 = vsel %vm2546, %v3066, 0.0
      %v3195 = vsel %vm2547, %v3067, 0.0
      %v3196 = vsel %vm2548, %v3068, 0.0
      %v3197 = vsel %vm2549, %v3069, 0.0
      %v3198 = vsel %vm2550, %v3070, 0.0
      %v3199 = vsel %vm2551, %v3071, 0.0
      %v3200 = vsel %vm2552, %v3072, 0.0
      %v3201 = vsel %vm2553, %v3073, 0.0
      %v3202 = vsel %vm2554, %v3074, 0.0
      %v3203 = vsel %vm2555, %v3075, 0.0
      %v3204 = vsel %vm2556, %v3076, 0.0
      %v3205 = vsel %vm2557, %v3077, 0.0
      %v3206 = vsel %vm2558, %v3078, 0.0
      %v3207 = vsel %vm2559, %v3079, 0.0
      %v3208 = vsel %vm2560, %v3080, 0.0
      %v3209 = vsel %vm2561, %v3081, 0.0
      %v3210 = vsel %vm2562, %v3082, 0.0
      %v3211 = vsel %vm2563, %v3083, 0.0
      %v3212 = vsel %vm2564, %v3084, 0.0
      %v3213 = vsel %vm2565, %v3085, 0.0
      %v3214 = vsel %vm2566, %v3086, 0.0
      %v3215 = vsel %vm2567, %v3087, 0.0
      %v3216 = vsel %vm2568, %v3088, 0.0
      %v3217 = vsel %vm2569, %v3089, 0.0
      %v3218 = vsel %vm2570, %v3090, 0.0
      %v3219 = vsel %vm2571, %v3091, 0.0
      %v3220 = vsel %vm2572, %v3092, 0.0
      %v3221 = vsel %vm2573, %v3093, 0.0
      %v3222 = vsel %vm2574, %v3094, 0.0
      %v3223 = vsel %vm2575, %v3095, 0.0
      %v3224 = vsel %vm2576, %v3096, 0.0
      %v3225 = vsel %vm2577, %v3097, 0.0
      %v3226 = vsel %vm2578, %v3098, 0.0
      %v3227 = vsel %vm2579, %v3099, 0.0
      %v3228 = vsel %vm2580, %v3100, 0.0
      %v3229 = vsel %vm2581, %v3101, 0.0
      %v3230 = vsel %vm2582, %v3102, 0.0
      %v3231 = vsel %vm2583, %v3103, 0.0
      %v3232 = vsel %vm2584, %v3104, 0.0
      %v3233 = vsel %vm2585, %v3105, 0.0
      %v3234 = vsel %vm2586, %v3106, 0.0
      %v3235 = vsel %vm2587, %v3107, 0.0
      %v3236 = vsel %vm2588, %v3108, 0.0
      %v3237 = vsel %vm2589, %v3109, 0.0
      %v3238 = vsel %vm2590, %v3110, 0.0
      %v3239 = vsel %vm2591, %v3111, 0.0
      %v3240 = vsel %vm2592, %v3112, 0.0
      %v3241 = vsel %vm2593, %v3113, 0.0
      %v3242 = vsel %vm2594, %v3114, 0.0
      %v3243 = vsel %vm2595, %v3115, 0.0
      %v3244 = vsel %vm2596, %v3116, 0.0
      %v3245 = vsel %vm2597, %v3117, 0.0
      %v3246 = vsel %vm2598, %v3118, 0.0
      %v3247 = vsel %vm2599, %v3119, 0.0
      %v3248 = vsel %vm2600, %v3120, 0.0
      %v3249 = vsel %vm2601, %v3121, 0.0
      %v3250 = vsel %vm2602, %v3122, 0.0
      %v3251 = vsel %vm2603, %v3123, 0.0
      %v3252 = vsel %vm2604, %v3124, 0.0
      %v3253 = vsel %vm2605, %v3125, 0.0
      %v3254 = vsel %vm2606, %v3126, 0.0
      %v3255 = vsel %vm2607, %v3127, 0.0
      %v3256 = vsel %vm2608, %v3128, 0.0
      %v3257 = vsel %vm2609, %v3129, 0.0
      %v3258 = vsel %vm2610, %v3130, 0.0
      %v3259 = vsel %vm2611, %v3131, 0.0
      %v3260 = vsel %vm2612, %v3132, 0.0
      %v3261 = vsel %vm2613, %v3133, 0.0
      %v3262 = vsel %vm2614, %v3134, 0.0
      %v3263 = vsel %vm2615, %v3135, 0.0
      %v3264 = vld [vmem:[%s7] sm:$0xff]
      %v3265 = vld [vmem:[%s7 + $0x8] sm:$0xff]
      %v3266 = vld [vmem:[%s7 + $0x10] sm:$0xff]
      %v3267 = vld [vmem:[%s7 + $0x18] sm:$0xff]
      %v3268 = vld [vmem:[%s7 + $0x20] sm:$0xff]
      %v3269 = vld [vmem:[%s7 + $0x28] sm:$0xff]
      %v3270 = vld [vmem:[%s7 + $0x30] sm:$0xff]
      %v3271 = vld [vmem:[%s7 + $0x38] sm:$0xff]
      %v3272 = vld [vmem:[%s7 + $0x40] sm:$0xff]
      %v3273 = vld [vmem:[%s8] sm:$0x1]
      %v3275 = vperm.slane %v3273, 0
      %vm3277 = vcmask 588800
      %v3279 = vsel %vm3277, %v3136, 0
      %v3282 = vsel %vm3277, %v3137, 0
      %v3285 = vsel %vm3277, %v3138, 0
      %v3288 = vsel %vm3277, %v3139, 0
      %v3291 = vsel %vm3277, %v3140, 0
      %v3294 = vsel %vm3277, %v3141, 0
      %v3297 = vsel %vm3277, %v3142, 0
      %v3300 = vsel %vm3277, %v3143, 0
      %v3303 = vsel %vm3277, %v3144, 0
      %v3306 = vsel %vm3277, %v3145, 0
      %v3309 = vsel %vm3277, %v3146, 0
      %v3312 = vsel %vm3277, %v3147, 0
      %v3315 = vsel %vm3277, %v3148, 0
      %v3318 = vsel %vm3277, %v3149, 0
      %v3321 = vsel %vm3277, %v3150, 0
      %v3324 = vsel %vm3277, %v3151, 0
      %v3327 = vsel %vm3277, %v3152, 0
      %v3330 = vsel %vm3277, %v3153, 0
      %v3333 = vsel %vm3277, %v3154, 0
      %v3336 = vsel %vm3277, %v3155, 0
      %v3339 = vsel %vm3277, %v3156, 0
      %v3342 = vsel %vm3277, %v3157, 0
      %v3345 = vsel %vm3277, %v3158, 0
      %v3348 = vsel %vm3277, %v3159, 0
      %v3351 = vsel %vm3277, %v3160, 0
      %v3354 = vsel %vm3277, %v3161, 0
      %v3357 = vsel %vm3277, %v3162, 0
      %v3360 = vsel %vm3277, %v3163, 0
      %v3363 = vsel %vm3277, %v3164, 0
      %v3366 = vsel %vm3277, %v3165, 0
      %v3369 = vsel %vm3277, %v3166, 0
      %v3372 = vsel %vm3277, %v3167, 0
      %v3375 = vsel %vm3277, %v3168, 0
      %v3378 = vsel %vm3277, %v3169, 0
      %v3381 = vsel %vm3277, %v3170, 0
      %v3384 = vsel %vm3277, %v3171, 0
      %v3387 = vsel %vm3277, %v3172, 0
      %v3390 = vsel %vm3277, %v3173, 0
      %v3393 = vsel %vm3277, %v3174, 0
      %v3396 = vsel %vm3277, %v3175, 0
      %v3399 = vsel %vm3277, %v3176, 0
      %v3402 = vsel %vm3277, %v3177, 0
      %v3405 = vsel %vm3277, %v3178, 0
      %v3408 = vsel %vm3277, %v3179, 0
      %v3411 = vsel %vm3277, %v3180, 0
      %v3414 = vsel %vm3277, %v3181, 0
      %v3417 = vsel %vm3277, %v3182, 0
      %v3420 = vsel %vm3277, %v3183, 0
      %v3423 = vsel %vm3277, %v3184, 0
      %v3426 = vsel %vm3277, %v3185, 0
      %v3429 = vsel %vm3277, %v3186, 0
      %v3432 = vsel %vm3277, %v3187, 0
      %v3435 = vsel %vm3277, %v3188, 0
      %v3438 = vsel %vm3277, %v3189, 0
      %v3441 = vsel %vm3277, %v3190, 0
      %v3444 = vsel %vm3277, %v3191, 0
      %v3447 = vsel %vm3277, %v3192, 0
      %v3450 = vsel %vm3277, %v3193, 0
      %v3453 = vsel %vm3277, %v3194, 0
      %v3456 = vsel %vm3277, %v3195, 0
      %v3459 = vsel %vm3277, %v3196, 0
      %v3462 = vsel %vm3277, %v3197, 0
      %v3465 = vsel %vm3277, %v3198, 0
      %v3468 = vsel %vm3277, %v3199, 0
      %v3471 = vsel %vm3277, %v3200, 0
      %v3474 = vsel %vm3277, %v3201, 0
      %v3477 = vsel %vm3277, %v3202, 0
      %v3480 = vsel %vm3277, %v3203, 0
      %v3483 = vsel %vm3277, %v3204, 0
      %v3486 = vsel %vm3277, %v3205, 0
      %v3489 = vsel %vm3277, %v3206, 0
      %v3492 = vsel %vm3277, %v3207, 0
      %v3495 = vsel %vm3277, %v3208, 0
      %v3498 = vsel %vm3277, %v3209, 0
      %v3501 = vsel %vm3277, %v3210, 0
      %v3504 = vsel %vm3277, %v3211, 0
      %v3507 = vsel %vm3277, %v3212, 0
      %v3510 = vsel %vm3277, %v3213, 0
      %v3513 = vsel %vm3277, %v3214, 0
      %v3516 = vsel %vm3277, %v3215, 0
      %v3519 = vsel %vm3277, %v3216, 0
      %v3522 = vsel %vm3277, %v3217, 0
      %v3525 = vsel %vm3277, %v3218, 0
      %v3528 = vsel %vm3277, %v3219, 0
      %v3531 = vsel %vm3277, %v3220, 0
      %v3534 = vsel %vm3277, %v3221, 0
      %v3537 = vsel %vm3277, %v3222, 0
      %v3540 = vsel %vm3277, %v3223, 0
      %v3543 = vsel %vm3277, %v3224, 0
      %v3546 = vsel %vm3277, %v3225, 0
      %v3549 = vsel %vm3277, %v3226, 0
      %v3552 = vsel %vm3277, %v3227, 0
      %v3555 = vsel %vm3277, %v3228, 0
      %v3558 = vsel %vm3277, %v3229, 0
      %v3561 = vsel %vm3277, %v3230, 0
      %v3564 = vsel %vm3277, %v3231, 0
      %v3567 = vsel %vm3277, %v3232, 0
      %v3570 = vsel %vm3277, %v3233, 0
      %v3573 = vsel %vm3277, %v3234, 0
      %v3576 = vsel %vm3277, %v3235, 0
      %v3579 = vsel %vm3277, %v3236, 0
      %v3582 = vsel %vm3277, %v3237, 0
      %v3585 = vsel %vm3277, %v3238, 0
      %v3588 = vsel %vm3277, %v3239, 0
      %v3591 = vsel %vm3277, %v3240, 0
      %v3594 = vsel %vm3277, %v3241, 0
      %v3597 = vsel %vm3277, %v3242, 0
      %v3600 = vsel %vm3277, %v3243, 0
      %v3603 = vsel %vm3277, %v3244, 0
      %v3606 = vsel %vm3277, %v3245, 0
      %v3609 = vsel %vm3277, %v3246, 0
      %v3612 = vsel %vm3277, %v3247, 0
      %v3615 = vsel %vm3277, %v3248, 0
      %v3618 = vsel %vm3277, %v3249, 0
      %v3621 = vsel %vm3277, %v3250, 0
      %v3624 = vsel %vm3277, %v3251, 0
      %v3627 = vsel %vm3277, %v3252, 0
      %v3630 = vsel %vm3277, %v3253, 0
      %v3633 = vsel %vm3277, %v3254, 0
      %v3636 = vsel %vm3277, %v3255, 0
      %v3639 = vsel %vm3277, %v3256, 0
      %v3642 = vsel %vm3277, %v3257, 0
      %v3645 = vsel %vm3277, %v3258, 0
      %v3648 = vsel %vm3277, %v3259, 0
      %v3651 = vsel %vm3277, %v3260, 0
      %v3654 = vsel %vm3277, %v3261, 0
      %v3657 = vsel %vm3277, %v3262, 0
      %v3660 = vsel %vm3277, %v3263, 0
      %3662 = vmatpush.msra.mxu0 0.0
      %3663 = vmatpush.msra.mxu0 0.0
      %3664 = vmatpush.msra.mxu0 0.0
      %3665 = vmatpush.msra.mxu0 0.0
      %3666 = vmatpush.msra.mxu0 0.0
      %3667 = vmatpush.msra.mxu0 0.0
      %3668 = vmatpush.msra.mxu0 0.0
      %3669 = vmatpush.msra.mxu0 %v3272
      %3670 = vmatpush.msra.mxu0 %v3271
      %3671 = vmatpush.msra.mxu0 %v3270
      %3672 = vmatpush.msra.mxu0 %v3269
      %3673 = vmatpush.msra.mxu0 %v3268
      %3674 = vmatpush.msra.mxu0 %v3267
      %3675 = vmatpush.msra.mxu0 %v3266
      %3676 = vmatpush.msra.mxu0 %v3265
      %3677 = vmatpush.msra.mxu0 %v3264
      %3678 = vmatmul.f32.gmra.mxu0 %v3279
      %v3679 = vpop.f32.mrf.mxu0
      %v3680 = vadd.f32 %v3275, %v3679
      %3681 = vmatmul.f32.gmra.mxu0 %v3282
      %v3682 = vpop.f32.mrf.mxu0
      %v3683 = vadd.f32 %v3275, %v3682
      %3684 = vmatmul.f32.gmra.mxu0 %v3285
      %v3685 = vpop.f32.mrf.mxu0
      %v3686 = vadd.f32 %v3275, %v3685
      %3687 = vmatmul.f32.gmra.mxu0 %v3288
      %v3688 = vpop.f32.mrf.mxu0
      %v3689 = vadd.f32 %v3275, %v3688
      %3690 = vmatmul.f32.gmra.mxu0 %v3291
      %v3691 = vpop.f32.mrf.mxu0
      %v3692 = vadd.f32 %v3275, %v3691
      %3693 = vmatmul.f32.gmra.mxu0 %v3294
      %v3694 = vpop.f32.mrf.mxu0
      %v3695 = vadd.f32 %v3275, %v3694
      %3696 = vmatmul.f32.gmra.mxu0 %v3297
      %v3697 = vpop.f32.mrf.mxu0
      %v3698 = vadd.f32 %v3275, %v3697
      %3699 = vmatmul.f32.gmra.mxu0 %v3300
      %v3700 = vpop.f32.mrf.mxu0
      %v3701 = vadd.f32 %v3275, %v3700
      %3702 = vmatmul.f32.gmra.mxu0 %v3303
      %v3703 = vpop.f32.mrf.mxu0
      %v3704 = vadd.f32 %v3275, %v3703
      %3705 = vmatmul.f32.gmra.mxu0 %v3306
      %v3706 = vpop.f32.mrf.mxu0
      %v3707 = vadd.f32 %v3275, %v3706
      %3708 = vmatmul.f32.gmra.mxu0 %v3309
      %v3709 = vpop.f32.mrf.mxu0
      %v3710 = vadd.f32 %v3275, %v3709
      %3711 = vmatmul.f32.gmra.mxu0 %v3312
      %v3712 = vpop.f32.mrf.mxu0
      %v3713 = vadd.f32 %v3275, %v3712
      %3714 = vmatmul.f32.gmra.mxu0 %v3315
      %v3715 = vpop.f32.mrf.mxu0
      %v3716 = vadd.f32 %v3275, %v3715
      %3717 = vmatmul.f32.gmra.mxu0 %v3318
      %v3718 = vpop.f32.mrf.mxu0
      %v3719 = vadd.f32 %v3275, %v3718
      %3720 = vmatmul.f32.gmra.mxu0 %v3321
      %v3721 = vpop.f32.mrf.mxu0
      %v3722 = vadd.f32 %v3275, %v3721
      %3723 = vmatmul.f32.gmra.mxu0 %v3324
      %v3724 = vpop.f32.mrf.mxu0
      %v3725 = vadd.f32 %v3275, %v3724
      %3726 = vmatmul.f32.gmra.mxu0 %v3327
      %v3727 = vpop.f32.mrf.mxu0
      %v3728 = vadd.f32 %v3275, %v3727
      %3729 = vmatmul.f32.gmra.mxu0 %v3330
      %v3730 = vpop.f32.mrf.mxu0
      %v3731 = vadd.f32 %v3275, %v3730
      %3732 = vmatmul.f32.gmra.mxu0 %v3333
      %v3733 = vpop.f32.mrf.mxu0
      %v3734 = vadd.f32 %v3275, %v3733
      %3735 = vmatmul.f32.gmra.mxu0 %v3336
      %v3736 = vpop.f32.mrf.mxu0
      %v3737 = vadd.f32 %v3275, %v3736
      %3738 = vmatmul.f32.gmra.mxu0 %v3339
      %v3739 = vpop.f32.mrf.mxu0
      %v3740 = vadd.f32 %v3275, %v3739
      %3741 = vmatmul.f32.gmra.mxu0 %v3342
      %v3742 = vpop.f32.mrf.mxu0
      %v3743 = vadd.f32 %v3275, %v3742
      %3744 = vmatmul.f32.gmra.mxu0 %v3345
      %v3745 = vpop.f32.mrf.mxu0
      %v3746 = vadd.f32 %v3275, %v3745
      %3747 = vmatmul.f32.gmra.mxu0 %v3348
      %v3748 = vpop.f32.mrf.mxu0
      %v3749 = vadd.f32 %v3275, %v3748
      %3750 = vmatmul.f32.gmra.mxu0 %v3351
      %v3751 = vpop.f32.mrf.mxu0
      %v3752 = vadd.f32 %v3275, %v3751
      %3753 = vmatmul.f32.gmra.mxu0 %v3354
      %v3754 = vpop.f32.mrf.mxu0
      %v3755 = vadd.f32 %v3275, %v3754
      %3756 = vmatmul.f32.gmra.mxu0 %v3357
      %v3757 = vpop.f32.mrf.mxu0
      %v3758 = vadd.f32 %v3275, %v3757
      %3759 = vmatmul.f32.gmra.mxu0 %v3360
      %v3760 = vpop.f32.mrf.mxu0
      %v3761 = vadd.f32 %v3275, %v3760
      %3762 = vmatmul.f32.gmra.mxu0 %v3363
      %v3763 = vpop.f32.mrf.mxu0
      %v3764 = vadd.f32 %v3275, %v3763
      %3765 = vmatmul.f32.gmra.mxu0 %v3366
      %v3766 = vpop.f32.mrf.mxu0
      %v3767 = vadd.f32 %v3275, %v3766
      %3768 = vmatmul.f32.gmra.mxu0 %v3369
      %v3769 = vpop.f32.mrf.mxu0
      %v3770 = vadd.f32 %v3275, %v3769
      %3771 = vmatmul.f32.gmra.mxu0 %v3372
      %v3772 = vpop.f32.mrf.mxu0
      %v3773 = vadd.f32 %v3275, %v3772
      %3774 = vmatmul.f32.gmra.mxu0 %v3375
      %v3775 = vpop.f32.mrf.mxu0
      %v3776 = vadd.f32 %v3275, %v3775
      %3777 = vmatmul.f32.gmra.mxu0 %v3378
      %v3778 = vpop.f32.mrf.mxu0
      %v3779 = vadd.f32 %v3275, %v3778
      %3780 = vmatmul.f32.gmra.mxu0 %v3381
      %v3781 = vpop.f32.mrf.mxu0
      %v3782 = vadd.f32 %v3275, %v3781
      %3783 = vmatmul.f32.gmra.mxu0 %v3384
      %v3784 = vpop.f32.mrf.mxu0
      %v3785 = vadd.f32 %v3275, %v3784
      %3786 = vmatmul.f32.gmra.mxu0 %v3387
      %v3787 = vpop.f32.mrf.mxu0
      %v3788 = vadd.f32 %v3275, %v3787
      %3789 = vmatmul.f32.gmra.mxu0 %v3390
      %v3790 = vpop.f32.mrf.mxu0
      %v3791 = vadd.f32 %v3275, %v3790
      %3792 = vmatmul.f32.gmra.mxu0 %v3393
      %v3793 = vpop.f32.mrf.mxu0
      %v3794 = vadd.f32 %v3275, %v3793
      %3795 = vmatmul.f32.gmra.mxu0 %v3396
      %v3796 = vpop.f32.mrf.mxu0
      %v3797 = vadd.f32 %v3275, %v3796
      %3798 = vmatmul.f32.gmra.mxu0 %v3399
      %v3799 = vpop.f32.mrf.mxu0
      %v3800 = vadd.f32 %v3275, %v3799
      %3801 = vmatmul.f32.gmra.mxu0 %v3402
      %v3802 = vpop.f32.mrf.mxu0
      %v3803 = vadd.f32 %v3275, %v3802
      %3804 = vmatmul.f32.gmra.mxu0 %v3405
      %v3805 = vpop.f32.mrf.mxu0
      %v3806 = vadd.f32 %v3275, %v3805
      %3807 = vmatmul.f32.gmra.mxu0 %v3408
      %v3808 = vpop.f32.mrf.mxu0
      %v3809 = vadd.f32 %v3275, %v3808
      %3810 = vmatmul.f32.gmra.mxu0 %v3411
      %v3811 = vpop.f32.mrf.mxu0
      %v3812 = vadd.f32 %v3275, %v3811
      %3813 = vmatmul.f32.gmra.mxu0 %v3414
      %v3814 = vpop.f32.mrf.mxu0
      %v3815 = vadd.f32 %v3275, %v3814
      %3816 = vmatmul.f32.gmra.mxu0 %v3417
      %v3817 = vpop.f32.mrf.mxu0
      %v3818 = vadd.f32 %v3275, %v3817
      %3819 = vmatmul.f32.gmra.mxu0 %v3420
      %v3820 = vpop.f32.mrf.mxu0
      %v3821 = vadd.f32 %v3275, %v3820
      %3822 = vmatmul.f32.gmra.mxu0 %v3423
      %v3823 = vpop.f32.mrf.mxu0
      %v3824 = vadd.f32 %v3275, %v3823
      %3825 = vmatmul.f32.gmra.mxu0 %v3426
      %v3826 = vpop.f32.mrf.mxu0
      %v3827 = vadd.f32 %v3275, %v3826
      %3828 = vmatmul.f32.gmra.mxu0 %v3429
      %v3829 = vpop.f32.mrf.mxu0
      %v3830 = vadd.f32 %v3275, %v3829
      %3831 = vmatmul.f32.gmra.mxu0 %v3432
      %v3832 = vpop.f32.mrf.mxu0
      %v3833 = vadd.f32 %v3275, %v3832
      %3834 = vmatmul.f32.gmra.mxu0 %v3435
      %v3835 = vpop.f32.mrf.mxu0
      %v3836 = vadd.f32 %v3275, %v3835
      %3837 = vmatmul.f32.gmra.mxu0 %v3438
      %v3838 = vpop.f32.mrf.mxu0
      %v3839 = vadd.f32 %v3275, %v3838
      %3840 = vmatmul.f32.gmra.mxu0 %v3441
      %v3841 = vpop.f32.mrf.mxu0
      %v3842 = vadd.f32 %v3275, %v3841
      %3843 = vmatmul.f32.gmra.mxu0 %v3444
      %v3844 = vpop.f32.mrf.mxu0
      %v3845 = vadd.f32 %v3275, %v3844
      %3846 = vmatmul.f32.gmra.mxu0 %v3447
      %v3847 = vpop.f32.mrf.mxu0
      %v3848 = vadd.f32 %v3275, %v3847
      %3849 = vmatmul.f32.gmra.mxu0 %v3450
      %v3850 = vpop.f32.mrf.mxu0
      %v3851 = vadd.f32 %v3275, %v3850
      %3852 = vmatmul.f32.gmra.mxu0 %v3453
      %v3853 = vpop.f32.mrf.mxu0
      %v3854 = vadd.f32 %v3275, %v3853
      %3855 = vmatmul.f32.gmra.mxu0 %v3456
      %v3856 = vpop.f32.mrf.mxu0
      %v3857 = vadd.f32 %v3275, %v3856
      %3858 = vmatmul.f32.gmra.mxu0 %v3459
      %v3859 = vpop.f32.mrf.mxu0
      %v3860 = vadd.f32 %v3275, %v3859
      %3861 = vmatmul.f32.gmra.mxu0 %v3462
      %v3862 = vpop.f32.mrf.mxu0
      %v3863 = vadd.f32 %v3275, %v3862
      %3864 = vmatmul.f32.gmra.mxu0 %v3465
      %v3865 = vpop.f32.mrf.mxu0
      %v3866 = vadd.f32 %v3275, %v3865
      %3867 = vmatmul.f32.gmra.mxu0 %v3468
      %v3868 = vpop.f32.mrf.mxu0
      %v3869 = vadd.f32 %v3275, %v3868
      %3870 = vmatmul.f32.gmra.mxu0 %v3471
      %v3871 = vpop.f32.mrf.mxu0
      %v3872 = vadd.f32 %v3275, %v3871
      %3873 = vmatmul.f32.gmra.mxu0 %v3474
      %v3874 = vpop.f32.mrf.mxu0
      %v3875 = vadd.f32 %v3275, %v3874
      %3876 = vmatmul.f32.gmra.mxu0 %v3477
      %v3877 = vpop.f32.mrf.mxu0
      %v3878 = vadd.f32 %v3275, %v3877
      %3879 = vmatmul.f32.gmra.mxu0 %v3480
      %v3880 = vpop.f32.mrf.mxu0
      %v3881 = vadd.f32 %v3275, %v3880
      %3882 = vmatmul.f32.gmra.mxu0 %v3483
      %v3883 = vpop.f32.mrf.mxu0
      %v3884 = vadd.f32 %v3275, %v3883
      %3885 = vmatmul.f32.gmra.mxu0 %v3486
      %v3886 = vpop.f32.mrf.mxu0
      %v3887 = vadd.f32 %v3275, %v3886
      %3888 = vmatmul.f32.gmra.mxu0 %v3489
      %v3889 = vpop.f32.mrf.mxu0
      %v3890 = vadd.f32 %v3275, %v3889
      %3891 = vmatmul.f32.gmra.mxu0 %v3492
      %v3892 = vpop.f32.mrf.mxu0
      %v3893 = vadd.f32 %v3275, %v3892
      %3894 = vmatmul.f32.gmra.mxu0 %v3495
      %v3895 = vpop.f32.mrf.mxu0
      %v3896 = vadd.f32 %v3275, %v3895
      %3897 = vmatmul.f32.gmra.mxu0 %v3498
      %v3898 = vpop.f32.mrf.mxu0
      %v3899 = vadd.f32 %v3275, %v3898
      %3900 = vmatmul.f32.gmra.mxu0 %v3501
      %v3901 = vpop.f32.mrf.mxu0
      %v3902 = vadd.f32 %v3275, %v3901
      %3903 = vmatmul.f32.gmra.mxu0 %v3504
      %v3904 = vpop.f32.mrf.mxu0
      %v3905 = vadd.f32 %v3275, %v3904
      %3906 = vmatmul.f32.gmra.mxu0 %v3507
      %v3907 = vpop.f32.mrf.mxu0
      %v3908 = vadd.f32 %v3275, %v3907
      %3909 = vmatmul.f32.gmra.mxu0 %v3510
      %v3910 = vpop.f32.mrf.mxu0
      %v3911 = vadd.f32 %v3275, %v3910
      %3912 = vmatmul.f32.gmra.mxu0 %v3513
      %v3913 = vpop.f32.mrf.mxu0
      %v3914 = vadd.f32 %v3275, %v3913
      %3915 = vmatmul.f32.gmra.mxu0 %v3516
      %v3916 = vpop.f32.mrf.mxu0
      %v3917 = vadd.f32 %v3275, %v3916
      %3918 = vmatmul.f32.gmra.mxu0 %v3519
      %v3919 = vpop.f32.mrf.mxu0
      %v3920 = vadd.f32 %v3275, %v3919
      %3921 = vmatmul.f32.gmra.mxu0 %v3522
      %v3922 = vpop.f32.mrf.mxu0
      %v3923 = vadd.f32 %v3275, %v3922
      %3924 = vmatmul.f32.gmra.mxu0 %v3525
      %v3925 = vpop.f32.mrf.mxu0
      %v3926 = vadd.f32 %v3275, %v3925
      %3927 = vmatmul.f32.gmra.mxu0 %v3528
      %v3928 = vpop.f32.mrf.mxu0
      %v3929 = vadd.f32 %v3275, %v3928
      %3930 = vmatmul.f32.gmra.mxu0 %v3531
      %v3931 = vpop.f32.mrf.mxu0
      %v3932 = vadd.f32 %v3275, %v3931
      %3933 = vmatmul.f32.gmra.mxu0 %v3534
      %v3934 = vpop.f32.mrf.mxu0
      %v3935 = vadd.f32 %v3275, %v3934
      %3936 = vmatmul.f32.gmra.mxu0 %v3537
      %v3937 = vpop.f32.mrf.mxu0
      %v3938 = vadd.f32 %v3275, %v3937
      %3939 = vmatmul.f32.gmra.mxu0 %v3540
      %v3940 = vpop.f32.mrf.mxu0
      %v3941 = vadd.f32 %v3275, %v3940
      %3942 = vmatmul.f32.gmra.mxu0 %v3543
      %v3943 = vpop.f32.mrf.mxu0
      %v3944 = vadd.f32 %v3275, %v3943
      %3945 = vmatmul.f32.gmra.mxu0 %v3546
      %v3946 = vpop.f32.mrf.mxu0
      %v3947 = vadd.f32 %v3275, %v3946
      %3948 = vmatmul.f32.gmra.mxu0 %v3549
      %v3949 = vpop.f32.mrf.mxu0
      %v3950 = vadd.f32 %v3275, %v3949
      %3951 = vmatmul.f32.gmra.mxu0 %v3552
      %v3952 = vpop.f32.mrf.mxu0
      %v3953 = vadd.f32 %v3275, %v3952
      %3954 = vmatmul.f32.gmra.mxu0 %v3555
      %v3955 = vpop.f32.mrf.mxu0
      %v3956 = vadd.f32 %v3275, %v3955
      %3957 = vmatmul.f32.gmra.mxu0 %v3558
      %v3958 = vpop.f32.mrf.mxu0
      %v3959 = vadd.f32 %v3275, %v3958
      %3960 = vmatmul.f32.gmra.mxu0 %v3561
      %v3961 = vpop.f32.mrf.mxu0
      %v3962 = vadd.f32 %v3275, %v3961
      %3963 = vmatmul.f32.gmra.mxu0 %v3564
      %v3964 = vpop.f32.mrf.mxu0
      %v3965 = vadd.f32 %v3275, %v3964
      %3966 = vmatmul.f32.gmra.mxu0 %v3567
      %v3967 = vpop.f32.mrf.mxu0
      %v3968 = vadd.f32 %v3275, %v3967
      %3969 = vmatmul.f32.gmra.mxu0 %v3570
      %v3970 = vpop.f32.mrf.mxu0
      %v3971 = vadd.f32 %v3275, %v3970
      %3972 = vmatmul.f32.gmra.mxu0 %v3573
      %v3973 = vpop.f32.mrf.mxu0
      %v3974 = vadd.f32 %v3275, %v3973
      %3975 = vmatmul.f32.gmra.mxu0 %v3576
      %v3976 = vpop.f32.mrf.mxu0
      %v3977 = vadd.f32 %v3275, %v3976
      %3978 = vmatmul.f32.gmra.mxu0 %v3579
      %v3979 = vpop.f32.mrf.mxu0
      %v3980 = vadd.f32 %v3275, %v3979
      %3981 = vmatmul.f32.gmra.mxu0 %v3582
      %v3982 = vpop.f32.mrf.mxu0
      %v3983 = vadd.f32 %v3275, %v3982
      %3984 = vmatmul.f32.gmra.mxu0 %v3585
      %v3985 = vpop.f32.mrf.mxu0
      %v3986 = vadd.f32 %v3275, %v3985
      %3987 = vmatmul.f32.gmra.mxu0 %v3588
      %v3988 = vpop.f32.mrf.mxu0
      %v3989 = vadd.f32 %v3275, %v3988
      %3990 = vmatmul.f32.gmra.mxu0 %v3591
      %v3991 = vpop.f32.mrf.mxu0
      %v3992 = vadd.f32 %v3275, %v3991
      %3993 = vmatmul.f32.gmra.mxu0 %v3594
      %v3994 = vpop.f32.mrf.mxu0
      %v3995 = vadd.f32 %v3275, %v3994
      %3996 = vmatmul.f32.gmra.mxu0 %v3597
      %v3997 = vpop.f32.mrf.mxu0
      %v3998 = vadd.f32 %v3275, %v3997
      %3999 = vmatmul.f32.gmra.mxu0 %v3600
      %v4000 = vpop.f32.mrf.mxu0
      %v4001 = vadd.f32 %v3275, %v4000
      %4002 = vmatmul.f32.gmra.mxu0 %v3603
      %v4003 = vpop.f32.mrf.mxu0
      %v4004 = vadd.f32 %v3275, %v4003
      %4005 = vmatmul.f32.gmra.mxu0 %v3606
      %v4006 = vpop.f32.mrf.mxu0
      %v4007 = vadd.f32 %v3275, %v4006
      %4008 = vmatmul.f32.gmra.mxu0 %v3609
      %v4009 = vpop.f32.mrf.mxu0
      %v4010 = vadd.f32 %v3275, %v4009
      %4011 = vmatmul.f32.gmra.mxu0 %v3612
      %v4012 = vpop.f32.mrf.mxu0
      %v4013 = vadd.f32 %v3275, %v4012
      %4014 = vmatmul.f32.gmra.mxu0 %v3615
      %v4015 = vpop.f32.mrf.mxu0
      %v4016 = vadd.f32 %v3275, %v4015
      %4017 = vmatmul.f32.gmra.mxu0 %v3618
      %v4018 = vpop.f32.mrf.mxu0
      %v4019 = vadd.f32 %v3275, %v4018
      %4020 = vmatmul.f32.gmra.mxu0 %v3621
      %v4021 = vpop.f32.mrf.mxu0
      %v4022 = vadd.f32 %v3275, %v4021
      %4023 = vmatmul.f32.gmra.mxu0 %v3624
      %v4024 = vpop.f32.mrf.mxu0
      %v4025 = vadd.f32 %v3275, %v4024
      %4026 = vmatmul.f32.gmra.mxu0 %v3627
      %v4027 = vpop.f32.mrf.mxu0
      %v4028 = vadd.f32 %v3275, %v4027
      %4029 = vmatmul.f32.gmra.mxu0 %v3630
      %v4030 = vpop.f32.mrf.mxu0
      %v4031 = vadd.f32 %v3275, %v4030
      %4032 = vmatmul.f32.gmra.mxu0 %v3633
      %v4033 = vpop.f32.mrf.mxu0
      %v4034 = vadd.f32 %v3275, %v4033
      %4035 = vmatmul.f32.gmra.mxu0 %v3636
      %v4036 = vpop.f32.mrf.mxu0
      %v4037 = vadd.f32 %v3275, %v4036
      %4038 = vmatmul.f32.gmra.mxu0 %v3639
      %v4039 = vpop.f32.mrf.mxu0
      %v4040 = vadd.f32 %v3275, %v4039
      %4041 = vmatmul.f32.gmra.mxu0 %v3642
      %v4042 = vpop.f32.mrf.mxu0
      %v4043 = vadd.f32 %v3275, %v4042
      %4044 = vmatmul.f32.gmra.mxu0 %v3645
      %v4045 = vpop.f32.mrf.mxu0
      %v4046 = vadd.f32 %v3275, %v4045
      %4047 = vmatmul.f32.gmra.mxu0 %v3648
      %v4048 = vpop.f32.mrf.mxu0
      %v4049 = vadd.f32 %v3275, %v4048
      %4050 = vmatmul.f32.gmra.mxu0 %v3651
      %v4051 = vpop.f32.mrf.mxu0
      %v4052 = vadd.f32 %v3275, %v4051
      %4053 = vmatmul.f32.gmra.mxu0 %v3654
      %v4054 = vpop.f32.mrf.mxu0
      %v4055 = vadd.f32 %v3275, %v4054
      %4056 = vmatmul.f32.gmra.mxu0 %v3657
      %v4057 = vpop.f32.mrf.mxu0
      %v4058 = vadd.f32 %v3275, %v4057
      %4059 = vmatmul.f32.gmra.mxu0 %v3660
      %v4060 = vpop.f32.mrf.mxu0
      %v4061 = vadd.f32 %v3275, %v4060
      %4062 = vdwg.mxu0
      %vm4063 = vcmask 64512
      %4064 = vst.msk [vmem:[%s427] sm:$0xff] %vm4063, %v3680
      %4065 = vst.msk [vmem:[%s427 + $0x8] sm:$0xff] %vm4063, %v3683
      %4066 = vst.msk [vmem:[%s427 + $0x10] sm:$0xff] %vm4063, %v3686
      %4067 = vst.msk [vmem:[%s427 + $0x18] sm:$0xff] %vm4063, %v3689
      %4068 = vst.msk [vmem:[%s427 + $0x20] sm:$0xff] %vm4063, %v3692
      %4069 = vst.msk [vmem:[%s427 + $0x28] sm:$0xff] %vm4063, %v3695
      %4070 = vst.msk [vmem:[%s427 + $0x30] sm:$0xff] %vm4063, %v3698
      %4071 = vst.msk [vmem:[%s427 + $0x38] sm:$0xff] %vm4063, %v3701
      %4072 = vst.msk [vmem:[%s427 + $0x40] sm:$0xff] %vm4063, %v3704
      %4073 = vst.msk [vmem:[%s427 + $0x48] sm:$0xff] %vm4063, %v3707
      %4074 = vst.msk [vmem:[%s427 + $0x50] sm:$0xff] %vm4063, %v3710
      %4075 = vst.msk [vmem:[%s427 + $0x58] sm:$0xff] %vm4063, %v3713
      %4076 = vst.msk [vmem:[%s427 + $0x60] sm:$0xff] %vm4063, %v3716
      %4077 = vst.msk [vmem:[%s427 + $0x68] sm:$0xff] %vm4063, %v3719
      %4078 = vst.msk [vmem:[%s427 + $0x70] sm:$0xff] %vm4063, %v3722
      %4079 = vst.msk [vmem:[%s427 + $0x78] sm:$0xff] %vm4063, %v3725
      %4080 = vst.msk [vmem:[%s427 + $0x80] sm:$0xff] %vm4063, %v3728
      %4081 = vst.msk [vmem:[%s427 + $0x88] sm:$0xff] %vm4063, %v3731
      %4082 = vst.msk [vmem:[%s427 + $0x90] sm:$0xff] %vm4063, %v3734
      %4083 = vst.msk [vmem:[%s427 + $0x98] sm:$0xff] %vm4063, %v3737
      %4084 = vst.msk [vmem:[%s427 + $0xa0] sm:$0xff] %vm4063, %v3740
      %4085 = vst.msk [vmem:[%s427 + $0xa8] sm:$0xff] %vm4063, %v3743
      %4086 = vst.msk [vmem:[%s427 + $0xb0] sm:$0xff] %vm4063, %v3746
      %4087 = vst.msk [vmem:[%s427 + $0xb8] sm:$0xff] %vm4063, %v3749
      %4088 = vst.msk [vmem:[%s427 + $0xc0] sm:$0xff] %vm4063, %v3752
      %4089 = vst.msk [vmem:[%s427 + $0xc8] sm:$0xff] %vm4063, %v3755
      %4090 = vst.msk [vmem:[%s427 + $0xd0] sm:$0xff] %vm4063, %v3758
      %4091 = vst.msk [vmem:[%s427 + $0xd8] sm:$0xff] %vm4063, %v3761
      %4092 = vst.msk [vmem:[%s427 + $0xe0] sm:$0xff] %vm4063, %v3764
      %4093 = vst.msk [vmem:[%s427 + $0xe8] sm:$0xff] %vm4063, %v3767
      %4094 = vst.msk [vmem:[%s427 + $0xf0] sm:$0xff] %vm4063, %v3770
      %4095 = vst.msk [vmem:[%s427 + $0xf8] sm:$0xff] %vm4063, %v3773
      %4096 = vst.msk [vmem:[%s427 + $0x100] sm:$0xff] %vm4063, %v3776
      %4097 = vst.msk [vmem:[%s427 + $0x108] sm:$0xff] %vm4063, %v3779
      %4098 = vst.msk [vmem:[%s427 + $0x110] sm:$0xff] %vm4063, %v3782
      %4099 = vst.msk [vmem:[%s427 + $0x118] sm:$0xff] %vm4063, %v3785
      %4100 = vst.msk [vmem:[%s427 + $0x120] sm:$0xff] %vm4063, %v3788
      %4101 = vst.msk [vmem:[%s427 + $0x128] sm:$0xff] %vm4063, %v3791
      %4102 = vst.msk [vmem:[%s427 + $0x130] sm:$0xff] %vm4063, %v3794
      %4103 = vst.msk [vmem:[%s427 + $0x138] sm:$0xff] %vm4063, %v3797
      %4104 = vst.msk [vmem:[%s427 + $0x140] sm:$0xff] %vm4063, %v3800
      %4105 = vst.msk [vmem:[%s427 + $0x148] sm:$0xff] %vm4063, %v3803
      %4106 = vst.msk [vmem:[%s427 + $0x150] sm:$0xff] %vm4063, %v3806
      %4107 = vst.msk [vmem:[%s427 + $0x158] sm:$0xff] %vm4063, %v3809
      %4108 = vst.msk [vmem:[%s427 + $0x160] sm:$0xff] %vm4063, %v3812
      %4109 = vst.msk [vmem:[%s427 + $0x168] sm:$0xff] %vm4063, %v3815
      %4110 = vst.msk [vmem:[%s427 + $0x170] sm:$0xff] %vm4063, %v3818
      %4111 = vst.msk [vmem:[%s427 + $0x178] sm:$0xff] %vm4063, %v3821
      %4112 = vst.msk [vmem:[%s427 + $0x180] sm:$0xff] %vm4063, %v3824
      %4113 = vst.msk [vmem:[%s427 + $0x188] sm:$0xff] %vm4063, %v3827
      %4114 = vst.msk [vmem:[%s427 + $0x190] sm:$0xff] %vm4063, %v3830
      %4115 = vst.msk [vmem:[%s427 + $0x198] sm:$0xff] %vm4063, %v3833
      %4116 = vst.msk [vmem:[%s427 + $0x1a0] sm:$0xff] %vm4063, %v3836
      %4117 = vst.msk [vmem:[%s427 + $0x1a8] sm:$0xff] %vm4063, %v3839
      %4118 = vst.msk [vmem:[%s427 + $0x1b0] sm:$0xff] %vm4063, %v3842
      %4119 = vst.msk [vmem:[%s427 + $0x1b8] sm:$0xff] %vm4063, %v3845
      %4120 = vst.msk [vmem:[%s427 + $0x1c0] sm:$0xff] %vm4063, %v3848
      %4121 = vst.msk [vmem:[%s427 + $0x1c8] sm:$0xff] %vm4063, %v3851
      %4122 = vst.msk [vmem:[%s427 + $0x1d0] sm:$0xff] %vm4063, %v3854
      %4123 = vst.msk [vmem:[%s427 + $0x1d8] sm:$0xff] %vm4063, %v3857
      %4124 = vst.msk [vmem:[%s427 + $0x1e0] sm:$0xff] %vm4063, %v3860
      %4125 = vst.msk [vmem:[%s427 + $0x1e8] sm:$0xff] %vm4063, %v3863
      %4126 = vst.msk [vmem:[%s427 + $0x1f0] sm:$0xff] %vm4063, %v3866
      %4127 = vst.msk [vmem:[%s427 + $0x1f8] sm:$0xff] %vm4063, %v3869
      %4128 = vst.msk [vmem:[%s427 + $0x200] sm:$0xff] %vm4063, %v3872
      %4129 = vst.msk [vmem:[%s427 + $0x208] sm:$0xff] %vm4063, %v3875
      %4130 = vst.msk [vmem:[%s427 + $0x210] sm:$0xff] %vm4063, %v3878
      %4131 = vst.msk [vmem:[%s427 + $0x218] sm:$0xff] %vm4063, %v3881
      %4132 = vst.msk [vmem:[%s427 + $0x220] sm:$0xff] %vm4063, %v3884
      %4133 = vst.msk [vmem:[%s427 + $0x228] sm:$0xff] %vm4063, %v3887
      %4134 = vst.msk [vmem:[%s427 + $0x230] sm:$0xff] %vm4063, %v3890
      %4135 = vst.msk [vmem:[%s427 + $0x238] sm:$0xff] %vm4063, %v3893
      %4136 = vst.msk [vmem:[%s427 + $0x240] sm:$0xff] %vm4063, %v3896
      %4137 = vst.msk [vmem:[%s427 + $0x248] sm:$0xff] %vm4063, %v3899
      %4138 = vst.msk [vmem:[%s427 + $0x250] sm:$0xff] %vm4063, %v3902
      %4139 = vst.msk [vmem:[%s427 + $0x258] sm:$0xff] %vm4063, %v3905
      %4140 = vst.msk [vmem:[%s427 + $0x260] sm:$0xff] %vm4063, %v3908
      %4141 = vst.msk [vmem:[%s427 + $0x268] sm:$0xff] %vm4063, %v3911
      %4142 = vst.msk [vmem:[%s427 + $0x270] sm:$0xff] %vm4063, %v3914
      %4143 = vst.msk [vmem:[%s427 + $0x278] sm:$0xff] %vm4063, %v3917
      %4144 = vst.msk [vmem:[%s427 + $0x280] sm:$0xff] %vm4063, %v3920
      %4145 = vst.msk [vmem:[%s427 + $0x288] sm:$0xff] %vm4063, %v3923
      %4146 = vst.msk [vmem:[%s427 + $0x290] sm:$0xff] %vm4063, %v3926
      %4147 = vst.msk [vmem:[%s427 + $0x298] sm:$0xff] %vm4063, %v3929
      %4148 = vst.msk [vmem:[%s427 + $0x2a0] sm:$0xff] %vm4063, %v3932
      %4149 = vst.msk [vmem:[%s427 + $0x2a8] sm:$0xff] %vm4063, %v3935
      %4150 = vst.msk [vmem:[%s427 + $0x2b0] sm:$0xff] %vm4063, %v3938
      %4151 = vst.msk [vmem:[%s427 + $0x2b8] sm:$0xff] %vm4063, %v3941
      %4152 = vst.msk [vmem:[%s427 + $0x2c0] sm:$0xff] %vm4063, %v3944
      %4153 = vst.msk [vmem:[%s427 + $0x2c8] sm:$0xff] %vm4063, %v3947
      %4154 = vst.msk [vmem:[%s427 + $0x2d0] sm:$0xff] %vm4063, %v3950
      %4155 = vst.msk [vmem:[%s427 + $0x2d8] sm:$0xff] %vm4063, %v3953
      %4156 = vst.msk [vmem:[%s427 + $0x2e0] sm:$0xff] %vm4063, %v3956
      %4157 = vst.msk [vmem:[%s427 + $0x2e8] sm:$0xff] %vm4063, %v3959
      %4158 = vst.msk [vmem:[%s427 + $0x2f0] sm:$0xff] %vm4063, %v3962
      %4159 = vst.msk [vmem:[%s427 + $0x2f8] sm:$0xff] %vm4063, %v3965
      %4160 = vst.msk [vmem:[%s427 + $0x300] sm:$0xff] %vm4063, %v3968
      %4161 = vst.msk [vmem:[%s427 + $0x308] sm:$0xff] %vm4063, %v3971
      %4162 = vst.msk [vmem:[%s427 + $0x310] sm:$0xff] %vm4063, %v3974
      %4163 = vst.msk [vmem:[%s427 + $0x318] sm:$0xff] %vm4063, %v3977
      %4164 = vst.msk [vmem:[%s427 + $0x320] sm:$0xff] %vm4063, %v3980
      %4165 = vst.msk [vmem:[%s427 + $0x328] sm:$0xff] %vm4063, %v3983
      %4166 = vst.msk [vmem:[%s427 + $0x330] sm:$0xff] %vm4063, %v3986
      %4167 = vst.msk [vmem:[%s427 + $0x338] sm:$0xff] %vm4063, %v3989
      %4168 = vst.msk [vmem:[%s427 + $0x340] sm:$0xff] %vm4063, %v3992
      %4169 = vst.msk [vmem:[%s427 + $0x348] sm:$0xff] %vm4063, %v3995
      %4170 = vst.msk [vmem:[%s427 + $0x350] sm:$0xff] %vm4063, %v3998
      %4171 = vst.msk [vmem:[%s427 + $0x358] sm:$0xff] %vm4063, %v4001
      %4172 = vst.msk [vmem:[%s427 + $0x360] sm:$0xff] %vm4063, %v4004
      %4173 = vst.msk [vmem:[%s427 + $0x368] sm:$0xff] %vm4063, %v4007
      %4174 = vst.msk [vmem:[%s427 + $0x370] sm:$0xff] %vm4063, %v4010
      %4175 = vst.msk [vmem:[%s427 + $0x378] sm:$0xff] %vm4063, %v4013
      %4176 = vst.msk [vmem:[%s427 + $0x380] sm:$0xff] %vm4063, %v4016
      %4177 = vst.msk [vmem:[%s427 + $0x388] sm:$0xff] %vm4063, %v4019
      %4178 = vst.msk [vmem:[%s427 + $0x390] sm:$0xff] %vm4063, %v4022
      %4179 = vst.msk [vmem:[%s427 + $0x398] sm:$0xff] %vm4063, %v4025
      %4180 = vst.msk [vmem:[%s427 + $0x3a0] sm:$0xff] %vm4063, %v4028
      %4181 = vst.msk [vmem:[%s427 + $0x3a8] sm:$0xff] %vm4063, %v4031
      %4182 = vst.msk [vmem:[%s427 + $0x3b0] sm:$0xff] %vm4063, %v4034
      %4183 = vst.msk [vmem:[%s427 + $0x3b8] sm:$0xff] %vm4063, %v4037
      %4184 = vst.msk [vmem:[%s427 + $0x3c0] sm:$0xff] %vm4063, %v4040
      %4185 = vst.msk [vmem:[%s427 + $0x3c8] sm:$0xff] %vm4063, %v4043
      %4186 = vst.msk [vmem:[%s427 + $0x3d0] sm:$0xff] %vm4063, %v4046
      %4187 = vst.msk [vmem:[%s427 + $0x3d8] sm:$0xff] %vm4063, %v4049
      %4188 = vst.msk [vmem:[%s427 + $0x3e0] sm:$0xff] %vm4063, %v4052
      %4189 = vst.msk [vmem:[%s427 + $0x3e8] sm:$0xff] %vm4063, %v4055
      %4190 = vst.msk [vmem:[%s427 + $0x3f0] sm:$0xff] %vm4063, %v4058
      %4191 = vst.msk [vmem:[%s427 + $0x3f8] sm:$0xff] %vm4063, %v4061
      %v4192 = vld [vmem:[%s10] sm:$0x1]
      %v4193 = vsel %vm4063, %v3680, 0.0
      %v4194 = vsel %vm4063, %v3683, 0.0
      %v4195 = vadd.f32 %v4193, %v4194
      %v4196 = vsel %vm4063, %v3686, 0.0
      %v4197 = vadd.f32 %v4195, %v4196
      %v4198 = vsel %vm4063, %v3689, 0.0
      %v4199 = vadd.f32 %v4197, %v4198
      %v4200 = vsel %vm4063, %v3692, 0.0
      %v4201 = vadd.f32 %v4199, %v4200
      %v4202 = vsel %vm4063, %v3695, 0.0
      %v4203 = vadd.f32 %v4201, %v4202
      %v4204 = vsel %vm4063, %v3698, 0.0
      %v4205 = vadd.f32 %v4203, %v4204
      %v4206 = vsel %vm4063, %v3701, 0.0
      %v4207 = vadd.f32 %v4205, %v4206
      %v4208 = vsel %vm4063, %v3704, 0.0
      %v4209 = vadd.f32 %v4207, %v4208
      %v4210 = vsel %vm4063, %v3707, 0.0
      %v4211 = vadd.f32 %v4209, %v4210
      %v4212 = vsel %vm4063, %v3710, 0.0
      %v4213 = vadd.f32 %v4211, %v4212
      %v4214 = vsel %vm4063, %v3713, 0.0
      %v4215 = vadd.f32 %v4213, %v4214
      %v4216 = vsel %vm4063, %v3716, 0.0
      %v4217 = vadd.f32 %v4215, %v4216
      %v4218 = vsel %vm4063, %v3719, 0.0
      %v4219 = vadd.f32 %v4217, %v4218
      %v4220 = vsel %vm4063, %v3722, 0.0
      %v4221 = vadd.f32 %v4219, %v4220
      %v4222 = vsel %vm4063, %v3725, 0.0
      %v4223 = vadd.f32 %v4221, %v4222
      %v4224 = vsel %vm4063, %v3728, 0.0
      %v4225 = vadd.f32 %v4223, %v4224
      %v4226 = vsel %vm4063, %v3731, 0.0
      %v4227 = vadd.f32 %v4225, %v4226
      %v4228 = vsel %vm4063, %v3734, 0.0
      %v4229 = vadd.f32 %v4227, %v4228
      %v4230 = vsel %vm4063, %v3737, 0.0
      %v4231 = vadd.f32 %v4229, %v4230
      %v4232 = vsel %vm4063, %v3740, 0.0
      %v4233 = vadd.f32 %v4231, %v4232
      %v4234 = vsel %vm4063, %v3743, 0.0
      %v4235 = vadd.f32 %v4233, %v4234
      %v4236 = vsel %vm4063, %v3746, 0.0
      %v4237 = vadd.f32 %v4235, %v4236
      %v4238 = vsel %vm4063, %v3749, 0.0
      %v4239 = vadd.f32 %v4237, %v4238
      %v4240 = vsel %vm4063, %v3752, 0.0
      %v4241 = vadd.f32 %v4239, %v4240
      %v4242 = vsel %vm4063, %v3755, 0.0
      %v4243 = vadd.f32 %v4241, %v4242
      %v4244 = vsel %vm4063, %v3758, 0.0
      %v4245 = vadd.f32 %v4243, %v4244
      %v4246 = vsel %vm4063, %v3761, 0.0
      %v4247 = vadd.f32 %v4245, %v4246
      %v4248 = vsel %vm4063, %v3764, 0.0
      %v4249 = vadd.f32 %v4247, %v4248
      %v4250 = vsel %vm4063, %v3767, 0.0
      %v4251 = vadd.f32 %v4249, %v4250
      %v4252 = vsel %vm4063, %v3770, 0.0
      %v4253 = vadd.f32 %v4251, %v4252
      %v4254 = vsel %vm4063, %v3773, 0.0
      %v4255 = vadd.f32 %v4253, %v4254
      %v4256 = vsel %vm4063, %v3776, 0.0
      %v4257 = vadd.f32 %v4255, %v4256
      %v4258 = vsel %vm4063, %v3779, 0.0
      %v4259 = vadd.f32 %v4257, %v4258
      %v4260 = vsel %vm4063, %v3782, 0.0
      %v4261 = vadd.f32 %v4259, %v4260
      %v4262 = vsel %vm4063, %v3785, 0.0
      %v4263 = vadd.f32 %v4261, %v4262
      %v4264 = vsel %vm4063, %v3788, 0.0
      %v4265 = vadd.f32 %v4263, %v4264
      %v4266 = vsel %vm4063, %v3791, 0.0
      %v4267 = vadd.f32 %v4265, %v4266
      %v4268 = vsel %vm4063, %v3794, 0.0
      %v4269 = vadd.f32 %v4267, %v4268
      %v4270 = vsel %vm4063, %v3797, 0.0
      %v4271 = vadd.f32 %v4269, %v4270
      %v4272 = vsel %vm4063, %v3800, 0.0
      %v4273 = vadd.f32 %v4271, %v4272
      %v4274 = vsel %vm4063, %v3803, 0.0
      %v4275 = vadd.f32 %v4273, %v4274
      %v4276 = vsel %vm4063, %v3806, 0.0
      %v4277 = vadd.f32 %v4275, %v4276
      %v4278 = vsel %vm4063, %v3809, 0.0
      %v4279 = vadd.f32 %v4277, %v4278
      %v4280 = vsel %vm4063, %v3812, 0.0
      %v4281 = vadd.f32 %v4279, %v4280
      %v4282 = vsel %vm4063, %v3815, 0.0
      %v4283 = vadd.f32 %v4281, %v4282
      %v4284 = vsel %vm4063, %v3818, 0.0
      %v4285 = vadd.f32 %v4283, %v4284
      %v4286 = vsel %vm4063, %v3821, 0.0
      %v4287 = vadd.f32 %v4285, %v4286
      %v4288 = vsel %vm4063, %v3824, 0.0
      %v4289 = vadd.f32 %v4287, %v4288
      %v4290 = vsel %vm4063, %v3827, 0.0
      %v4291 = vadd.f32 %v4289, %v4290
      %v4292 = vsel %vm4063, %v3830, 0.0
      %v4293 = vadd.f32 %v4291, %v4292
      %v4294 = vsel %vm4063, %v3833, 0.0
      %v4295 = vadd.f32 %v4293, %v4294
      %v4296 = vsel %vm4063, %v3836, 0.0
      %v4297 = vadd.f32 %v4295, %v4296
      %v4298 = vsel %vm4063, %v3839, 0.0
      %v4299 = vadd.f32 %v4297, %v4298
      %v4300 = vsel %vm4063, %v3842, 0.0
      %v4301 = vadd.f32 %v4299, %v4300
      %v4302 = vsel %vm4063, %v3845, 0.0
      %v4303 = vadd.f32 %v4301, %v4302
      %v4304 = vsel %vm4063, %v3848, 0.0
      %v4305 = vadd.f32 %v4303, %v4304
      %v4306 = vsel %vm4063, %v3851, 0.0
      %v4307 = vadd.f32 %v4305, %v4306
      %v4308 = vsel %vm4063, %v3854, 0.0
      %v4309 = vadd.f32 %v4307, %v4308
      %v4310 = vsel %vm4063, %v3857, 0.0
      %v4311 = vadd.f32 %v4309, %v4310
      %v4312 = vsel %vm4063, %v3860, 0.0
      %v4313 = vadd.f32 %v4311, %v4312
      %v4314 = vsel %vm4063, %v3863, 0.0
      %v4315 = vadd.f32 %v4313, %v4314
      %v4316 = vsel %vm4063, %v3866, 0.0
      %v4317 = vadd.f32 %v4315, %v4316
      %v4318 = vsel %vm4063, %v3869, 0.0
      %v4319 = vadd.f32 %v4317, %v4318
      %v4320 = vsel %vm4063, %v3872, 0.0
      %v4321 = vadd.f32 %v4319, %v4320
      %v4322 = vsel %vm4063, %v3875, 0.0
      %v4323 = vadd.f32 %v4321, %v4322
      %v4324 = vsel %vm4063, %v3878, 0.0
      %v4325 = vadd.f32 %v4323, %v4324
      %v4326 = vsel %vm4063, %v3881, 0.0
      %v4327 = vadd.f32 %v4325, %v4326
      %v4328 = vsel %vm4063, %v3884, 0.0
      %v4329 = vadd.f32 %v4327, %v4328
      %v4330 = vsel %vm4063, %v3887, 0.0
      %v4331 = vadd.f32 %v4329, %v4330
      %v4332 = vsel %vm4063, %v3890, 0.0
      %v4333 = vadd.f32 %v4331, %v4332
      %v4334 = vsel %vm4063, %v3893, 0.0
      %v4335 = vadd.f32 %v4333, %v4334
      %v4336 = vsel %vm4063, %v3896, 0.0
      %v4337 = vadd.f32 %v4335, %v4336
      %v4338 = vsel %vm4063, %v3899, 0.0
      %v4339 = vadd.f32 %v4337, %v4338
      %v4340 = vsel %vm4063, %v3902, 0.0
      %v4341 = vadd.f32 %v4339, %v4340
      %v4342 = vsel %vm4063, %v3905, 0.0
      %v4343 = vadd.f32 %v4341, %v4342
      %v4344 = vsel %vm4063, %v3908, 0.0
      %v4345 = vadd.f32 %v4343, %v4344
      %v4346 = vsel %vm4063, %v3911, 0.0
      %v4347 = vadd.f32 %v4345, %v4346
      %v4348 = vsel %vm4063, %v3914, 0.0
      %v4349 = vadd.f32 %v4347, %v4348
      %v4350 = vsel %vm4063, %v3917, 0.0
      %v4351 = vadd.f32 %v4349, %v4350
      %v4352 = vsel %vm4063, %v3920, 0.0
      %v4353 = vadd.f32 %v4351, %v4352
      %v4354 = vsel %vm4063, %v3923, 0.0
      %v4355 = vadd.f32 %v4353, %v4354
      %v4356 = vsel %vm4063, %v3926, 0.0
      %v4357 = vadd.f32 %v4355, %v4356
      %v4358 = vsel %vm4063, %v3929, 0.0
      %v4359 = vadd.f32 %v4357, %v4358
      %v4360 = vsel %vm4063, %v3932, 0.0
      %v4361 = vadd.f32 %v4359, %v4360
      %v4362 = vsel %vm4063, %v3935, 0.0
      %v4363 = vadd.f32 %v4361, %v4362
      %v4364 = vsel %vm4063, %v3938, 0.0
      %v4365 = vadd.f32 %v4363, %v4364
      %v4366 = vsel %vm4063, %v3941, 0.0
      %v4367 = vadd.f32 %v4365, %v4366
      %v4368 = vsel %vm4063, %v3944, 0.0
      %v4369 = vadd.f32 %v4367, %v4368
      %v4370 = vsel %vm4063, %v3947, 0.0
      %v4371 = vadd.f32 %v4369, %v4370
      %v4372 = vsel %vm4063, %v3950, 0.0
      %v4373 = vadd.f32 %v4371, %v4372
      %v4374 = vsel %vm4063, %v3953, 0.0
      %v4375 = vadd.f32 %v4373, %v4374
      %v4376 = vsel %vm4063, %v3956, 0.0
      %v4377 = vadd.f32 %v4375, %v4376
      %v4378 = vsel %vm4063, %v3959, 0.0
      %v4379 = vadd.f32 %v4377, %v4378
      %v4380 = vsel %vm4063, %v3962, 0.0
      %v4381 = vadd.f32 %v4379, %v4380
      %v4382 = vsel %vm4063, %v3965, 0.0
      %v4383 = vadd.f32 %v4381, %v4382
      %v4384 = vsel %vm4063, %v3968, 0.0
      %v4385 = vadd.f32 %v4383, %v4384
      %v4386 = vsel %vm4063, %v3971, 0.0
      %v4387 = vadd.f32 %v4385, %v4386
      %v4388 = vsel %vm4063, %v3974, 0.0
      %v4389 = vadd.f32 %v4387, %v4388
      %v4390 = vsel %vm4063, %v3977, 0.0
      %v4391 = vadd.f32 %v4389, %v4390
      %v4392 = vsel %vm4063, %v3980, 0.0
      %v4393 = vadd.f32 %v4391, %v4392
      %v4394 = vsel %vm4063, %v3983, 0.0
      %v4395 = vadd.f32 %v4393, %v4394
      %v4396 = vsel %vm4063, %v3986, 0.0
      %v4397 = vadd.f32 %v4395, %v4396
      %v4398 = vsel %vm4063, %v3989, 0.0
      %v4399 = vadd.f32 %v4397, %v4398
      %v4400 = vsel %vm4063, %v3992, 0.0
      %v4401 = vadd.f32 %v4399, %v4400
      %v4402 = vsel %vm4063, %v3995, 0.0
      %v4403 = vadd.f32 %v4401, %v4402
      %v4404 = vsel %vm4063, %v3998, 0.0
      %v4405 = vadd.f32 %v4403, %v4404
      %v4406 = vsel %vm4063, %v4001, 0.0
      %v4407 = vadd.f32 %v4405, %v4406
      %v4408 = vsel %vm4063, %v4004, 0.0
      %v4409 = vadd.f32 %v4407, %v4408
      %v4410 = vsel %vm4063, %v4007, 0.0
      %v4411 = vadd.f32 %v4409, %v4410
      %v4412 = vsel %vm4063, %v4010, 0.0
      %v4413 = vadd.f32 %v4411, %v4412
      %v4414 = vsel %vm4063, %v4013, 0.0
      %v4415 = vadd.f32 %v4413, %v4414
      %v4416 = vsel %vm4063, %v4016, 0.0
      %v4417 = vadd.f32 %v4415, %v4416
      %v4418 = vsel %vm4063, %v4019, 0.0
      %v4419 = vadd.f32 %v4417, %v4418
      %v4420 = vsel %vm4063, %v4022, 0.0
      %v4421 = vadd.f32 %v4419, %v4420
      %v4422 = vsel %vm4063, %v4025, 0.0
      %v4423 = vadd.f32 %v4421, %v4422
      %v4424 = vsel %vm4063, %v4028, 0.0
      %v4425 = vadd.f32 %v4423, %v4424
      %v4426 = vsel %vm4063, %v4031, 0.0
      %v4427 = vadd.f32 %v4425, %v4426
      %v4428 = vsel %vm4063, %v4034, 0.0
      %v4429 = vadd.f32 %v4427, %v4428
      %v4430 = vsel %vm4063, %v4037, 0.0
      %v4431 = vadd.f32 %v4429, %v4430
      %v4432 = vsel %vm4063, %v4040, 0.0
      %v4433 = vadd.f32 %v4431, %v4432
      %v4434 = vsel %vm4063, %v4043, 0.0
      %v4435 = vadd.f32 %v4433, %v4434
      %v4436 = vsel %vm4063, %v4046, 0.0
      %v4437 = vadd.f32 %v4435, %v4436
      %v4438 = vsel %vm4063, %v4049, 0.0
      %v4439 = vadd.f32 %v4437, %v4438
      %v4440 = vsel %vm4063, %v4052, 0.0
      %v4441 = vadd.f32 %v4439, %v4440
      %v4442 = vsel %vm4063, %v4055, 0.0
      %v4443 = vadd.f32 %v4441, %v4442
      %v4444 = vsel %vm4063, %v4058, 0.0
      %v4445 = vadd.f32 %v4443, %v4444
      %v4446 = vsel %vm4063, %v4061, 0.0
      %v4447 = vadd.f32 %v4445, %v4446
      %v4448 = vrot.slane %v4447, 4
      %v4449 = vadd.f32 %v4447, %v4448
      %v4450 = vrot.slane %v4449, 2
      %v4451 = vadd.f32 %v4449, %v4450
      %v4452 = vrot.slane %v4451, 1
      %v4453 = vadd.f32 %v4451, %v4452
      %v4454 = vadd.f32 %v4192, %v4453
      %vm4455 = vcmask 57344
      %4456 = vst.msk [vmem:[%s10] sm:$0x1] %vm4455, %v4454
      %v4457 = vld [vmem:[%s11] sm:$0x1]
      %v4458 = vmul.f32 %v3680, %v3680
      %v4459 = vmul.f32 %v3683, %v3683
      %v4460 = vmul.f32 %v3686, %v3686
      %v4461 = vmul.f32 %v3689, %v3689
      %v4462 = vmul.f32 %v3692, %v3692
      %v4463 = vmul.f32 %v3695, %v3695
      %v4464 = vmul.f32 %v3698, %v3698
      %v4465 = vmul.f32 %v3701, %v3701
      %v4466 = vmul.f32 %v3704, %v3704
      %v4467 = vmul.f32 %v3707, %v3707
      %v4468 = vmul.f32 %v3710, %v3710
      %v4469 = vmul.f32 %v3713, %v3713
      %v4470 = vmul.f32 %v3716, %v3716
      %v4471 = vmul.f32 %v3719, %v3719
      %v4472 = vmul.f32 %v3722, %v3722
      %v4473 = vmul.f32 %v3725, %v3725
      %v4474 = vmul.f32 %v3728, %v3728
      %v4475 = vmul.f32 %v3731, %v3731
      %v4476 = vmul.f32 %v3734, %v3734
      %v4477 = vmul.f32 %v3737, %v3737
      %v4478 = vmul.f32 %v3740, %v3740
      %v4479 = vmul.f32 %v3743, %v3743
      %v4480 = vmul.f32 %v3746, %v3746
      %v4481 = vmul.f32 %v3749, %v3749
      %v4482 = vmul.f32 %v3752, %v3752
      %v4483 = vmul.f32 %v3755, %v3755
      %v4484 = vmul.f32 %v3758, %v3758
      %v4485 = vmul.f32 %v3761, %v3761
      %v4486 = vmul.f32 %v3764, %v3764
      %v4487 = vmul.f32 %v3767, %v3767
      %v4488 = vmul.f32 %v3770, %v3770
      %v4489 = vmul.f32 %v3773, %v3773
      %v4490 = vmul.f32 %v3776, %v3776
      %v4491 = vmul.f32 %v3779, %v3779
      %v4492 = vmul.f32 %v3782, %v3782
      %v4493 = vmul.f32 %v3785, %v3785
      %v4494 = vmul.f32 %v3788, %v3788
      %v4495 = vmul.f32 %v3791, %v3791
      %v4496 = vmul.f32 %v3794, %v3794
      %v4497 = vmul.f32 %v3797, %v3797
      %v4498 = vmul.f32 %v3800, %v3800
      %v4499 = vmul.f32 %v3803, %v3803
      %v4500 = vmul.f32 %v3806, %v3806
      %v4501 = vmul.f32 %v3809, %v3809
      %v4502 = vmul.f32 %v3812, %v3812
      %v4503 = vmul.f32 %v3815, %v3815
      %v4504 = vmul.f32 %v3818, %v3818
      %v4505 = vmul.f32 %v3821, %v3821
      %v4506 = vmul.f32 %v3824, %v3824
      %v4507 = vmul.f32 %v3827, %v3827
      %v4508 = vmul.f32 %v3830, %v3830
      %v4509 = vmul.f32 %v3833, %v3833
      %v4510 = vmul.f32 %v3836, %v3836
      %v4511 = vmul.f32 %v3839, %v3839
      %v4512 = vmul.f32 %v3842, %v3842
      %v4513 = vmul.f32 %v3845, %v3845
      %v4514 = vmul.f32 %v3848, %v3848
      %v4515 = vmul.f32 %v3851, %v3851
      %v4516 = vmul.f32 %v3854, %v3854
      %v4517 = vmul.f32 %v3857, %v3857
      %v4518 = vmul.f32 %v3860, %v3860
      %v4519 = vmul.f32 %v3863, %v3863
      %v4520 = vmul.f32 %v3866, %v3866
      %v4521 = vmul.f32 %v3869, %v3869
      %v4522 = vmul.f32 %v3872, %v3872
      %v4523 = vmul.f32 %v3875, %v3875
      %v4524 = vmul.f32 %v3878, %v3878
      %v4525 = vmul.f32 %v3881, %v3881
      %v4526 = vmul.f32 %v3884, %v3884
      %v4527 = vmul.f32 %v3887, %v3887
      %v4528 = vmul.f32 %v3890, %v3890
      %v4529 = vmul.f32 %v3893, %v3893
      %v4530 = vmul.f32 %v3896, %v3896
      %v4531 = vmul.f32 %v3899, %v3899
      %v4532 = vmul.f32 %v3902, %v3902
      %v4533 = vmul.f32 %v3905, %v3905
      %v4534 = vmul.f32 %v3908, %v3908
      %v4535 = vmul.f32 %v3911, %v3911
      %v4536 = vmul.f32 %v3914, %v3914
      %v4537 = vmul.f32 %v3917, %v3917
      %v4538 = vmul.f32 %v3920, %v3920
      %v4539 = vmul.f32 %v3923, %v3923
      %v4540 = vmul.f32 %v3926, %v3926
      %v4541 = vmul.f32 %v3929, %v3929
      %v4542 = vmul.f32 %v3932, %v3932
      %v4543 = vmul.f32 %v3935, %v3935
      %v4544 = vmul.f32 %v3938, %v3938
      %v4545 = vmul.f32 %v3941, %v3941
      %v4546 = vmul.f32 %v3944, %v3944
      %v4547 = vmul.f32 %v3947, %v3947
      %v4548 = vmul.f32 %v3950, %v3950
      %v4549 = vmul.f32 %v3953, %v3953
      %v4550 = vmul.f32 %v3956, %v3956
      %v4551 = vmul.f32 %v3959, %v3959
      %v4552 = vmul.f32 %v3962, %v3962
      %v4553 = vmul.f32 %v3965, %v3965
      %v4554 = vmul.f32 %v3968, %v3968
      %v4555 = vmul.f32 %v3971, %v3971
      %v4556 = vmul.f32 %v3974, %v3974
      %v4557 = vmul.f32 %v3977, %v3977
      %v4558 = vmul.f32 %v3980, %v3980
      %v4559 = vmul.f32 %v3983, %v3983
      %v4560 = vmul.f32 %v3986, %v3986
      %v4561 = vmul.f32 %v3989, %v3989
      %v4562 = vmul.f32 %v3992, %v3992
      %v4563 = vmul.f32 %v3995, %v3995
      %v4564 = vmul.f32 %v3998, %v3998
      %v4565 = vmul.f32 %v4001, %v4001
      %v4566 = vmul.f32 %v4004, %v4004
      %v4567 = vmul.f32 %v4007, %v4007
      %v4568 = vmul.f32 %v4010, %v4010
      %v4569 = vmul.f32 %v4013, %v4013
      %v4570 = vmul.f32 %v4016, %v4016
      %v4571 = vmul.f32 %v4019, %v4019
      %v4572 = vmul.f32 %v4022, %v4022
      %v4573 = vmul.f32 %v4025, %v4025
      %v4574 = vmul.f32 %v4028, %v4028
      %v4575 = vmul.f32 %v4031, %v4031
      %v4576 = vmul.f32 %v4034, %v4034
      %v4577 = vmul.f32 %v4037, %v4037
      %v4578 = vmul.f32 %v4040, %v4040
      %v4579 = vmul.f32 %v4043, %v4043
      %v4580 = vmul.f32 %v4046, %v4046
      %v4581 = vmul.f32 %v4049, %v4049
      %v4582 = vmul.f32 %v4052, %v4052
      %v4583 = vmul.f32 %v4055, %v4055
      %v4584 = vmul.f32 %v4058, %v4058
      %v4585 = vmul.f32 %v4061, %v4061
      %v4586 = vsel %vm4063, %v4458, 0.0
      %v4587 = vsel %vm4063, %v4459, 0.0
      %v4588 = vadd.f32 %v4586, %v4587
      %v4589 = vsel %vm4063, %v4460, 0.0
      %v4590 = vadd.f32 %v4588, %v4589
      %v4591 = vsel %vm4063, %v4461, 0.0
      %v4592 = vadd.f32 %v4590, %v4591
      %v4593 = vsel %vm4063, %v4462, 0.0
      %v4594 = vadd.f32 %v4592, %v4593
      %v4595 = vsel %vm4063, %v4463, 0.0
      %v4596 = vadd.f32 %v4594, %v4595
      %v4597 = vsel %vm4063, %v4464, 0.0
      %v4598 = vadd.f32 %v4596, %v4597
      %v4599 = vsel %vm4063, %v4465, 0.0
      %v4600 = vadd.f32 %v4598, %v4599
      %v4601 = vsel %vm4063, %v4466, 0.0
      %v4602 = vadd.f32 %v4600, %v4601
      %v4603 = vsel %vm4063, %v4467, 0.0
      %v4604 = vadd.f32 %v4602, %v4603
      %v4605 = vsel %vm4063, %v4468, 0.0
      %v4606 = vadd.f32 %v4604, %v4605
      %v4607 = vsel %vm4063, %v4469, 0.0
      %v4608 = vadd.f32 %v4606, %v4607
      %v4609 = vsel %vm4063, %v4470, 0.0
      %v4610 = vadd.f32 %v4608, %v4609
      %v4611 = vsel %vm4063, %v4471, 0.0
      %v4612 = vadd.f32 %v4610, %v4611
      %v4613 = vsel %vm4063, %v4472, 0.0
      %v4614 = vadd.f32 %v4612, %v4613
      %v4615 = vsel %vm4063, %v4473, 0.0
      %v4616 = vadd.f32 %v4614, %v4615
      %v4617 = vsel %vm4063, %v4474, 0.0
      %v4618 = vadd.f32 %v4616, %v4617
      %v4619 = vsel %vm4063, %v4475, 0.0
      %v4620 = vadd.f32 %v4618, %v4619
      %v4621 = vsel %vm4063, %v4476, 0.0
      %v4622 = vadd.f32 %v4620, %v4621
      %v4623 = vsel %vm4063, %v4477, 0.0
      %v4624 = vadd.f32 %v4622, %v4623
      %v4625 = vsel %vm4063, %v4478, 0.0
      %v4626 = vadd.f32 %v4624, %v4625
      %v4627 = vsel %vm4063, %v4479, 0.0
      %v4628 = vadd.f32 %v4626, %v4627
      %v4629 = vsel %vm4063, %v4480, 0.0
      %v4630 = vadd.f32 %v4628, %v4629
      %v4631 = vsel %vm4063, %v4481, 0.0
      %v4632 = vadd.f32 %v4630, %v4631
      %v4633 = vsel %vm4063, %v4482, 0.0
      %v4634 = vadd.f32 %v4632, %v4633
      %v4635 = vsel %vm4063, %v4483, 0.0
      %v4636 = vadd.f32 %v4634, %v4635
      %v4637 = vsel %vm4063, %v4484, 0.0
      %v4638 = vadd.f32 %v4636, %v4637
      %v4639 = vsel %vm4063, %v4485, 0.0
      %v4640 = vadd.f32 %v4638, %v4639
      %v4641 = vsel %vm4063, %v4486, 0.0
      %v4642 = vadd.f32 %v4640, %v4641
      %v4643 = vsel %vm4063, %v4487, 0.0
      %v4644 = vadd.f32 %v4642, %v4643
      %v4645 = vsel %vm4063, %v4488, 0.0
      %v4646 = vadd.f32 %v4644, %v4645
      %v4647 = vsel %vm4063, %v4489, 0.0
      %v4648 = vadd.f32 %v4646, %v4647
      %v4649 = vsel %vm4063, %v4490, 0.0
      %v4650 = vadd.f32 %v4648, %v4649
      %v4651 = vsel %vm4063, %v4491, 0.0
      %v4652 = vadd.f32 %v4650, %v4651
      %v4653 = vsel %vm4063, %v4492, 0.0
      %v4654 = vadd.f32 %v4652, %v4653
      %v4655 = vsel %vm4063, %v4493, 0.0
      %v4656 = vadd.f32 %v4654, %v4655
      %v4657 = vsel %vm4063, %v4494, 0.0
      %v4658 = vadd.f32 %v4656, %v4657
      %v4659 = vsel %vm4063, %v4495, 0.0
      %v4660 = vadd.f32 %v4658, %v4659
      %v4661 = vsel %vm4063, %v4496, 0.0
      %v4662 = vadd.f32 %v4660, %v4661
      %v4663 = vsel %vm4063, %v4497, 0.0
      %v4664 = vadd.f32 %v4662, %v4663
      %v4665 = vsel %vm4063, %v4498, 0.0
      %v4666 = vadd.f32 %v4664, %v4665
      %v4667 = vsel %vm4063, %v4499, 0.0
      %v4668 = vadd.f32 %v4666, %v4667
      %v4669 = vsel %vm4063, %v4500, 0.0
      %v4670 = vadd.f32 %v4668, %v4669
      %v4671 = vsel %vm4063, %v4501, 0.0
      %v4672 = vadd.f32 %v4670, %v4671
      %v4673 = vsel %vm4063, %v4502, 0.0
      %v4674 = vadd.f32 %v4672, %v4673
      %v4675 = vsel %vm4063, %v4503, 0.0
      %v4676 = vadd.f32 %v4674, %v4675
      %v4677 = vsel %vm4063, %v4504, 0.0
      %v4678 = vadd.f32 %v4676, %v4677
      %v4679 = vsel %vm4063, %v4505, 0.0
      %v4680 = vadd.f32 %v4678, %v4679
      %v4681 = vsel %vm4063, %v4506, 0.0
      %v4682 = vadd.f32 %v4680, %v4681
      %v4683 = vsel %vm4063, %v4507, 0.0
      %v4684 = vadd.f32 %v4682, %v4683
      %v4685 = vsel %vm4063, %v4508, 0.0
      %v4686 = vadd.f32 %v4684, %v4685
      %v4687 = vsel %vm4063, %v4509, 0.0
      %v4688 = vadd.f32 %v4686, %v4687
      %v4689 = vsel %vm4063, %v4510, 0.0
      %v4690 = vadd.f32 %v4688, %v4689
      %v4691 = vsel %vm4063, %v4511, 0.0
      %v4692 = vadd.f32 %v4690, %v4691
      %v4693 = vsel %vm4063, %v4512, 0.0
      %v4694 = vadd.f32 %v4692, %v4693
      %v4695 = vsel %vm4063, %v4513, 0.0
      %v4696 = vadd.f32 %v4694, %v4695
      %v4697 = vsel %vm4063, %v4514, 0.0
      %v4698 = vadd.f32 %v4696, %v4697
      %v4699 = vsel %vm4063, %v4515, 0.0
      %v4700 = vadd.f32 %v4698, %v4699
      %v4701 = vsel %vm4063, %v4516, 0.0
      %v4702 = vadd.f32 %v4700, %v4701
      %v4703 = vsel %vm4063, %v4517, 0.0
      %v4704 = vadd.f32 %v4702, %v4703
      %v4705 = vsel %vm4063, %v4518, 0.0
      %v4706 = vadd.f32 %v4704, %v4705
      %v4707 = vsel %vm4063, %v4519, 0.0
      %v4708 = vadd.f32 %v4706, %v4707
      %v4709 = vsel %vm4063, %v4520, 0.0
      %v4710 = vadd.f32 %v4708, %v4709
      %v4711 = vsel %vm4063, %v4521, 0.0
      %v4712 = vadd.f32 %v4710, %v4711
      %v4713 = vsel %vm4063, %v4522, 0.0
      %v4714 = vadd.f32 %v4712, %v4713
      %v4715 = vsel %vm4063, %v4523, 0.0
      %v4716 = vadd.f32 %v4714, %v4715
      %v4717 = vsel %vm4063, %v4524, 0.0
      %v4718 = vadd.f32 %v4716, %v4717
      %v4719 = vsel %vm4063, %v4525, 0.0
      %v4720 = vadd.f32 %v4718, %v4719
      %v4721 = vsel %vm4063, %v4526, 0.0
      %v4722 = vadd.f32 %v4720, %v4721
      %v4723 = vsel %vm4063, %v4527, 0.0
      %v4724 = vadd.f32 %v4722, %v4723
      %v4725 = vsel %vm4063, %v4528, 0.0
      %v4726 = vadd.f32 %v4724, %v4725
      %v4727 = vsel %vm4063, %v4529, 0.0
      %v4728 = vadd.f32 %v4726, %v4727
      %v4729 = vsel %vm4063, %v4530, 0.0
      %v4730 = vadd.f32 %v4728, %v4729
      %v4731 = vsel %vm4063, %v4531, 0.0
      %v4732 = vadd.f32 %v4730, %v4731
      %v4733 = vsel %vm4063, %v4532, 0.0
      %v4734 = vadd.f32 %v4732, %v4733
      %v4735 = vsel %vm4063, %v4533, 0.0
      %v4736 = vadd.f32 %v4734, %v4735
      %v4737 = vsel %vm4063, %v4534, 0.0
      %v4738 = vadd.f32 %v4736, %v4737
      %v4739 = vsel %vm4063, %v4535, 0.0
      %v4740 = vadd.f32 %v4738, %v4739
      %v4741 = vsel %vm4063, %v4536, 0.0
      %v4742 = vadd.f32 %v4740, %v4741
      %v4743 = vsel %vm4063, %v4537, 0.0
      %v4744 = vadd.f32 %v4742, %v4743
      %v4745 = vsel %vm4063, %v4538, 0.0
      %v4746 = vadd.f32 %v4744, %v4745
      %v4747 = vsel %vm4063, %v4539, 0.0
      %v4748 = vadd.f32 %v4746, %v4747
      %v4749 = vsel %vm4063, %v4540, 0.0
      %v4750 = vadd.f32 %v4748, %v4749
      %v4751 = vsel %vm4063, %v4541, 0.0
      %v4752 = vadd.f32 %v4750, %v4751
      %v4753 = vsel %vm4063, %v4542, 0.0
      %v4754 = vadd.f32 %v4752, %v4753
      %v4755 = vsel %vm4063, %v4543, 0.0
      %v4756 = vadd.f32 %v4754, %v4755
      %v4757 = vsel %vm4063, %v4544, 0.0
      %v4758 = vadd.f32 %v4756, %v4757
      %v4759 = vsel %vm4063, %v4545, 0.0
      %v4760 = vadd.f32 %v4758, %v4759
      %v4761 = vsel %vm4063, %v4546, 0.0
      %v4762 = vadd.f32 %v4760, %v4761
      %v4763 = vsel %vm4063, %v4547, 0.0
      %v4764 = vadd.f32 %v4762, %v4763
      %v4765 = vsel %vm4063, %v4548, 0.0
      %v4766 = vadd.f32 %v4764, %v4765
      %v4767 = vsel %vm4063, %v4549, 0.0
      %v4768 = vadd.f32 %v4766, %v4767
      %v4769 = vsel %vm4063, %v4550, 0.0
      %v4770 = vadd.f32 %v4768, %v4769
      %v4771 = vsel %vm4063, %v4551, 0.0
      %v4772 = vadd.f32 %v4770, %v4771
      %v4773 = vsel %vm4063, %v4552, 0.0
      %v4774 = vadd.f32 %v4772, %v4773
      %v4775 = vsel %vm4063, %v4553, 0.0
      %v4776 = vadd.f32 %v4774, %v4775
      %v4777 = vsel %vm4063, %v4554, 0.0
      %v4778 = vadd.f32 %v4776, %v4777
      %v4779 = vsel %vm4063, %v4555, 0.0
      %v4780 = vadd.f32 %v4778, %v4779
      %v4781 = vsel %vm4063, %v4556, 0.0
      %v4782 = vadd.f32 %v4780, %v4781
      %v4783 = vsel %vm4063, %v4557, 0.0
      %v4784 = vadd.f32 %v4782, %v4783
      %v4785 = vsel %vm4063, %v4558, 0.0
      %v4786 = vadd.f32 %v4784, %v4785
      %v4787 = vsel %vm4063, %v4559, 0.0
      %v4788 = vadd.f32 %v4786, %v4787
      %v4789 = vsel %vm4063, %v4560, 0.0
      %v4790 = vadd.f32 %v4788, %v4789
      %v4791 = vsel %vm4063, %v4561, 0.0
      %v4792 = vadd.f32 %v4790, %v4791
      %v4793 = vsel %vm4063, %v4562, 0.0
      %v4794 = vadd.f32 %v4792, %v4793
      %v4795 = vsel %vm4063, %v4563, 0.0
      %v4796 = vadd.f32 %v4794, %v4795
      %v4797 = vsel %vm4063, %v4564, 0.0
      %v4798 = vadd.f32 %v4796, %v4797
      %v4799 = vsel %vm4063, %v4565, 0.0
      %v4800 = vadd.f32 %v4798, %v4799
      %v4801 = vsel %vm4063, %v4566, 0.0
      %v4802 = vadd.f32 %v4800, %v4801
      %v4803 = vsel %vm4063, %v4567, 0.0
      %v4804 = vadd.f32 %v4802, %v4803
      %v4805 = vsel %vm4063, %v4568, 0.0
      %v4806 = vadd.f32 %v4804, %v4805
      %v4807 = vsel %vm4063, %v4569, 0.0
      %v4808 = vadd.f32 %v4806, %v4807
      %v4809 = vsel %vm4063, %v4570, 0.0
      %v4810 = vadd.f32 %v4808, %v4809
      %v4811 = vsel %vm4063, %v4571, 0.0
      %v4812 = vadd.f32 %v4810, %v4811
      %v4813 = vsel %vm4063, %v4572, 0.0
      %v4814 = vadd.f32 %v4812, %v4813
      %v4815 = vsel %vm4063, %v4573, 0.0
      %v4816 = vadd.f32 %v4814, %v4815
      %v4817 = vsel %vm4063, %v4574, 0.0
      %v4818 = vadd.f32 %v4816, %v4817
      %v4819 = vsel %vm4063, %v4575, 0.0
      %v4820 = vadd.f32 %v4818, %v4819
      %v4821 = vsel %vm4063, %v4576, 0.0
      %v4822 = vadd.f32 %v4820, %v4821
      %v4823 = vsel %vm4063, %v4577, 0.0
      %v4824 = vadd.f32 %v4822, %v4823
      %v4825 = vsel %vm4063, %v4578, 0.0
      %v4826 = vadd.f32 %v4824, %v4825
      %v4827 = vsel %vm4063, %v4579, 0.0
      %v4828 = vadd.f32 %v4826, %v4827
      %v4829 = vsel %vm4063, %v4580, 0.0
      %v4830 = vadd.f32 %v4828, %v4829
      %v4831 = vsel %vm4063, %v4581, 0.0
      %v4832 = vadd.f32 %v4830, %v4831
      %v4833 = vsel %vm4063, %v4582, 0.0
      %v4834 = vadd.f32 %v4832, %v4833
      %v4835 = vsel %vm4063, %v4583, 0.0
      %v4836 = vadd.f32 %v4834, %v4835
      %v4837 = vsel %vm4063, %v4584, 0.0
      %v4838 = vadd.f32 %v4836, %v4837
      %v4839 = vsel %vm4063, %v4585, 0.0
      %v4840 = vadd.f32 %v4838, %v4839
      %v4841 = vrot.slane %v4840, 4
      %v4842 = vadd.f32 %v4840, %v4841
      %v4843 = vrot.slane %v4842, 2
      %v4844 = vadd.f32 %v4842, %v4843
      %v4845 = vrot.slane %v4844, 1
      %v4846 = vadd.f32 %v4844, %v4845
      %v4847 = vadd.f32 %v4457, %v4846
      %4848 = vst.msk [vmem:[%s11] sm:$0x1] %vm4455, %v4847
      %s4849 = smul.u32 128, %s23
      %p4850 = scmp.lt.s32.totalorder %s4849, 255
      %s4851 = scalar_select %p4850, %s4849, 255
      %s4852 = smul.addr %s4851, 8
      %s4853 = scalar_lea.vmem %s9, %s4852
      // Predicated region
      $region61: #{residual_up_block.4} parent=55 // pred_check
        %p4854 = pneg %p245
      $region62: #{residual_up_block.4} parent=55 // pred_check_branch
        %4856 = sbr.rel (%p4854) target = $region64
      $region63: #{residual_up_block.4} parent=55 // pred_region
        %s4857 = smul.u32 128, %s23
      $region64: #{residual_up_block.4} parent=55 // pred_fallthru
        _
      // Predicated region
      $region65: #{residual_up_block.4} parent=55 // pred_check
        %p4858 = pneg %p266
      $region66: #{residual_up_block.4} parent=55 // pred_check_branch
        %4860 = sbr.rel (%p4858) target = $region68
      $region67: #{residual_up_block.4} parent=55 // pred_region
        _
      $region68: #{residual_up_block.4} parent=55 // pred_fallthru
        _
      // Predicated region
      $region69: #{residual_up_block.4} parent=55 // pred_check
        %p4861 = pneg %p287
      $region70: #{residual_up_block.4} parent=55 // pred_check_branch
        %4863 = sbr.rel (%p4861) target = $region72
      $region71: #{residual_up_block.4} parent=55 // pred_region
        _
      $region72: #{residual_up_block.4} parent=55 // pred_fallthru
        _
      // Predicated region
      $region73: #{residual_up_block.4} parent=55 // pred_check
        %p4864 = pneg %p266
      $region74: #{residual_up_block.4} parent=55 // pred_check_branch
        %4866 = sbr.rel (%p4864) target = $region76
      $region75: #{residual_up_block.4} parent=55 // pred_region
        _
      $region76: #{residual_up_block.4} parent=55 // pred_fallthru
        _
      // Predicated region
      $region77: #{residual_up_block.4} parent=55 // pred_check
        %p4867 = pneg %p287
      $region78: #{residual_up_block.4} parent=55 // pred_check_branch
        %4869 = sbr.rel (%p4867) target = $region80
      $region79: #{residual_up_block.4} parent=55 // pred_region
        _
      $region80: #{residual_up_block.4} parent=55 // pred_fallthru
        _
    $region56: #{residual_up_block.4} parent=5 // pred_fallthru
      _
    %p4870 = scmp.le.s32.totalorder 2, %s18
    // Predicated region
    $region81: #{residual_up_block.4} parent=5 // pred_check
      %p4871 = pneg %p4870
    $region82: #{residual_up_block.4} parent=5 // pred_check_branch
      %4873 = sbr.rel (%p4871) target = $region84
    $region83: #{residual_up_block.4} parent=5 // pred_region
      %s4874 = ssub.s32 %s18, 2
      // Predicated region
      $region85: #{residual_up_block.4} parent=83 // pred_check
        %p4875 = pneg %p251
      $region86: #{residual_up_block.4} parent=83 // pred_check_branch
        %4877 = sbr.rel (%p4875) target = $region88
      $region87: #{residual_up_block.4} parent=83 // pred_region
        %s4878 = smul.u32 128, %s24
        %p4879 = scmp.lt.s32.totalorder %s4878, 255
        %s4880 = scalar_select %p4879, %s4878, 255
        %s4881 = smul.addr %s4880, 8
        %s4882 = scalar_lea.vmem %s9, %s4881
      $region88: #{residual_up_block.4} parent=83 // pred_fallthru
        _
    $region84: #{residual_up_block.4} parent=5 // pred_fallthru
      _
  $region6: #{residual_up_block.4} parent=0 // loop_footer
    %s22 = sadd.s32 1, %s18
  $region7: #{residual_up_block.4} parent=0 // loop_footer_branch
    %17 = sbr.rel target = $region3
  $region8: #{residual_up_block.4} parent=0 // loop_exit
    _

// kernel: residual_up_block.5
$region0: #{residual_up_block.5}
  #allocation0 [shape = 'u32[]', space=smem, size = 0x4, offset = 0x4, fixed_abs, tag = 'smem constant byte address 0x4 - core index']
  #allocation1 [shape = 'u32[72,128]{1,0:T(1,128)}', space=vmem, size = 0x9000, scoped, tag = 'internal scratch']
  %s0 = inlined_call_operand.vmem [shape: f32[128,128], index: 0, kind: input, shape index: {}]
  %s1 = inlined_call_operand.vmem [shape: f32[128,128], index: 1, kind: input, shape index: {}]
  %s2 = inlined_call_operand.vmem [shape: f32[1,128], index: 2, kind: input, shape index: {}]
  %s3 = inlined_call_operand.vmem [shape: f32[1,128], index: 3, kind: input, shape index: {}]
  %s4 = inlined_call_operand.vmem [shape: f32[1,128], index: 4, kind: input, shape index: {}]
  %s5 = inlined_call_operand.vmem [shape: f32[1,128], index: 5, kind: input, shape index: {}]
  %s6 = inlined_call_operand.vmem [shape: f32[128,128], index: 6, kind: output, shape index: {}]
  %s7 = sld [smem:[#allocation0]]
  $region34: #{residual_up_block.5} parent=0
    _
  %s9 = ssub.s32 1, %s7
  %s10 = scalar_select 0, %s9, %s7
  // Predicated region
  $region2: #{residual_up_block.5} parent=0 // pred_check
    _
  $region3: #{residual_up_block.5} parent=0 // pred_check_branch
    %12 = sbr.rel (0) target = $region5
  $region4: #{residual_up_block.5} parent=0 // pred_region
    _
  $region5: #{residual_up_block.5} parent=0 // pred_fallthru
    _
  // Predicated region
  $region6: #{residual_up_block.5} parent=0 // pred_check
    _
  $region7: #{residual_up_block.5} parent=0 // pred_check_branch
    %14 = sbr.rel (0) target = $region9
  $region8: #{residual_up_block.5} parent=0 // pred_region
    _
  $region9: #{residual_up_block.5} parent=0 // pred_fallthru
    _
  // Predicated region
  $region10: #{residual_up_block.5} parent=0 // pred_check
    _
  $region11: #{residual_up_block.5} parent=0 // pred_check_branch
    %16 = sbr.rel (0) target = $region13
  $region12: #{residual_up_block.5} parent=0 // pred_region
    _
  $region13: #{residual_up_block.5} parent=0 // pred_fallthru
    _
  // Predicated region
  $region14: #{residual_up_block.5} parent=0 // pred_check
    _
  $region15: #{residual_up_block.5} parent=0 // pred_check_branch
    %18 = sbr.rel (0) target = $region17
  $region16: #{residual_up_block.5} parent=0 // pred_region
    _
  $region17: #{residual_up_block.5} parent=0 // pred_fallthru
    _
  // Predicated region
  $region18: #{residual_up_block.5} parent=0 // pred_check
    _
  $region19: #{residual_up_block.5} parent=0 // pred_check_branch
    %20 = sbr.rel (0) target = $region21
  $region20: #{residual_up_block.5} parent=0 // pred_region
    _
  $region21: #{residual_up_block.5} parent=0 // pred_fallthru
    _
  // Predicated region
  $region22: #{residual_up_block.5} parent=0 // pred_check
    _
  $region23: #{residual_up_block.5} parent=0 // pred_check_branch
    %22 = sbr.rel (0) target = $region25
  $region24: #{residual_up_block.5} parent=0 // pred_region
    _
  $region25: #{residual_up_block.5} parent=0 // pred_fallthru
    _
  %v23 = vld [vmem:[%s0] sm:$0xff]
  %v24 = vld [vmem:[%s0 + $0x8] sm:$0xff]
  %v25 = vld [vmem:[%s0 + $0x10] sm:$0xff]
  %v26 = vld [vmem:[%s0 + $0x18] sm:$0xff]
  %v27 = vld [vmem:[%s0 + $0x20] sm:$0xff]
  %v28 = vld [vmem:[%s0 + $0x28] sm:$0xff]
  %v29 = vld [vmem:[%s0 + $0x30] sm:$0xff]
  %v30 = vld [vmem:[%s0 + $0x38] sm:$0xff]
  %v31 = vld [vmem:[%s0 + $0x40] sm:$0xff]
  %v32 = vld [vmem:[%s0 + $0x48] sm:$0xff]
  %v33 = vld [vmem:[%s0 + $0x50] sm:$0xff]
  %v34 = vld [vmem:[%s0 + $0x58] sm:$0xff]
  %v35 = vld [vmem:[%s0 + $0x60] sm:$0xff]
  %v36 = vld [vmem:[%s0 + $0x68] sm:$0xff]
  %v37 = vld [vmem:[%s0 + $0x70] sm:$0xff]
  %v38 = vld [vmem:[%s0 + $0x78] sm:$0xff]
  %v39 = vld [vmem:[%s2] sm:$0x1]
  %v41 = vperm.slane %v39, 0
  %v43 = vmul.f32 %v23, %v41
  %v44 = vmul.f32 %v24, %v41
  %v45 = vmul.f32 %v25, %v41
  %v46 = vmul.f32 %v26, %v41
  %v47 = vmul.f32 %v27, %v41
  %v48 = vmul.f32 %v28, %v41
  %v49 = vmul.f32 %v29, %v41
  %v50 = vmul.f32 %v30, %v41
  %v51 = vmul.f32 %v31, %v41
  %v52 = vmul.f32 %v32, %v41
  %v53 = vmul.f32 %v33, %v41
  %v54 = vmul.f32 %v34, %v41
  %v55 = vmul.f32 %v35, %v41
  %v56 = vmul.f32 %v36, %v41
  %v57 = vmul.f32 %v37, %v41
  %v58 = vmul.f32 %v38, %v41
  %v59 = vld [vmem:[%s3] sm:$0x1]
  %v61 = vperm.slane %v59, 0
  %v63 = vadd.f32 %v43, %v61
  %v64 = vadd.f32 %v44, %v61
  %v65 = vadd.f32 %v45, %v61
  %v66 = vadd.f32 %v46, %v61
  %v67 = vadd.f32 %v47, %v61
  %v68 = vadd.f32 %v48, %v61
  %v69 = vadd.f32 %v49, %v61
  %v70 = vadd.f32 %v50, %v61
  %v71 = vadd.f32 %v51, %v61
  %v72 = vadd.f32 %v52, %v61
  %v73 = vadd.f32 %v53, %v61
  %v74 = vadd.f32 %v54, %v61
  %v75 = vadd.f32 %v55, %v61
  %v76 = vadd.f32 %v56, %v61
  %v77 = vadd.f32 %v57, %v61
  %v78 = vadd.f32 %v58, %v61
  %v79 = vld [vmem:[%s1] sm:$0xff]
  %v80 = vld [vmem:[%s1 + $0x8] sm:$0xff]
  %v81 = vld [vmem:[%s1 + $0x10] sm:$0xff]
  %v82 = vld [vmem:[%s1 + $0x18] sm:$0xff]
  %v83 = vld [vmem:[%s1 + $0x20] sm:$0xff]
  %v84 = vld [vmem:[%s1 + $0x28] sm:$0xff]
  %v85 = vld [vmem:[%s1 + $0x30] sm:$0xff]
  %v86 = vld [vmem:[%s1 + $0x38] sm:$0xff]
  %v87 = vld [vmem:[%s1 + $0x40] sm:$0xff]
  %v88 = vld [vmem:[%s1 + $0x48] sm:$0xff]
  %v89 = vld [vmem:[%s1 + $0x50] sm:$0xff]
  %v90 = vld [vmem:[%s1 + $0x58] sm:$0xff]
  %v91 = vld [vmem:[%s1 + $0x60] sm:$0xff]
  %v92 = vld [vmem:[%s1 + $0x68] sm:$0xff]
  %v93 = vld [vmem:[%s1 + $0x70] sm:$0xff]
  %v94 = vld [vmem:[%s1 + $0x78] sm:$0xff]
  %v95 = vld [vmem:[%s4] sm:$0x1]
  %v97 = vperm.slane %v95, 0
  %v99 = vmul.f32 %v79, %v97
  %v100 = vmul.f32 %v80, %v97
  %v101 = vmul.f32 %v81, %v97
  %v102 = vmul.f32 %v82, %v97
  %v103 = vmul.f32 %v83, %v97
  %v104 = vmul.f32 %v84, %v97
  %v105 = vmul.f32 %v85, %v97
  %v106 = vmul.f32 %v86, %v97
  %v107 = vmul.f32 %v87, %v97
  %v108 = vmul.f32 %v88, %v97
  %v109 = vmul.f32 %v89, %v97
  %v110 = vmul.f32 %v90, %v97
  %v111 = vmul.f32 %v91, %v97
  %v112 = vmul.f32 %v92, %v97
  %v113 = vmul.f32 %v93, %v97
  %v114 = vmul.f32 %v94, %v97
  %v115 = vadd.f32 %v63, %v99
  %v116 = vadd.f32 %v64, %v100
  %v117 = vadd.f32 %v65, %v101
  %v118 = vadd.f32 %v66, %v102
  %v119 = vadd.f32 %v67, %v103
  %v120 = vadd.f32 %v68, %v104
  %v121 = vadd.f32 %v69, %v105
  %v122 = vadd.f32 %v70, %v106
  %v123 = vadd.f32 %v71, %v107
  %v124 = vadd.f32 %v72, %v108
  %v125 = vadd.f32 %v73, %v109
  %v126 = vadd.f32 %v74, %v110
  %v127 = vadd.f32 %v75, %v111
  %v128 = vadd.f32 %v76, %v112
  %v129 = vadd.f32 %v77, %v113
  %v130 = vadd.f32 %v78, %v114
  %v131 = vld [vmem:[%s5] sm:$0x1]
  %v133 = vperm.slane %v131, 0
  %v135 = vadd.f32 %v115, %v133
  %v136 = vadd.f32 %v116, %v133
  %v137 = vadd.f32 %v117, %v133
  %v138 = vadd.f32 %v118, %v133
  %v139 = vadd.f32 %v119, %v133
  %v140 = vadd.f32 %v120, %v133
  %v141 = vadd.f32 %v121, %v133
  %v142 = vadd.f32 %v122, %v133
  %v143 = vadd.f32 %v123, %v133
  %v144 = vadd.f32 %v124, %v133
  %v145 = vadd.f32 %v125, %v133
  %v146 = vadd.f32 %v126, %v133
  %v147 = vadd.f32 %v127, %v133
  %v148 = vadd.f32 %v128, %v133
  %v149 = vadd.f32 %v129, %v133
  %v150 = vadd.f32 %v130, %v133
  %v151 = vmax.f32 %v135, 0.0
  %v152 = vmax.f32 %v136, 0.0
  %v153 = vmax.f32 %v137, 0.0
  %v154 = vmax.f32 %v138, 0.0
  %v155 = vmax.f32 %v139, 0.0
  %v156 = vmax.f32 %v140, 0.0
  %v157 = vmax.f32 %v141, 0.0
  %v158 = vmax.f32 %v142, 0.0
  %v159 = vmax.f32 %v143, 0.0
  %v160 = vmax.f32 %v144, 0.0
  %v161 = vmax.f32 %v145, 0.0
  %v162 = vmax.f32 %v146, 0.0
  %v163 = vmax.f32 %v147, 0.0
  %v164 = vmax.f32 %v148, 0.0
  %v165 = vmax.f32 %v149, 0.0
  %v166 = vmax.f32 %v150, 0.0
  %167 = vst [vmem:[%s6] sm:$0xff] %v151
  %168 = vst [vmem:[%s6 + $0x8] sm:$0xff] %v152
  %169 = vst [vmem:[%s6 + $0x10] sm:$0xff] %v153
  %170 = vst [vmem:[%s6 + $0x18] sm:$0xff] %v154
  %171 = vst [vmem:[%s6 + $0x20] sm:$0xff] %v155
  %172 = vst [vmem:[%s6 + $0x28] sm:$0xff] %v156
  %173 = vst [vmem:[%s6 + $0x30] sm:$0xff] %v157
  %174 = vst [vmem:[%s6 + $0x38] sm:$0xff] %v158
  %175 = vst [vmem:[%s6 + $0x40] sm:$0xff] %v159
  %176 = vst [vmem:[%s6 + $0x48] sm:$0xff] %v160
  %177 = vst [vmem:[%s6 + $0x50] sm:$0xff] %v161
  %178 = vst [vmem:[%s6 + $0x58] sm:$0xff] %v162
  %179 = vst [vmem:[%s6 + $0x60] sm:$0xff] %v163
  %180 = vst [vmem:[%s6 + $0x68] sm:$0xff] %v164
  %181 = vst [vmem:[%s6 + $0x70] sm:$0xff] %v165
  %182 = vst [vmem:[%s6 + $0x78] sm:$0xff] %v166
  // Predicated region
  $region26: #{residual_up_block.5} parent=0 // pred_check
    _
  $region27: #{residual_up_block.5} parent=0 // pred_check_branch
    %184 = sbr.rel (0) target = $region29
  $region28: #{residual_up_block.5} parent=0 // pred_region
    _
  $region29: #{residual_up_block.5} parent=0 // pred_fallthru
    _
  // Predicated region
  $region30: #{residual_up_block.5} parent=0 // pred_check
    _
  $region31: #{residual_up_block.5} parent=0 // pred_check_branch
    %186 = sbr.rel (0) target = $region33
  $region32: #{residual_up_block.5} parent=0 // pred_region
    _
  $region33: #{residual_up_block.5} parent=0 // pred_fallthru
    _

</llo_original>
